<compile_context>
chip_gen: v7x
topology: tpu7x:2x2x1
jax: 0.10.0
libtpu: 0.0.40
codegen_flags: <defaults>
</compile_context>

<pallas_src>
import functools

import numpy as np
import jax
import jax.numpy as jnp
from jax import lax
from jax.experimental import pallas as pl
from jax.experimental.pallas import tpu as pltpu

LANE = 128  # TPU lane width; all kernel outputs are padded to a multiple of this.


def _round_up(n, m):
    return ((n + m - 1) // m) * m


# ----------------------------------------------------------------------------
# Kernel 1/2: fused  conv(5x5, valid) + bias + PReLU + maxpool(2x2, stride 2)
# ----------------------------------------------------------------------------
def _conv_prelu_pool_kernel(x_ref, w_ref, b_ref, a_ref, o_ref):
    xb = x_ref[...].astype(jnp.bfloat16)                 # single-pass MXU path
    y = jnp.dot(xb, w_ref[...], preferred_element_type=jnp.float32)
    y = y + b_ref[...]                                   # f32 epilogue
    a = a_ref[0]                                         # scalar PReLU slope
    y = jnp.where(y >= 0.0, y, a * y)                    # PReLU before the max
    cp = o_ref.shape[-1]
    o_ref[...] = jnp.maximum(                            # 2x2 max over the 4
        jnp.maximum(y[:, 0 * cp:1 * cp], y[:, 1 * cp:2 * cp]),   # lane-blocks
        jnp.maximum(y[:, 2 * cp:3 * cp], y[:, 3 * cp:4 * cp]))


def conv_prelu_pool(patches, w_big, b_big, a, *, tm_max=512):
    """patches: (M, K) f32, w_big: (K, 4*Cp) bf16, b_big: (1, 4*Cp) f32,
    a: (1,) f32 -> (M, Cp) f32 pooled activations."""
    M, K = patches.shape
    n_big = w_big.shape[1]
    cp = n_big // 4
    tm = min(tm_max, _round_up(max(M, 8), 8))
    mp = _round_up(M, tm)
    if mp != M:
        patches = jnp.pad(patches, ((0, mp - M), (0, 0)))
    out = pl.pallas_call(
        _conv_prelu_pool_kernel,
        out_shape=jax.ShapeDtypeStruct((mp, cp), jnp.float32),
        grid=(mp // tm,),
        in_specs=[
            pl.BlockSpec((tm, K), lambda i: (i, 0)),          # row tiles
            pl.BlockSpec((K, n_big), lambda i: (0, 0)),       # weights resident
            pl.BlockSpec((1, n_big), lambda i: (0, 0)),
            pl.BlockSpec(memory_space=pltpu.MemorySpace.SMEM),
        ],
        out_specs=pl.BlockSpec((tm, cp), lambda i: (i, 0)),   # lane-dense store
        compiler_params=pltpu.CompilerParams(
            dimension_semantics=("parallel",)),
    )(patches, w_big, b_big, a)
    return out[:M]


# ----------------------------------------------------------------------------
# Kernel 3: fused FC stack   fc1 + PReLU + fc2 + PReLU + fc3
# ----------------------------------------------------------------------------
def _fc_stack_kernel(x_ref, w1_ref, b1_ref, w2_ref, b2_ref, w3_ref, b3_ref,
                     a_ref, o_ref):
    h = jnp.dot(x_ref[...].astype(jnp.bfloat16), w1_ref[...],
                preferred_element_type=jnp.float32) + b1_ref[...]
    h = jnp.where(h >= 0.0, h, a_ref[0] * h)
    h = jnp.dot(h.astype(jnp.bfloat16), w2_ref[...],
                preferred_element_type=jnp.float32) + b2_ref[...]
    h = jnp.where(h >= 0.0, h, a_ref[1] * h)
    o_ref[...] = jnp.dot(h.astype(jnp.bfloat16), w3_ref[...],
                         preferred_element_type=jnp.float32) + b3_ref[...]


def fc_stack(x, slopes, w1, b1, w2, b2, w3, b3, *, tm_max=256):
    M, K = x.shape
    n1, n2, n3 = w1.shape[1], w2.shape[1], w3.shape[1]
    tm = min(tm_max, _round_up(max(M, 8), 8))
    mp = _round_up(M, tm)
    if mp != M:
        x = jnp.pad(x, ((0, mp - M), (0, 0)))
    out = pl.pallas_call(
        _fc_stack_kernel,
        out_shape=jax.ShapeDtypeStruct((mp, n3), jnp.float32),
        grid=(mp // tm,),
        in_specs=[
            pl.BlockSpec((tm, K), lambda i: (i, 0)),
            pl.BlockSpec((K, n1), lambda i: (0, 0)),
            pl.BlockSpec((1, n1), lambda i: (0, 0)),
            pl.BlockSpec((n1, n2), lambda i: (0, 0)),
            pl.BlockSpec((1, n2), lambda i: (0, 0)),
            pl.BlockSpec((n2, n3), lambda i: (0, 0)),
            pl.BlockSpec((1, n3), lambda i: (0, 0)),
            pl.BlockSpec(memory_space=pltpu.MemorySpace.SMEM),
        ],
        out_specs=pl.BlockSpec((tm, n3), lambda i: (i, 0)),
        compiler_params=pltpu.CompilerParams(
            dimension_semantics=("parallel",)),
    )(x, w1, b1, w2, b2, w3, b3, slopes)
    return out[:M]


# ----------------------------------------------------------------------------
# Plain-JAX glue (layout plumbing only, no hot compute)
# ----------------------------------------------------------------------------
def pool_window_patches(x_nhwc, win=6, stride=2):
    """x: (B, H, W, C) -> (B*Ho*Wo, C*36) rows = the 6x6/stride-2 input window
    feeding one 2x2 pool window; feature order (c, ph, pw)."""
    B, H, W, C = x_nhwc.shape
    ho = (H - win) // stride + 1
    wo = (W - win) // stride + 1
    cols = []
    for ph in range(win):
        for pw in range(win):
            cols.append(x_nhwc[:, ph:ph + stride * ho:stride,
                               pw:pw + stride * wo:stride, :])
    pt = jnp.stack(cols, axis=-1)                       # (B, ho, wo, C, 36)
    return pt.reshape(B * ho * wo, C * win * win), (ho, wo)


def _build_fused_conv_weight(w_oihw, bias, cout_p):
    """w: (Cout, Cin, 5, 5), bias: (Cout,) ->
    w_big (Cin*36, 4*cout_p), b_big (1, 4*cout_p): the 5x5 kernel embedded at
    the 4 positions of the 2x2 pool window, channels zero-padded to cout_p."""
    cout, cin, kh, kw = w_oihw.shape
    w_hwio = jnp.transpose(w_oihw, (1, 2, 3, 0))        # (cin, 5, 5, cout)
    blocks = []
    for i in range(2):
        for j in range(2):
            wp = jnp.zeros((cin, kh + 1, kw + 1, cout), w_oihw.dtype)
            wp = wp.at[:, i:i + kh, j:j + kw, :].set(w_hwio)
            wp = wp.reshape(cin * (kh + 1) * (kw + 1), cout)
            blocks.append(jnp.pad(wp, ((0, 0), (0, cout_p - cout))))
    w_big = jnp.concatenate(blocks, axis=1)             # (cin*36, 4*cout_p)
    b_big = jnp.tile(jnp.pad(bias, (0, cout_p - cout)), 4).reshape(1, -1)
    return w_big, b_big


def prepare_params(p, embd_size):
    """One-time weight packing (done outside the jitted forward)."""
    cp = LANE
    w1_big, b1_big = _build_fused_conv_weight(p["w1"], p["b1"], cp)   # (108, 512)
    k1p = _round_up(w1_big.shape[0], LANE)                            # 108 -> 128
    w1_big = jnp.pad(w1_big, ((0, k1p - w1_big.shape[0]), (0, 0)))
    w2_big, b2_big = _build_fused_conv_weight(p["w2"], p["b2"], cp)   # (1152, 512)

    # fc1 weight reordered to the conv2 kernel's (h, w, padded-c) output layout,
    # so the FC input is a pure reshape (no NHWC->NCHW transpose of activations).
    fw1 = p["fw1"].reshape(-1, 64, 5, 5)                # (256, c, h, w)
    fw1 = jnp.transpose(fw1, (2, 3, 1, 0))              # (h, w, c, 256)
    fw1 = jnp.pad(fw1, ((0, 0), (0, 0), (0, cp - 64), (0, 0)))
    fw1 = fw1.reshape(5 * 5 * cp, -1)                   # (3200, 256)

    n3 = _round_up(embd_size, LANE)                     # lane-dense fc3 output
    fw3 = jnp.pad(p["fw3"].T, ((0, 0), (0, n3 - embd_size)))
    fb3 = jnp.pad(p["fb3"], (0, n3 - embd_size))

    bf, f32 = jnp.bfloat16, jnp.float32
    return dict(
        w1=w1_big.astype(bf), b1=b1_big.astype(f32),
        a1=p["a1"].reshape(1).astype(f32),
        w2=w2_big.astype(bf), b2=b2_big.astype(f32),
        a2=p["a2"].reshape(1).astype(f32),
        fw1=fw1.astype(bf), fb1=p["fb1"].reshape(1, -1).astype(f32),
        fw2=p["fw2"].T.astype(bf), fb2=p["fb2"].reshape(1, -1).astype(f32),
        fw3=fw3.astype(bf), fb3=fb3.reshape(1, -1).astype(f32),
        fa=jnp.concatenate([p["fa1"].reshape(1), p["fa2"].reshape(1)]).astype(f32),
    )


# ----------------------------------------------------------------------------
# Full forward pass
# ----------------------------------------------------------------------------
def embedding_net_rgb_forward(x_nchw, pp, *, embd_size):
    B = x_nchw.shape[0]
    x = jnp.transpose(x_nchw, (0, 2, 3, 1)).astype(jnp.float32)     # NHWC

    # stage 1: conv1 + PReLU + pool   (B,32,32,3) -> (B,14,14,32)
    patches, (h1, w1) = pool_window_patches(x)                      # (B*196, 108)
    kpad = pp["w1"].shape[0] - patches.shape[1]
    if kpad:
        patches = jnp.pad(patches, ((0, 0), (0, kpad)))             # K -> 128
    y = conv_prelu_pool(patches, pp["w1"], pp["b1"], pp["a1"])      # (B*196, 128)
    y = y.reshape(B, h1, w1, LANE)[..., :32]                        # drop pad lanes

    # stage 2: conv2 + PReLU + pool   -> (B, 5, 5, 128) -> (B, 3200)
    patches, (h2, w2) = pool_window_patches(y)                      # (B*25, 1152)
    kpad = pp["w2"].shape[0] - patches.shape[1]
    if kpad:
        patches = jnp.pad(patches, ((0, 0), (0, kpad)))
    y = conv_prelu_pool(patches, pp["w2"], pp["b2"], pp["a2"])      # (B*25, 128)
    y = y.reshape(B, h2 * w2 * LANE)                                # matches reordered fc1

    # fused FC stack: fc1 + PReLU + fc2 + PReLU + fc3 (lane-padded to 128)
    out = fc_stack(y, pp["fa"], pp["fw1"], pp["fb1"],
                   pp["fw2"], pp["fb2"], pp["fw3"], pp["fb3"])      # (B, 128)
    return out[:, :embd_size]


# ----------------------------------------------------------------------------
# Pure-JAX reference (mirrors the PyTorch module) for a correctness check
# ----------------------------------------------------------------------------
def _prelu(x, a):
    return jnp.where(x >= 0.0, x, a * x)


def _maxpool_nchw(x):
    B, C, H, W = x.shape
    return jnp.max(x.reshape(B, C, H // 2, 2, W // 2, 2), axis=(3, 5))


def reference_forward(x, p):
    dn = ("NCHW", "OIHW", "NCHW")
    hp = lax.Precision.HIGHEST
    y = lax.conv_general_dilated(x, p["w1"], (1, 1), "VALID",
                                 dimension_numbers=dn, precision=hp)
    y = _prelu(y + p["b1"][None, :, None, None], p["a1"][0])
    y = _maxpool_nchw(y)
    y = lax.conv_general_dilated(y, p["w2"], (1, 1), "VALID",
                                 dimension_numbers=dn, precision=hp)
    y = _prelu(y + p["b2"][None, :, None, None], p["a2"][0])
    y = _maxpool_nchw(y)
    y = y.reshape(y.shape[0], -1)
    y = _prelu(jnp.dot(y, p["fw1"].T, precision=hp) + p["fb1"], p["fa1"][0])
    y = _prelu(jnp.dot(y, p["fw2"].T, precision=hp) + p["fb2"], p["fa2"][0])
    y = jnp.dot(y, p["fw3"].T, precision=hp) + p["fb3"]
    return y


# ----------------------------------------------------------------------------
# Deterministic parameter init (shapes from the module's __init__)
# ----------------------------------------------------------------------------
def init_params(embd_size, key):
    ks = jax.random.split(key, 10)

    def rn(k, shape, scale):
        return jax.random.normal(k, shape, jnp.float32) * scale

    return dict(
        w1=rn(ks[0], (32, 3, 5, 5), 0.10), b1=rn(ks[1], (32,), 0.10),
        a1=jnp.full((1,), 0.25, jnp.float32),             # nn.PReLU() default
        w2=rn(ks[2], (64, 32, 5, 5), 0.05), b2=rn(ks[3], (64,), 0.05),
        a2=jnp.full((1,), 0.25, jnp.float32),
        fw1=rn(ks[4], (256, 1600), 0.02), fb1=rn(ks[5], (256,), 0.02),
        fa1=jnp.full((1,), 0.25, jnp.float32),
        fw2=rn(ks[6], (256, 256), 0.05), fb2=rn(ks[7], (256,), 0.05),
        fa2=jnp.full((1,), 0.25, jnp.float32),
        fw3=rn(ks[8], (embd_size, 256), 0.05), fb3=rn(ks[9], (embd_size,), 0.05),
    )


if __name__ == "__main__":
    embd_size = 32
    root = jax.random.PRNGKey(0)
    k_param, k_x = jax.random.split(root)

    params = init_params(embd_size, k_param)
    # 32x32 spatial is required by the module's hard-coded 64*5*5 FC input.
    x = jax.random.normal(k_x, (2, 3, 32, 32), jnp.float32)

    prepped = prepare_params(params, embd_size)
    fwd = jax.jit(functools.partial(embedding_net_rgb_forward, embd_size=embd_size))
    out = jax.block_until_ready(fwd(x, prepped))
    assert out.shape == (2, embd_size)

    ref = jax.block_until_ready(reference_forward(x, params))
    # Kernels use bf16 MXU operands (f32 accumulate) per the perf review, so
    # compare against the f32-HIGHEST reference with a bf16-appropriate tolerance.
    np.testing.assert_allclose(np.asarray(out), np.asarray(ref),
                               rtol=2e-2, atol=2e-2)
    print("KERNEL_OK")
</pallas_src>

<mosaic_0001>
module attributes {stable_mosaic.version = 11 : i64} {
  func.func @_conv_prelu_pool_kernel(%arg0: i32, %arg1: memref<392x128xf32, #tpu.memory_space<vmem>>, %arg2: memref<128x512xbf16, #tpu.memory_space<vmem>>, %arg3: memref<1x512xf32, #tpu.memory_space<vmem>>, %arg4: memref<1xf32, #tpu.memory_space<smem>>, %arg5: memref<392x128xf32, #tpu.memory_space<vmem>>) attributes {dimension_semantics = [#tpu.dimension_semantics<parallel>], iteration_bounds = array<i64: 1>, scalar_prefetch = 0 : i64, scratch_operands = 0 : i64, tpu.core_type = #tpu.core_type<tc>, window_params = [{transform_indices = @transform_0, window_bounds = array<i64: 392, 128>}, {pipeline_mode = #tpu.pipeline_mode<synchronous>, transform_indices = @transform_1, window_bounds = array<i64: 128, 512>}, {pipeline_mode = #tpu.pipeline_mode<synchronous>, transform_indices = @transform_2, window_bounds = array<i64: 1, 512>}, {transform_indices = @transform_3, window_bounds = array<i64: 1>}, {transform_indices = @transform_4, window_bounds = array<i64: 392, 128>}]} {
    %c0 = arith.constant 0 : index
    %c0_0 = arith.constant 0 : index
    %0 = vector.load %arg1[%c0, %c0_0] : memref<392x128xf32, #tpu.memory_space<vmem>>, vector<392x128xf32>
    %1 = arith.truncf %0 : vector<392x128xf32> to vector<392x128xbf16>
    %c0_1 = arith.constant 0 : index
    %c0_2 = arith.constant 0 : index
    %2 = vector.load %arg2[%c0_1, %c0_2] : memref<128x512xbf16, #tpu.memory_space<vmem>>, vector<128x512xbf16>
    %cst = arith.constant dense<0.000000e+00> : vector<392x512xf32>
    %3 = tpu.matmul %1, %2, %cst {dimension_numbers = #tpu.dot_dimension_numbers<[1], [0], [0], [1], [0, 0, 1, 1], [], []>} : vector<392x128xbf16>, vector<128x512xbf16>, vector<392x512xf32> -> vector<392x512xf32>
    %c0_3 = arith.constant 0 : index
    %c0_4 = arith.constant 0 : index
    %4 = vector.load %arg3[%c0_3, %c0_4] : memref<1x512xf32, #tpu.memory_space<vmem>>, vector<1x512xf32>
    %5 = vector.broadcast %4 : vector<1x512xf32> to vector<392x512xf32>
    %6 = arith.addf %3, %5 : vector<392x512xf32>
    %c0_5 = arith.constant 0 : index
    %7 = memref.load %arg4[%c0_5] : memref<1xf32, #tpu.memory_space<smem>>
    %cst_6 = arith.constant 0.000000e+00 : f32
    %8 = vector.broadcast %cst_6 : f32 to vector<392x512xf32>
    %9 = arith.cmpf oge, %6, %8 : vector<392x512xf32>
    %10 = vector.broadcast %7 : f32 to vector<392x512xf32>
    %11 = arith.mulf %10, %6 : vector<392x512xf32>
    %12 = arith.select %9, %6, %11 : vector<392x512xi1>, vector<392x512xf32>
    %13 = vector.extract_strided_slice %12 {offsets = [0, 0], sizes = [392, 128], strides = [1, 1]} : vector<392x512xf32> to vector<392x128xf32>
    %14 = vector.extract_strided_slice %12 {offsets = [0, 128], sizes = [392, 128], strides = [1, 1]} : vector<392x512xf32> to vector<392x128xf32>
    %15 = arith.maximumf %13, %14 : vector<392x128xf32>
    %16 = vector.extract_strided_slice %12 {offsets = [0, 256], sizes = [392, 128], strides = [1, 1]} : vector<392x512xf32> to vector<392x128xf32>
    %17 = vector.extract_strided_slice %12 {offsets = [0, 384], sizes = [392, 128], strides = [1, 1]} : vector<392x512xf32> to vector<392x128xf32>
    %18 = arith.maximumf %16, %17 : vector<392x128xf32>
    %19 = arith.maximumf %15, %18 : vector<392x128xf32>
    %c0_7 = arith.constant 0 : index
    %c0_8 = arith.constant 0 : index
    %20 = vector.load %arg5[%c0_7, %c0_8] : memref<392x128xf32, #tpu.memory_space<vmem>>, vector<392x128xf32>
    tpu.vector_store %arg5[%c0_7, %c0_8], %19 {strides = array<i32>} : memref<392x128xf32, #tpu.memory_space<vmem>>, vector<392x128xf32>,
    return
  }
  func.func @transform_0(%arg0: i32) -> (i32, i32) {
    %c0_i32 = arith.constant 0 : i32
    %c0_i32_0 = arith.constant 0 : i32
    return %arg0, %c0_i32 : i32, i32
  }
  func.func @transform_1(%arg0: i32) -> (i32, i32) {
    %c0_i32 = arith.constant 0 : i32
    %c0_i32_0 = arith.constant 0 : i32
    %c0_i32_1 = arith.constant 0 : i32
    return %c0_i32, %c0_i32_0 : i32, i32
  }
  func.func @transform_2(%arg0: i32) -> (i32, i32) {
    %c0_i32 = arith.constant 0 : i32
    %c0_i32_0 = arith.constant 0 : i32
    %c0_i32_1 = arith.constant 0 : i32
    return %c0_i32, %c0_i32_0 : i32, i32
  }
  func.func @transform_3(%arg0: i32) -> i32 {
    %c0_i32 = arith.constant 0 : i32
    %c0_i32_0 = arith.constant 0 : i32
    return %c0_i32 : i32
  }
  func.func @transform_4(%arg0: i32) -> (i32, i32) {
    %c0_i32 = arith.constant 0 : i32
    %c0_i32_0 = arith.constant 0 : i32
    return %arg0, %c0_i32 : i32, i32
  }
}

module attributes {stable_mosaic.version = 11 : i64} {
  func.func @_conv_prelu_pool_kernel(%arg0: i32, %arg1: memref<56x1152xf32, #tpu.memory_space<vmem>>, %arg2: memref<1152x512xbf16, #tpu.memory_space<vmem>>, %arg3: memref<1x512xf32, #tpu.memory_space<vmem>>, %arg4: memref<1xf32, #tpu.memory_space<smem>>, %arg5: memref<56x128xf32, #tpu.memory_space<vmem>>) attributes {dimension_semantics = [#tpu.dimension_semantics<parallel>], iteration_bounds = array<i64: 1>, scalar_prefetch = 0 : i64, scratch_operands = 0 : i64, tpu.core_type = #tpu.core_type<tc>, window_params = [{transform_indices = @transform_0, window_bounds = array<i64: 56, 1152>}, {pipeline_mode = #tpu.pipeline_mode<synchronous>, transform_indices = @transform_1, window_bounds = array<i64: 1152, 512>}, {pipeline_mode = #tpu.pipeline_mode<synchronous>, transform_indices = @transform_2, window_bounds = array<i64: 1, 512>}, {transform_indices = @transform_3, window_bounds = array<i64: 1>}, {transform_indices = @transform_4, window_bounds = array<i64: 56, 128>}]} {
    %c0 = arith.constant 0 : index
    %c0_0 = arith.constant 0 : index
    %0 = vector.load %arg1[%c0, %c0_0] : memref<56x1152xf32, #tpu.memory_space<vmem>>, vector<56x1152xf32>
    %1 = arith.truncf %0 : vector<56x1152xf32> to vector<56x1152xbf16>
    %c0_1 = arith.constant 0 : index
    %c0_2 = arith.constant 0 : index
    %2 = vector.load %arg2[%c0_1, %c0_2] : memref<1152x512xbf16, #tpu.memory_space<vmem>>, vector<1152x512xbf16>
    %cst = arith.constant dense<0.000000e+00> : vector<56x512xf32>
    %3 = tpu.matmul %1, %2, %cst {dimension_numbers = #tpu.dot_dimension_numbers<[1], [0], [0], [1], [0, 0, 1, 1], [], []>} : vector<56x1152xbf16>, vector<1152x512xbf16>, vector<56x512xf32> -> vector<56x512xf32>
    %c0_3 = arith.constant 0 : index
    %c0_4 = arith.constant 0 : index
    %4 = vector.load %arg3[%c0_3, %c0_4] : memref<1x512xf32, #tpu.memory_space<vmem>>, vector<1x512xf32>
    %5 = vector.broadcast %4 : vector<1x512xf32> to vector<56x512xf32>
    %6 = arith.addf %3, %5 : vector<56x512xf32>
    %c0_5 = arith.constant 0 : index
    %7 = memref.load %arg4[%c0_5] : memref<1xf32, #tpu.memory_space<smem>>
    %cst_6 = arith.constant 0.000000e+00 : f32
    %8 = vector.broadcast %cst_6 : f32 to vector<56x512xf32>
    %9 = arith.cmpf oge, %6, %8 : vector<56x512xf32>
    %10 = vector.broadcast %7 : f32 to vector<56x512xf32>
    %11 = arith.mulf %10, %6 : vector<56x512xf32>
    %12 = arith.select %9, %6, %11 : vector<56x512xi1>, vector<56x512xf32>
    %13 = vector.extract_strided_slice %12 {offsets = [0, 0], sizes = [56, 128], strides = [1, 1]} : vector<56x512xf32> to vector<56x128xf32>
    %14 = vector.extract_strided_slice %12 {offsets = [0, 128], sizes = [56, 128], strides = [1, 1]} : vector<56x512xf32> to vector<56x128xf32>
    %15 = arith.maximumf %13, %14 : vector<56x128xf32>
    %16 = vector.extract_strided_slice %12 {offsets = [0, 256], sizes = [56, 128], strides = [1, 1]} : vector<56x512xf32> to vector<56x128xf32>
    %17 = vector.extract_strided_slice %12 {offsets = [0, 384], sizes = [56, 128], strides = [1, 1]} : vector<56x512xf32> to vector<56x128xf32>
    %18 = arith.maximumf %16, %17 : vector<56x128xf32>
    %19 = arith.maximumf %15, %18 : vector<56x128xf32>
    %c0_7 = arith.constant 0 : index
    %c0_8 = arith.constant 0 : index
    %20 = vector.load %arg5[%c0_7, %c0_8] : memref<56x128xf32, #tpu.memory_space<vmem>>, vector<56x128xf32>
    tpu.vector_store %arg5[%c0_7, %c0_8], %19 {strides = array<i32>} : memref<56x128xf32, #tpu.memory_space<vmem>>, vector<56x128xf32>,
    return
  }
  func.func @transform_0(%arg0: i32) -> (i32, i32) {
    %c0_i32 = arith.constant 0 : i32
    %c0_i32_0 = arith.constant 0 : i32
    return %arg0, %c0_i32 : i32, i32
  }
  func.func @transform_1(%arg0: i32) -> (i32, i32) {
    %c0_i32 = arith.constant 0 : i32
    %c0_i32_0 = arith.constant 0 : i32
    %c0_i32_1 = arith.constant 0 : i32
    return %c0_i32, %c0_i32_0 : i32, i32
  }
  func.func @transform_2(%arg0: i32) -> (i32, i32) {
    %c0_i32 = arith.constant 0 : i32
    %c0_i32_0 = arith.constant 0 : i32
    %c0_i32_1 = arith.constant 0 : i32
    return %c0_i32, %c0_i32_0 : i32, i32
  }
  func.func @transform_3(%arg0: i32) -> i32 {
    %c0_i32 = arith.constant 0 : i32
    %c0_i32_0 = arith.constant 0 : i32
    return %c0_i32 : i32
  }
  func.func @transform_4(%arg0: i32) -> (i32, i32) {
    %c0_i32 = arith.constant 0 : i32
    %c0_i32_0 = arith.constant 0 : i32
    return %arg0, %c0_i32 : i32, i32
  }
}

module attributes {stable_mosaic.version = 11 : i64} {
  func.func @_fc_stack_kernel(%arg0: i32, %arg1: memref<8x3200xf32, #tpu.memory_space<vmem>>, %arg2: memref<3200x256xbf16, #tpu.memory_space<vmem>>, %arg3: memref<1x256xf32, #tpu.memory_space<vmem>>, %arg4: memref<256x256xbf16, #tpu.memory_space<vmem>>, %arg5: memref<1x256xf32, #tpu.memory_space<vmem>>, %arg6: memref<256x128xbf16, #tpu.memory_space<vmem>>, %arg7: memref<1x128xf32, #tpu.memory_space<vmem>>, %arg8: memref<2xf32, #tpu.memory_space<smem>>, %arg9: memref<8x128xf32, #tpu.memory_space<vmem>>) attributes {dimension_semantics = [#tpu.dimension_semantics<parallel>], iteration_bounds = array<i64: 1>, scalar_prefetch = 0 : i64, scratch_operands = 0 : i64, tpu.core_type = #tpu.core_type<tc>, window_params = [{transform_indices = @transform_0, window_bounds = array<i64: 8, 3200>}, {pipeline_mode = #tpu.pipeline_mode<synchronous>, transform_indices = @transform_1, window_bounds = array<i64: 3200, 256>}, {pipeline_mode = #tpu.pipeline_mode<synchronous>, transform_indices = @transform_2, window_bounds = array<i64: 1, 256>}, {pipeline_mode = #tpu.pipeline_mode<synchronous>, transform_indices = @transform_3, window_bounds = array<i64: 256, 256>}, {pipeline_mode = #tpu.pipeline_mode<synchronous>, transform_indices = @transform_4, window_bounds = array<i64: 1, 256>}, {pipeline_mode = #tpu.pipeline_mode<synchronous>, transform_indices = @transform_5, window_bounds = array<i64: 256, 128>}, {pipeline_mode = #tpu.pipeline_mode<synchronous>, transform_indices = @transform_6, window_bounds = array<i64: 1, 128>}, {transform_indices = @transform_7, window_bounds = array<i64: 2>}, {transform_indices = @transform_8, window_bounds = array<i64: 8, 128>}]} {
    %c0 = arith.constant 0 : index
    %c0_0 = arith.constant 0 : index
    %0 = vector.load %arg1[%c0, %c0_0] : memref<8x3200xf32, #tpu.memory_space<vmem>>, vector<8x3200xf32>
    %1 = arith.truncf %0 : vector<8x3200xf32> to vector<8x3200xbf16>
    %c0_1 = arith.constant 0 : index
    %c0_2 = arith.constant 0 : index
    %2 = vector.load %arg2[%c0_1, %c0_2] : memref<3200x256xbf16, #tpu.memory_space<vmem>>, vector<3200x256xbf16>
    %cst = arith.constant dense<0.000000e+00> : vector<8x256xf32>
    %3 = tpu.matmul %1, %2, %cst {dimension_numbers = #tpu.dot_dimension_numbers<[1], [0], [0], [1], [0, 0, 1, 1], [], []>} : vector<8x3200xbf16>, vector<3200x256xbf16>, vector<8x256xf32> -> vector<8x256xf32>
    %c0_3 = arith.constant 0 : index
    %c0_4 = arith.constant 0 : index
    %4 = vector.load %arg3[%c0_3, %c0_4] : memref<1x256xf32, #tpu.memory_space<vmem>>, vector<1x256xf32>
    %5 = vector.broadcast %4 : vector<1x256xf32> to vector<8x256xf32>
    %6 = arith.addf %3, %5 : vector<8x256xf32>
    %cst_5 = arith.constant 0.000000e+00 : f32
    %7 = vector.broadcast %cst_5 : f32 to vector<8x256xf32>
    %8 = arith.cmpf oge, %6, %7 : vector<8x256xf32>
    %c0_6 = arith.constant 0 : index
    %9 = memref.load %arg8[%c0_6] : memref<2xf32, #tpu.memory_space<smem>>
    %10 = vector.broadcast %9 : f32 to vector<8x256xf32>
    %11 = arith.mulf %10, %6 : vector<8x256xf32>
    %12 = arith.select %8, %6, %11 : vector<8x256xi1>, vector<8x256xf32>
    %13 = arith.truncf %12 : vector<8x256xf32> to vector<8x256xbf16>
    %c0_7 = arith.constant 0 : index
    %c0_8 = arith.constant 0 : index
    %14 = vector.load %arg4[%c0_7, %c0_8] : memref<256x256xbf16, #tpu.memory_space<vmem>>, vector<256x256xbf16>
    %cst_9 = arith.constant dense<0.000000e+00> : vector<8x256xf32>
    %15 = tpu.matmul %13, %14, %cst_9 {dimension_numbers = #tpu.dot_dimension_numbers<[1], [0], [0], [1], [0, 0, 1, 1], [], []>} : vector<8x256xbf16>, vector<256x256xbf16>, vector<8x256xf32> -> vector<8x256xf32>
    %c0_10 = arith.constant 0 : index
    %c0_11 = arith.constant 0 : index
    %16 = vector.load %arg5[%c0_10, %c0_11] : memref<1x256xf32, #tpu.memory_space<vmem>>, vector<1x256xf32>
    %17 = vector.broadcast %16 : vector<1x256xf32> to vector<8x256xf32>
    %18 = arith.addf %15, %17 : vector<8x256xf32>
    %cst_12 = arith.constant 0.000000e+00 : f32
    %19 = vector.broadcast %cst_12 : f32 to vector<8x256xf32>
    %20 = arith.cmpf oge, %18, %19 : vector<8x256xf32>
    %c1 = arith.constant 1 : index
    %21 = memref.load %arg8[%c1] : memref<2xf32, #tpu.memory_space<smem>>
    %22 = vector.broadcast %21 : f32 to vector<8x256xf32>
    %23 = arith.mulf %22, %18 : vector<8x256xf32>
    %24 = arith.select %20, %18, %23 : vector<8x256xi1>, vector<8x256xf32>
    %25 = arith.truncf %24 : vector<8x256xf32> to vector<8x256xbf16>
    %c0_13 = arith.constant 0 : index
    %c0_14 = arith.constant 0 : index
    %26 = vector.load %arg6[%c0_13, %c0_14] : memref<256x128xbf16, #tpu.memory_space<vmem>>, vector<256x128xbf16>
    %cst_15 = arith.constant dense<0.000000e+00> : vector<8x128xf32>
    %27 = tpu.matmul %25, %26, %cst_15 {dimension_numbers = #tpu.dot_dimension_numbers<[1], [0], [0], [1], [0, 0, 1, 1], [], []>} : vector<8x256xbf16>, vector<256x128xbf16>, vector<8x128xf32> -> vector<8x128xf32>
    %c0_16 = arith.constant 0 : index
    %c0_17 = arith.constant 0 : index
    %28 = vector.load %arg7[%c0_16, %c0_17] : memref<1x128xf32, #tpu.memory_space<vmem>>, vector<1x128xf32>
    %29 = vector.broadcast %28 : vector<1x128xf32> to vector<8x128xf32>
    %30 = arith.addf %27, %29 : vector<8x128xf32>
    %c0_18 = arith.constant 0 : index
    %c0_19 = arith.constant 0 : index
    %31 = vector.load %arg9[%c0_18, %c0_19] : memref<8x128xf32, #tpu.memory_space<vmem>>, vector<8x128xf32>
    tpu.vector_store %arg9[%c0_18, %c0_19], %30 {strides = array<i32>} : memref<8x128xf32, #tpu.memory_space<vmem>>, vector<8x128xf32>,
    return
  }
  func.func @transform_0(%arg0: i32) -> (i32, i32) {
    %c0_i32 = arith.constant 0 : i32
    %c0_i32_0 = arith.constant 0 : i32
    return %arg0, %c0_i32 : i32, i32
  }
  func.func @transform_1(%arg0: i32) -> (i32, i32) {
    %c0_i32 = arith.constant 0 : i32
    %c0_i32_0 = arith.constant 0 : i32
    %c0_i32_1 = arith.constant 0 : i32
    return %c0_i32, %c0_i32_0 : i32, i32
  }
  func.func @transform_2(%arg0: i32) -> (i32, i32) {
    %c0_i32 = arith.constant 0 : i32
    %c0_i32_0 = arith.constant 0 : i32
    %c0_i32_1 = arith.constant 0 : i32
    return %c0_i32, %c0_i32_0 : i32, i32
  }
  func.func @transform_3(%arg0: i32) -> (i32, i32) {
    %c0_i32 = arith.constant 0 : i32
    %c0_i32_0 = arith.constant 0 : i32
    %c0_i32_1 = arith.constant 0 : i32
    return %c0_i32, %c0_i32_0 : i32, i32
  }
  func.func @transform_4(%arg0: i32) -> (i32, i32) {
    %c0_i32 = arith.constant 0 : i32
    %c0_i32_0 = arith.constant 0 : i32
    %c0_i32_1 = arith.constant 0 : i32
    return %c0_i32, %c0_i32_0 : i32, i32
  }
  func.func @transform_5(%arg0: i32) -> (i32, i32) {
    %c0_i32 = arith.constant 0 : i32
    %c0_i32_0 = arith.constant 0 : i32
    %c0_i32_1 = arith.constant 0 : i32
    return %c0_i32, %c0_i32_0 : i32, i32
  }
  func.func @transform_6(%arg0: i32) -> (i32, i32) {
    %c0_i32 = arith.constant 0 : i32
    %c0_i32_0 = arith.constant 0 : i32
    %c0_i32_1 = arith.constant 0 : i32
    return %c0_i32, %c0_i32_0 : i32, i32
  }
  func.func @transform_7(%arg0: i32) -> i32 {
    %c0_i32 = arith.constant 0 : i32
    %c0_i32_0 = arith.constant 0 : i32
    return %c0_i32 : i32
  }
  func.func @transform_8(%arg0: i32) -> (i32, i32) {
    %c0_i32 = arith.constant 0 : i32
    %c0_i32_0 = arith.constant 0 : i32
    return %arg0, %c0_i32 : i32, i32
  }
}

</mosaic_0001>

<llo_original>
// kernel: embedding_net_rgb_forward.3
$region0: #{embedding_net_rgb_forward.3}
  #allocation0 [shape = 'u32[]', space=smem, size = 0x4, offset = 0x4, fixed_abs, tag = 'smem constant byte address 0x4 - core index']
  #allocation1 [shape = 'u32[144,128]{1,0:T(1,128)}', space=vmem, size = 0x12000, scoped, tag = 'internal scratch']
  #allocation2 [shape = 'f32[1]{0:T(128)S(6)}', space=smem, size = 0x200, scoped, tag = 'scoped memory for embedding_net_rgb_forward.3']
  %s0 = inlined_call_operand.vmem [shape: f32[392,128], index: 0, kind: input, shape index: {}]
  %s1 = inlined_call_operand.vmem [shape: bf16[128,512], index: 1, kind: input, shape index: {}]
  %s2 = inlined_call_operand.vmem [shape: f32[1,512], index: 2, kind: input, shape index: {}]
  %s3 = inlined_call_operand.<no memory space> [shape: f32[1], index: 3, kind: input, shape index: {}]
  %s4 = inlined_call_operand.vmem [shape: f32[392,128], index: 4, kind: output, shape index: {}]
  %s5 = sld [smem:[#allocation0]]
  $region26: #{embedding_net_rgb_forward.3} parent=0
    _
  %s7 = ssub.s32 1, %s5
  %s8 = scalar_select 0, %s7, %s5
  %9 = sst [smem:[#allocation2]] %s3
  // Predicated region
  $region2: #{embedding_net_rgb_forward.3} parent=0 // pred_check
    _
  $region3: #{embedding_net_rgb_forward.3} parent=0 // pred_check_branch
    %11 = sbr.rel (0) target = $region5
  $region4: #{embedding_net_rgb_forward.3} parent=0 // pred_region
    _
  $region5: #{embedding_net_rgb_forward.3} parent=0 // pred_fallthru
    _
  // Predicated region
  $region6: #{embedding_net_rgb_forward.3} parent=0 // pred_check
    _
  $region7: #{embedding_net_rgb_forward.3} parent=0 // pred_check_branch
    %13 = sbr.rel (0) target = $region9
  $region8: #{embedding_net_rgb_forward.3} parent=0 // pred_region
    _
  $region9: #{embedding_net_rgb_forward.3} parent=0 // pred_fallthru
    _
  // Predicated region
  $region10: #{embedding_net_rgb_forward.3} parent=0 // pred_check
    _
  $region11: #{embedding_net_rgb_forward.3} parent=0 // pred_check_branch
    %15 = sbr.rel (0) target = $region13
  $region12: #{embedding_net_rgb_forward.3} parent=0 // pred_region
    _
  $region13: #{embedding_net_rgb_forward.3} parent=0 // pred_fallthru
    _
  // Predicated region
  $region14: #{embedding_net_rgb_forward.3} parent=0 // pred_check
    _
  $region15: #{embedding_net_rgb_forward.3} parent=0 // pred_check_branch
    %17 = sbr.rel (0) target = $region17
  $region16: #{embedding_net_rgb_forward.3} parent=0 // pred_region
    _
  $region17: #{embedding_net_rgb_forward.3} parent=0 // pred_fallthru
    _
  %v19 = vld [vmem:[%s0] sm:$0xff]
  %v20 = vld [vmem:[%s0 + $0x8] sm:$0xff]
  %v21 = vld [vmem:[%s0 + $0x10] sm:$0xff]
  %v22 = vld [vmem:[%s0 + $0x18] sm:$0xff]
  %v23 = vld [vmem:[%s0 + $0x20] sm:$0xff]
  %v24 = vld [vmem:[%s0 + $0x28] sm:$0xff]
  %v25 = vld [vmem:[%s0 + $0x30] sm:$0xff]
  %v26 = vld [vmem:[%s0 + $0x38] sm:$0xff]
  %v27 = vld [vmem:[%s0 + $0x40] sm:$0xff]
  %v28 = vld [vmem:[%s0 + $0x48] sm:$0xff]
  %v29 = vld [vmem:[%s0 + $0x50] sm:$0xff]
  %v30 = vld [vmem:[%s0 + $0x58] sm:$0xff]
  %v31 = vld [vmem:[%s0 + $0x60] sm:$0xff]
  %v32 = vld [vmem:[%s0 + $0x68] sm:$0xff]
  %v33 = vld [vmem:[%s0 + $0x70] sm:$0xff]
  %v34 = vld [vmem:[%s0 + $0x78] sm:$0xff]
  %v35 = vld [vmem:[%s0 + $0x80] sm:$0xff]
  %v36 = vld [vmem:[%s0 + $0x88] sm:$0xff]
  %v37 = vld [vmem:[%s0 + $0x90] sm:$0xff]
  %v38 = vld [vmem:[%s0 + $0x98] sm:$0xff]
  %v39 = vld [vmem:[%s0 + $0xa0] sm:$0xff]
  %v40 = vld [vmem:[%s0 + $0xa8] sm:$0xff]
  %v41 = vld [vmem:[%s0 + $0xb0] sm:$0xff]
  %v42 = vld [vmem:[%s0 + $0xb8] sm:$0xff]
  %v43 = vld [vmem:[%s0 + $0xc0] sm:$0xff]
  %v44 = vld [vmem:[%s0 + $0xc8] sm:$0xff]
  %v45 = vld [vmem:[%s0 + $0xd0] sm:$0xff]
  %v46 = vld [vmem:[%s0 + $0xd8] sm:$0xff]
  %v47 = vld [vmem:[%s0 + $0xe0] sm:$0xff]
  %v48 = vld [vmem:[%s0 + $0xe8] sm:$0xff]
  %v49 = vld [vmem:[%s0 + $0xf0] sm:$0xff]
  %v50 = vld [vmem:[%s0 + $0xf8] sm:$0xff]
  %v51 = vld [vmem:[%s0 + $0x100] sm:$0xff]
  %v52 = vld [vmem:[%s0 + $0x108] sm:$0xff]
  %v53 = vld [vmem:[%s0 + $0x110] sm:$0xff]
  %v54 = vld [vmem:[%s0 + $0x118] sm:$0xff]
  %v55 = vld [vmem:[%s0 + $0x120] sm:$0xff]
  %v56 = vld [vmem:[%s0 + $0x128] sm:$0xff]
  %v57 = vld [vmem:[%s0 + $0x130] sm:$0xff]
  %v58 = vld [vmem:[%s0 + $0x138] sm:$0xff]
  %v59 = vld [vmem:[%s0 + $0x140] sm:$0xff]
  %v60 = vld [vmem:[%s0 + $0x148] sm:$0xff]
  %v61 = vld [vmem:[%s0 + $0x150] sm:$0xff]
  %v62 = vld [vmem:[%s0 + $0x158] sm:$0xff]
  %v63 = vld [vmem:[%s0 + $0x160] sm:$0xff]
  %v64 = vld [vmem:[%s0 + $0x168] sm:$0xff]
  %v65 = vld [vmem:[%s0 + $0x170] sm:$0xff]
  %v66 = vld [vmem:[%s0 + $0x178] sm:$0xff]
  %v67 = vld [vmem:[%s0 + $0x180] sm:$0xff]
  %v68 = vpack.c.bf16 %v20, %v19
  %v69 = vpack.c.bf16 %v22, %v21
  %v70 = vpack.c.bf16 %v24, %v23
  %v71 = vpack.c.bf16 %v26, %v25
  %v72 = vpack.c.bf16 %v28, %v27
  %v73 = vpack.c.bf16 %v30, %v29
  %v74 = vpack.c.bf16 %v32, %v31
  %v75 = vpack.c.bf16 %v34, %v33
  %v76 = vpack.c.bf16 %v36, %v35
  %v77 = vpack.c.bf16 %v38, %v37
  %v78 = vpack.c.bf16 %v40, %v39
  %v79 = vpack.c.bf16 %v42, %v41
  %v80 = vpack.c.bf16 %v44, %v43
  %v81 = vpack.c.bf16 %v46, %v45
  %v82 = vpack.c.bf16 %v48, %v47
  %v83 = vpack.c.bf16 %v50, %v49
  %v84 = vpack.c.bf16 %v52, %v51
  %v85 = vpack.c.bf16 %v54, %v53
  %v86 = vpack.c.bf16 %v56, %v55
  %v87 = vpack.c.bf16 %v58, %v57
  %v88 = vpack.c.bf16 %v60, %v59
  %v89 = vpack.c.bf16 %v62, %v61
  %v90 = vpack.c.bf16 %v64, %v63
  %v91 = vpack.c.bf16 %v66, %v65
  %v92 = vpack.c.bf16 %v67, %v67
  %v93 = vld [vmem:[%s1] sm:$0xff]
  %v94 = vld [vmem:[%s1 + $0x8] sm:$0xff]
  %v95 = vld [vmem:[%s1 + $0x10] sm:$0xff]
  %v96 = vld [vmem:[%s1 + $0x18] sm:$0xff]
  %v97 = vld [vmem:[%s1 + $0x20] sm:$0xff]
  %v98 = vld [vmem:[%s1 + $0x28] sm:$0xff]
  %v99 = vld [vmem:[%s1 + $0x30] sm:$0xff]
  %v100 = vld [vmem:[%s1 + $0x38] sm:$0xff]
  %v101 = vld [vmem:[%s1 + $0x40] sm:$0xff]
  %v102 = vld [vmem:[%s1 + $0x48] sm:$0xff]
  %v103 = vld [vmem:[%s1 + $0x50] sm:$0xff]
  %v104 = vld [vmem:[%s1 + $0x58] sm:$0xff]
  %v105 = vld [vmem:[%s1 + $0x60] sm:$0xff]
  %v106 = vld [vmem:[%s1 + $0x68] sm:$0xff]
  %v107 = vld [vmem:[%s1 + $0x70] sm:$0xff]
  %v108 = vld [vmem:[%s1 + $0x78] sm:$0xff]
  %v109 = vld [vmem:[%s1 + $0x80] sm:$0xff]
  %v110 = vld [vmem:[%s1 + $0x88] sm:$0xff]
  %v111 = vld [vmem:[%s1 + $0x90] sm:$0xff]
  %v112 = vld [vmem:[%s1 + $0x98] sm:$0xff]
  %v113 = vld [vmem:[%s1 + $0xa0] sm:$0xff]
  %v114 = vld [vmem:[%s1 + $0xa8] sm:$0xff]
  %v115 = vld [vmem:[%s1 + $0xb0] sm:$0xff]
  %v116 = vld [vmem:[%s1 + $0xb8] sm:$0xff]
  %v117 = vld [vmem:[%s1 + $0xc0] sm:$0xff]
  %v118 = vld [vmem:[%s1 + $0xc8] sm:$0xff]
  %v119 = vld [vmem:[%s1 + $0xd0] sm:$0xff]
  %v120 = vld [vmem:[%s1 + $0xd8] sm:$0xff]
  %v121 = vld [vmem:[%s1 + $0xe0] sm:$0xff]
  %v122 = vld [vmem:[%s1 + $0xe8] sm:$0xff]
  %v123 = vld [vmem:[%s1 + $0xf0] sm:$0xff]
  %v124 = vld [vmem:[%s1 + $0xf8] sm:$0xff]
  %v125 = vld [vmem:[%s2] sm:$0xf]
  %v127 = vlaneseq
  %v128 = vshrl.u32 %v127, 7
  %v129 = vsub.s32 0, %v128
  %v130 = vrot.slane %v125, %v129
  %v131 = vlaneseq
  %v132 = vshrl.u32 %v131, 7
  %v133 = vsub.s32 1, %v132
  %v134 = vrot.slane %v125, %v133
  %v135 = vlaneseq
  %v136 = vshrl.u32 %v135, 7
  %v137 = vsub.s32 2, %v136
  %v138 = vrot.slane %v125, %v137
  %v139 = vlaneseq
  %v140 = vshrl.u32 %v139, 7
  %v141 = vsub.s32 3, %v140
  %v142 = vrot.slane %v125, %v141
  %v179 = vunpack.c.l.b16 %v93
  %v180 = vunpack.c.h.b16 %v93
  %v181 = vunpack.c.l.b16 %v94
  %v182 = vunpack.c.h.b16 %v94
  %v183 = vunpack.c.l.b16 %v95
  %v184 = vunpack.c.h.b16 %v95
  %v185 = vunpack.c.l.b16 %v96
  %v186 = vunpack.c.h.b16 %v96
  %v187 = vunpack.c.l.b16 %v97
  %v188 = vunpack.c.h.b16 %v97
  %v189 = vunpack.c.l.b16 %v98
  %v190 = vunpack.c.h.b16 %v98
  %v191 = vunpack.c.l.b16 %v99
  %v192 = vunpack.c.h.b16 %v99
  %v193 = vunpack.c.l.b16 %v100
  %v194 = vunpack.c.h.b16 %v100
  %v195 = vunpack.c.l.b16 %v101
  %v196 = vunpack.c.h.b16 %v101
  %v197 = vunpack.c.l.b16 %v102
  %v198 = vunpack.c.h.b16 %v102
  %v199 = vunpack.c.l.b16 %v103
  %v200 = vunpack.c.h.b16 %v103
  %v201 = vunpack.c.l.b16 %v104
  %v202 = vunpack.c.h.b16 %v104
  %v203 = vunpack.c.l.b16 %v105
  %v204 = vunpack.c.h.b16 %v105
  %v205 = vunpack.c.l.b16 %v106
  %v206 = vunpack.c.h.b16 %v106
  %v207 = vunpack.c.l.b16 %v107
  %v208 = vunpack.c.h.b16 %v107
  %v209 = vunpack.c.l.b16 %v108
  %v210 = vunpack.c.h.b16 %v108
  %v211 = vunpack.c.l.b16 %v109
  %v212 = vunpack.c.h.b16 %v109
  %v213 = vunpack.c.l.b16 %v110
  %v214 = vunpack.c.h.b16 %v110
  %v215 = vunpack.c.l.b16 %v111
  %v216 = vunpack.c.h.b16 %v111
  %v217 = vunpack.c.l.b16 %v112
  %v218 = vunpack.c.h.b16 %v112
  %v219 = vunpack.c.l.b16 %v113
  %v220 = vunpack.c.h.b16 %v113
  %v221 = vunpack.c.l.b16 %v114
  %v222 = vunpack.c.h.b16 %v114
  %v223 = vunpack.c.l.b16 %v115
  %v224 = vunpack.c.h.b16 %v115
  %v225 = vunpack.c.l.b16 %v116
  %v226 = vunpack.c.h.b16 %v116
  %v227 = vunpack.c.l.b16 %v117
  %v228 = vunpack.c.h.b16 %v117
  %v229 = vunpack.c.l.b16 %v118
  %v230 = vunpack.c.h.b16 %v118
  %v231 = vunpack.c.l.b16 %v119
  %v232 = vunpack.c.h.b16 %v119
  %v233 = vunpack.c.l.b16 %v120
  %v234 = vunpack.c.h.b16 %v120
  %v235 = vunpack.c.l.b16 %v121
  %v236 = vunpack.c.h.b16 %v121
  %v237 = vunpack.c.l.b16 %v122
  %v238 = vunpack.c.h.b16 %v122
  %v239 = vunpack.c.l.b16 %v123
  %v240 = vunpack.c.h.b16 %v123
  %v241 = vunpack.c.l.b16 %v124
  %v242 = vunpack.c.h.b16 %v124
  %v243 = vpack.c.b16 %v183, %v179
  %v244 = vpack.c.b16 %v184, %v180
  %v245 = vpack.c.b16 %v185, %v181
  %v246 = vpack.c.b16 %v186, %v182
  %v247 = vpack.c.b16 %v191, %v187
  %v248 = vpack.c.b16 %v192, %v188
  %v249 = vpack.c.b16 %v193, %v189
  %v250 = vpack.c.b16 %v194, %v190
  %v251 = vpack.c.b16 %v199, %v195
  %v252 = vpack.c.b16 %v200, %v196
  %v253 = vpack.c.b16 %v201, %v197
  %v254 = vpack.c.b16 %v202, %v198
  %v255 = vpack.c.b16 %v207, %v203
  %v256 = vpack.c.b16 %v208, %v204
  %v257 = vpack.c.b16 %v209, %v205
  %v258 = vpack.c.b16 %v210, %v206
  %v259 = vpack.c.b16 %v215, %v211
  %v260 = vpack.c.b16 %v216, %v212
  %v261 = vpack.c.b16 %v217, %v213
  %v262 = vpack.c.b16 %v218, %v214
  %v263 = vpack.c.b16 %v223, %v219
  %v264 = vpack.c.b16 %v224, %v220
  %v265 = vpack.c.b16 %v225, %v221
  %v266 = vpack.c.b16 %v226, %v222
  %v267 = vpack.c.b16 %v231, %v227
  %v268 = vpack.c.b16 %v232, %v228
  %v269 = vpack.c.b16 %v233, %v229
  %v270 = vpack.c.b16 %v234, %v230
  %v271 = vpack.c.b16 %v239, %v235
  %v272 = vpack.c.b16 %v240, %v236
  %v273 = vpack.c.b16 %v241, %v237
  %v274 = vpack.c.b16 %v242, %v238
  %307 = vmatprep.subr.bf16.mxu0 %v244
  %308 = vmatpush1.bf16.msra.mxu0 %v243
  %309 = vmatprep.subr.bf16.mxu0 %v248
  %310 = vmatpush1.bf16.msra.mxu0 %v247
  %311 = vmatprep.subr.bf16.mxu0 %v252
  %312 = vmatpush1.bf16.msra.mxu0 %v251
  %313 = vmatprep.subr.bf16.mxu0 %v256
  %314 = vmatpush1.bf16.msra.mxu0 %v255
  %315 = vmatprep.subr.bf16.mxu0 %v260
  %316 = vmatpush1.bf16.msra.mxu0 %v259
  %317 = vmatprep.subr.bf16.mxu0 %v264
  %318 = vmatpush1.bf16.msra.mxu0 %v263
  %319 = vmatprep.subr.bf16.mxu0 %v268
  %320 = vmatpush1.bf16.msra.mxu0 %v267
  %321 = vmatprep.subr.bf16.mxu0 %v272
  %322 = vmatpush1.bf16.msra.mxu0 %v271
  %323 = vmatprep.subr.bf16.mxu0 0
  %324 = vmatpush1.bf16.msra.mxu0 0
  %325 = vmatprep.subr.bf16.mxu0 0
  %326 = vmatpush1.bf16.msra.mxu0 0
  %327 = vmatprep.subr.bf16.mxu0 0
  %328 = vmatpush1.bf16.msra.mxu0 0
  %329 = vmatprep.subr.bf16.mxu0 0
  %330 = vmatpush1.bf16.msra.mxu0 0
  %331 = vmatprep.subr.bf16.mxu0 0
  %332 = vmatpush1.bf16.msra.mxu0 0
  %333 = vmatprep.subr.bf16.mxu0 0
  %334 = vmatpush1.bf16.msra.mxu0 0
  %335 = vmatprep.subr.bf16.mxu0 0
  %336 = vmatpush1.bf16.msra.mxu0 0
  %337 = vmatprep.subr.bf16.mxu0 0
  %338 = vmatpush1.bf16.msra.mxu0 0
  %339 = vmatprep.mubr.bf16.mxu0 0
  %340 = vmatmul.mubr.bf16.gmra.mrb[0].mxu0 %v68
  %v341 = vpop.f32.mrb[0].mxu0
  %v342 = vadd.f32 %v130, %v341
  %v343 = vpop.f32.mrb[0].mxu0
  %v344 = vadd.f32 %v134, %v343
  %v345 = vpop.f32.mrb[0].mxu0
  %v346 = vadd.f32 %v130, %v345
  %v347 = vpop.f32.mrb[0].mxu0
  %v348 = vadd.f32 %v134, %v347
  %349 = vmatprep.mubr.bf16.mxu0 0
  %350 = vmatmul.mubr.bf16.gmra.mrb[0].mxu0 %v69
  %v351 = vpop.f32.mrb[0].mxu0
  %v352 = vadd.f32 %v130, %v351
  %v353 = vpop.f32.mrb[0].mxu0
  %v354 = vadd.f32 %v134, %v353
  %v355 = vpop.f32.mrb[0].mxu0
  %v356 = vadd.f32 %v130, %v355
  %v357 = vpop.f32.mrb[0].mxu0
  %v358 = vadd.f32 %v134, %v357
  %359 = vmatprep.mubr.bf16.mxu0 0
  %360 = vmatmul.mubr.bf16.gmra.mrb[0].mxu0 %v70
  %v361 = vpop.f32.mrb[0].mxu0
  %v362 = vadd.f32 %v130, %v361
  %v363 = vpop.f32.mrb[0].mxu0
  %v364 = vadd.f32 %v134, %v363
  %v365 = vpop.f32.mrb[0].mxu0
  %v366 = vadd.f32 %v130, %v365
  %v367 = vpop.f32.mrb[0].mxu0
  %v368 = vadd.f32 %v134, %v367
  %369 = vmatprep.mubr.bf16.mxu0 0
  %370 = vmatmul.mubr.bf16.gmra.mrb[0].mxu0 %v71
  %v371 = vpop.f32.mrb[0].mxu0
  %v372 = vadd.f32 %v130, %v371
  %v373 = vpop.f32.mrb[0].mxu0
  %v374 = vadd.f32 %v134, %v373
  %v375 = vpop.f32.mrb[0].mxu0
  %v376 = vadd.f32 %v130, %v375
  %v377 = vpop.f32.mrb[0].mxu0
  %v378 = vadd.f32 %v134, %v377
  %379 = vmatprep.mubr.bf16.mxu0 0
  %380 = vmatmul.mubr.bf16.gmra.mrb[0].mxu0 %v72
  %v381 = vpop.f32.mrb[0].mxu0
  %v382 = vadd.f32 %v130, %v381
  %v383 = vpop.f32.mrb[0].mxu0
  %v384 = vadd.f32 %v134, %v383
  %v385 = vpop.f32.mrb[0].mxu0
  %v386 = vadd.f32 %v130, %v385
  %v387 = vpop.f32.mrb[0].mxu0
  %v388 = vadd.f32 %v134, %v387
  %389 = vmatprep.mubr.bf16.mxu0 0
  %390 = vmatmul.mubr.bf16.gmra.mrb[0].mxu0 %v73
  %v391 = vpop.f32.mrb[0].mxu0
  %v392 = vadd.f32 %v130, %v391
  %v393 = vpop.f32.mrb[0].mxu0
  %v394 = vadd.f32 %v134, %v393
  %v395 = vpop.f32.mrb[0].mxu0
  %v396 = vadd.f32 %v130, %v395
  %v397 = vpop.f32.mrb[0].mxu0
  %v398 = vadd.f32 %v134, %v397
  %399 = vmatprep.mubr.bf16.mxu0 0
  %400 = vmatmul.mubr.bf16.gmra.mrb[0].mxu0 %v74
  %v401 = vpop.f32.mrb[0].mxu0
  %v402 = vadd.f32 %v130, %v401
  %v403 = vpop.f32.mrb[0].mxu0
  %v404 = vadd.f32 %v134, %v403
  %v405 = vpop.f32.mrb[0].mxu0
  %v406 = vadd.f32 %v130, %v405
  %v407 = vpop.f32.mrb[0].mxu0
  %v408 = vadd.f32 %v134, %v407
  %409 = vmatprep.mubr.bf16.mxu0 0
  %410 = vmatmul.mubr.bf16.gmra.mrb[0].mxu0 %v75
  %v411 = vpop.f32.mrb[0].mxu0
  %v412 = vadd.f32 %v130, %v411
  %v413 = vpop.f32.mrb[0].mxu0
  %v414 = vadd.f32 %v134, %v413
  %v415 = vpop.f32.mrb[0].mxu0
  %v416 = vadd.f32 %v130, %v415
  %v417 = vpop.f32.mrb[0].mxu0
  %v418 = vadd.f32 %v134, %v417
  %419 = vmatprep.mubr.bf16.mxu0 0
  %420 = vmatmul.mubr.bf16.gmra.mrb[0].mxu0 %v76
  %v421 = vpop.f32.mrb[0].mxu0
  %v422 = vadd.f32 %v130, %v421
  %v423 = vpop.f32.mrb[0].mxu0
  %v424 = vadd.f32 %v134, %v423
  %v425 = vpop.f32.mrb[0].mxu0
  %v426 = vadd.f32 %v130, %v425
  %v427 = vpop.f32.mrb[0].mxu0
  %v428 = vadd.f32 %v134, %v427
  %429 = vmatprep.mubr.bf16.mxu0 0
  %430 = vmatmul.mubr.bf16.gmra.mrb[0].mxu0 %v77
  %v431 = vpop.f32.mrb[0].mxu0
  %v432 = vadd.f32 %v130, %v431
  %v433 = vpop.f32.mrb[0].mxu0
  %v434 = vadd.f32 %v134, %v433
  %v435 = vpop.f32.mrb[0].mxu0
  %v436 = vadd.f32 %v130, %v435
  %v437 = vpop.f32.mrb[0].mxu0
  %v438 = vadd.f32 %v134, %v437
  %439 = vmatprep.mubr.bf16.mxu0 0
  %440 = vmatmul.mubr.bf16.gmra.mrb[0].mxu0 %v78
  %v441 = vpop.f32.mrb[0].mxu0
  %v442 = vadd.f32 %v130, %v441
  %v443 = vpop.f32.mrb[0].mxu0
  %v444 = vadd.f32 %v134, %v443
  %v445 = vpop.f32.mrb[0].mxu0
  %v446 = vadd.f32 %v130, %v445
  %v447 = vpop.f32.mrb[0].mxu0
  %v448 = vadd.f32 %v134, %v447
  %449 = vmatprep.mubr.bf16.mxu0 0
  %450 = vmatmul.mubr.bf16.gmra.mrb[0].mxu0 %v79
  %v451 = vpop.f32.mrb[0].mxu0
  %v452 = vadd.f32 %v130, %v451
  %v453 = vpop.f32.mrb[0].mxu0
  %v454 = vadd.f32 %v134, %v453
  %v455 = vpop.f32.mrb[0].mxu0
  %v456 = vadd.f32 %v130, %v455
  %v457 = vpop.f32.mrb[0].mxu0
  %v458 = vadd.f32 %v134, %v457
  %459 = vmatprep.mubr.bf16.mxu0 0
  %460 = vmatmul.mubr.bf16.gmra.mrb[0].mxu0 %v80
  %v461 = vpop.f32.mrb[0].mxu0
  %v462 = vadd.f32 %v130, %v461
  %v463 = vpop.f32.mrb[0].mxu0
  %v464 = vadd.f32 %v134, %v463
  %v465 = vpop.f32.mrb[0].mxu0
  %v466 = vadd.f32 %v130, %v465
  %v467 = vpop.f32.mrb[0].mxu0
  %v468 = vadd.f32 %v134, %v467
  %469 = vmatprep.mubr.bf16.mxu0 0
  %470 = vmatmul.mubr.bf16.gmra.mrb[0].mxu0 %v81
  %v471 = vpop.f32.mrb[0].mxu0
  %v472 = vadd.f32 %v130, %v471
  %v473 = vpop.f32.mrb[0].mxu0
  %v474 = vadd.f32 %v134, %v473
  %v475 = vpop.f32.mrb[0].mxu0
  %v476 = vadd.f32 %v130, %v475
  %v477 = vpop.f32.mrb[0].mxu0
  %v478 = vadd.f32 %v134, %v477
  %479 = vmatprep.mubr.bf16.mxu0 0
  %480 = vmatmul.mubr.bf16.gmra.mrb[0].mxu0 %v82
  %v481 = vpop.f32.mrb[0].mxu0
  %v482 = vadd.f32 %v130, %v481
  %v483 = vpop.f32.mrb[0].mxu0
  %v484 = vadd.f32 %v134, %v483
  %v485 = vpop.f32.mrb[0].mxu0
  %v486 = vadd.f32 %v130, %v485
  %v487 = vpop.f32.mrb[0].mxu0
  %v488 = vadd.f32 %v134, %v487
  %489 = vmatprep.mubr.bf16.mxu0 0
  %490 = vmatmul.mubr.bf16.gmra.mrb[0].mxu0 %v83
  %v491 = vpop.f32.mrb[0].mxu0
  %v492 = vadd.f32 %v130, %v491
  %v493 = vpop.f32.mrb[0].mxu0
  %v494 = vadd.f32 %v134, %v493
  %v495 = vpop.f32.mrb[0].mxu0
  %v496 = vadd.f32 %v130, %v495
  %v497 = vpop.f32.mrb[0].mxu0
  %v498 = vadd.f32 %v134, %v497
  %499 = vmatprep.mubr.bf16.mxu0 0
  %500 = vmatmul.mubr.bf16.gmra.mrb[0].mxu0 %v84
  %v501 = vpop.f32.mrb[0].mxu0
  %v502 = vadd.f32 %v130, %v501
  %v503 = vpop.f32.mrb[0].mxu0
  %v504 = vadd.f32 %v134, %v503
  %v505 = vpop.f32.mrb[0].mxu0
  %v506 = vadd.f32 %v130, %v505
  %v507 = vpop.f32.mrb[0].mxu0
  %v508 = vadd.f32 %v134, %v507
  %509 = vmatprep.mubr.bf16.mxu0 0
  %510 = vmatmul.mubr.bf16.gmra.mrb[0].mxu0 %v85
  %v511 = vpop.f32.mrb[0].mxu0
  %v512 = vadd.f32 %v130, %v511
  %v513 = vpop.f32.mrb[0].mxu0
  %v514 = vadd.f32 %v134, %v513
  %v515 = vpop.f32.mrb[0].mxu0
  %v516 = vadd.f32 %v130, %v515
  %v517 = vpop.f32.mrb[0].mxu0
  %v518 = vadd.f32 %v134, %v517
  %519 = vmatprep.mubr.bf16.mxu0 0
  %520 = vmatmul.mubr.bf16.gmra.mrb[0].mxu0 %v86
  %v521 = vpop.f32.mrb[0].mxu0
  %v522 = vadd.f32 %v130, %v521
  %v523 = vpop.f32.mrb[0].mxu0
  %v524 = vadd.f32 %v134, %v523
  %v525 = vpop.f32.mrb[0].mxu0
  %v526 = vadd.f32 %v130, %v525
  %v527 = vpop.f32.mrb[0].mxu0
  %v528 = vadd.f32 %v134, %v527
  %529 = vmatprep.mubr.bf16.mxu0 0
  %530 = vmatmul.mubr.bf16.gmra.mrb[0].mxu0 %v87
  %v531 = vpop.f32.mrb[0].mxu0
  %v532 = vadd.f32 %v130, %v531
  %v533 = vpop.f32.mrb[0].mxu0
  %v534 = vadd.f32 %v134, %v533
  %v535 = vpop.f32.mrb[0].mxu0
  %v536 = vadd.f32 %v130, %v535
  %v537 = vpop.f32.mrb[0].mxu0
  %v538 = vadd.f32 %v134, %v537
  %539 = vmatprep.mubr.bf16.mxu0 0
  %540 = vmatmul.mubr.bf16.gmra.mrb[0].mxu0 %v88
  %v541 = vpop.f32.mrb[0].mxu0
  %v542 = vadd.f32 %v130, %v541
  %v543 = vpop.f32.mrb[0].mxu0
  %v544 = vadd.f32 %v134, %v543
  %v545 = vpop.f32.mrb[0].mxu0
  %v546 = vadd.f32 %v130, %v545
  %v547 = vpop.f32.mrb[0].mxu0
  %v548 = vadd.f32 %v134, %v547
  %549 = vmatprep.mubr.bf16.mxu0 0
  %550 = vmatmul.mubr.bf16.gmra.mrb[0].mxu0 %v89
  %v551 = vpop.f32.mrb[0].mxu0
  %v552 = vadd.f32 %v130, %v551
  %v553 = vpop.f32.mrb[0].mxu0
  %v554 = vadd.f32 %v134, %v553
  %v555 = vpop.f32.mrb[0].mxu0
  %v556 = vadd.f32 %v130, %v555
  %v557 = vpop.f32.mrb[0].mxu0
  %v558 = vadd.f32 %v134, %v557
  %559 = vmatprep.mubr.bf16.mxu0 0
  %560 = vmatmul.mubr.bf16.gmra.mrb[0].mxu0 %v90
  %v561 = vpop.f32.mrb[0].mxu0
  %v562 = vadd.f32 %v130, %v561
  %v563 = vpop.f32.mrb[0].mxu0
  %v564 = vadd.f32 %v134, %v563
  %v565 = vpop.f32.mrb[0].mxu0
  %v566 = vadd.f32 %v130, %v565
  %v567 = vpop.f32.mrb[0].mxu0
  %v568 = vadd.f32 %v134, %v567
  %569 = vmatprep.mubr.bf16.mxu0 0
  %570 = vmatmul.mubr.bf16.gmra.mrb[0].mxu0 %v91
  %v571 = vpop.f32.mrb[0].mxu0
  %v572 = vadd.f32 %v130, %v571
  %v573 = vpop.f32.mrb[0].mxu0
  %v574 = vadd.f32 %v134, %v573
  %v575 = vpop.f32.mrb[0].mxu0
  %v576 = vadd.f32 %v130, %v575
  %v577 = vpop.f32.mrb[0].mxu0
  %v578 = vadd.f32 %v134, %v577
  %579 = vmatprep.mubr.bf16.mxu0 0
  %580 = vmatmul.mubr.bf16.gmra.mrb[0].mxu0 %v92
  %v581 = vpop.f32.mrb[0].mxu0
  %v582 = vadd.f32 %v130, %v581
  %v583 = vpop.f32.mrb[0].mxu0
  %v584 = vadd.f32 %v134, %v583
  %v585 = vpop.f32.mrb[0].mxu0
  %v586 = vpop.f32.mrb[0].mxu0
  %587 = vdwg.mxu0
  %588 = vmatprep.subr.bf16.mxu0 %v246
  %589 = vmatpush1.bf16.msra.mxu0 %v245
  %590 = vmatprep.subr.bf16.mxu0 %v250
  %591 = vmatpush1.bf16.msra.mxu0 %v249
  %592 = vmatprep.subr.bf16.mxu0 %v254
  %593 = vmatpush1.bf16.msra.mxu0 %v253
  %594 = vmatprep.subr.bf16.mxu0 %v258
  %595 = vmatpush1.bf16.msra.mxu0 %v257
  %596 = vmatprep.subr.bf16.mxu0 %v262
  %597 = vmatpush1.bf16.msra.mxu0 %v261
  %598 = vmatprep.subr.bf16.mxu0 %v266
  %599 = vmatpush1.bf16.msra.mxu0 %v265
  %600 = vmatprep.subr.bf16.mxu0 %v270
  %601 = vmatpush1.bf16.msra.mxu0 %v269
  %602 = vmatprep.subr.bf16.mxu0 %v274
  %603 = vmatpush1.bf16.msra.mxu0 %v273
  %604 = vmatprep.subr.bf16.mxu0 0
  %605 = vmatpush1.bf16.msra.mxu0 0
  %606 = vmatprep.subr.bf16.mxu0 0
  %607 = vmatpush1.bf16.msra.mxu0 0
  %608 = vmatprep.subr.bf16.mxu0 0
  %609 = vmatpush1.bf16.msra.mxu0 0
  %610 = vmatprep.subr.bf16.mxu0 0
  %611 = vmatpush1.bf16.msra.mxu0 0
  %612 = vmatprep.subr.bf16.mxu0 0
  %613 = vmatpush1.bf16.msra.mxu0 0
  %614 = vmatprep.subr.bf16.mxu0 0
  %615 = vmatpush1.bf16.msra.mxu0 0
  %616 = vmatprep.subr.bf16.mxu0 0
  %617 = vmatpush1.bf16.msra.mxu0 0
  %618 = vmatprep.subr.bf16.mxu0 0
  %619 = vmatpush1.bf16.msra.mxu0 0
  %620 = vmatprep.mubr.bf16.mxu0 0
  %621 = vmatmul.mubr.bf16.gmra.mrb[0].mxu0 %v68
  %v622 = vpop.f32.mrb[0].mxu0
  %v623 = vadd.f32 %v138, %v622
  %v624 = vpop.f32.mrb[0].mxu0
  %v625 = vadd.f32 %v142, %v624
  %v626 = vpop.f32.mrb[0].mxu0
  %v627 = vadd.f32 %v138, %v626
  %v628 = vpop.f32.mrb[0].mxu0
  %v629 = vadd.f32 %v142, %v628
  %630 = vmatprep.mubr.bf16.mxu0 0
  %631 = vmatmul.mubr.bf16.gmra.mrb[0].mxu0 %v69
  %v632 = vpop.f32.mrb[0].mxu0
  %v633 = vadd.f32 %v138, %v632
  %v634 = vpop.f32.mrb[0].mxu0
  %v635 = vadd.f32 %v142, %v634
  %v636 = vpop.f32.mrb[0].mxu0
  %v637 = vadd.f32 %v138, %v636
  %v638 = vpop.f32.mrb[0].mxu0
  %v639 = vadd.f32 %v142, %v638
  %640 = vmatprep.mubr.bf16.mxu0 0
  %641 = vmatmul.mubr.bf16.gmra.mrb[0].mxu0 %v70
  %v642 = vpop.f32.mrb[0].mxu0
  %v643 = vadd.f32 %v138, %v642
  %v644 = vpop.f32.mrb[0].mxu0
  %v645 = vadd.f32 %v142, %v644
  %v646 = vpop.f32.mrb[0].mxu0
  %v647 = vadd.f32 %v138, %v646
  %v648 = vpop.f32.mrb[0].mxu0
  %v649 = vadd.f32 %v142, %v648
  %650 = vmatprep.mubr.bf16.mxu0 0
  %651 = vmatmul.mubr.bf16.gmra.mrb[0].mxu0 %v71
  %v652 = vpop.f32.mrb[0].mxu0
  %v653 = vadd.f32 %v138, %v652
  %v654 = vpop.f32.mrb[0].mxu0
  %v655 = vadd.f32 %v142, %v654
  %v656 = vpop.f32.mrb[0].mxu0
  %v657 = vadd.f32 %v138, %v656
  %v658 = vpop.f32.mrb[0].mxu0
  %v659 = vadd.f32 %v142, %v658
  %660 = vmatprep.mubr.bf16.mxu0 0
  %661 = vmatmul.mubr.bf16.gmra.mrb[0].mxu0 %v72
  %v662 = vpop.f32.mrb[0].mxu0
  %v663 = vadd.f32 %v138, %v662
  %v664 = vpop.f32.mrb[0].mxu0
  %v665 = vadd.f32 %v142, %v664
  %v666 = vpop.f32.mrb[0].mxu0
  %v667 = vadd.f32 %v138, %v666
  %v668 = vpop.f32.mrb[0].mxu0
  %v669 = vadd.f32 %v142, %v668
  %670 = vmatprep.mubr.bf16.mxu0 0
  %671 = vmatmul.mubr.bf16.gmra.mrb[0].mxu0 %v73
  %v672 = vpop.f32.mrb[0].mxu0
  %v673 = vadd.f32 %v138, %v672
  %v674 = vpop.f32.mrb[0].mxu0
  %v675 = vadd.f32 %v142, %v674
  %v676 = vpop.f32.mrb[0].mxu0
  %v677 = vadd.f32 %v138, %v676
  %v678 = vpop.f32.mrb[0].mxu0
  %v679 = vadd.f32 %v142, %v678
  %680 = vmatprep.mubr.bf16.mxu0 0
  %681 = vmatmul.mubr.bf16.gmra.mrb[0].mxu0 %v74
  %v682 = vpop.f32.mrb[0].mxu0
  %v683 = vadd.f32 %v138, %v682
  %v684 = vpop.f32.mrb[0].mxu0
  %v685 = vadd.f32 %v142, %v684
  %v686 = vpop.f32.mrb[0].mxu0
  %v687 = vadd.f32 %v138, %v686
  %v688 = vpop.f32.mrb[0].mxu0
  %v689 = vadd.f32 %v142, %v688
  %690 = vmatprep.mubr.bf16.mxu0 0
  %691 = vmatmul.mubr.bf16.gmra.mrb[0].mxu0 %v75
  %v692 = vpop.f32.mrb[0].mxu0
  %v693 = vadd.f32 %v138, %v692
  %v694 = vpop.f32.mrb[0].mxu0
  %v695 = vadd.f32 %v142, %v694
  %v696 = vpop.f32.mrb[0].mxu0
  %v697 = vadd.f32 %v138, %v696
  %v698 = vpop.f32.mrb[0].mxu0
  %v699 = vadd.f32 %v142, %v698
  %700 = vmatprep.mubr.bf16.mxu0 0
  %701 = vmatmul.mubr.bf16.gmra.mrb[0].mxu0 %v76
  %v702 = vpop.f32.mrb[0].mxu0
  %v703 = vadd.f32 %v138, %v702
  %v704 = vpop.f32.mrb[0].mxu0
  %v705 = vadd.f32 %v142, %v704
  %v706 = vpop.f32.mrb[0].mxu0
  %v707 = vadd.f32 %v138, %v706
  %v708 = vpop.f32.mrb[0].mxu0
  %v709 = vadd.f32 %v142, %v708
  %710 = vmatprep.mubr.bf16.mxu0 0
  %711 = vmatmul.mubr.bf16.gmra.mrb[0].mxu0 %v77
  %v712 = vpop.f32.mrb[0].mxu0
  %v713 = vadd.f32 %v138, %v712
  %v714 = vpop.f32.mrb[0].mxu0
  %v715 = vadd.f32 %v142, %v714
  %v716 = vpop.f32.mrb[0].mxu0
  %v717 = vadd.f32 %v138, %v716
  %v718 = vpop.f32.mrb[0].mxu0
  %v719 = vadd.f32 %v142, %v718
  %720 = vmatprep.mubr.bf16.mxu0 0
  %721 = vmatmul.mubr.bf16.gmra.mrb[0].mxu0 %v78
  %v722 = vpop.f32.mrb[0].mxu0
  %v723 = vadd.f32 %v138, %v722
  %v724 = vpop.f32.mrb[0].mxu0
  %v725 = vadd.f32 %v142, %v724
  %v726 = vpop.f32.mrb[0].mxu0
  %v727 = vadd.f32 %v138, %v726
  %v728 = vpop.f32.mrb[0].mxu0
  %v729 = vadd.f32 %v142, %v728
  %730 = vmatprep.mubr.bf16.mxu0 0
  %731 = vmatmul.mubr.bf16.gmra.mrb[0].mxu0 %v79
  %v732 = vpop.f32.mrb[0].mxu0
  %v733 = vadd.f32 %v138, %v732
  %v734 = vpop.f32.mrb[0].mxu0
  %v735 = vadd.f32 %v142, %v734
  %v736 = vpop.f32.mrb[0].mxu0
  %v737 = vadd.f32 %v138, %v736
  %v738 = vpop.f32.mrb[0].mxu0
  %v739 = vadd.f32 %v142, %v738
  %740 = vmatprep.mubr.bf16.mxu0 0
  %741 = vmatmul.mubr.bf16.gmra.mrb[0].mxu0 %v80
  %v742 = vpop.f32.mrb[0].mxu0
  %v743 = vadd.f32 %v138, %v742
  %v744 = vpop.f32.mrb[0].mxu0
  %v745 = vadd.f32 %v142, %v744
  %v746 = vpop.f32.mrb[0].mxu0
  %v747 = vadd.f32 %v138, %v746
  %v748 = vpop.f32.mrb[0].mxu0
  %v749 = vadd.f32 %v142, %v748
  %750 = vmatprep.mubr.bf16.mxu0 0
  %751 = vmatmul.mubr.bf16.gmra.mrb[0].mxu0 %v81
  %v752 = vpop.f32.mrb[0].mxu0
  %v753 = vadd.f32 %v138, %v752
  %v754 = vpop.f32.mrb[0].mxu0
  %v755 = vadd.f32 %v142, %v754
  %v756 = vpop.f32.mrb[0].mxu0
  %v757 = vadd.f32 %v138, %v756
  %v758 = vpop.f32.mrb[0].mxu0
  %v759 = vadd.f32 %v142, %v758
  %760 = vmatprep.mubr.bf16.mxu0 0
  %761 = vmatmul.mubr.bf16.gmra.mrb[0].mxu0 %v82
  %v762 = vpop.f32.mrb[0].mxu0
  %v763 = vadd.f32 %v138, %v762
  %v764 = vpop.f32.mrb[0].mxu0
  %v765 = vadd.f32 %v142, %v764
  %v766 = vpop.f32.mrb[0].mxu0
  %v767 = vadd.f32 %v138, %v766
  %v768 = vpop.f32.mrb[0].mxu0
  %v769 = vadd.f32 %v142, %v768
  %770 = vmatprep.mubr.bf16.mxu0 0
  %771 = vmatmul.mubr.bf16.gmra.mrb[0].mxu0 %v83
  %v772 = vpop.f32.mrb[0].mxu0
  %v773 = vadd.f32 %v138, %v772
  %v774 = vpop.f32.mrb[0].mxu0
  %v775 = vadd.f32 %v142, %v774
  %v776 = vpop.f32.mrb[0].mxu0
  %v777 = vadd.f32 %v138, %v776
  %v778 = vpop.f32.mrb[0].mxu0
  %v779 = vadd.f32 %v142, %v778
  %780 = vmatprep.mubr.bf16.mxu0 0
  %781 = vmatmul.mubr.bf16.gmra.mrb[0].mxu0 %v84
  %v782 = vpop.f32.mrb[0].mxu0
  %v783 = vadd.f32 %v138, %v782
  %v784 = vpop.f32.mrb[0].mxu0
  %v785 = vadd.f32 %v142, %v784
  %v786 = vpop.f32.mrb[0].mxu0
  %v787 = vadd.f32 %v138, %v786
  %v788 = vpop.f32.mrb[0].mxu0
  %v789 = vadd.f32 %v142, %v788
  %790 = vmatprep.mubr.bf16.mxu0 0
  %791 = vmatmul.mubr.bf16.gmra.mrb[0].mxu0 %v85
  %v792 = vpop.f32.mrb[0].mxu0
  %v793 = vadd.f32 %v138, %v792
  %v794 = vpop.f32.mrb[0].mxu0
  %v795 = vadd.f32 %v142, %v794
  %v796 = vpop.f32.mrb[0].mxu0
  %v797 = vadd.f32 %v138, %v796
  %v798 = vpop.f32.mrb[0].mxu0
  %v799 = vadd.f32 %v142, %v798
  %800 = vmatprep.mubr.bf16.mxu0 0
  %801 = vmatmul.mubr.bf16.gmra.mrb[0].mxu0 %v86
  %v802 = vpop.f32.mrb[0].mxu0
  %v803 = vadd.f32 %v138, %v802
  %v804 = vpop.f32.mrb[0].mxu0
  %v805 = vadd.f32 %v142, %v804
  %v806 = vpop.f32.mrb[0].mxu0
  %v807 = vadd.f32 %v138, %v806
  %v808 = vpop.f32.mrb[0].mxu0
  %v809 = vadd.f32 %v142, %v808
  %810 = vmatprep.mubr.bf16.mxu0 0
  %811 = vmatmul.mubr.bf16.gmra.mrb[0].mxu0 %v87
  %v812 = vpop.f32.mrb[0].mxu0
  %v813 = vadd.f32 %v138, %v812
  %v814 = vpop.f32.mrb[0].mxu0
  %v815 = vadd.f32 %v142, %v814
  %v816 = vpop.f32.mrb[0].mxu0
  %v817 = vadd.f32 %v138, %v816
  %v818 = vpop.f32.mrb[0].mxu0
  %v819 = vadd.f32 %v142, %v818
  %820 = vmatprep.mubr.bf16.mxu0 0
  %821 = vmatmul.mubr.bf16.gmra.mrb[0].mxu0 %v88
  %v822 = vpop.f32.mrb[0].mxu0
  %v823 = vadd.f32 %v138, %v822
  %v824 = vpop.f32.mrb[0].mxu0
  %v825 = vadd.f32 %v142, %v824
  %v826 = vpop.f32.mrb[0].mxu0
  %v827 = vadd.f32 %v138, %v826
  %v828 = vpop.f32.mrb[0].mxu0
  %v829 = vadd.f32 %v142, %v828
  %830 = vmatprep.mubr.bf16.mxu0 0
  %831 = vmatmul.mubr.bf16.gmra.mrb[0].mxu0 %v89
  %v832 = vpop.f32.mrb[0].mxu0
  %v833 = vadd.f32 %v138, %v832
  %v834 = vpop.f32.mrb[0].mxu0
  %v835 = vadd.f32 %v142, %v834
  %v836 = vpop.f32.mrb[0].mxu0
  %v837 = vadd.f32 %v138, %v836
  %v838 = vpop.f32.mrb[0].mxu0
  %v839 = vadd.f32 %v142, %v838
  %840 = vmatprep.mubr.bf16.mxu0 0
  %841 = vmatmul.mubr.bf16.gmra.mrb[0].mxu0 %v90
  %v842 = vpop.f32.mrb[0].mxu0
  %v843 = vadd.f32 %v138, %v842
  %v844 = vpop.f32.mrb[0].mxu0
  %v845 = vadd.f32 %v142, %v844
  %v846 = vpop.f32.mrb[0].mxu0
  %v847 = vadd.f32 %v138, %v846
  %v848 = vpop.f32.mrb[0].mxu0
  %v849 = vadd.f32 %v142, %v848
  %850 = vmatprep.mubr.bf16.mxu0 0
  %851 = vmatmul.mubr.bf16.gmra.mrb[0].mxu0 %v91
  %v852 = vpop.f32.mrb[0].mxu0
  %v853 = vadd.f32 %v138, %v852
  %v854 = vpop.f32.mrb[0].mxu0
  %v855 = vadd.f32 %v142, %v854
  %v856 = vpop.f32.mrb[0].mxu0
  %v857 = vadd.f32 %v138, %v856
  %v858 = vpop.f32.mrb[0].mxu0
  %v859 = vadd.f32 %v142, %v858
  %860 = vmatprep.mubr.bf16.mxu0 0
  %861 = vmatmul.mubr.bf16.gmra.mrb[0].mxu0 %v92
  %v862 = vpop.f32.mrb[0].mxu0
  %v863 = vadd.f32 %v138, %v862
  %v864 = vpop.f32.mrb[0].mxu0
  %v865 = vadd.f32 %v142, %v864
  %v866 = vpop.f32.mrb[0].mxu0
  %v867 = vpop.f32.mrb[0].mxu0
  %868 = vdwg.mxu0
  %s869 = sld [smem:[#allocation2]]
  %vm870 = vcmp.ge.f32.partialorder %v342, 0.0
  %vm871 = vcmp.ge.f32.partialorder %v344, 0.0
  %vm872 = vcmp.ge.f32.partialorder %v623, 0.0
  %vm873 = vcmp.ge.f32.partialorder %v625, 0.0
  %vm874 = vcmp.ge.f32.partialorder %v346, 0.0
  %vm875 = vcmp.ge.f32.partialorder %v348, 0.0
  %vm876 = vcmp.ge.f32.partialorder %v627, 0.0
  %vm877 = vcmp.ge.f32.partialorder %v629, 0.0
  %vm878 = vcmp.ge.f32.partialorder %v352, 0.0
  %vm879 = vcmp.ge.f32.partialorder %v354, 0.0
  %vm880 = vcmp.ge.f32.partialorder %v633, 0.0
  %vm881 = vcmp.ge.f32.partialorder %v635, 0.0
  %vm882 = vcmp.ge.f32.partialorder %v356, 0.0
  %vm883 = vcmp.ge.f32.partialorder %v358, 0.0
  %vm884 = vcmp.ge.f32.partialorder %v637, 0.0
  %vm885 = vcmp.ge.f32.partialorder %v639, 0.0
  %vm886 = vcmp.ge.f32.partialorder %v362, 0.0
  %vm887 = vcmp.ge.f32.partialorder %v364, 0.0
  %vm888 = vcmp.ge.f32.partialorder %v643, 0.0
  %vm889 = vcmp.ge.f32.partialorder %v645, 0.0
  %vm890 = vcmp.ge.f32.partialorder %v366, 0.0
  %vm891 = vcmp.ge.f32.partialorder %v368, 0.0
  %vm892 = vcmp.ge.f32.partialorder %v647, 0.0
  %vm893 = vcmp.ge.f32.partialorder %v649, 0.0
  %vm894 = vcmp.ge.f32.partialorder %v372, 0.0
  %vm895 = vcmp.ge.f32.partialorder %v374, 0.0
  %vm896 = vcmp.ge.f32.partialorder %v653, 0.0
  %vm897 = vcmp.ge.f32.partialorder %v655, 0.0
  %vm898 = vcmp.ge.f32.partialorder %v376, 0.0
  %vm899 = vcmp.ge.f32.partialorder %v378, 0.0
  %vm900 = vcmp.ge.f32.partialorder %v657, 0.0
  %vm901 = vcmp.ge.f32.partialorder %v659, 0.0
  %vm902 = vcmp.ge.f32.partialorder %v382, 0.0
  %vm903 = vcmp.ge.f32.partialorder %v384, 0.0
  %vm904 = vcmp.ge.f32.partialorder %v663, 0.0
  %vm905 = vcmp.ge.f32.partialorder %v665, 0.0
  %vm906 = vcmp.ge.f32.partialorder %v386, 0.0
  %vm907 = vcmp.ge.f32.partialorder %v388, 0.0
  %vm908 = vcmp.ge.f32.partialorder %v667, 0.0
  %vm909 = vcmp.ge.f32.partialorder %v669, 0.0
  %vm910 = vcmp.ge.f32.partialorder %v392, 0.0
  %vm911 = vcmp.ge.f32.partialorder %v394, 0.0
  %vm912 = vcmp.ge.f32.partialorder %v673, 0.0
  %vm913 = vcmp.ge.f32.partialorder %v675, 0.0
  %vm914 = vcmp.ge.f32.partialorder %v396, 0.0
  %vm915 = vcmp.ge.f32.partialorder %v398, 0.0
  %vm916 = vcmp.ge.f32.partialorder %v677, 0.0
  %vm917 = vcmp.ge.f32.partialorder %v679, 0.0
  %vm918 = vcmp.ge.f32.partialorder %v402, 0.0
  %vm919 = vcmp.ge.f32.partialorder %v404, 0.0
  %vm920 = vcmp.ge.f32.partialorder %v683, 0.0
  %vm921 = vcmp.ge.f32.partialorder %v685, 0.0
  %vm922 = vcmp.ge.f32.partialorder %v406, 0.0
  %vm923 = vcmp.ge.f32.partialorder %v408, 0.0
  %vm924 = vcmp.ge.f32.partialorder %v687, 0.0
  %vm925 = vcmp.ge.f32.partialorder %v689, 0.0
  %vm926 = vcmp.ge.f32.partialorder %v412, 0.0
  %vm927 = vcmp.ge.f32.partialorder %v414, 0.0
  %vm928 = vcmp.ge.f32.partialorder %v693, 0.0
  %vm929 = vcmp.ge.f32.partialorder %v695, 0.0
  %vm930 = vcmp.ge.f32.partialorder %v416, 0.0
  %vm931 = vcmp.ge.f32.partialorder %v418, 0.0
  %vm932 = vcmp.ge.f32.partialorder %v697, 0.0
  %vm933 = vcmp.ge.f32.partialorder %v699, 0.0
  %vm934 = vcmp.ge.f32.partialorder %v422, 0.0
  %vm935 = vcmp.ge.f32.partialorder %v424, 0.0
  %vm936 = vcmp.ge.f32.partialorder %v703, 0.0
  %vm937 = vcmp.ge.f32.partialorder %v705, 0.0
  %vm938 = vcmp.ge.f32.partialorder %v426, 0.0
  %vm939 = vcmp.ge.f32.partialorder %v428, 0.0
  %vm940 = vcmp.ge.f32.partialorder %v707, 0.0
  %vm941 = vcmp.ge.f32.partialorder %v709, 0.0
  %vm942 = vcmp.ge.f32.partialorder %v432, 0.0
  %vm943 = vcmp.ge.f32.partialorder %v434, 0.0
  %vm944 = vcmp.ge.f32.partialorder %v713, 0.0
  %vm945 = vcmp.ge.f32.partialorder %v715, 0.0
  %vm946 = vcmp.ge.f32.partialorder %v436, 0.0
  %vm947 = vcmp.ge.f32.partialorder %v438, 0.0
  %vm948 = vcmp.ge.f32.partialorder %v717, 0.0
  %vm949 = vcmp.ge.f32.partialorder %v719, 0.0
  %vm950 = vcmp.ge.f32.partialorder %v442, 0.0
  %vm951 = vcmp.ge.f32.partialorder %v444, 0.0
  %vm952 = vcmp.ge.f32.partialorder %v723, 0.0
  %vm953 = vcmp.ge.f32.partialorder %v725, 0.0
  %vm954 = vcmp.ge.f32.partialorder %v446, 0.0
  %vm955 = vcmp.ge.f32.partialorder %v448, 0.0
  %vm956 = vcmp.ge.f32.partialorder %v727, 0.0
  %vm957 = vcmp.ge.f32.partialorder %v729, 0.0
  %vm958 = vcmp.ge.f32.partialorder %v452, 0.0
  %vm959 = vcmp.ge.f32.partialorder %v454, 0.0
  %vm960 = vcmp.ge.f32.partialorder %v733, 0.0
  %vm961 = vcmp.ge.f32.partialorder %v735, 0.0
  %vm962 = vcmp.ge.f32.partialorder %v456, 0.0
  %vm963 = vcmp.ge.f32.partialorder %v458, 0.0
  %vm964 = vcmp.ge.f32.partialorder %v737, 0.0
  %vm965 = vcmp.ge.f32.partialorder %v739, 0.0
  %vm966 = vcmp.ge.f32.partialorder %v462, 0.0
  %vm967 = vcmp.ge.f32.partialorder %v464, 0.0
  %vm968 = vcmp.ge.f32.partialorder %v743, 0.0
  %vm969 = vcmp.ge.f32.partialorder %v745, 0.0
  %vm970 = vcmp.ge.f32.partialorder %v466, 0.0
  %vm971 = vcmp.ge.f32.partialorder %v468, 0.0
  %vm972 = vcmp.ge.f32.partialorder %v747, 0.0
  %vm973 = vcmp.ge.f32.partialorder %v749, 0.0
  %vm974 = vcmp.ge.f32.partialorder %v472, 0.0
  %vm975 = vcmp.ge.f32.partialorder %v474, 0.0
  %vm976 = vcmp.ge.f32.partialorder %v753, 0.0
  %vm977 = vcmp.ge.f32.partialorder %v755, 0.0
  %vm978 = vcmp.ge.f32.partialorder %v476, 0.0
  %vm979 = vcmp.ge.f32.partialorder %v478, 0.0
  %vm980 = vcmp.ge.f32.partialorder %v757, 0.0
  %vm981 = vcmp.ge.f32.partialorder %v759, 0.0
  %vm982 = vcmp.ge.f32.partialorder %v482, 0.0
  %vm983 = vcmp.ge.f32.partialorder %v484, 0.0
  %vm984 = vcmp.ge.f32.partialorder %v763, 0.0
  %vm985 = vcmp.ge.f32.partialorder %v765, 0.0
  %vm986 = vcmp.ge.f32.partialorder %v486, 0.0
  %vm987 = vcmp.ge.f32.partialorder %v488, 0.0
  %vm988 = vcmp.ge.f32.partialorder %v767, 0.0
  %vm989 = vcmp.ge.f32.partialorder %v769, 0.0
  %vm990 = vcmp.ge.f32.partialorder %v492, 0.0
  %vm991 = vcmp.ge.f32.partialorder %v494, 0.0
  %vm992 = vcmp.ge.f32.partialorder %v773, 0.0
  %vm993 = vcmp.ge.f32.partialorder %v775, 0.0
  %vm994 = vcmp.ge.f32.partialorder %v496, 0.0
  %vm995 = vcmp.ge.f32.partialorder %v498, 0.0
  %vm996 = vcmp.ge.f32.partialorder %v777, 0.0
  %vm997 = vcmp.ge.f32.partialorder %v779, 0.0
  %vm998 = vcmp.ge.f32.partialorder %v502, 0.0
  %vm999 = vcmp.ge.f32.partialorder %v504, 0.0
  %vm1000 = vcmp.ge.f32.partialorder %v783, 0.0
  %vm1001 = vcmp.ge.f32.partialorder %v785, 0.0
  %vm1002 = vcmp.ge.f32.partialorder %v506, 0.0
  %vm1003 = vcmp.ge.f32.partialorder %v508, 0.0
  %vm1004 = vcmp.ge.f32.partialorder %v787, 0.0
  %vm1005 = vcmp.ge.f32.partialorder %v789, 0.0
  %vm1006 = vcmp.ge.f32.partialorder %v512, 0.0
  %vm1007 = vcmp.ge.f32.partialorder %v514, 0.0
  %vm1008 = vcmp.ge.f32.partialorder %v793, 0.0
  %vm1009 = vcmp.ge.f32.partialorder %v795, 0.0
  %vm1010 = vcmp.ge.f32.partialorder %v516, 0.0
  %vm1011 = vcmp.ge.f32.partialorder %v518, 0.0
  %vm1012 = vcmp.ge.f32.partialorder %v797, 0.0
  %vm1013 = vcmp.ge.f32.partialorder %v799, 0.0
  %vm1014 = vcmp.ge.f32.partialorder %v522, 0.0
  %vm1015 = vcmp.ge.f32.partialorder %v524, 0.0
  %vm1016 = vcmp.ge.f32.partialorder %v803, 0.0
  %vm1017 = vcmp.ge.f32.partialorder %v805, 0.0
  %vm1018 = vcmp.ge.f32.partialorder %v526, 0.0
  %vm1019 = vcmp.ge.f32.partialorder %v528, 0.0
  %vm1020 = vcmp.ge.f32.partialorder %v807, 0.0
  %vm1021 = vcmp.ge.f32.partialorder %v809, 0.0
  %vm1022 = vcmp.ge.f32.partialorder %v532, 0.0
  %vm1023 = vcmp.ge.f32.partialorder %v534, 0.0
  %vm1024 = vcmp.ge.f32.partialorder %v813, 0.0
  %vm1025 = vcmp.ge.f32.partialorder %v815, 0.0
  %vm1026 = vcmp.ge.f32.partialorder %v536, 0.0
  %vm1027 = vcmp.ge.f32.partialorder %v538, 0.0
  %vm1028 = vcmp.ge.f32.partialorder %v817, 0.0
  %vm1029 = vcmp.ge.f32.partialorder %v819, 0.0
  %vm1030 = vcmp.ge.f32.partialorder %v542, 0.0
  %vm1031 = vcmp.ge.f32.partialorder %v544, 0.0
  %vm1032 = vcmp.ge.f32.partialorder %v823, 0.0
  %vm1033 = vcmp.ge.f32.partialorder %v825, 0.0
  %vm1034 = vcmp.ge.f32.partialorder %v546, 0.0
  %vm1035 = vcmp.ge.f32.partialorder %v548, 0.0
  %vm1036 = vcmp.ge.f32.partialorder %v827, 0.0
  %vm1037 = vcmp.ge.f32.partialorder %v829, 0.0
  %vm1038 = vcmp.ge.f32.partialorder %v552, 0.0
  %vm1039 = vcmp.ge.f32.partialorder %v554, 0.0
  %vm1040 = vcmp.ge.f32.partialorder %v833, 0.0
  %vm1041 = vcmp.ge.f32.partialorder %v835, 0.0
  %vm1042 = vcmp.ge.f32.partialorder %v556, 0.0
  %vm1043 = vcmp.ge.f32.partialorder %v558, 0.0
  %vm1044 = vcmp.ge.f32.partialorder %v837, 0.0
  %vm1045 = vcmp.ge.f32.partialorder %v839, 0.0
  %vm1046 = vcmp.ge.f32.partialorder %v562, 0.0
  %vm1047 = vcmp.ge.f32.partialorder %v564, 0.0
  %vm1048 = vcmp.ge.f32.partialorder %v843, 0.0
  %vm1049 = vcmp.ge.f32.partialorder %v845, 0.0
  %vm1050 = vcmp.ge.f32.partialorder %v566, 0.0
  %vm1051 = vcmp.ge.f32.partialorder %v568, 0.0
  %vm1052 = vcmp.ge.f32.partialorder %v847, 0.0
  %vm1053 = vcmp.ge.f32.partialorder %v849, 0.0
  %vm1054 = vcmp.ge.f32.partialorder %v572, 0.0
  %vm1055 = vcmp.ge.f32.partialorder %v574, 0.0
  %vm1056 = vcmp.ge.f32.partialorder %v853, 0.0
  %vm1057 = vcmp.ge.f32.partialorder %v855, 0.0
  %vm1058 = vcmp.ge.f32.partialorder %v576, 0.0
  %vm1059 = vcmp.ge.f32.partialorder %v578, 0.0
  %vm1060 = vcmp.ge.f32.partialorder %v857, 0.0
  %vm1061 = vcmp.ge.f32.partialorder %v859, 0.0
  %vm1062 = vcmp.ge.f32.partialorder %v582, 0.0
  %vm1063 = vcmp.ge.f32.partialorder %v584, 0.0
  %vm1064 = vcmp.ge.f32.partialorder %v863, 0.0
  %vm1065 = vcmp.ge.f32.partialorder %v865, 0.0
  %v1066 = vstv %s869
  %v1067 = vmul.f32 %v1066, %v342
  %v1068 = vmul.f32 %v1066, %v344
  %v1069 = vmul.f32 %v1066, %v623
  %v1070 = vmul.f32 %v1066, %v625
  %v1071 = vmul.f32 %v1066, %v346
  %v1072 = vmul.f32 %v1066, %v348
  %v1073 = vmul.f32 %v1066, %v627
  %v1074 = vmul.f32 %v1066, %v629
  %v1075 = vmul.f32 %v1066, %v352
  %v1076 = vmul.f32 %v1066, %v354
  %v1077 = vmul.f32 %v1066, %v633
  %v1078 = vmul.f32 %v1066, %v635
  %v1079 = vmul.f32 %v1066, %v356
  %v1080 = vmul.f32 %v1066, %v358
  %v1081 = vmul.f32 %v1066, %v637
  %v1082 = vmul.f32 %v1066, %v639
  %v1083 = vmul.f32 %v1066, %v362
  %v1084 = vmul.f32 %v1066, %v364
  %v1085 = vmul.f32 %v1066, %v643
  %v1086 = vmul.f32 %v1066, %v645
  %v1087 = vmul.f32 %v1066, %v366
  %v1088 = vmul.f32 %v1066, %v368
  %v1089 = vmul.f32 %v1066, %v647
  %v1090 = vmul.f32 %v1066, %v649
  %v1091 = vmul.f32 %v1066, %v372
  %v1092 = vmul.f32 %v1066, %v374
  %v1093 = vmul.f32 %v1066, %v653
  %v1094 = vmul.f32 %v1066, %v655
  %v1095 = vmul.f32 %v1066, %v376
  %v1096 = vmul.f32 %v1066, %v378
  %v1097 = vmul.f32 %v1066, %v657
  %v1098 = vmul.f32 %v1066, %v659
  %v1099 = vmul.f32 %v1066, %v382
  %v1100 = vmul.f32 %v1066, %v384
  %v1101 = vmul.f32 %v1066, %v663
  %v1102 = vmul.f32 %v1066, %v665
  %v1103 = vmul.f32 %v1066, %v386
  %v1104 = vmul.f32 %v1066, %v388
  %v1105 = vmul.f32 %v1066, %v667
  %v1106 = vmul.f32 %v1066, %v669
  %v1107 = vmul.f32 %v1066, %v392
  %v1108 = vmul.f32 %v1066, %v394
  %v1109 = vmul.f32 %v1066, %v673
  %v1110 = vmul.f32 %v1066, %v675
  %v1111 = vmul.f32 %v1066, %v396
  %v1112 = vmul.f32 %v1066, %v398
  %v1113 = vmul.f32 %v1066, %v677
  %v1114 = vmul.f32 %v1066, %v679
  %v1115 = vmul.f32 %v1066, %v402
  %v1116 = vmul.f32 %v1066, %v404
  %v1117 = vmul.f32 %v1066, %v683
  %v1118 = vmul.f32 %v1066, %v685
  %v1119 = vmul.f32 %v1066, %v406
  %v1120 = vmul.f32 %v1066, %v408
  %v1121 = vmul.f32 %v1066, %v687
  %v1122 = vmul.f32 %v1066, %v689
  %v1123 = vmul.f32 %v1066, %v412
  %v1124 = vmul.f32 %v1066, %v414
  %v1125 = vmul.f32 %v1066, %v693
  %v1126 = vmul.f32 %v1066, %v695
  %v1127 = vmul.f32 %v1066, %v416
  %v1128 = vmul.f32 %v1066, %v418
  %v1129 = vmul.f32 %v1066, %v697
  %v1130 = vmul.f32 %v1066, %v699
  %v1131 = vmul.f32 %v1066, %v422
  %v1132 = vmul.f32 %v1066, %v424
  %v1133 = vmul.f32 %v1066, %v703
  %v1134 = vmul.f32 %v1066, %v705
  %v1135 = vmul.f32 %v1066, %v426
  %v1136 = vmul.f32 %v1066, %v428
  %v1137 = vmul.f32 %v1066, %v707
  %v1138 = vmul.f32 %v1066, %v709
  %v1139 = vmul.f32 %v1066, %v432
  %v1140 = vmul.f32 %v1066, %v434
  %v1141 = vmul.f32 %v1066, %v713
  %v1142 = vmul.f32 %v1066, %v715
  %v1143 = vmul.f32 %v1066, %v436
  %v1144 = vmul.f32 %v1066, %v438
  %v1145 = vmul.f32 %v1066, %v717
  %v1146 = vmul.f32 %v1066, %v719
  %v1147 = vmul.f32 %v1066, %v442
  %v1148 = vmul.f32 %v1066, %v444
  %v1149 = vmul.f32 %v1066, %v723
  %v1150 = vmul.f32 %v1066, %v725
  %v1151 = vmul.f32 %v1066, %v446
  %v1152 = vmul.f32 %v1066, %v448
  %v1153 = vmul.f32 %v1066, %v727
  %v1154 = vmul.f32 %v1066, %v729
  %v1155 = vmul.f32 %v1066, %v452
  %v1156 = vmul.f32 %v1066, %v454
  %v1157 = vmul.f32 %v1066, %v733
  %v1158 = vmul.f32 %v1066, %v735
  %v1159 = vmul.f32 %v1066, %v456
  %v1160 = vmul.f32 %v1066, %v458
  %v1161 = vmul.f32 %v1066, %v737
  %v1162 = vmul.f32 %v1066, %v739
  %v1163 = vmul.f32 %v1066, %v462
  %v1164 = vmul.f32 %v1066, %v464
  %v1165 = vmul.f32 %v1066, %v743
  %v1166 = vmul.f32 %v1066, %v745
  %v1167 = vmul.f32 %v1066, %v466
  %v1168 = vmul.f32 %v1066, %v468
  %v1169 = vmul.f32 %v1066, %v747
  %v1170 = vmul.f32 %v1066, %v749
  %v1171 = vmul.f32 %v1066, %v472
  %v1172 = vmul.f32 %v1066, %v474
  %v1173 = vmul.f32 %v1066, %v753
  %v1174 = vmul.f32 %v1066, %v755
  %v1175 = vmul.f32 %v1066, %v476
  %v1176 = vmul.f32 %v1066, %v478
  %v1177 = vmul.f32 %v1066, %v757
  %v1178 = vmul.f32 %v1066, %v759
  %v1179 = vmul.f32 %v1066, %v482
  %v1180 = vmul.f32 %v1066, %v484
  %v1181 = vmul.f32 %v1066, %v763
  %v1182 = vmul.f32 %v1066, %v765
  %v1183 = vmul.f32 %v1066, %v486
  %v1184 = vmul.f32 %v1066, %v488
  %v1185 = vmul.f32 %v1066, %v767
  %v1186 = vmul.f32 %v1066, %v769
  %v1187 = vmul.f32 %v1066, %v492
  %v1188 = vmul.f32 %v1066, %v494
  %v1189 = vmul.f32 %v1066, %v773
  %v1190 = vmul.f32 %v1066, %v775
  %v1191 = vmul.f32 %v1066, %v496
  %v1192 = vmul.f32 %v1066, %v498
  %v1193 = vmul.f32 %v1066, %v777
  %v1194 = vmul.f32 %v1066, %v779
  %v1195 = vmul.f32 %v1066, %v502
  %v1196 = vmul.f32 %v1066, %v504
  %v1197 = vmul.f32 %v1066, %v783
  %v1198 = vmul.f32 %v1066, %v785
  %v1199 = vmul.f32 %v1066, %v506
  %v1200 = vmul.f32 %v1066, %v508
  %v1201 = vmul.f32 %v1066, %v787
  %v1202 = vmul.f32 %v1066, %v789
  %v1203 = vmul.f32 %v1066, %v512
  %v1204 = vmul.f32 %v1066, %v514
  %v1205 = vmul.f32 %v1066, %v793
  %v1206 = vmul.f32 %v1066, %v795
  %v1207 = vmul.f32 %v1066, %v516
  %v1208 = vmul.f32 %v1066, %v518
  %v1209 = vmul.f32 %v1066, %v797
  %v1210 = vmul.f32 %v1066, %v799
  %v1211 = vmul.f32 %v1066, %v522
  %v1212 = vmul.f32 %v1066, %v524
  %v1213 = vmul.f32 %v1066, %v803
  %v1214 = vmul.f32 %v1066, %v805
  %v1215 = vmul.f32 %v1066, %v526
  %v1216 = vmul.f32 %v1066, %v528
  %v1217 = vmul.f32 %v1066, %v807
  %v1218 = vmul.f32 %v1066, %v809
  %v1219 = vmul.f32 %v1066, %v532
  %v1220 = vmul.f32 %v1066, %v534
  %v1221 = vmul.f32 %v1066, %v813
  %v1222 = vmul.f32 %v1066, %v815
  %v1223 = vmul.f32 %v1066, %v536
  %v1224 = vmul.f32 %v1066, %v538
  %v1225 = vmul.f32 %v1066, %v817
  %v1226 = vmul.f32 %v1066, %v819
  %v1227 = vmul.f32 %v1066, %v542
  %v1228 = vmul.f32 %v1066, %v544
  %v1229 = vmul.f32 %v1066, %v823
  %v1230 = vmul.f32 %v1066, %v825
  %v1231 = vmul.f32 %v1066, %v546
  %v1232 = vmul.f32 %v1066, %v548
  %v1233 = vmul.f32 %v1066, %v827
  %v1234 = vmul.f32 %v1066, %v829
  %v1235 = vmul.f32 %v1066, %v552
  %v1236 = vmul.f32 %v1066, %v554
  %v1237 = vmul.f32 %v1066, %v833
  %v1238 = vmul.f32 %v1066, %v835
  %v1239 = vmul.f32 %v1066, %v556
  %v1240 = vmul.f32 %v1066, %v558
  %v1241 = vmul.f32 %v1066, %v837
  %v1242 = vmul.f32 %v1066, %v839
  %v1243 = vmul.f32 %v1066, %v562
  %v1244 = vmul.f32 %v1066, %v564
  %v1245 = vmul.f32 %v1066, %v843
  %v1246 = vmul.f32 %v1066, %v845
  %v1247 = vmul.f32 %v1066, %v566
  %v1248 = vmul.f32 %v1066, %v568
  %v1249 = vmul.f32 %v1066, %v847
  %v1250 = vmul.f32 %v1066, %v849
  %v1251 = vmul.f32 %v1066, %v572
  %v1252 = vmul.f32 %v1066, %v574
  %v1253 = vmul.f32 %v1066, %v853
  %v1254 = vmul.f32 %v1066, %v855
  %v1255 = vmul.f32 %v1066, %v576
  %v1256 = vmul.f32 %v1066, %v578
  %v1257 = vmul.f32 %v1066, %v857
  %v1258 = vmul.f32 %v1066, %v859
  %v1259 = vmul.f32 %v1066, %v582
  %v1260 = vmul.f32 %v1066, %v584
  %v1261 = vmul.f32 %v1066, %v863
  %v1262 = vmul.f32 %v1066, %v865
  %v1263 = vsel %vm870, %v342, %v1067
  %v1264 = vsel %vm871, %v344, %v1068
  %v1265 = vsel %vm872, %v623, %v1069
  %v1266 = vsel %vm873, %v625, %v1070
  %v1267 = vsel %vm874, %v346, %v1071
  %v1268 = vsel %vm875, %v348, %v1072
  %v1269 = vsel %vm876, %v627, %v1073
  %v1270 = vsel %vm877, %v629, %v1074
  %v1271 = vsel %vm878, %v352, %v1075
  %v1272 = vsel %vm879, %v354, %v1076
  %v1273 = vsel %vm880, %v633, %v1077
  %v1274 = vsel %vm881, %v635, %v1078
  %v1275 = vsel %vm882, %v356, %v1079
  %v1276 = vsel %vm883, %v358, %v1080
  %v1277 = vsel %vm884, %v637, %v1081
  %v1278 = vsel %vm885, %v639, %v1082
  %v1279 = vsel %vm886, %v362, %v1083
  %v1280 = vsel %vm887, %v364, %v1084
  %v1281 = vsel %vm888, %v643, %v1085
  %v1282 = vsel %vm889, %v645, %v1086
  %v1283 = vsel %vm890, %v366, %v1087
  %v1284 = vsel %vm891, %v368, %v1088
  %v1285 = vsel %vm892, %v647, %v1089
  %v1286 = vsel %vm893, %v649, %v1090
  %v1287 = vsel %vm894, %v372, %v1091
  %v1288 = vsel %vm895, %v374, %v1092
  %v1289 = vsel %vm896, %v653, %v1093
  %v1290 = vsel %vm897, %v655, %v1094
  %v1291 = vsel %vm898, %v376, %v1095
  %v1292 = vsel %vm899, %v378, %v1096
  %v1293 = vsel %vm900, %v657, %v1097
  %v1294 = vsel %vm901, %v659, %v1098
  %v1295 = vsel %vm902, %v382, %v1099
  %v1296 = vsel %vm903, %v384, %v1100
  %v1297 = vsel %vm904, %v663, %v1101
  %v1298 = vsel %vm905, %v665, %v1102
  %v1299 = vsel %vm906, %v386, %v1103
  %v1300 = vsel %vm907, %v388, %v1104
  %v1301 = vsel %vm908, %v667, %v1105
  %v1302 = vsel %vm909, %v669, %v1106
  %v1303 = vsel %vm910, %v392, %v1107
  %v1304 = vsel %vm911, %v394, %v1108
  %v1305 = vsel %vm912, %v673, %v1109
  %v1306 = vsel %vm913, %v675, %v1110
  %v1307 = vsel %vm914, %v396, %v1111
  %v1308 = vsel %vm915, %v398, %v1112
  %v1309 = vsel %vm916, %v677, %v1113
  %v1310 = vsel %vm917, %v679, %v1114
  %v1311 = vsel %vm918, %v402, %v1115
  %v1312 = vsel %vm919, %v404, %v1116
  %v1313 = vsel %vm920, %v683, %v1117
  %v1314 = vsel %vm921, %v685, %v1118
  %v1315 = vsel %vm922, %v406, %v1119
  %v1316 = vsel %vm923, %v408, %v1120
  %v1317 = vsel %vm924, %v687, %v1121
  %v1318 = vsel %vm925, %v689, %v1122
  %v1319 = vsel %vm926, %v412, %v1123
  %v1320 = vsel %vm927, %v414, %v1124
  %v1321 = vsel %vm928, %v693, %v1125
  %v1322 = vsel %vm929, %v695, %v1126
  %v1323 = vsel %vm930, %v416, %v1127
  %v1324 = vsel %vm931, %v418, %v1128
  %v1325 = vsel %vm932, %v697, %v1129
  %v1326 = vsel %vm933, %v699, %v1130
  %v1327 = vsel %vm934, %v422, %v1131
  %v1328 = vsel %vm935, %v424, %v1132
  %v1329 = vsel %vm936, %v703, %v1133
  %v1330 = vsel %vm937, %v705, %v1134
  %v1331 = vsel %vm938, %v426, %v1135
  %v1332 = vsel %vm939, %v428, %v1136
  %v1333 = vsel %vm940, %v707, %v1137
  %v1334 = vsel %vm941, %v709, %v1138
  %v1335 = vsel %vm942, %v432, %v1139
  %v1336 = vsel %vm943, %v434, %v1140
  %v1337 = vsel %vm944, %v713, %v1141
  %v1338 = vsel %vm945, %v715, %v1142
  %v1339 = vsel %vm946, %v436, %v1143
  %v1340 = vsel %vm947, %v438, %v1144
  %v1341 = vsel %vm948, %v717, %v1145
  %v1342 = vsel %vm949, %v719, %v1146
  %v1343 = vsel %vm950, %v442, %v1147
  %v1344 = vsel %vm951, %v444, %v1148
  %v1345 = vsel %vm952, %v723, %v1149
  %v1346 = vsel %vm953, %v725, %v1150
  %v1347 = vsel %vm954, %v446, %v1151
  %v1348 = vsel %vm955, %v448, %v1152
  %v1349 = vsel %vm956, %v727, %v1153
  %v1350 = vsel %vm957, %v729, %v1154
  %v1351 = vsel %vm958, %v452, %v1155
  %v1352 = vsel %vm959, %v454, %v1156
  %v1353 = vsel %vm960, %v733, %v1157
  %v1354 = vsel %vm961, %v735, %v1158
  %v1355 = vsel %vm962, %v456, %v1159
  %v1356 = vsel %vm963, %v458, %v1160
  %v1357 = vsel %vm964, %v737, %v1161
  %v1358 = vsel %vm965, %v739, %v1162
  %v1359 = vsel %vm966, %v462, %v1163
  %v1360 = vsel %vm967, %v464, %v1164
  %v1361 = vsel %vm968, %v743, %v1165
  %v1362 = vsel %vm969, %v745, %v1166
  %v1363 = vsel %vm970, %v466, %v1167
  %v1364 = vsel %vm971, %v468, %v1168
  %v1365 = vsel %vm972, %v747, %v1169
  %v1366 = vsel %vm973, %v749, %v1170
  %v1367 = vsel %vm974, %v472, %v1171
  %v1368 = vsel %vm975, %v474, %v1172
  %v1369 = vsel %vm976, %v753, %v1173
  %v1370 = vsel %vm977, %v755, %v1174
  %v1371 = vsel %vm978, %v476, %v1175
  %v1372 = vsel %vm979, %v478, %v1176
  %v1373 = vsel %vm980, %v757, %v1177
  %v1374 = vsel %vm981, %v759, %v1178
  %v1375 = vsel %vm982, %v482, %v1179
  %v1376 = vsel %vm983, %v484, %v1180
  %v1377 = vsel %vm984, %v763, %v1181
  %v1378 = vsel %vm985, %v765, %v1182
  %v1379 = vsel %vm986, %v486, %v1183
  %v1380 = vsel %vm987, %v488, %v1184
  %v1381 = vsel %vm988, %v767, %v1185
  %v1382 = vsel %vm989, %v769, %v1186
  %v1383 = vsel %vm990, %v492, %v1187
  %v1384 = vsel %vm991, %v494, %v1188
  %v1385 = vsel %vm992, %v773, %v1189
  %v1386 = vsel %vm993, %v775, %v1190
  %v1387 = vsel %vm994, %v496, %v1191
  %v1388 = vsel %vm995, %v498, %v1192
  %v1389 = vsel %vm996, %v777, %v1193
  %v1390 = vsel %vm997, %v779, %v1194
  %v1391 = vsel %vm998, %v502, %v1195
  %v1392 = vsel %vm999, %v504, %v1196
  %v1393 = vsel %vm1000, %v783, %v1197
  %v1394 = vsel %vm1001, %v785, %v1198
  %v1395 = vsel %vm1002, %v506, %v1199
  %v1396 = vsel %vm1003, %v508, %v1200
  %v1397 = vsel %vm1004, %v787, %v1201
  %v1398 = vsel %vm1005, %v789, %v1202
  %v1399 = vsel %vm1006, %v512, %v1203
  %v1400 = vsel %vm1007, %v514, %v1204
  %v1401 = vsel %vm1008, %v793, %v1205
  %v1402 = vsel %vm1009, %v795, %v1206
  %v1403 = vsel %vm1010, %v516, %v1207
  %v1404 = vsel %vm1011, %v518, %v1208
  %v1405 = vsel %vm1012, %v797, %v1209
  %v1406 = vsel %vm1013, %v799, %v1210
  %v1407 = vsel %vm1014, %v522, %v1211
  %v1408 = vsel %vm1015, %v524, %v1212
  %v1409 = vsel %vm1016, %v803, %v1213
  %v1410 = vsel %vm1017, %v805, %v1214
  %v1411 = vsel %vm1018, %v526, %v1215
  %v1412 = vsel %vm1019, %v528, %v1216
  %v1413 = vsel %vm1020, %v807, %v1217
  %v1414 = vsel %vm1021, %v809, %v1218
  %v1415 = vsel %vm1022, %v532, %v1219
  %v1416 = vsel %vm1023, %v534, %v1220
  %v1417 = vsel %vm1024, %v813, %v1221
  %v1418 = vsel %vm1025, %v815, %v1222
  %v1419 = vsel %vm1026, %v536, %v1223
  %v1420 = vsel %vm1027, %v538, %v1224
  %v1421 = vsel %vm1028, %v817, %v1225
  %v1422 = vsel %vm1029, %v819, %v1226
  %v1423 = vsel %vm1030, %v542, %v1227
  %v1424 = vsel %vm1031, %v544, %v1228
  %v1425 = vsel %vm1032, %v823, %v1229
  %v1426 = vsel %vm1033, %v825, %v1230
  %v1427 = vsel %vm1034, %v546, %v1231
  %v1428 = vsel %vm1035, %v548, %v1232
  %v1429 = vsel %vm1036, %v827, %v1233
  %v1430 = vsel %vm1037, %v829, %v1234
  %v1431 = vsel %vm1038, %v552, %v1235
  %v1432 = vsel %vm1039, %v554, %v1236
  %v1433 = vsel %vm1040, %v833, %v1237
  %v1434 = vsel %vm1041, %v835, %v1238
  %v1435 = vsel %vm1042, %v556, %v1239
  %v1436 = vsel %vm1043, %v558, %v1240
  %v1437 = vsel %vm1044, %v837, %v1241
  %v1438 = vsel %vm1045, %v839, %v1242
  %v1439 = vsel %vm1046, %v562, %v1243
  %v1440 = vsel %vm1047, %v564, %v1244
  %v1441 = vsel %vm1048, %v843, %v1245
  %v1442 = vsel %vm1049, %v845, %v1246
  %v1443 = vsel %vm1050, %v566, %v1247
  %v1444 = vsel %vm1051, %v568, %v1248
  %v1445 = vsel %vm1052, %v847, %v1249
  %v1446 = vsel %vm1053, %v849, %v1250
  %v1447 = vsel %vm1054, %v572, %v1251
  %v1448 = vsel %vm1055, %v574, %v1252
  %v1449 = vsel %vm1056, %v853, %v1253
  %v1450 = vsel %vm1057, %v855, %v1254
  %v1451 = vsel %vm1058, %v576, %v1255
  %v1452 = vsel %vm1059, %v578, %v1256
  %v1453 = vsel %vm1060, %v857, %v1257
  %v1454 = vsel %vm1061, %v859, %v1258
  %v1455 = vsel %vm1062, %v582, %v1259
  %v1456 = vsel %vm1063, %v584, %v1260
  %v1457 = vsel %vm1064, %v863, %v1261
  %v1458 = vsel %vm1065, %v865, %v1262
  %v1459 = vmax.f32 %v1263, %v1264
  %v1460 = vmax.f32 %v1267, %v1268
  %v1461 = vmax.f32 %v1271, %v1272
  %v1462 = vmax.f32 %v1275, %v1276
  %v1463 = vmax.f32 %v1279, %v1280
  %v1464 = vmax.f32 %v1283, %v1284
  %v1465 = vmax.f32 %v1287, %v1288
  %v1466 = vmax.f32 %v1291, %v1292
  %v1467 = vmax.f32 %v1295, %v1296
  %v1468 = vmax.f32 %v1299, %v1300
  %v1469 = vmax.f32 %v1303, %v1304
  %v1470 = vmax.f32 %v1307, %v1308
  %v1471 = vmax.f32 %v1311, %v1312
  %v1472 = vmax.f32 %v1315, %v1316
  %v1473 = vmax.f32 %v1319, %v1320
  %v1474 = vmax.f32 %v1323, %v1324
  %v1475 = vmax.f32 %v1327, %v1328
  %v1476 = vmax.f32 %v1331, %v1332
  %v1477 = vmax.f32 %v1335, %v1336
  %v1478 = vmax.f32 %v1339, %v1340
  %v1479 = vmax.f32 %v1343, %v1344
  %v1480 = vmax.f32 %v1347, %v1348
  %v1481 = vmax.f32 %v1351, %v1352
  %v1482 = vmax.f32 %v1355, %v1356
  %v1483 = vmax.f32 %v1359, %v1360
  %v1484 = vmax.f32 %v1363, %v1364
  %v1485 = vmax.f32 %v1367, %v1368
  %v1486 = vmax.f32 %v1371, %v1372
  %v1487 = vmax.f32 %v1375, %v1376
  %v1488 = vmax.f32 %v1379, %v1380
  %v1489 = vmax.f32 %v1383, %v1384
  %v1490 = vmax.f32 %v1387, %v1388
  %v1491 = vmax.f32 %v1391, %v1392
  %v1492 = vmax.f32 %v1395, %v1396
  %v1493 = vmax.f32 %v1399, %v1400
  %v1494 = vmax.f32 %v1403, %v1404
  %v1495 = vmax.f32 %v1407, %v1408
  %v1496 = vmax.f32 %v1411, %v1412
  %v1497 = vmax.f32 %v1415, %v1416
  %v1498 = vmax.f32 %v1419, %v1420
  %v1499 = vmax.f32 %v1423, %v1424
  %v1500 = vmax.f32 %v1427, %v1428
  %v1501 = vmax.f32 %v1431, %v1432
  %v1502 = vmax.f32 %v1435, %v1436
  %v1503 = vmax.f32 %v1439, %v1440
  %v1504 = vmax.f32 %v1443, %v1444
  %v1505 = vmax.f32 %v1447, %v1448
  %v1506 = vmax.f32 %v1451, %v1452
  %v1507 = vmax.f32 %v1455, %v1456
  %v1508 = vmax.f32 %v1265, %v1266
  %v1509 = vmax.f32 %v1269, %v1270
  %v1510 = vmax.f32 %v1273, %v1274
  %v1511 = vmax.f32 %v1277, %v1278
  %v1512 = vmax.f32 %v1281, %v1282
  %v1513 = vmax.f32 %v1285, %v1286
  %v1514 = vmax.f32 %v1289, %v1290
  %v1515 = vmax.f32 %v1293, %v1294
  %v1516 = vmax.f32 %v1297, %v1298
  %v1517 = vmax.f32 %v1301, %v1302
  %v1518 = vmax.f32 %v1305, %v1306
  %v1519 = vmax.f32 %v1309, %v1310
  %v1520 = vmax.f32 %v1313, %v1314
  %v1521 = vmax.f32 %v1317, %v1318
  %v1522 = vmax.f32 %v1321, %v1322
  %v1523 = vmax.f32 %v1325, %v1326
  %v1524 = vmax.f32 %v1329, %v1330
  %v1525 = vmax.f32 %v1333, %v1334
  %v1526 = vmax.f32 %v1337, %v1338
  %v1527 = vmax.f32 %v1341, %v1342
  %v1528 = vmax.f32 %v1345, %v1346
  %v1529 = vmax.f32 %v1349, %v1350
  %v1530 = vmax.f32 %v1353, %v1354
  %v1531 = vmax.f32 %v1357, %v1358
  %v1532 = vmax.f32 %v1361, %v1362
  %v1533 = vmax.f32 %v1365, %v1366
  %v1534 = vmax.f32 %v1369, %v1370
  %v1535 = vmax.f32 %v1373, %v1374
  %v1536 = vmax.f32 %v1377, %v1378
  %v1537 = vmax.f32 %v1381, %v1382
  %v1538 = vmax.f32 %v1385, %v1386
  %v1539 = vmax.f32 %v1389, %v1390
  %v1540 = vmax.f32 %v1393, %v1394
  %v1541 = vmax.f32 %v1397, %v1398
  %v1542 = vmax.f32 %v1401, %v1402
  %v1543 = vmax.f32 %v1405, %v1406
  %v1544 = vmax.f32 %v1409, %v1410
  %v1545 = vmax.f32 %v1413, %v1414
  %v1546 = vmax.f32 %v1417, %v1418
  %v1547 = vmax.f32 %v1421, %v1422
  %v1548 = vmax.f32 %v1425, %v1426
  %v1549 = vmax.f32 %v1429, %v1430
  %v1550 = vmax.f32 %v1433, %v1434
  %v1551 = vmax.f32 %v1437, %v1438
  %v1552 = vmax.f32 %v1441, %v1442
  %v1553 = vmax.f32 %v1445, %v1446
  %v1554 = vmax.f32 %v1449, %v1450
  %v1555 = vmax.f32 %v1453, %v1454
  %v1556 = vmax.f32 %v1457, %v1458
  %v1557 = vmax.f32 %v1459, %v1508
  %v1558 = vmax.f32 %v1460, %v1509
  %v1559 = vmax.f32 %v1461, %v1510
  %v1560 = vmax.f32 %v1462, %v1511
  %v1561 = vmax.f32 %v1463, %v1512
  %v1562 = vmax.f32 %v1464, %v1513
  %v1563 = vmax.f32 %v1465, %v1514
  %v1564 = vmax.f32 %v1466, %v1515
  %v1565 = vmax.f32 %v1467, %v1516
  %v1566 = vmax.f32 %v1468, %v1517
  %v1567 = vmax.f32 %v1469, %v1518
  %v1568 = vmax.f32 %v1470, %v1519
  %v1569 = vmax.f32 %v1471, %v1520
  %v1570 = vmax.f32 %v1472, %v1521
  %v1571 = vmax.f32 %v1473, %v1522
  %v1572 = vmax.f32 %v1474, %v1523
  %v1573 = vmax.f32 %v1475, %v1524
  %v1574 = vmax.f32 %v1476, %v1525
  %v1575 = vmax.f32 %v1477, %v1526
  %v1576 = vmax.f32 %v1478, %v1527
  %v1577 = vmax.f32 %v1479, %v1528
  %v1578 = vmax.f32 %v1480, %v1529
  %v1579 = vmax.f32 %v1481, %v1530
  %v1580 = vmax.f32 %v1482, %v1531
  %v1581 = vmax.f32 %v1483, %v1532
  %v1582 = vmax.f32 %v1484, %v1533
  %v1583 = vmax.f32 %v1485, %v1534
  %v1584 = vmax.f32 %v1486, %v1535
  %v1585 = vmax.f32 %v1487, %v1536
  %v1586 = vmax.f32 %v1488, %v1537
  %v1587 = vmax.f32 %v1489, %v1538
  %v1588 = vmax.f32 %v1490, %v1539
  %v1589 = vmax.f32 %v1491, %v1540
  %v1590 = vmax.f32 %v1492, %v1541
  %v1591 = vmax.f32 %v1493, %v1542
  %v1592 = vmax.f32 %v1494, %v1543
  %v1593 = vmax.f32 %v1495, %v1544
  %v1594 = vmax.f32 %v1496, %v1545
  %v1595 = vmax.f32 %v1497, %v1546
  %v1596 = vmax.f32 %v1498, %v1547
  %v1597 = vmax.f32 %v1499, %v1548
  %v1598 = vmax.f32 %v1500, %v1549
  %v1599 = vmax.f32 %v1501, %v1550
  %v1600 = vmax.f32 %v1502, %v1551
  %v1601 = vmax.f32 %v1503, %v1552
  %v1602 = vmax.f32 %v1504, %v1553
  %v1603 = vmax.f32 %v1505, %v1554
  %v1604 = vmax.f32 %v1506, %v1555
  %v1605 = vmax.f32 %v1507, %v1556
  %1606 = vst [vmem:[%s4] sm:$0xff] %v1557
  %1607 = vst [vmem:[%s4 + $0x8] sm:$0xff] %v1558
  %1608 = vst [vmem:[%s4 + $0x10] sm:$0xff] %v1559
  %1609 = vst [vmem:[%s4 + $0x18] sm:$0xff] %v1560
  %1610 = vst [vmem:[%s4 + $0x20] sm:$0xff] %v1561
  %1611 = vst [vmem:[%s4 + $0x28] sm:$0xff] %v1562
  %1612 = vst [vmem:[%s4 + $0x30] sm:$0xff] %v1563
  %1613 = vst [vmem:[%s4 + $0x38] sm:$0xff] %v1564
  %1614 = vst [vmem:[%s4 + $0x40] sm:$0xff] %v1565
  %1615 = vst [vmem:[%s4 + $0x48] sm:$0xff] %v1566
  %1616 = vst [vmem:[%s4 + $0x50] sm:$0xff] %v1567
  %1617 = vst [vmem:[%s4 + $0x58] sm:$0xff] %v1568
  %1618 = vst [vmem:[%s4 + $0x60] sm:$0xff] %v1569
  %1619 = vst [vmem:[%s4 + $0x68] sm:$0xff] %v1570
  %1620 = vst [vmem:[%s4 + $0x70] sm:$0xff] %v1571
  %1621 = vst [vmem:[%s4 + $0x78] sm:$0xff] %v1572
  %1622 = vst [vmem:[%s4 + $0x80] sm:$0xff] %v1573
  %1623 = vst [vmem:[%s4 + $0x88] sm:$0xff] %v1574
  %1624 = vst [vmem:[%s4 + $0x90] sm:$0xff] %v1575
  %1625 = vst [vmem:[%s4 + $0x98] sm:$0xff] %v1576
  %1626 = vst [vmem:[%s4 + $0xa0] sm:$0xff] %v1577
  %1627 = vst [vmem:[%s4 + $0xa8] sm:$0xff] %v1578
  %1628 = vst [vmem:[%s4 + $0xb0] sm:$0xff] %v1579
  %1629 = vst [vmem:[%s4 + $0xb8] sm:$0xff] %v1580
  %1630 = vst [vmem:[%s4 + $0xc0] sm:$0xff] %v1581
  %1631 = vst [vmem:[%s4 + $0xc8] sm:$0xff] %v1582
  %1632 = vst [vmem:[%s4 + $0xd0] sm:$0xff] %v1583
  %1633 = vst [vmem:[%s4 + $0xd8] sm:$0xff] %v1584
  %1634 = vst [vmem:[%s4 + $0xe0] sm:$0xff] %v1585
  %1635 = vst [vmem:[%s4 + $0xe8] sm:$0xff] %v1586
  %1636 = vst [vmem:[%s4 + $0xf0] sm:$0xff] %v1587
  %1637 = vst [vmem:[%s4 + $0xf8] sm:$0xff] %v1588
  %1638 = vst [vmem:[%s4 + $0x100] sm:$0xff] %v1589
  %1639 = vst [vmem:[%s4 + $0x108] sm:$0xff] %v1590
  %1640 = vst [vmem:[%s4 + $0x110] sm:$0xff] %v1591
  %1641 = vst [vmem:[%s4 + $0x118] sm:$0xff] %v1592
  %1642 = vst [vmem:[%s4 + $0x120] sm:$0xff] %v1593
  %1643 = vst [vmem:[%s4 + $0x128] sm:$0xff] %v1594
  %1644 = vst [vmem:[%s4 + $0x130] sm:$0xff] %v1595
  %1645 = vst [vmem:[%s4 + $0x138] sm:$0xff] %v1596
  %1646 = vst [vmem:[%s4 + $0x140] sm:$0xff] %v1597
  %1647 = vst [vmem:[%s4 + $0x148] sm:$0xff] %v1598
  %1648 = vst [vmem:[%s4 + $0x150] sm:$0xff] %v1599
  %1649 = vst [vmem:[%s4 + $0x158] sm:$0xff] %v1600
  %1650 = vst [vmem:[%s4 + $0x160] sm:$0xff] %v1601
  %1651 = vst [vmem:[%s4 + $0x168] sm:$0xff] %v1602
  %1652 = vst [vmem:[%s4 + $0x170] sm:$0xff] %v1603
  %1653 = vst [vmem:[%s4 + $0x178] sm:$0xff] %v1604
  %1654 = vst [vmem:[%s4 + $0x180] sm:$0xff] %v1605
  // Predicated region
  $region18: #{embedding_net_rgb_forward.3} parent=0 // pred_check
    _
  $region19: #{embedding_net_rgb_forward.3} parent=0 // pred_check_branch
    %1656 = sbr.rel (0) target = $region21
  $region20: #{embedding_net_rgb_forward.3} parent=0 // pred_region
    _
  $region21: #{embedding_net_rgb_forward.3} parent=0 // pred_fallthru
    _
  // Predicated region
  $region22: #{embedding_net_rgb_forward.3} parent=0 // pred_check
    _
  $region23: #{embedding_net_rgb_forward.3} parent=0 // pred_check_branch
    %1658 = sbr.rel (0) target = $region25
  $region24: #{embedding_net_rgb_forward.3} parent=0 // pred_region
    _
  $region25: #{embedding_net_rgb_forward.3} parent=0 // pred_fallthru
    _

// kernel: embedding_net_rgb_forward.4
$region0: #{embedding_net_rgb_forward.4}
  #allocation0 [shape = 'u32[]', space=smem, size = 0x4, offset = 0x4, fixed_abs, tag = 'smem constant byte address 0x4 - core index']
  #allocation1 [shape = 'u32[144,128]{1,0:T(1,128)}', space=vmem, size = 0x12000, scoped, tag = 'internal scratch']
  #allocation2 [shape = 'f32[1]{0:T(128)S(6)}', space=smem, size = 0x200, scoped, tag = 'scoped memory for embedding_net_rgb_forward.4']
  %s0 = inlined_call_operand.vmem [shape: f32[56,1152], index: 0, kind: input, shape index: {}]
  %s1 = inlined_call_operand.vmem [shape: bf16[1152,512], index: 1, kind: input, shape index: {}]
  %s2 = inlined_call_operand.vmem [shape: f32[1,512], index: 2, kind: input, shape index: {}]
  %s3 = inlined_call_operand.<no memory space> [shape: f32[1], index: 3, kind: input, shape index: {}]
  %s4 = inlined_call_operand.vmem [shape: f32[56,128], index: 4, kind: output, shape index: {}]
  %s5 = sld [smem:[#allocation0]]
  $region26: #{embedding_net_rgb_forward.4} parent=0
    _
  %s7 = ssub.s32 1, %s5
  %s8 = scalar_select 0, %s7, %s5
  %9 = sst [smem:[#allocation2]] %s3
  // Predicated region
  $region2: #{embedding_net_rgb_forward.4} parent=0 // pred_check
    _
  $region3: #{embedding_net_rgb_forward.4} parent=0 // pred_check_branch
    %11 = sbr.rel (0) target = $region5
  $region4: #{embedding_net_rgb_forward.4} parent=0 // pred_region
    _
  $region5: #{embedding_net_rgb_forward.4} parent=0 // pred_fallthru
    _
  // Predicated region
  $region6: #{embedding_net_rgb_forward.4} parent=0 // pred_check
    _
  $region7: #{embedding_net_rgb_forward.4} parent=0 // pred_check_branch
    %13 = sbr.rel (0) target = $region9
  $region8: #{embedding_net_rgb_forward.4} parent=0 // pred_region
    _
  $region9: #{embedding_net_rgb_forward.4} parent=0 // pred_fallthru
    _
  // Predicated region
  $region10: #{embedding_net_rgb_forward.4} parent=0 // pred_check
    _
  $region11: #{embedding_net_rgb_forward.4} parent=0 // pred_check_branch
    %15 = sbr.rel (0) target = $region13
  $region12: #{embedding_net_rgb_forward.4} parent=0 // pred_region
    _
  $region13: #{embedding_net_rgb_forward.4} parent=0 // pred_fallthru
    _
  // Predicated region
  $region14: #{embedding_net_rgb_forward.4} parent=0 // pred_check
    _
  $region15: #{embedding_net_rgb_forward.4} parent=0 // pred_check_branch
    %17 = sbr.rel (0) target = $region17
  $region16: #{embedding_net_rgb_forward.4} parent=0 // pred_region
    _
  $region17: #{embedding_net_rgb_forward.4} parent=0 // pred_fallthru
    _
  %v19 = vld [vmem:[%s0] sm:$0xff]
  %v20 = vld [vmem:[%s0 + $0x8] sm:$0xff]
  %v21 = vld [vmem:[%s0 + $0x10] sm:$0xff]
  %v22 = vld [vmem:[%s0 + $0x18] sm:$0xff]
  %v23 = vld [vmem:[%s0 + $0x20] sm:$0xff]
  %v24 = vld [vmem:[%s0 + $0x28] sm:$0xff]
  %v25 = vld [vmem:[%s0 + $0x30] sm:$0xff]
  %v26 = vld [vmem:[%s0 + $0x38] sm:$0xff]
  %v27 = vld [vmem:[%s0 + $0x40] sm:$0xff]
  %v28 = vld [vmem:[%s0 + $0x48] sm:$0xff]
  %v29 = vld [vmem:[%s0 + $0x50] sm:$0xff]
  %v30 = vld [vmem:[%s0 + $0x58] sm:$0xff]
  %v31 = vld [vmem:[%s0 + $0x60] sm:$0xff]
  %v32 = vld [vmem:[%s0 + $0x68] sm:$0xff]
  %v33 = vld [vmem:[%s0 + $0x70] sm:$0xff]
  %v34 = vld [vmem:[%s0 + $0x78] sm:$0xff]
  %v35 = vld [vmem:[%s0 + $0x80] sm:$0xff]
  %v36 = vld [vmem:[%s0 + $0x88] sm:$0xff]
  %v37 = vld [vmem:[%s0 + $0x90] sm:$0xff]
  %v38 = vld [vmem:[%s0 + $0x98] sm:$0xff]
  %v39 = vld [vmem:[%s0 + $0xa0] sm:$0xff]
  %v40 = vld [vmem:[%s0 + $0xa8] sm:$0xff]
  %v41 = vld [vmem:[%s0 + $0xb0] sm:$0xff]
  %v42 = vld [vmem:[%s0 + $0xb8] sm:$0xff]
  %v43 = vld [vmem:[%s0 + $0xc0] sm:$0xff]
  %v44 = vld [vmem:[%s0 + $0xc8] sm:$0xff]
  %v45 = vld [vmem:[%s0 + $0xd0] sm:$0xff]
  %v46 = vld [vmem:[%s0 + $0xd8] sm:$0xff]
  %v47 = vld [vmem:[%s0 + $0xe0] sm:$0xff]
  %v48 = vld [vmem:[%s0 + $0xe8] sm:$0xff]
  %v49 = vld [vmem:[%s0 + $0xf0] sm:$0xff]
  %v50 = vld [vmem:[%s0 + $0xf8] sm:$0xff]
  %v51 = vld [vmem:[%s0 + $0x100] sm:$0xff]
  %v52 = vld [vmem:[%s0 + $0x108] sm:$0xff]
  %v53 = vld [vmem:[%s0 + $0x110] sm:$0xff]
  %v54 = vld [vmem:[%s0 + $0x118] sm:$0xff]
  %v55 = vld [vmem:[%s0 + $0x120] sm:$0xff]
  %v56 = vld [vmem:[%s0 + $0x128] sm:$0xff]
  %v57 = vld [vmem:[%s0 + $0x130] sm:$0xff]
  %v58 = vld [vmem:[%s0 + $0x138] sm:$0xff]
  %v59 = vld [vmem:[%s0 + $0x140] sm:$0xff]
  %v60 = vld [vmem:[%s0 + $0x148] sm:$0xff]
  %v61 = vld [vmem:[%s0 + $0x150] sm:$0xff]
  %v62 = vld [vmem:[%s0 + $0x158] sm:$0xff]
  %v63 = vld [vmem:[%s0 + $0x160] sm:$0xff]
  %v64 = vld [vmem:[%s0 + $0x168] sm:$0xff]
  %v65 = vld [vmem:[%s0 + $0x170] sm:$0xff]
  %v66 = vld [vmem:[%s0 + $0x178] sm:$0xff]
  %v67 = vld [vmem:[%s0 + $0x180] sm:$0xff]
  %v68 = vld [vmem:[%s0 + $0x188] sm:$0xff]
  %v69 = vld [vmem:[%s0 + $0x190] sm:$0xff]
  %v70 = vld [vmem:[%s0 + $0x198] sm:$0xff]
  %v71 = vld [vmem:[%s0 + $0x1a0] sm:$0xff]
  %v72 = vld [vmem:[%s0 + $0x1a8] sm:$0xff]
  %v73 = vld [vmem:[%s0 + $0x1b0] sm:$0xff]
  %v74 = vld [vmem:[%s0 + $0x1b8] sm:$0xff]
  %v75 = vld [vmem:[%s0 + $0x1c0] sm:$0xff]
  %v76 = vld [vmem:[%s0 + $0x1c8] sm:$0xff]
  %v77 = vld [vmem:[%s0 + $0x1d0] sm:$0xff]
  %v78 = vld [vmem:[%s0 + $0x1d8] sm:$0xff]
  %v79 = vld [vmem:[%s0 + $0x1e0] sm:$0xff]
  %v80 = vld [vmem:[%s0 + $0x1e8] sm:$0xff]
  %v81 = vld [vmem:[%s0 + $0x1f0] sm:$0xff]
  %v82 = vpack.c.bf16 %v28, %v19
  %v83 = vpack.c.bf16 %v29, %v20
  %v84 = vpack.c.bf16 %v30, %v21
  %v85 = vpack.c.bf16 %v31, %v22
  %v86 = vpack.c.bf16 %v32, %v23
  %v87 = vpack.c.bf16 %v33, %v24
  %v88 = vpack.c.bf16 %v34, %v25
  %v89 = vpack.c.bf16 %v35, %v26
  %v90 = vpack.c.bf16 %v36, %v27
  %v91 = vpack.c.bf16 %v46, %v37
  %v92 = vpack.c.bf16 %v47, %v38
  %v93 = vpack.c.bf16 %v48, %v39
  %v94 = vpack.c.bf16 %v49, %v40
  %v95 = vpack.c.bf16 %v50, %v41
  %v96 = vpack.c.bf16 %v51, %v42
  %v97 = vpack.c.bf16 %v52, %v43
  %v98 = vpack.c.bf16 %v53, %v44
  %v99 = vpack.c.bf16 %v54, %v45
  %v100 = vpack.c.bf16 %v64, %v55
  %v101 = vpack.c.bf16 %v65, %v56
  %v102 = vpack.c.bf16 %v66, %v57
  %v103 = vpack.c.bf16 %v67, %v58
  %v104 = vpack.c.bf16 %v68, %v59
  %v105 = vpack.c.bf16 %v69, %v60
  %v106 = vpack.c.bf16 %v70, %v61
  %v107 = vpack.c.bf16 %v71, %v62
  %v108 = vpack.c.bf16 %v72, %v63
  %v109 = vpack.c.bf16 %v73, %v73
  %v110 = vpack.c.bf16 %v74, %v74
  %v111 = vpack.c.bf16 %v75, %v75
  %v112 = vpack.c.bf16 %v76, %v76
  %v113 = vpack.c.bf16 %v77, %v77
  %v114 = vpack.c.bf16 %v78, %v78
  %v115 = vpack.c.bf16 %v79, %v79
  %v116 = vpack.c.bf16 %v80, %v80
  %v117 = vpack.c.bf16 %v81, %v81
  %v118 = vld [vmem:[%s1] sm:$0xff]
  %v119 = vld [vmem:[%s1 + $0x8] sm:$0xff]
  %v120 = vld [vmem:[%s1 + $0x10] sm:$0xff]
  %v121 = vld [vmem:[%s1 + $0x18] sm:$0xff]
  %v122 = vld [vmem:[%s1 + $0x20] sm:$0xff]
  %v123 = vld [vmem:[%s1 + $0x28] sm:$0xff]
  %v124 = vld [vmem:[%s1 + $0x30] sm:$0xff]
  %v125 = vld [vmem:[%s1 + $0x38] sm:$0xff]
  %v126 = vld [vmem:[%s1 + $0x40] sm:$0xff]
  %v127 = vld [vmem:[%s1 + $0x48] sm:$0xff]
  %v128 = vld [vmem:[%s1 + $0x50] sm:$0xff]
  %v129 = vld [vmem:[%s1 + $0x58] sm:$0xff]
  %v130 = vld [vmem:[%s1 + $0x60] sm:$0xff]
  %v131 = vld [vmem:[%s1 + $0x68] sm:$0xff]
  %v132 = vld [vmem:[%s1 + $0x70] sm:$0xff]
  %v133 = vld [vmem:[%s1 + $0x78] sm:$0xff]
  %v134 = vld [vmem:[%s1 + $0x80] sm:$0xff]
  %v135 = vld [vmem:[%s1 + $0x88] sm:$0xff]
  %v136 = vld [vmem:[%s1 + $0x90] sm:$0xff]
  %v137 = vld [vmem:[%s1 + $0x98] sm:$0xff]
  %v138 = vld [vmem:[%s1 + $0xa0] sm:$0xff]
  %v139 = vld [vmem:[%s1 + $0xa8] sm:$0xff]
  %v140 = vld [vmem:[%s1 + $0xb0] sm:$0xff]
  %v141 = vld [vmem:[%s1 + $0xb8] sm:$0xff]
  %v142 = vld [vmem:[%s1 + $0xc0] sm:$0xff]
  %v143 = vld [vmem:[%s1 + $0xc8] sm:$0xff]
  %v144 = vld [vmem:[%s1 + $0xd0] sm:$0xff]
  %v145 = vld [vmem:[%s1 + $0xd8] sm:$0xff]
  %v146 = vld [vmem:[%s1 + $0xe0] sm:$0xff]
  %v147 = vld [vmem:[%s1 + $0xe8] sm:$0xff]
  %v148 = vld [vmem:[%s1 + $0xf0] sm:$0xff]
  %v149 = vld [vmem:[%s1 + $0xf8] sm:$0xff]
  %v150 = vld [vmem:[%s1 + $0x100] sm:$0xff]
  %v151 = vld [vmem:[%s1 + $0x108] sm:$0xff]
  %v152 = vld [vmem:[%s1 + $0x110] sm:$0xff]
  %v153 = vld [vmem:[%s1 + $0x118] sm:$0xff]
  %v154 = vld [vmem:[%s1 + $0x120] sm:$0xff]
  %v155 = vld [vmem:[%s1 + $0x128] sm:$0xff]
  %v156 = vld [vmem:[%s1 + $0x130] sm:$0xff]
  %v157 = vld [vmem:[%s1 + $0x138] sm:$0xff]
  %v158 = vld [vmem:[%s1 + $0x140] sm:$0xff]
  %v159 = vld [vmem:[%s1 + $0x148] sm:$0xff]
  %v160 = vld [vmem:[%s1 + $0x150] sm:$0xff]
  %v161 = vld [vmem:[%s1 + $0x158] sm:$0xff]
  %v162 = vld [vmem:[%s1 + $0x160] sm:$0xff]
  %v163 = vld [vmem:[%s1 + $0x168] sm:$0xff]
  %v164 = vld [vmem:[%s1 + $0x170] sm:$0xff]
  %v165 = vld [vmem:[%s1 + $0x178] sm:$0xff]
  %v166 = vld [vmem:[%s1 + $0x180] sm:$0xff]
  %v167 = vld [vmem:[%s1 + $0x188] sm:$0xff]
  %v168 = vld [vmem:[%s1 + $0x190] sm:$0xff]
  %v169 = vld [vmem:[%s1 + $0x198] sm:$0xff]
  %v170 = vld [vmem:[%s1 + $0x1a0] sm:$0xff]
  %v171 = vld [vmem:[%s1 + $0x1a8] sm:$0xff]
  %v172 = vld [vmem:[%s1 + $0x1b0] sm:$0xff]
  %v173 = vld [vmem:[%s1 + $0x1b8] sm:$0xff]
  %v174 = vld [vmem:[%s1 + $0x1c0] sm:$0xff]
  %v175 = vld [vmem:[%s1 + $0x1c8] sm:$0xff]
  %v176 = vld [vmem:[%s1 + $0x1d0] sm:$0xff]
  %v177 = vld [vmem:[%s1 + $0x1d8] sm:$0xff]
  %v178 = vld [vmem:[%s1 + $0x1e0] sm:$0xff]
  %v179 = vld [vmem:[%s1 + $0x1e8] sm:$0xff]
  %v180 = vld [vmem:[%s1 + $0x1f0] sm:$0xff]
  %v181 = vld [vmem:[%s1 + $0x1f8] sm:$0xff]
  %v182 = vld [vmem:[%s1 + $0x200] sm:$0xff]
  %v183 = vld [vmem:[%s1 + $0x208] sm:$0xff]
  %v184 = vld [vmem:[%s1 + $0x210] sm:$0xff]
  %v185 = vld [vmem:[%s1 + $0x218] sm:$0xff]
  %v186 = vld [vmem:[%s1 + $0x220] sm:$0xff]
  %v187 = vld [vmem:[%s1 + $0x228] sm:$0xff]
  %v188 = vld [vmem:[%s1 + $0x230] sm:$0xff]
  %v189 = vld [vmem:[%s1 + $0x238] sm:$0xff]
  %v190 = vld [vmem:[%s1 + $0x240] sm:$0xff]
  %v191 = vld [vmem:[%s1 + $0x248] sm:$0xff]
  %v192 = vld [vmem:[%s1 + $0x250] sm:$0xff]
  %v193 = vld [vmem:[%s1 + $0x258] sm:$0xff]
  %v194 = vld [vmem:[%s1 + $0x260] sm:$0xff]
  %v195 = vld [vmem:[%s1 + $0x268] sm:$0xff]
  %v196 = vld [vmem:[%s1 + $0x270] sm:$0xff]
  %v197 = vld [vmem:[%s1 + $0x278] sm:$0xff]
  %v198 = vld [vmem:[%s1 + $0x280] sm:$0xff]
  %v199 = vld [vmem:[%s1 + $0x288] sm:$0xff]
  %v200 = vld [vmem:[%s1 + $0x290] sm:$0xff]
  %v201 = vld [vmem:[%s1 + $0x298] sm:$0xff]
  %v202 = vld [vmem:[%s1 + $0x2a0] sm:$0xff]
  %v203 = vld [vmem:[%s1 + $0x2a8] sm:$0xff]
  %v204 = vld [vmem:[%s1 + $0x2b0] sm:$0xff]
  %v205 = vld [vmem:[%s1 + $0x2b8] sm:$0xff]
  %v206 = vld [vmem:[%s1 + $0x2c0] sm:$0xff]
  %v207 = vld [vmem:[%s1 + $0x2c8] sm:$0xff]
  %v208 = vld [vmem:[%s1 + $0x2d0] sm:$0xff]
  %v209 = vld [vmem:[%s1 + $0x2d8] sm:$0xff]
  %v210 = vld [vmem:[%s1 + $0x2e0] sm:$0xff]
  %v211 = vld [vmem:[%s1 + $0x2e8] sm:$0xff]
  %v212 = vld [vmem:[%s1 + $0x2f0] sm:$0xff]
  %v213 = vld [vmem:[%s1 + $0x2f8] sm:$0xff]
  %v214 = vld [vmem:[%s1 + $0x300] sm:$0xff]
  %v215 = vld [vmem:[%s1 + $0x308] sm:$0xff]
  %v216 = vld [vmem:[%s1 + $0x310] sm:$0xff]
  %v217 = vld [vmem:[%s1 + $0x318] sm:$0xff]
  %v218 = vld [vmem:[%s1 + $0x320] sm:$0xff]
  %v219 = vld [vmem:[%s1 + $0x328] sm:$0xff]
  %v220 = vld [vmem:[%s1 + $0x330] sm:$0xff]
  %v221 = vld [vmem:[%s1 + $0x338] sm:$0xff]
  %v222 = vld [vmem:[%s1 + $0x340] sm:$0xff]
  %v223 = vld [vmem:[%s1 + $0x348] sm:$0xff]
  %v224 = vld [vmem:[%s1 + $0x350] sm:$0xff]
  %v225 = vld [vmem:[%s1 + $0x358] sm:$0xff]
  %v226 = vld [vmem:[%s1 + $0x360] sm:$0xff]
  %v227 = vld [vmem:[%s1 + $0x368] sm:$0xff]
  %v228 = vld [vmem:[%s1 + $0x370] sm:$0xff]
  %v229 = vld [vmem:[%s1 + $0x378] sm:$0xff]
  %v230 = vld [vmem:[%s1 + $0x380] sm:$0xff]
  %v231 = vld [vmem:[%s1 + $0x388] sm:$0xff]
  %v232 = vld [vmem:[%s1 + $0x390] sm:$0xff]
  %v233 = vld [vmem:[%s1 + $0x398] sm:$0xff]
  %v234 = vld [vmem:[%s1 + $0x3a0] sm:$0xff]
  %v235 = vld [vmem:[%s1 + $0x3a8] sm:$0xff]
  %v236 = vld [vmem:[%s1 + $0x3b0] sm:$0xff]
  %v237 = vld [vmem:[%s1 + $0x3b8] sm:$0xff]
  %v238 = vld [vmem:[%s1 + $0x3c0] sm:$0xff]
  %v239 = vld [vmem:[%s1 + $0x3c8] sm:$0xff]
  %v240 = vld [vmem:[%s1 + $0x3d0] sm:$0xff]
  %v241 = vld [vmem:[%s1 + $0x3d8] sm:$0xff]
  %v242 = vld [vmem:[%s1 + $0x3e0] sm:$0xff]
  %v243 = vld [vmem:[%s1 + $0x3e8] sm:$0xff]
  %v244 = vld [vmem:[%s1 + $0x3f0] sm:$0xff]
  %v245 = vld [vmem:[%s1 + $0x3f8] sm:$0xff]
  %v246 = vld [vmem:[%s1 + $0x400] sm:$0xff]
  %v247 = vld [vmem:[%s1 + $0x408] sm:$0xff]
  %v248 = vld [vmem:[%s1 + $0x410] sm:$0xff]
  %v249 = vld [vmem:[%s1 + $0x418] sm:$0xff]
  %v250 = vld [vmem:[%s1 + $0x420] sm:$0xff]
  %v251 = vld [vmem:[%s1 + $0x428] sm:$0xff]
  %v252 = vld [vmem:[%s1 + $0x430] sm:$0xff]
  %v253 = vld [vmem:[%s1 + $0x438] sm:$0xff]
  %v254 = vld [vmem:[%s1 + $0x440] sm:$0xff]
  %v255 = vld [vmem:[%s1 + $0x448] sm:$0xff]
  %v256 = vld [vmem:[%s1 + $0x450] sm:$0xff]
  %v257 = vld [vmem:[%s1 + $0x458] sm:$0xff]
  %v258 = vld [vmem:[%s1 + $0x460] sm:$0xff]
  %v259 = vld [vmem:[%s1 + $0x468] sm:$0xff]
  %v260 = vld [vmem:[%s1 + $0x470] sm:$0xff]
  %v261 = vld [vmem:[%s1 + $0x478] sm:$0xff]
  %v262 = vld [vmem:[%s1 + $0x480] sm:$0xff]
  %v263 = vld [vmem:[%s1 + $0x488] sm:$0xff]
  %v264 = vld [vmem:[%s1 + $0x490] sm:$0xff]
  %v265 = vld [vmem:[%s1 + $0x498] sm:$0xff]
  %v266 = vld [vmem:[%s1 + $0x4a0] sm:$0xff]
  %v267 = vld [vmem:[%s1 + $0x4a8] sm:$0xff]
  %v268 = vld [vmem:[%s1 + $0x4b0] sm:$0xff]
  %v269 = vld [vmem:[%s1 + $0x4b8] sm:$0xff]
  %v270 = vld [vmem:[%s1 + $0x4c0] sm:$0xff]
  %v271 = vld [vmem:[%s1 + $0x4c8] sm:$0xff]
  %v272 = vld [vmem:[%s1 + $0x4d0] sm:$0xff]
  %v273 = vld [vmem:[%s1 + $0x4d8] sm:$0xff]
  %v274 = vld [vmem:[%s1 + $0x4e0] sm:$0xff]
  %v275 = vld [vmem:[%s1 + $0x4e8] sm:$0xff]
  %v276 = vld [vmem:[%s1 + $0x4f0] sm:$0xff]
  %v277 = vld [vmem:[%s1 + $0x4f8] sm:$0xff]
  %v278 = vld [vmem:[%s1 + $0x500] sm:$0xff]
  %v279 = vld [vmem:[%s1 + $0x508] sm:$0xff]
  %v280 = vld [vmem:[%s1 + $0x510] sm:$0xff]
  %v281 = vld [vmem:[%s1 + $0x518] sm:$0xff]
  %v282 = vld [vmem:[%s1 + $0x520] sm:$0xff]
  %v283 = vld [vmem:[%s1 + $0x528] sm:$0xff]
  %v284 = vld [vmem:[%s1 + $0x530] sm:$0xff]
  %v285 = vld [vmem:[%s1 + $0x538] sm:$0xff]
  %v286 = vld [vmem:[%s1 + $0x540] sm:$0xff]
  %v287 = vld [vmem:[%s1 + $0x548] sm:$0xff]
  %v288 = vld [vmem:[%s1 + $0x550] sm:$0xff]
  %v289 = vld [vmem:[%s1 + $0x558] sm:$0xff]
  %v290 = vld [vmem:[%s1 + $0x560] sm:$0xff]
  %v291 = vld [vmem:[%s1 + $0x568] sm:$0xff]
  %v292 = vld [vmem:[%s1 + $0x570] sm:$0xff]
  %v293 = vld [vmem:[%s1 + $0x578] sm:$0xff]
  %v294 = vld [vmem:[%s1 + $0x580] sm:$0xff]
  %v295 = vld [vmem:[%s1 + $0x588] sm:$0xff]
  %v296 = vld [vmem:[%s1 + $0x590] sm:$0xff]
  %v297 = vld [vmem:[%s1 + $0x598] sm:$0xff]
  %v298 = vld [vmem:[%s1 + $0x5a0] sm:$0xff]
  %v299 = vld [vmem:[%s1 + $0x5a8] sm:$0xff]
  %v300 = vld [vmem:[%s1 + $0x5b0] sm:$0xff]
  %v301 = vld [vmem:[%s1 + $0x5b8] sm:$0xff]
  %v302 = vld [vmem:[%s1 + $0x5c0] sm:$0xff]
  %v303 = vld [vmem:[%s1 + $0x5c8] sm:$0xff]
  %v304 = vld [vmem:[%s1 + $0x5d0] sm:$0xff]
  %v305 = vld [vmem:[%s1 + $0x5d8] sm:$0xff]
  %v306 = vld [vmem:[%s1 + $0x5e0] sm:$0xff]
  %v307 = vld [vmem:[%s1 + $0x5e8] sm:$0xff]
  %v308 = vld [vmem:[%s1 + $0x5f0] sm:$0xff]
  %v309 = vld [vmem:[%s1 + $0x5f8] sm:$0xff]
  %v310 = vld [vmem:[%s1 + $0x600] sm:$0xff]
  %v311 = vld [vmem:[%s1 + $0x608] sm:$0xff]
  %v312 = vld [vmem:[%s1 + $0x610] sm:$0xff]
  %v313 = vld [vmem:[%s1 + $0x618] sm:$0xff]
  %v314 = vld [vmem:[%s1 + $0x620] sm:$0xff]
  %v315 = vld [vmem:[%s1 + $0x628] sm:$0xff]
  %v316 = vld [vmem:[%s1 + $0x630] sm:$0xff]
  %v317 = vld [vmem:[%s1 + $0x638] sm:$0xff]
  %v318 = vld [vmem:[%s1 + $0x640] sm:$0xff]
  %v319 = vld [vmem:[%s1 + $0x648] sm:$0xff]
  %v320 = vld [vmem:[%s1 + $0x650] sm:$0xff]
  %v321 = vld [vmem:[%s1 + $0x658] sm:$0xff]
  %v322 = vld [vmem:[%s1 + $0x660] sm:$0xff]
  %v323 = vld [vmem:[%s1 + $0x668] sm:$0xff]
  %v324 = vld [vmem:[%s1 + $0x670] sm:$0xff]
  %v325 = vld [vmem:[%s1 + $0x678] sm:$0xff]
  %v326 = vld [vmem:[%s1 + $0x680] sm:$0xff]
  %v327 = vld [vmem:[%s1 + $0x688] sm:$0xff]
  %v328 = vld [vmem:[%s1 + $0x690] sm:$0xff]
  %v329 = vld [vmem:[%s1 + $0x698] sm:$0xff]
  %v330 = vld [vmem:[%s1 + $0x6a0] sm:$0xff]
  %v331 = vld [vmem:[%s1 + $0x6a8] sm:$0xff]
  %v332 = vld [vmem:[%s1 + $0x6b0] sm:$0xff]
  %v333 = vld [vmem:[%s1 + $0x6b8] sm:$0xff]
  %v334 = vld [vmem:[%s1 + $0x6c0] sm:$0xff]
  %v335 = vld [vmem:[%s1 + $0x6c8] sm:$0xff]
  %v336 = vld [vmem:[%s1 + $0x6d0] sm:$0xff]
  %v337 = vld [vmem:[%s1 + $0x6d8] sm:$0xff]
  %v338 = vld [vmem:[%s1 + $0x6e0] sm:$0xff]
  %v339 = vld [vmem:[%s1 + $0x6e8] sm:$0xff]
  %v340 = vld [vmem:[%s1 + $0x6f0] sm:$0xff]
  %v341 = vld [vmem:[%s1 + $0x6f8] sm:$0xff]
  %v342 = vld [vmem:[%s1 + $0x700] sm:$0xff]
  %v343 = vld [vmem:[%s1 + $0x708] sm:$0xff]
  %v344 = vld [vmem:[%s1 + $0x710] sm:$0xff]
  %v345 = vld [vmem:[%s1 + $0x718] sm:$0xff]
  %v346 = vld [vmem:[%s1 + $0x720] sm:$0xff]
  %v347 = vld [vmem:[%s1 + $0x728] sm:$0xff]
  %v348 = vld [vmem:[%s1 + $0x730] sm:$0xff]
  %v349 = vld [vmem:[%s1 + $0x738] sm:$0xff]
  %v350 = vld [vmem:[%s1 + $0x740] sm:$0xff]
  %v351 = vld [vmem:[%s1 + $0x748] sm:$0xff]
  %v352 = vld [vmem:[%s1 + $0x750] sm:$0xff]
  %v353 = vld [vmem:[%s1 + $0x758] sm:$0xff]
  %v354 = vld [vmem:[%s1 + $0x760] sm:$0xff]
  %v355 = vld [vmem:[%s1 + $0x768] sm:$0xff]
  %v356 = vld [vmem:[%s1 + $0x770] sm:$0xff]
  %v357 = vld [vmem:[%s1 + $0x778] sm:$0xff]
  %v358 = vld [vmem:[%s1 + $0x780] sm:$0xff]
  %v359 = vld [vmem:[%s1 + $0x788] sm:$0xff]
  %v360 = vld [vmem:[%s1 + $0x790] sm:$0xff]
  %v361 = vld [vmem:[%s1 + $0x798] sm:$0xff]
  %v362 = vld [vmem:[%s1 + $0x7a0] sm:$0xff]
  %v363 = vld [vmem:[%s1 + $0x7a8] sm:$0xff]
  %v364 = vld [vmem:[%s1 + $0x7b0] sm:$0xff]
  %v365 = vld [vmem:[%s1 + $0x7b8] sm:$0xff]
  %v366 = vld [vmem:[%s1 + $0x7c0] sm:$0xff]
  %v367 = vld [vmem:[%s1 + $0x7c8] sm:$0xff]
  %v368 = vld [vmem:[%s1 + $0x7d0] sm:$0xff]
  %v369 = vld [vmem:[%s1 + $0x7d8] sm:$0xff]
  %v370 = vld [vmem:[%s1 + $0x7e0] sm:$0xff]
  %v371 = vld [vmem:[%s1 + $0x7e8] sm:$0xff]
  %v372 = vld [vmem:[%s1 + $0x7f0] sm:$0xff]
  %v373 = vld [vmem:[%s1 + $0x7f8] sm:$0xff]
  %v374 = vld [vmem:[%s1 + $0x800] sm:$0xff]
  %v375 = vld [vmem:[%s1 + $0x808] sm:$0xff]
  %v376 = vld [vmem:[%s1 + $0x810] sm:$0xff]
  %v377 = vld [vmem:[%s1 + $0x818] sm:$0xff]
  %v378 = vld [vmem:[%s1 + $0x820] sm:$0xff]
  %v379 = vld [vmem:[%s1 + $0x828] sm:$0xff]
  %v380 = vld [vmem:[%s1 + $0x830] sm:$0xff]
  %v381 = vld [vmem:[%s1 + $0x838] sm:$0xff]
  %v382 = vld [vmem:[%s1 + $0x840] sm:$0xff]
  %v383 = vld [vmem:[%s1 + $0x848] sm:$0xff]
  %v384 = vld [vmem:[%s1 + $0x850] sm:$0xff]
  %v385 = vld [vmem:[%s1 + $0x858] sm:$0xff]
  %v386 = vld [vmem:[%s1 + $0x860] sm:$0xff]
  %v387 = vld [vmem:[%s1 + $0x868] sm:$0xff]
  %v388 = vld [vmem:[%s1 + $0x870] sm:$0xff]
  %v389 = vld [vmem:[%s1 + $0x878] sm:$0xff]
  %v390 = vld [vmem:[%s1 + $0x880] sm:$0xff]
  %v391 = vld [vmem:[%s1 + $0x888] sm:$0xff]
  %v392 = vld [vmem:[%s1 + $0x890] sm:$0xff]
  %v393 = vld [vmem:[%s1 + $0x898] sm:$0xff]
  %v394 = vld [vmem:[%s1 + $0x8a0] sm:$0xff]
  %v395 = vld [vmem:[%s1 + $0x8a8] sm:$0xff]
  %v396 = vld [vmem:[%s1 + $0x8b0] sm:$0xff]
  %v397 = vld [vmem:[%s1 + $0x8b8] sm:$0xff]
  %v398 = vld [vmem:[%s1 + $0x8c0] sm:$0xff]
  %v399 = vld [vmem:[%s1 + $0x8c8] sm:$0xff]
  %v400 = vld [vmem:[%s1 + $0x8d0] sm:$0xff]
  %v401 = vld [vmem:[%s1 + $0x8d8] sm:$0xff]
  %v402 = vld [vmem:[%s1 + $0x8e0] sm:$0xff]
  %v403 = vld [vmem:[%s1 + $0x8e8] sm:$0xff]
  %v404 = vld [vmem:[%s1 + $0x8f0] sm:$0xff]
  %v405 = vld [vmem:[%s1 + $0x8f8] sm:$0xff]
  %v406 = vld [vmem:[%s2] sm:$0xf]
  %v408 = vlaneseq
  %v409 = vshrl.u32 %v408, 7
  %v410 = vsub.s32 0, %v409
  %v411 = vrot.slane %v406, %v410
  %v412 = vlaneseq
  %v413 = vshrl.u32 %v412, 7
  %v414 = vsub.s32 1, %v413
  %v415 = vrot.slane %v406, %v414
  %v416 = vlaneseq
  %v417 = vshrl.u32 %v416, 7
  %v418 = vsub.s32 2, %v417
  %v419 = vrot.slane %v406, %v418
  %v420 = vlaneseq
  %v421 = vshrl.u32 %v420, 7
  %v422 = vsub.s32 3, %v421
  %v423 = vrot.slane %v406, %v422
  %v716 = vunpack.c.l.b16 %v118
  %v717 = vunpack.c.h.b16 %v118
  %v718 = vunpack.c.l.b16 %v119
  %v719 = vunpack.c.h.b16 %v119
  %v720 = vunpack.c.l.b16 %v120
  %v721 = vunpack.c.h.b16 %v120
  %v722 = vunpack.c.l.b16 %v121
  %v723 = vunpack.c.h.b16 %v121
  %v724 = vunpack.c.l.b16 %v122
  %v725 = vunpack.c.h.b16 %v122
  %v726 = vunpack.c.l.b16 %v123
  %v727 = vunpack.c.h.b16 %v123
  %v728 = vunpack.c.l.b16 %v124
  %v729 = vunpack.c.h.b16 %v124
  %v730 = vunpack.c.l.b16 %v125
  %v731 = vunpack.c.h.b16 %v125
  %v732 = vunpack.c.l.b16 %v126
  %v733 = vunpack.c.h.b16 %v126
  %v734 = vunpack.c.l.b16 %v127
  %v735 = vunpack.c.h.b16 %v127
  %v736 = vunpack.c.l.b16 %v128
  %v737 = vunpack.c.h.b16 %v128
  %v738 = vunpack.c.l.b16 %v129
  %v739 = vunpack.c.h.b16 %v129
  %v740 = vunpack.c.l.b16 %v130
  %v741 = vunpack.c.h.b16 %v130
  %v742 = vunpack.c.l.b16 %v131
  %v743 = vunpack.c.h.b16 %v131
  %v744 = vunpack.c.l.b16 %v132
  %v745 = vunpack.c.h.b16 %v132
  %v746 = vunpack.c.l.b16 %v133
  %v747 = vunpack.c.h.b16 %v133
  %v748 = vunpack.c.l.b16 %v134
  %v749 = vunpack.c.h.b16 %v134
  %v750 = vunpack.c.l.b16 %v135
  %v751 = vunpack.c.h.b16 %v135
  %v752 = vunpack.c.l.b16 %v136
  %v753 = vunpack.c.h.b16 %v136
  %v754 = vunpack.c.l.b16 %v137
  %v755 = vunpack.c.h.b16 %v137
  %v756 = vunpack.c.l.b16 %v138
  %v757 = vunpack.c.h.b16 %v138
  %v758 = vunpack.c.l.b16 %v139
  %v759 = vunpack.c.h.b16 %v139
  %v760 = vunpack.c.l.b16 %v140
  %v761 = vunpack.c.h.b16 %v140
  %v762 = vunpack.c.l.b16 %v141
  %v763 = vunpack.c.h.b16 %v141
  %v764 = vunpack.c.l.b16 %v142
  %v765 = vunpack.c.h.b16 %v142
  %v766 = vunpack.c.l.b16 %v143
  %v767 = vunpack.c.h.b16 %v143
  %v768 = vunpack.c.l.b16 %v144
  %v769 = vunpack.c.h.b16 %v144
  %v770 = vunpack.c.l.b16 %v145
  %v771 = vunpack.c.h.b16 %v145
  %v772 = vunpack.c.l.b16 %v146
  %v773 = vunpack.c.h.b16 %v146
  %v774 = vunpack.c.l.b16 %v147
  %v775 = vunpack.c.h.b16 %v147
  %v776 = vunpack.c.l.b16 %v148
  %v777 = vunpack.c.h.b16 %v148
  %v778 = vunpack.c.l.b16 %v149
  %v779 = vunpack.c.h.b16 %v149
  %v780 = vunpack.c.l.b16 %v150
  %v781 = vunpack.c.h.b16 %v150
  %v782 = vunpack.c.l.b16 %v151
  %v783 = vunpack.c.h.b16 %v151
  %v784 = vunpack.c.l.b16 %v152
  %v785 = vunpack.c.h.b16 %v152
  %v786 = vunpack.c.l.b16 %v153
  %v787 = vunpack.c.h.b16 %v153
  %v788 = vunpack.c.l.b16 %v154
  %v789 = vunpack.c.h.b16 %v154
  %v790 = vunpack.c.l.b16 %v155
  %v791 = vunpack.c.h.b16 %v155
  %v792 = vunpack.c.l.b16 %v156
  %v793 = vunpack.c.h.b16 %v156
  %v794 = vunpack.c.l.b16 %v157
  %v795 = vunpack.c.h.b16 %v157
  %v796 = vunpack.c.l.b16 %v158
  %v797 = vunpack.c.h.b16 %v158
  %v798 = vunpack.c.l.b16 %v159
  %v799 = vunpack.c.h.b16 %v159
  %v800 = vunpack.c.l.b16 %v160
  %v801 = vunpack.c.h.b16 %v160
  %v802 = vunpack.c.l.b16 %v161
  %v803 = vunpack.c.h.b16 %v161
  %v804 = vunpack.c.l.b16 %v162
  %v805 = vunpack.c.h.b16 %v162
  %v806 = vunpack.c.l.b16 %v163
  %v807 = vunpack.c.h.b16 %v163
  %v808 = vunpack.c.l.b16 %v164
  %v809 = vunpack.c.h.b16 %v164
  %v810 = vunpack.c.l.b16 %v165
  %v811 = vunpack.c.h.b16 %v165
  %v812 = vunpack.c.l.b16 %v166
  %v813 = vunpack.c.h.b16 %v166
  %v814 = vunpack.c.l.b16 %v167
  %v815 = vunpack.c.h.b16 %v167
  %v816 = vunpack.c.l.b16 %v168
  %v817 = vunpack.c.h.b16 %v168
  %v818 = vunpack.c.l.b16 %v169
  %v819 = vunpack.c.h.b16 %v169
  %v820 = vunpack.c.l.b16 %v170
  %v821 = vunpack.c.h.b16 %v170
  %v822 = vunpack.c.l.b16 %v171
  %v823 = vunpack.c.h.b16 %v171
  %v824 = vunpack.c.l.b16 %v172
  %v825 = vunpack.c.h.b16 %v172
  %v826 = vunpack.c.l.b16 %v173
  %v827 = vunpack.c.h.b16 %v173
  %v828 = vunpack.c.l.b16 %v174
  %v829 = vunpack.c.h.b16 %v174
  %v830 = vunpack.c.l.b16 %v175
  %v831 = vunpack.c.h.b16 %v175
  %v832 = vunpack.c.l.b16 %v176
  %v833 = vunpack.c.h.b16 %v176
  %v834 = vunpack.c.l.b16 %v177
  %v835 = vunpack.c.h.b16 %v177
  %v836 = vunpack.c.l.b16 %v178
  %v837 = vunpack.c.h.b16 %v178
  %v838 = vunpack.c.l.b16 %v179
  %v839 = vunpack.c.h.b16 %v179
  %v840 = vunpack.c.l.b16 %v180
  %v841 = vunpack.c.h.b16 %v180
  %v842 = vunpack.c.l.b16 %v181
  %v843 = vunpack.c.h.b16 %v181
  %v844 = vunpack.c.l.b16 %v182
  %v845 = vunpack.c.h.b16 %v182
  %v846 = vunpack.c.l.b16 %v183
  %v847 = vunpack.c.h.b16 %v183
  %v848 = vunpack.c.l.b16 %v184
  %v849 = vunpack.c.h.b16 %v184
  %v850 = vunpack.c.l.b16 %v185
  %v851 = vunpack.c.h.b16 %v185
  %v852 = vunpack.c.l.b16 %v186
  %v853 = vunpack.c.h.b16 %v186
  %v854 = vunpack.c.l.b16 %v187
  %v855 = vunpack.c.h.b16 %v187
  %v856 = vunpack.c.l.b16 %v188
  %v857 = vunpack.c.h.b16 %v188
  %v858 = vunpack.c.l.b16 %v189
  %v859 = vunpack.c.h.b16 %v189
  %v860 = vunpack.c.l.b16 %v190
  %v861 = vunpack.c.h.b16 %v190
  %v862 = vunpack.c.l.b16 %v191
  %v863 = vunpack.c.h.b16 %v191
  %v864 = vunpack.c.l.b16 %v192
  %v865 = vunpack.c.h.b16 %v192
  %v866 = vunpack.c.l.b16 %v193
  %v867 = vunpack.c.h.b16 %v193
  %v868 = vunpack.c.l.b16 %v194
  %v869 = vunpack.c.h.b16 %v194
  %v870 = vunpack.c.l.b16 %v195
  %v871 = vunpack.c.h.b16 %v195
  %v872 = vunpack.c.l.b16 %v196
  %v873 = vunpack.c.h.b16 %v196
  %v874 = vunpack.c.l.b16 %v197
  %v875 = vunpack.c.h.b16 %v197
  %v876 = vunpack.c.l.b16 %v198
  %v877 = vunpack.c.h.b16 %v198
  %v878 = vunpack.c.l.b16 %v199
  %v879 = vunpack.c.h.b16 %v199
  %v880 = vunpack.c.l.b16 %v200
  %v881 = vunpack.c.h.b16 %v200
  %v882 = vunpack.c.l.b16 %v201
  %v883 = vunpack.c.h.b16 %v201
  %v884 = vunpack.c.l.b16 %v202
  %v885 = vunpack.c.h.b16 %v202
  %v886 = vunpack.c.l.b16 %v203
  %v887 = vunpack.c.h.b16 %v203
  %v888 = vunpack.c.l.b16 %v204
  %v889 = vunpack.c.h.b16 %v204
  %v890 = vunpack.c.l.b16 %v205
  %v891 = vunpack.c.h.b16 %v205
  %v892 = vunpack.c.l.b16 %v206
  %v893 = vunpack.c.h.b16 %v206
  %v894 = vunpack.c.l.b16 %v207
  %v895 = vunpack.c.h.b16 %v207
  %v896 = vunpack.c.l.b16 %v208
  %v897 = vunpack.c.h.b16 %v208
  %v898 = vunpack.c.l.b16 %v209
  %v899 = vunpack.c.h.b16 %v209
  %v900 = vunpack.c.l.b16 %v210
  %v901 = vunpack.c.h.b16 %v210
  %v902 = vunpack.c.l.b16 %v211
  %v903 = vunpack.c.h.b16 %v211
  %v904 = vunpack.c.l.b16 %v212
  %v905 = vunpack.c.h.b16 %v212
  %v906 = vunpack.c.l.b16 %v213
  %v907 = vunpack.c.h.b16 %v213
  %v908 = vunpack.c.l.b16 %v214
  %v909 = vunpack.c.h.b16 %v214
  %v910 = vunpack.c.l.b16 %v215
  %v911 = vunpack.c.h.b16 %v215
  %v912 = vunpack.c.l.b16 %v216
  %v913 = vunpack.c.h.b16 %v216
  %v914 = vunpack.c.l.b16 %v217
  %v915 = vunpack.c.h.b16 %v217
  %v916 = vunpack.c.l.b16 %v218
  %v917 = vunpack.c.h.b16 %v218
  %v918 = vunpack.c.l.b16 %v219
  %v919 = vunpack.c.h.b16 %v219
  %v920 = vunpack.c.l.b16 %v220
  %v921 = vunpack.c.h.b16 %v220
  %v922 = vunpack.c.l.b16 %v221
  %v923 = vunpack.c.h.b16 %v221
  %v924 = vunpack.c.l.b16 %v222
  %v925 = vunpack.c.h.b16 %v222
  %v926 = vunpack.c.l.b16 %v223
  %v927 = vunpack.c.h.b16 %v223
  %v928 = vunpack.c.l.b16 %v224
  %v929 = vunpack.c.h.b16 %v224
  %v930 = vunpack.c.l.b16 %v225
  %v931 = vunpack.c.h.b16 %v225
  %v932 = vunpack.c.l.b16 %v226
  %v933 = vunpack.c.h.b16 %v226
  %v934 = vunpack.c.l.b16 %v227
  %v935 = vunpack.c.h.b16 %v227
  %v936 = vunpack.c.l.b16 %v228
  %v937 = vunpack.c.h.b16 %v228
  %v938 = vunpack.c.l.b16 %v229
  %v939 = vunpack.c.h.b16 %v229
  %v940 = vunpack.c.l.b16 %v230
  %v941 = vunpack.c.h.b16 %v230
  %v942 = vunpack.c.l.b16 %v231
  %v943 = vunpack.c.h.b16 %v231
  %v944 = vunpack.c.l.b16 %v232
  %v945 = vunpack.c.h.b16 %v232
  %v946 = vunpack.c.l.b16 %v233
  %v947 = vunpack.c.h.b16 %v233
  %v948 = vunpack.c.l.b16 %v234
  %v949 = vunpack.c.h.b16 %v234
  %v950 = vunpack.c.l.b16 %v235
  %v951 = vunpack.c.h.b16 %v235
  %v952 = vunpack.c.l.b16 %v236
  %v953 = vunpack.c.h.b16 %v236
  %v954 = vunpack.c.l.b16 %v237
  %v955 = vunpack.c.h.b16 %v237
  %v956 = vunpack.c.l.b16 %v238
  %v957 = vunpack.c.h.b16 %v238
  %v958 = vunpack.c.l.b16 %v239
  %v959 = vunpack.c.h.b16 %v239
  %v960 = vunpack.c.l.b16 %v240
  %v961 = vunpack.c.h.b16 %v240
  %v962 = vunpack.c.l.b16 %v241
  %v963 = vunpack.c.h.b16 %v241
  %v964 = vunpack.c.l.b16 %v242
  %v965 = vunpack.c.h.b16 %v242
  %v966 = vunpack.c.l.b16 %v243
  %v967 = vunpack.c.h.b16 %v243
  %v968 = vunpack.c.l.b16 %v244
  %v969 = vunpack.c.h.b16 %v244
  %v970 = vunpack.c.l.b16 %v245
  %v971 = vunpack.c.h.b16 %v245
  %v972 = vunpack.c.l.b16 %v246
  %v973 = vunpack.c.h.b16 %v246
  %v974 = vunpack.c.l.b16 %v247
  %v975 = vunpack.c.h.b16 %v247
  %v976 = vunpack.c.l.b16 %v248
  %v977 = vunpack.c.h.b16 %v248
  %v978 = vunpack.c.l.b16 %v249
  %v979 = vunpack.c.h.b16 %v249
  %v980 = vunpack.c.l.b16 %v250
  %v981 = vunpack.c.h.b16 %v250
  %v982 = vunpack.c.l.b16 %v251
  %v983 = vunpack.c.h.b16 %v251
  %v984 = vunpack.c.l.b16 %v252
  %v985 = vunpack.c.h.b16 %v252
  %v986 = vunpack.c.l.b16 %v253
  %v987 = vunpack.c.h.b16 %v253
  %v988 = vunpack.c.l.b16 %v254
  %v989 = vunpack.c.h.b16 %v254
  %v990 = vunpack.c.l.b16 %v255
  %v991 = vunpack.c.h.b16 %v255
  %v992 = vunpack.c.l.b16 %v256
  %v993 = vunpack.c.h.b16 %v256
  %v994 = vunpack.c.l.b16 %v257
  %v995 = vunpack.c.h.b16 %v257
  %v996 = vunpack.c.l.b16 %v258
  %v997 = vunpack.c.h.b16 %v258
  %v998 = vunpack.c.l.b16 %v259
  %v999 = vunpack.c.h.b16 %v259
  %v1000 = vunpack.c.l.b16 %v260
  %v1001 = vunpack.c.h.b16 %v260
  %v1002 = vunpack.c.l.b16 %v261
  %v1003 = vunpack.c.h.b16 %v261
  %v1004 = vunpack.c.l.b16 %v262
  %v1005 = vunpack.c.h.b16 %v262
  %v1006 = vunpack.c.l.b16 %v263
  %v1007 = vunpack.c.h.b16 %v263
  %v1008 = vunpack.c.l.b16 %v264
  %v1009 = vunpack.c.h.b16 %v264
  %v1010 = vunpack.c.l.b16 %v265
  %v1011 = vunpack.c.h.b16 %v265
  %v1012 = vunpack.c.l.b16 %v266
  %v1013 = vunpack.c.h.b16 %v266
  %v1014 = vunpack.c.l.b16 %v267
  %v1015 = vunpack.c.h.b16 %v267
  %v1016 = vunpack.c.l.b16 %v268
  %v1017 = vunpack.c.h.b16 %v268
  %v1018 = vunpack.c.l.b16 %v269
  %v1019 = vunpack.c.h.b16 %v269
  %v1020 = vunpack.c.l.b16 %v270
  %v1021 = vunpack.c.h.b16 %v270
  %v1022 = vunpack.c.l.b16 %v271
  %v1023 = vunpack.c.h.b16 %v271
  %v1024 = vunpack.c.l.b16 %v272
  %v1025 = vunpack.c.h.b16 %v272
  %v1026 = vunpack.c.l.b16 %v273
  %v1027 = vunpack.c.h.b16 %v273
  %v1028 = vunpack.c.l.b16 %v274
  %v1029 = vunpack.c.h.b16 %v274
  %v1030 = vunpack.c.l.b16 %v275
  %v1031 = vunpack.c.h.b16 %v275
  %v1032 = vunpack.c.l.b16 %v276
  %v1033 = vunpack.c.h.b16 %v276
  %v1034 = vunpack.c.l.b16 %v277
  %v1035 = vunpack.c.h.b16 %v277
  %v1036 = vunpack.c.l.b16 %v278
  %v1037 = vunpack.c.h.b16 %v278
  %v1038 = vunpack.c.l.b16 %v279
  %v1039 = vunpack.c.h.b16 %v279
  %v1040 = vunpack.c.l.b16 %v280
  %v1041 = vunpack.c.h.b16 %v280
  %v1042 = vunpack.c.l.b16 %v281
  %v1043 = vunpack.c.h.b16 %v281
  %v1044 = vunpack.c.l.b16 %v282
  %v1045 = vunpack.c.h.b16 %v282
  %v1046 = vunpack.c.l.b16 %v283
  %v1047 = vunpack.c.h.b16 %v283
  %v1048 = vunpack.c.l.b16 %v284
  %v1049 = vunpack.c.h.b16 %v284
  %v1050 = vunpack.c.l.b16 %v285
  %v1051 = vunpack.c.h.b16 %v285
  %v1052 = vunpack.c.l.b16 %v286
  %v1053 = vunpack.c.h.b16 %v286
  %v1054 = vunpack.c.l.b16 %v287
  %v1055 = vunpack.c.h.b16 %v287
  %v1056 = vunpack.c.l.b16 %v288
  %v1057 = vunpack.c.h.b16 %v288
  %v1058 = vunpack.c.l.b16 %v289
  %v1059 = vunpack.c.h.b16 %v289
  %v1060 = vunpack.c.l.b16 %v290
  %v1061 = vunpack.c.h.b16 %v290
  %v1062 = vunpack.c.l.b16 %v291
  %v1063 = vunpack.c.h.b16 %v291
  %v1064 = vunpack.c.l.b16 %v292
  %v1065 = vunpack.c.h.b16 %v292
  %v1066 = vunpack.c.l.b16 %v293
  %v1067 = vunpack.c.h.b16 %v293
  %v1068 = vunpack.c.l.b16 %v294
  %v1069 = vunpack.c.h.b16 %v294
  %v1070 = vunpack.c.l.b16 %v295
  %v1071 = vunpack.c.h.b16 %v295
  %v1072 = vunpack.c.l.b16 %v296
  %v1073 = vunpack.c.h.b16 %v296
  %v1074 = vunpack.c.l.b16 %v297
  %v1075 = vunpack.c.h.b16 %v297
  %v1076 = vunpack.c.l.b16 %v298
  %v1077 = vunpack.c.h.b16 %v298
  %v1078 = vunpack.c.l.b16 %v299
  %v1079 = vunpack.c.h.b16 %v299
  %v1080 = vunpack.c.l.b16 %v300
  %v1081 = vunpack.c.h.b16 %v300
  %v1082 = vunpack.c.l.b16 %v301
  %v1083 = vunpack.c.h.b16 %v301
  %v1084 = vunpack.c.l.b16 %v302
  %v1085 = vunpack.c.h.b16 %v302
  %v1086 = vunpack.c.l.b16 %v303
  %v1087 = vunpack.c.h.b16 %v303
  %v1088 = vunpack.c.l.b16 %v304
  %v1089 = vunpack.c.h.b16 %v304
  %v1090 = vunpack.c.l.b16 %v305
  %v1091 = vunpack.c.h.b16 %v305
  %v1092 = vunpack.c.l.b16 %v306
  %v1093 = vunpack.c.h.b16 %v306
  %v1094 = vunpack.c.l.b16 %v307
  %v1095 = vunpack.c.h.b16 %v307
  %v1096 = vunpack.c.l.b16 %v308
  %v1097 = vunpack.c.h.b16 %v308
  %v1098 = vunpack.c.l.b16 %v309
  %v1099 = vunpack.c.h.b16 %v309
  %v1100 = vunpack.c.l.b16 %v310
  %v1101 = vunpack.c.h.b16 %v310
  %v1102 = vunpack.c.l.b16 %v311
  %v1103 = vunpack.c.h.b16 %v311
  %v1104 = vunpack.c.l.b16 %v312
  %v1105 = vunpack.c.h.b16 %v312
  %v1106 = vunpack.c.l.b16 %v313
  %v1107 = vunpack.c.h.b16 %v313
  %v1108 = vunpack.c.l.b16 %v314
  %v1109 = vunpack.c.h.b16 %v314
  %v1110 = vunpack.c.l.b16 %v315
  %v1111 = vunpack.c.h.b16 %v315
  %v1112 = vunpack.c.l.b16 %v316
  %v1113 = vunpack.c.h.b16 %v316
  %v1114 = vunpack.c.l.b16 %v317
  %v1115 = vunpack.c.h.b16 %v317
  %v1116 = vunpack.c.l.b16 %v318
  %v1117 = vunpack.c.h.b16 %v318
  %v1118 = vunpack.c.l.b16 %v319
  %v1119 = vunpack.c.h.b16 %v319
  %v1120 = vunpack.c.l.b16 %v320
  %v1121 = vunpack.c.h.b16 %v320
  %v1122 = vunpack.c.l.b16 %v321
  %v1123 = vunpack.c.h.b16 %v321
  %v1124 = vunpack.c.l.b16 %v322
  %v1125 = vunpack.c.h.b16 %v322
  %v1126 = vunpack.c.l.b16 %v323
  %v1127 = vunpack.c.h.b16 %v323
  %v1128 = vunpack.c.l.b16 %v324
  %v1129 = vunpack.c.h.b16 %v324
  %v1130 = vunpack.c.l.b16 %v325
  %v1131 = vunpack.c.h.b16 %v325
  %v1132 = vunpack.c.l.b16 %v326
  %v1133 = vunpack.c.h.b16 %v326
  %v1134 = vunpack.c.l.b16 %v327
  %v1135 = vunpack.c.h.b16 %v327
  %v1136 = vunpack.c.l.b16 %v328
  %v1137 = vunpack.c.h.b16 %v328
  %v1138 = vunpack.c.l.b16 %v329
  %v1139 = vunpack.c.h.b16 %v329
  %v1140 = vunpack.c.l.b16 %v330
  %v1141 = vunpack.c.h.b16 %v330
  %v1142 = vunpack.c.l.b16 %v331
  %v1143 = vunpack.c.h.b16 %v331
  %v1144 = vunpack.c.l.b16 %v332
  %v1145 = vunpack.c.h.b16 %v332
  %v1146 = vunpack.c.l.b16 %v333
  %v1147 = vunpack.c.h.b16 %v333
  %v1148 = vunpack.c.l.b16 %v334
  %v1149 = vunpack.c.h.b16 %v334
  %v1150 = vunpack.c.l.b16 %v335
  %v1151 = vunpack.c.h.b16 %v335
  %v1152 = vunpack.c.l.b16 %v336
  %v1153 = vunpack.c.h.b16 %v336
  %v1154 = vunpack.c.l.b16 %v337
  %v1155 = vunpack.c.h.b16 %v337
  %v1156 = vunpack.c.l.b16 %v338
  %v1157 = vunpack.c.h.b16 %v338
  %v1158 = vunpack.c.l.b16 %v339
  %v1159 = vunpack.c.h.b16 %v339
  %v1160 = vunpack.c.l.b16 %v340
  %v1161 = vunpack.c.h.b16 %v340
  %v1162 = vunpack.c.l.b16 %v341
  %v1163 = vunpack.c.h.b16 %v341
  %v1164 = vunpack.c.l.b16 %v342
  %v1165 = vunpack.c.h.b16 %v342
  %v1166 = vunpack.c.l.b16 %v343
  %v1167 = vunpack.c.h.b16 %v343
  %v1168 = vunpack.c.l.b16 %v344
  %v1169 = vunpack.c.h.b16 %v344
  %v1170 = vunpack.c.l.b16 %v345
  %v1171 = vunpack.c.h.b16 %v345
  %v1172 = vunpack.c.l.b16 %v346
  %v1173 = vunpack.c.h.b16 %v346
  %v1174 = vunpack.c.l.b16 %v347
  %v1175 = vunpack.c.h.b16 %v347
  %v1176 = vunpack.c.l.b16 %v348
  %v1177 = vunpack.c.h.b16 %v348
  %v1178 = vunpack.c.l.b16 %v349
  %v1179 = vunpack.c.h.b16 %v349
  %v1180 = vunpack.c.l.b16 %v350
  %v1181 = vunpack.c.h.b16 %v350
  %v1182 = vunpack.c.l.b16 %v351
  %v1183 = vunpack.c.h.b16 %v351
  %v1184 = vunpack.c.l.b16 %v352
  %v1185 = vunpack.c.h.b16 %v352
  %v1186 = vunpack.c.l.b16 %v353
  %v1187 = vunpack.c.h.b16 %v353
  %v1188 = vunpack.c.l.b16 %v354
  %v1189 = vunpack.c.h.b16 %v354
  %v1190 = vunpack.c.l.b16 %v355
  %v1191 = vunpack.c.h.b16 %v355
  %v1192 = vunpack.c.l.b16 %v356
  %v1193 = vunpack.c.h.b16 %v356
  %v1194 = vunpack.c.l.b16 %v357
  %v1195 = vunpack.c.h.b16 %v357
  %v1196 = vunpack.c.l.b16 %v358
  %v1197 = vunpack.c.h.b16 %v358
  %v1198 = vunpack.c.l.b16 %v359
  %v1199 = vunpack.c.h.b16 %v359
  %v1200 = vunpack.c.l.b16 %v360
  %v1201 = vunpack.c.h.b16 %v360
  %v1202 = vunpack.c.l.b16 %v361
  %v1203 = vunpack.c.h.b16 %v361
  %v1204 = vunpack.c.l.b16 %v362
  %v1205 = vunpack.c.h.b16 %v362
  %v1206 = vunpack.c.l.b16 %v363
  %v1207 = vunpack.c.h.b16 %v363
  %v1208 = vunpack.c.l.b16 %v364
  %v1209 = vunpack.c.h.b16 %v364
  %v1210 = vunpack.c.l.b16 %v365
  %v1211 = vunpack.c.h.b16 %v365
  %v1212 = vunpack.c.l.b16 %v366
  %v1213 = vunpack.c.h.b16 %v366
  %v1214 = vunpack.c.l.b16 %v367
  %v1215 = vunpack.c.h.b16 %v367
  %v1216 = vunpack.c.l.b16 %v368
  %v1217 = vunpack.c.h.b16 %v368
  %v1218 = vunpack.c.l.b16 %v369
  %v1219 = vunpack.c.h.b16 %v369
  %v1220 = vunpack.c.l.b16 %v370
  %v1221 = vunpack.c.h.b16 %v370
  %v1222 = vunpack.c.l.b16 %v371
  %v1223 = vunpack.c.h.b16 %v371
  %v1224 = vunpack.c.l.b16 %v372
  %v1225 = vunpack.c.h.b16 %v372
  %v1226 = vunpack.c.l.b16 %v373
  %v1227 = vunpack.c.h.b16 %v373
  %v1228 = vunpack.c.l.b16 %v374
  %v1229 = vunpack.c.h.b16 %v374
  %v1230 = vunpack.c.l.b16 %v375
  %v1231 = vunpack.c.h.b16 %v375
  %v1232 = vunpack.c.l.b16 %v376
  %v1233 = vunpack.c.h.b16 %v376
  %v1234 = vunpack.c.l.b16 %v377
  %v1235 = vunpack.c.h.b16 %v377
  %v1236 = vunpack.c.l.b16 %v378
  %v1237 = vunpack.c.h.b16 %v378
  %v1238 = vunpack.c.l.b16 %v379
  %v1239 = vunpack.c.h.b16 %v379
  %v1240 = vunpack.c.l.b16 %v380
  %v1241 = vunpack.c.h.b16 %v380
  %v1242 = vunpack.c.l.b16 %v381
  %v1243 = vunpack.c.h.b16 %v381
  %v1244 = vunpack.c.l.b16 %v382
  %v1245 = vunpack.c.h.b16 %v382
  %v1246 = vunpack.c.l.b16 %v383
  %v1247 = vunpack.c.h.b16 %v383
  %v1248 = vunpack.c.l.b16 %v384
  %v1249 = vunpack.c.h.b16 %v384
  %v1250 = vunpack.c.l.b16 %v385
  %v1251 = vunpack.c.h.b16 %v385
  %v1252 = vunpack.c.l.b16 %v386
  %v1253 = vunpack.c.h.b16 %v386
  %v1254 = vunpack.c.l.b16 %v387
  %v1255 = vunpack.c.h.b16 %v387
  %v1256 = vunpack.c.l.b16 %v388
  %v1257 = vunpack.c.h.b16 %v388
  %v1258 = vunpack.c.l.b16 %v389
  %v1259 = vunpack.c.h.b16 %v389
  %v1260 = vunpack.c.l.b16 %v390
  %v1261 = vunpack.c.h.b16 %v390
  %v1262 = vunpack.c.l.b16 %v391
  %v1263 = vunpack.c.h.b16 %v391
  %v1264 = vunpack.c.l.b16 %v392
  %v1265 = vunpack.c.h.b16 %v392
  %v1266 = vunpack.c.l.b16 %v393
  %v1267 = vunpack.c.h.b16 %v393
  %v1268 = vunpack.c.l.b16 %v394
  %v1269 = vunpack.c.h.b16 %v394
  %v1270 = vunpack.c.l.b16 %v395
  %v1271 = vunpack.c.h.b16 %v395
  %v1272 = vunpack.c.l.b16 %v396
  %v1273 = vunpack.c.h.b16 %v396
  %v1274 = vunpack.c.l.b16 %v397
  %v1275 = vunpack.c.h.b16 %v397
  %v1276 = vunpack.c.l.b16 %v398
  %v1277 = vunpack.c.h.b16 %v398
  %v1278 = vunpack.c.l.b16 %v399
  %v1279 = vunpack.c.h.b16 %v399
  %v1280 = vunpack.c.l.b16 %v400
  %v1281 = vunpack.c.h.b16 %v400
  %v1282 = vunpack.c.l.b16 %v401
  %v1283 = vunpack.c.h.b16 %v401
  %v1284 = vunpack.c.l.b16 %v402
  %v1285 = vunpack.c.h.b16 %v402
  %v1286 = vunpack.c.l.b16 %v403
  %v1287 = vunpack.c.h.b16 %v403
  %v1288 = vunpack.c.l.b16 %v404
  %v1289 = vunpack.c.h.b16 %v404
  %v1290 = vunpack.c.l.b16 %v405
  %v1291 = vunpack.c.h.b16 %v405
  %v1292 = vpack.c.b16 %v720, %v716
  %v1293 = vpack.c.b16 %v721, %v717
  %v1294 = vpack.c.b16 %v722, %v718
  %v1295 = vpack.c.b16 %v723, %v719
  %v1296 = vpack.c.b16 %v728, %v724
  %v1297 = vpack.c.b16 %v729, %v725
  %v1298 = vpack.c.b16 %v730, %v726
  %v1299 = vpack.c.b16 %v731, %v727
  %v1300 = vpack.c.b16 %v736, %v732
  %v1301 = vpack.c.b16 %v737, %v733
  %v1302 = vpack.c.b16 %v738, %v734
  %v1303 = vpack.c.b16 %v739, %v735
  %v1304 = vpack.c.b16 %v744, %v740
  %v1305 = vpack.c.b16 %v745, %v741
  %v1306 = vpack.c.b16 %v746, %v742
  %v1307 = vpack.c.b16 %v747, %v743
  %v1308 = vpack.c.b16 %v752, %v748
  %v1309 = vpack.c.b16 %v753, %v749
  %v1310 = vpack.c.b16 %v754, %v750
  %v1311 = vpack.c.b16 %v755, %v751
  %v1312 = vpack.c.b16 %v760, %v756
  %v1313 = vpack.c.b16 %v761, %v757
  %v1314 = vpack.c.b16 %v762, %v758
  %v1315 = vpack.c.b16 %v763, %v759
  %v1316 = vpack.c.b16 %v768, %v764
  %v1317 = vpack.c.b16 %v769, %v765
  %v1318 = vpack.c.b16 %v770, %v766
  %v1319 = vpack.c.b16 %v771, %v767
  %v1320 = vpack.c.b16 %v776, %v772
  %v1321 = vpack.c.b16 %v777, %v773
  %v1322 = vpack.c.b16 %v778, %v774
  %v1323 = vpack.c.b16 %v779, %v775
  %v1324 = vpack.c.b16 %v784, %v780
  %v1325 = vpack.c.b16 %v785, %v781
  %v1326 = vpack.c.b16 %v786, %v782
  %v1327 = vpack.c.b16 %v787, %v783
  %v1328 = vpack.c.b16 %v792, %v788
  %v1329 = vpack.c.b16 %v793, %v789
  %v1330 = vpack.c.b16 %v794, %v790
  %v1331 = vpack.c.b16 %v795, %v791
  %v1332 = vpack.c.b16 %v800, %v796
  %v1333 = vpack.c.b16 %v801, %v797
  %v1334 = vpack.c.b16 %v802, %v798
  %v1335 = vpack.c.b16 %v803, %v799
  %v1336 = vpack.c.b16 %v808, %v804
  %v1337 = vpack.c.b16 %v809, %v805
  %v1338 = vpack.c.b16 %v810, %v806
  %v1339 = vpack.c.b16 %v811, %v807
  %v1340 = vpack.c.b16 %v816, %v812
  %v1341 = vpack.c.b16 %v817, %v813
  %v1342 = vpack.c.b16 %v818, %v814
  %v1343 = vpack.c.b16 %v819, %v815
  %v1344 = vpack.c.b16 %v824, %v820
  %v1345 = vpack.c.b16 %v825, %v821
  %v1346 = vpack.c.b16 %v826, %v822
  %v1347 = vpack.c.b16 %v827, %v823
  %v1348 = vpack.c.b16 %v832, %v828
  %v1349 = vpack.c.b16 %v833, %v829
  %v1350 = vpack.c.b16 %v834, %v830
  %v1351 = vpack.c.b16 %v835, %v831
  %v1352 = vpack.c.b16 %v840, %v836
  %v1353 = vpack.c.b16 %v841, %v837
  %v1354 = vpack.c.b16 %v842, %v838
  %v1355 = vpack.c.b16 %v843, %v839
  %v1356 = vpack.c.b16 %v848, %v844
  %v1357 = vpack.c.b16 %v849, %v845
  %v1358 = vpack.c.b16 %v850, %v846
  %v1359 = vpack.c.b16 %v851, %v847
  %v1360 = vpack.c.b16 %v856, %v852
  %v1361 = vpack.c.b16 %v857, %v853
  %v1362 = vpack.c.b16 %v858, %v854
  %v1363 = vpack.c.b16 %v859, %v855
  %v1364 = vpack.c.b16 %v864, %v860
  %v1365 = vpack.c.b16 %v865, %v861
  %v1366 = vpack.c.b16 %v866, %v862
  %v1367 = vpack.c.b16 %v867, %v863
  %v1368 = vpack.c.b16 %v872, %v868
  %v1369 = vpack.c.b16 %v873, %v869
  %v1370 = vpack.c.b16 %v874, %v870
  %v1371 = vpack.c.b16 %v875, %v871
  %v1372 = vpack.c.b16 %v880, %v876
  %v1373 = vpack.c.b16 %v881, %v877
  %v1374 = vpack.c.b16 %v882, %v878
  %v1375 = vpack.c.b16 %v883, %v879
  %v1376 = vpack.c.b16 %v888, %v884
  %v1377 = vpack.c.b16 %v889, %v885
  %v1378 = vpack.c.b16 %v890, %v886
  %v1379 = vpack.c.b16 %v891, %v887
  %v1380 = vpack.c.b16 %v896, %v892
  %v1381 = vpack.c.b16 %v897, %v893
  %v1382 = vpack.c.b16 %v898, %v894
  %v1383 = vpack.c.b16 %v899, %v895
  %v1384 = vpack.c.b16 %v904, %v900
  %v1385 = vpack.c.b16 %v905, %v901
  %v1386 = vpack.c.b16 %v906, %v902
  %v1387 = vpack.c.b16 %v907, %v903
  %v1388 = vpack.c.b16 %v912, %v908
  %v1389 = vpack.c.b16 %v913, %v909
  %v1390 = vpack.c.b16 %v914, %v910
  %v1391 = vpack.c.b16 %v915, %v911
  %v1392 = vpack.c.b16 %v920, %v916
  %v1393 = vpack.c.b16 %v921, %v917
  %v1394 = vpack.c.b16 %v922, %v918
  %v1395 = vpack.c.b16 %v923, %v919
  %v1396 = vpack.c.b16 %v928, %v924
  %v1397 = vpack.c.b16 %v929, %v925
  %v1398 = vpack.c.b16 %v930, %v926
  %v1399 = vpack.c.b16 %v931, %v927
  %v1400 = vpack.c.b16 %v936, %v932
  %v1401 = vpack.c.b16 %v937, %v933
  %v1402 = vpack.c.b16 %v938, %v934
  %v1403 = vpack.c.b16 %v939, %v935
  %v1404 = vpack.c.b16 %v944, %v940
  %v1405 = vpack.c.b16 %v945, %v941
  %v1406 = vpack.c.b16 %v946, %v942
  %v1407 = vpack.c.b16 %v947, %v943
  %v1408 = vpack.c.b16 %v952, %v948
  %v1409 = vpack.c.b16 %v953, %v949
  %v1410 = vpack.c.b16 %v954, %v950
  %v1411 = vpack.c.b16 %v955, %v951
  %v1412 = vpack.c.b16 %v960, %v956
  %v1413 = vpack.c.b16 %v961, %v957
  %v1414 = vpack.c.b16 %v962, %v958
  %v1415 = vpack.c.b16 %v963, %v959
  %v1416 = vpack.c.b16 %v968, %v964
  %v1417 = vpack.c.b16 %v969, %v965
  %v1418 = vpack.c.b16 %v970, %v966
  %v1419 = vpack.c.b16 %v971, %v967
  %v1420 = vpack.c.b16 %v976, %v972
  %v1421 = vpack.c.b16 %v977, %v973
  %v1422 = vpack.c.b16 %v978, %v974
  %v1423 = vpack.c.b16 %v979, %v975
  %v1424 = vpack.c.b16 %v984, %v980
  %v1425 = vpack.c.b16 %v985, %v981
  %v1426 = vpack.c.b16 %v986, %v982
  %v1427 = vpack.c.b16 %v987, %v983
  %v1428 = vpack.c.b16 %v992, %v988
  %v1429 = vpack.c.b16 %v993, %v989
  %v1430 = vpack.c.b16 %v994, %v990
  %v1431 = vpack.c.b16 %v995, %v991
  %v1432 = vpack.c.b16 %v1000, %v996
  %v1433 = vpack.c.b16 %v1001, %v997
  %v1434 = vpack.c.b16 %v1002, %v998
  %v1435 = vpack.c.b16 %v1003, %v999
  %v1436 = vpack.c.b16 %v1008, %v1004
  %v1437 = vpack.c.b16 %v1009, %v1005
  %v1438 = vpack.c.b16 %v1010, %v1006
  %v1439 = vpack.c.b16 %v1011, %v1007
  %v1440 = vpack.c.b16 %v1016, %v1012
  %v1441 = vpack.c.b16 %v1017, %v1013
  %v1442 = vpack.c.b16 %v1018, %v1014
  %v1443 = vpack.c.b16 %v1019, %v1015
  %v1444 = vpack.c.b16 %v1024, %v1020
  %v1445 = vpack.c.b16 %v1025, %v1021
  %v1446 = vpack.c.b16 %v1026, %v1022
  %v1447 = vpack.c.b16 %v1027, %v1023
  %v1448 = vpack.c.b16 %v1032, %v1028
  %v1449 = vpack.c.b16 %v1033, %v1029
  %v1450 = vpack.c.b16 %v1034, %v1030
  %v1451 = vpack.c.b16 %v1035, %v1031
  %v1452 = vpack.c.b16 %v1040, %v1036
  %v1453 = vpack.c.b16 %v1041, %v1037
  %v1454 = vpack.c.b16 %v1042, %v1038
  %v1455 = vpack.c.b16 %v1043, %v1039
  %v1456 = vpack.c.b16 %v1048, %v1044
  %v1457 = vpack.c.b16 %v1049, %v1045
  %v1458 = vpack.c.b16 %v1050, %v1046
  %v1459 = vpack.c.b16 %v1051, %v1047
  %v1460 = vpack.c.b16 %v1056, %v1052
  %v1461 = vpack.c.b16 %v1057, %v1053
  %v1462 = vpack.c.b16 %v1058, %v1054
  %v1463 = vpack.c.b16 %v1059, %v1055
  %v1464 = vpack.c.b16 %v1064, %v1060
  %v1465 = vpack.c.b16 %v1065, %v1061
  %v1466 = vpack.c.b16 %v1066, %v1062
  %v1467 = vpack.c.b16 %v1067, %v1063
  %v1468 = vpack.c.b16 %v1072, %v1068
  %v1469 = vpack.c.b16 %v1073, %v1069
  %v1470 = vpack.c.b16 %v1074, %v1070
  %v1471 = vpack.c.b16 %v1075, %v1071
  %v1472 = vpack.c.b16 %v1080, %v1076
  %v1473 = vpack.c.b16 %v1081, %v1077
  %v1474 = vpack.c.b16 %v1082, %v1078
  %v1475 = vpack.c.b16 %v1083, %v1079
  %v1476 = vpack.c.b16 %v1088, %v1084
  %v1477 = vpack.c.b16 %v1089, %v1085
  %v1478 = vpack.c.b16 %v1090, %v1086
  %v1479 = vpack.c.b16 %v1091, %v1087
  %v1480 = vpack.c.b16 %v1096, %v1092
  %v1481 = vpack.c.b16 %v1097, %v1093
  %v1482 = vpack.c.b16 %v1098, %v1094
  %v1483 = vpack.c.b16 %v1099, %v1095
  %v1484 = vpack.c.b16 %v1104, %v1100
  %v1485 = vpack.c.b16 %v1105, %v1101
  %v1486 = vpack.c.b16 %v1106, %v1102
  %v1487 = vpack.c.b16 %v1107, %v1103
  %v1488 = vpack.c.b16 %v1112, %v1108
  %v1489 = vpack.c.b16 %v1113, %v1109
  %v1490 = vpack.c.b16 %v1114, %v1110
  %v1491 = vpack.c.b16 %v1115, %v1111
  %v1492 = vpack.c.b16 %v1120, %v1116
  %v1493 = vpack.c.b16 %v1121, %v1117
  %v1494 = vpack.c.b16 %v1122, %v1118
  %v1495 = vpack.c.b16 %v1123, %v1119
  %v1496 = vpack.c.b16 %v1128, %v1124
  %v1497 = vpack.c.b16 %v1129, %v1125
  %v1498 = vpack.c.b16 %v1130, %v1126
  %v1499 = vpack.c.b16 %v1131, %v1127
  %v1500 = vpack.c.b16 %v1136, %v1132
  %v1501 = vpack.c.b16 %v1137, %v1133
  %v1502 = vpack.c.b16 %v1138, %v1134
  %v1503 = vpack.c.b16 %v1139, %v1135
  %v1504 = vpack.c.b16 %v1144, %v1140
  %v1505 = vpack.c.b16 %v1145, %v1141
  %v1506 = vpack.c.b16 %v1146, %v1142
  %v1507 = vpack.c.b16 %v1147, %v1143
  %v1508 = vpack.c.b16 %v1152, %v1148
  %v1509 = vpack.c.b16 %v1153, %v1149
  %v1510 = vpack.c.b16 %v1154, %v1150
  %v1511 = vpack.c.b16 %v1155, %v1151
  %v1512 = vpack.c.b16 %v1160, %v1156
  %v1513 = vpack.c.b16 %v1161, %v1157
  %v1514 = vpack.c.b16 %v1162, %v1158
  %v1515 = vpack.c.b16 %v1163, %v1159
  %v1516 = vpack.c.b16 %v1168, %v1164
  %v1517 = vpack.c.b16 %v1169, %v1165
  %v1518 = vpack.c.b16 %v1170, %v1166
  %v1519 = vpack.c.b16 %v1171, %v1167
  %v1520 = vpack.c.b16 %v1176, %v1172
  %v1521 = vpack.c.b16 %v1177, %v1173
  %v1522 = vpack.c.b16 %v1178, %v1174
  %v1523 = vpack.c.b16 %v1179, %v1175
  %v1524 = vpack.c.b16 %v1184, %v1180
  %v1525 = vpack.c.b16 %v1185, %v1181
  %v1526 = vpack.c.b16 %v1186, %v1182
  %v1527 = vpack.c.b16 %v1187, %v1183
  %v1528 = vpack.c.b16 %v1192, %v1188
  %v1529 = vpack.c.b16 %v1193, %v1189
  %v1530 = vpack.c.b16 %v1194, %v1190
  %v1531 = vpack.c.b16 %v1195, %v1191
  %v1532 = vpack.c.b16 %v1200, %v1196
  %v1533 = vpack.c.b16 %v1201, %v1197
  %v1534 = vpack.c.b16 %v1202, %v1198
  %v1535 = vpack.c.b16 %v1203, %v1199
  %v1536 = vpack.c.b16 %v1208, %v1204
  %v1537 = vpack.c.b16 %v1209, %v1205
  %v1538 = vpack.c.b16 %v1210, %v1206
  %v1539 = vpack.c.b16 %v1211, %v1207
  %v1540 = vpack.c.b16 %v1216, %v1212
  %v1541 = vpack.c.b16 %v1217, %v1213
  %v1542 = vpack.c.b16 %v1218, %v1214
  %v1543 = vpack.c.b16 %v1219, %v1215
  %v1544 = vpack.c.b16 %v1224, %v1220
  %v1545 = vpack.c.b16 %v1225, %v1221
  %v1546 = vpack.c.b16 %v1226, %v1222
  %v1547 = vpack.c.b16 %v1227, %v1223
  %v1548 = vpack.c.b16 %v1232, %v1228
  %v1549 = vpack.c.b16 %v1233, %v1229
  %v1550 = vpack.c.b16 %v1234, %v1230
  %v1551 = vpack.c.b16 %v1235, %v1231
  %v1552 = vpack.c.b16 %v1240, %v1236
  %v1553 = vpack.c.b16 %v1241, %v1237
  %v1554 = vpack.c.b16 %v1242, %v1238
  %v1555 = vpack.c.b16 %v1243, %v1239
  %v1556 = vpack.c.b16 %v1248, %v1244
  %v1557 = vpack.c.b16 %v1249, %v1245
  %v1558 = vpack.c.b16 %v1250, %v1246
  %v1559 = vpack.c.b16 %v1251, %v1247
  %v1560 = vpack.c.b16 %v1256, %v1252
  %v1561 = vpack.c.b16 %v1257, %v1253
  %v1562 = vpack.c.b16 %v1258, %v1254
  %v1563 = vpack.c.b16 %v1259, %v1255
  %v1564 = vpack.c.b16 %v1264, %v1260
  %v1565 = vpack.c.b16 %v1265, %v1261
  %v1566 = vpack.c.b16 %v1266, %v1262
  %v1567 = vpack.c.b16 %v1267, %v1263
  %v1568 = vpack.c.b16 %v1272, %v1268
  %v1569 = vpack.c.b16 %v1273, %v1269
  %v1570 = vpack.c.b16 %v1274, %v1270
  %v1571 = vpack.c.b16 %v1275, %v1271
  %v1572 = vpack.c.b16 %v1280, %v1276
  %v1573 = vpack.c.b16 %v1281, %v1277
  %v1574 = vpack.c.b16 %v1282, %v1278
  %v1575 = vpack.c.b16 %v1283, %v1279
  %v1576 = vpack.c.b16 %v1288, %v1284
  %v1577 = vpack.c.b16 %v1289, %v1285
  %v1578 = vpack.c.b16 %v1290, %v1286
  %v1579 = vpack.c.b16 %v1291, %v1287
  %1868 = vmatprep.subr.bf16.mxu0 %v1293
  %1869 = vmatpush1.bf16.msra.mxu0 %v1292
  %1870 = vmatprep.subr.bf16.mxu0 %v1297
  %1871 = vmatpush1.bf16.msra.mxu0 %v1296
  %1872 = vmatprep.subr.bf16.mxu0 %v1301
  %1873 = vmatpush1.bf16.msra.mxu0 %v1300
  %1874 = vmatprep.subr.bf16.mxu0 %v1305
  %1875 = vmatpush1.bf16.msra.mxu0 %v1304
  %1876 = vmatprep.subr.bf16.mxu0 %v1309
  %1877 = vmatpush1.bf16.msra.mxu0 %v1308
  %1878 = vmatprep.subr.bf16.mxu0 %v1313
  %1879 = vmatpush1.bf16.msra.mxu0 %v1312
  %1880 = vmatprep.subr.bf16.mxu0 %v1317
  %1881 = vmatpush1.bf16.msra.mxu0 %v1316
  %1882 = vmatprep.subr.bf16.mxu0 %v1321
  %1883 = vmatpush1.bf16.msra.mxu0 %v1320
  %1884 = vmatprep.subr.bf16.mxu0 %v1325
  %1885 = vmatpush1.bf16.msra.mxu0 %v1324
  %1886 = vmatprep.subr.bf16.mxu0 %v1329
  %1887 = vmatpush1.bf16.msra.mxu0 %v1328
  %1888 = vmatprep.subr.bf16.mxu0 %v1333
  %1889 = vmatpush1.bf16.msra.mxu0 %v1332
  %1890 = vmatprep.subr.bf16.mxu0 %v1337
  %1891 = vmatpush1.bf16.msra.mxu0 %v1336
  %1892 = vmatprep.subr.bf16.mxu0 %v1341
  %1893 = vmatpush1.bf16.msra.mxu0 %v1340
  %1894 = vmatprep.subr.bf16.mxu0 %v1345
  %1895 = vmatpush1.bf16.msra.mxu0 %v1344
  %1896 = vmatprep.subr.bf16.mxu0 %v1349
  %1897 = vmatpush1.bf16.msra.mxu0 %v1348
  %1898 = vmatprep.subr.bf16.mxu0 %v1353
  %1899 = vmatpush1.bf16.msra.mxu0 %v1352
  %1900 = vmatprep.mubr.bf16.mxu0 %v83
  %1901 = vmatmul.mubr.bf16.gmra.mrb[0].mxu0 %v82
  %v1902 = vpop.f32.mrb[0].mxu0
  %v1903 = vadd.f32 %v411, %v1902
  %v1904 = vpop.f32.mrb[0].mxu0
  %v1905 = vadd.f32 %v415, %v1904
  %v1906 = vpop.f32.mrb[0].mxu0
  %v1907 = vadd.f32 %v411, %v1906
  %v1908 = vpop.f32.mrb[0].mxu0
  %v1909 = vadd.f32 %v415, %v1908
  %1910 = vmatprep.mubr.bf16.mxu0 %v92
  %1911 = vmatmul.mubr.bf16.gmra.mrb[0].mxu0 %v91
  %v1912 = vpop.f32.mrb[0].mxu0
  %v1913 = vadd.f32 %v411, %v1912
  %v1914 = vpop.f32.mrb[0].mxu0
  %v1915 = vadd.f32 %v415, %v1914
  %v1916 = vpop.f32.mrb[0].mxu0
  %v1917 = vadd.f32 %v411, %v1916
  %v1918 = vpop.f32.mrb[0].mxu0
  %v1919 = vadd.f32 %v415, %v1918
  %1920 = vmatprep.mubr.bf16.mxu0 %v101
  %1921 = vmatmul.mubr.bf16.gmra.mrb[0].mxu0 %v100
  %v1922 = vpop.f32.mrb[0].mxu0
  %v1923 = vadd.f32 %v411, %v1922
  %v1924 = vpop.f32.mrb[0].mxu0
  %v1925 = vadd.f32 %v415, %v1924
  %v1926 = vpop.f32.mrb[0].mxu0
  %v1927 = vadd.f32 %v411, %v1926
  %v1928 = vpop.f32.mrb[0].mxu0
  %v1929 = vadd.f32 %v415, %v1928
  %1930 = vmatprep.mubr.bf16.mxu0 %v110
  %1931 = vmatmul.mubr.bf16.gmra.mrb[0].mxu0 %v109
  %v1932 = vpop.f32.mrb[0].mxu0
  %v1933 = vadd.f32 %v411, %v1932
  %v1934 = vpop.f32.mrb[0].mxu0
  %v1935 = vadd.f32 %v415, %v1934
  %v1936 = vpop.f32.mrb[0].mxu0
  %v1937 = vpop.f32.mrb[0].mxu0
  %1938 = vdwg.mxu0
  %1939 = vmatprep.subr.bf16.mxu0 %v1357
  %1940 = vmatpush1.bf16.msra.mxu0 %v1356
  %1941 = vmatprep.subr.bf16.mxu0 %v1361
  %1942 = vmatpush1.bf16.msra.mxu0 %v1360
  %1943 = vmatprep.subr.bf16.mxu0 %v1365
  %1944 = vmatpush1.bf16.msra.mxu0 %v1364
  %1945 = vmatprep.subr.bf16.mxu0 %v1369
  %1946 = vmatpush1.bf16.msra.mxu0 %v1368
  %1947 = vmatprep.subr.bf16.mxu0 %v1373
  %1948 = vmatpush1.bf16.msra.mxu0 %v1372
  %1949 = vmatprep.subr.bf16.mxu0 %v1377
  %1950 = vmatpush1.bf16.msra.mxu0 %v1376
  %1951 = vmatprep.subr.bf16.mxu0 %v1381
  %1952 = vmatpush1.bf16.msra.mxu0 %v1380
  %1953 = vmatprep.subr.bf16.mxu0 %v1385
  %1954 = vmatpush1.bf16.msra.mxu0 %v1384
  %1955 = vmatprep.subr.bf16.mxu0 %v1389
  %1956 = vmatpush1.bf16.msra.mxu0 %v1388
  %1957 = vmatprep.subr.bf16.mxu0 %v1393
  %1958 = vmatpush1.bf16.msra.mxu0 %v1392
  %1959 = vmatprep.subr.bf16.mxu0 %v1397
  %1960 = vmatpush1.bf16.msra.mxu0 %v1396
  %1961 = vmatprep.subr.bf16.mxu0 %v1401
  %1962 = vmatpush1.bf16.msra.mxu0 %v1400
  %1963 = vmatprep.subr.bf16.mxu0 %v1405
  %1964 = vmatpush1.bf16.msra.mxu0 %v1404
  %1965 = vmatprep.subr.bf16.mxu0 %v1409
  %1966 = vmatpush1.bf16.msra.mxu0 %v1408
  %1967 = vmatprep.subr.bf16.mxu0 %v1413
  %1968 = vmatpush1.bf16.msra.mxu0 %v1412
  %1969 = vmatprep.subr.bf16.mxu0 %v1417
  %1970 = vmatpush1.bf16.msra.mxu0 %v1416
  %1971 = vmatprep.mubr.bf16.mxu0 %v85
  %1972 = vmatmul.mubr.bf16.gmra.mrb[0].mxu0 %v84
  %v1973 = vpop.f32.mrb[0].mxu0
  %v1974 = vadd.f32 %v1903, %v1973
  %v1975 = vpop.f32.mrb[0].mxu0
  %v1976 = vadd.f32 %v1905, %v1975
  %v1977 = vpop.f32.mrb[0].mxu0
  %v1978 = vadd.f32 %v1907, %v1977
  %v1979 = vpop.f32.mrb[0].mxu0
  %v1980 = vadd.f32 %v1909, %v1979
  %1981 = vmatprep.mubr.bf16.mxu0 %v94
  %1982 = vmatmul.mubr.bf16.gmra.mrb[0].mxu0 %v93
  %v1983 = vpop.f32.mrb[0].mxu0
  %v1984 = vadd.f32 %v1913, %v1983
  %v1985 = vpop.f32.mrb[0].mxu0
  %v1986 = vadd.f32 %v1915, %v1985
  %v1987 = vpop.f32.mrb[0].mxu0
  %v1988 = vadd.f32 %v1917, %v1987
  %v1989 = vpop.f32.mrb[0].mxu0
  %v1990 = vadd.f32 %v1919, %v1989
  %1991 = vmatprep.mubr.bf16.mxu0 %v103
  %1992 = vmatmul.mubr.bf16.gmra.mrb[0].mxu0 %v102
  %v1993 = vpop.f32.mrb[0].mxu0
  %v1994 = vadd.f32 %v1923, %v1993
  %v1995 = vpop.f32.mrb[0].mxu0
  %v1996 = vadd.f32 %v1925, %v1995
  %v1997 = vpop.f32.mrb[0].mxu0
  %v1998 = vadd.f32 %v1927, %v1997
  %v1999 = vpop.f32.mrb[0].mxu0
  %v2000 = vadd.f32 %v1929, %v1999
  %2001 = vmatprep.mubr.bf16.mxu0 %v112
  %2002 = vmatmul.mubr.bf16.gmra.mrb[0].mxu0 %v111
  %v2003 = vpop.f32.mrb[0].mxu0
  %v2004 = vadd.f32 %v1933, %v2003
  %v2005 = vpop.f32.mrb[0].mxu0
  %v2006 = vadd.f32 %v1935, %v2005
  %v2007 = vpop.f32.mrb[0].mxu0
  %v2008 = vpop.f32.mrb[0].mxu0
  %2009 = vdwg.mxu0
  %2010 = vmatprep.subr.bf16.mxu0 %v1421
  %2011 = vmatpush1.bf16.msra.mxu0 %v1420
  %2012 = vmatprep.subr.bf16.mxu0 %v1425
  %2013 = vmatpush1.bf16.msra.mxu0 %v1424
  %2014 = vmatprep.subr.bf16.mxu0 %v1429
  %2015 = vmatpush1.bf16.msra.mxu0 %v1428
  %2016 = vmatprep.subr.bf16.mxu0 %v1433
  %2017 = vmatpush1.bf16.msra.mxu0 %v1432
  %2018 = vmatprep.subr.bf16.mxu0 %v1437
  %2019 = vmatpush1.bf16.msra.mxu0 %v1436
  %2020 = vmatprep.subr.bf16.mxu0 %v1441
  %2021 = vmatpush1.bf16.msra.mxu0 %v1440
  %2022 = vmatprep.subr.bf16.mxu0 %v1445
  %2023 = vmatpush1.bf16.msra.mxu0 %v1444
  %2024 = vmatprep.subr.bf16.mxu0 %v1449
  %2025 = vmatpush1.bf16.msra.mxu0 %v1448
  %2026 = vmatprep.subr.bf16.mxu0 %v1453
  %2027 = vmatpush1.bf16.msra.mxu0 %v1452
  %2028 = vmatprep.subr.bf16.mxu0 %v1457
  %2029 = vmatpush1.bf16.msra.mxu0 %v1456
  %2030 = vmatprep.subr.bf16.mxu0 %v1461
  %2031 = vmatpush1.bf16.msra.mxu0 %v1460
  %2032 = vmatprep.subr.bf16.mxu0 %v1465
  %2033 = vmatpush1.bf16.msra.mxu0 %v1464
  %2034 = vmatprep.subr.bf16.mxu0 %v1469
  %2035 = vmatpush1.bf16.msra.mxu0 %v1468
  %2036 = vmatprep.subr.bf16.mxu0 %v1473
  %2037 = vmatpush1.bf16.msra.mxu0 %v1472
  %2038 = vmatprep.subr.bf16.mxu0 %v1477
  %2039 = vmatpush1.bf16.msra.mxu0 %v1476
  %2040 = vmatprep.subr.bf16.mxu0 %v1481
  %2041 = vmatpush1.bf16.msra.mxu0 %v1480
  %2042 = vmatprep.mubr.bf16.mxu0 %v87
  %2043 = vmatmul.mubr.bf16.gmra.mrb[0].mxu0 %v86
  %v2044 = vpop.f32.mrb[0].mxu0
  %v2045 = vadd.f32 %v1974, %v2044
  %v2046 = vpop.f32.mrb[0].mxu0
  %v2047 = vadd.f32 %v1976, %v2046
  %v2048 = vpop.f32.mrb[0].mxu0
  %v2049 = vadd.f32 %v1978, %v2048
  %v2050 = vpop.f32.mrb[0].mxu0
  %v2051 = vadd.f32 %v1980, %v2050
  %2052 = vmatprep.mubr.bf16.mxu0 %v96
  %2053 = vmatmul.mubr.bf16.gmra.mrb[0].mxu0 %v95
  %v2054 = vpop.f32.mrb[0].mxu0
  %v2055 = vadd.f32 %v1984, %v2054
  %v2056 = vpop.f32.mrb[0].mxu0
  %v2057 = vadd.f32 %v1986, %v2056
  %v2058 = vpop.f32.mrb[0].mxu0
  %v2059 = vadd.f32 %v1988, %v2058
  %v2060 = vpop.f32.mrb[0].mxu0
  %v2061 = vadd.f32 %v1990, %v2060
  %2062 = vmatprep.mubr.bf16.mxu0 %v105
  %2063 = vmatmul.mubr.bf16.gmra.mrb[0].mxu0 %v104
  %v2064 = vpop.f32.mrb[0].mxu0
  %v2065 = vadd.f32 %v1994, %v2064
  %v2066 = vpop.f32.mrb[0].mxu0
  %v2067 = vadd.f32 %v1996, %v2066
  %v2068 = vpop.f32.mrb[0].mxu0
  %v2069 = vadd.f32 %v1998, %v2068
  %v2070 = vpop.f32.mrb[0].mxu0
  %v2071 = vadd.f32 %v2000, %v2070
  %2072 = vmatprep.mubr.bf16.mxu0 %v114
  %2073 = vmatmul.mubr.bf16.gmra.mrb[0].mxu0 %v113
  %v2074 = vpop.f32.mrb[0].mxu0
  %v2075 = vadd.f32 %v2004, %v2074
  %v2076 = vpop.f32.mrb[0].mxu0
  %v2077 = vadd.f32 %v2006, %v2076
  %v2078 = vpop.f32.mrb[0].mxu0
  %v2079 = vpop.f32.mrb[0].mxu0
  %2080 = vdwg.mxu0
  %2081 = vmatprep.subr.bf16.mxu0 %v1485
  %2082 = vmatpush1.bf16.msra.mxu0 %v1484
  %2083 = vmatprep.subr.bf16.mxu0 %v1489
  %2084 = vmatpush1.bf16.msra.mxu0 %v1488
  %2085 = vmatprep.subr.bf16.mxu0 %v1493
  %2086 = vmatpush1.bf16.msra.mxu0 %v1492
  %2087 = vmatprep.subr.bf16.mxu0 %v1497
  %2088 = vmatpush1.bf16.msra.mxu0 %v1496
  %2089 = vmatprep.subr.bf16.mxu0 %v1501
  %2090 = vmatpush1.bf16.msra.mxu0 %v1500
  %2091 = vmatprep.subr.bf16.mxu0 %v1505
  %2092 = vmatpush1.bf16.msra.mxu0 %v1504
  %2093 = vmatprep.subr.bf16.mxu0 %v1509
  %2094 = vmatpush1.bf16.msra.mxu0 %v1508
  %2095 = vmatprep.subr.bf16.mxu0 %v1513
  %2096 = vmatpush1.bf16.msra.mxu0 %v1512
  %2097 = vmatprep.subr.bf16.mxu0 %v1517
  %2098 = vmatpush1.bf16.msra.mxu0 %v1516
  %2099 = vmatprep.subr.bf16.mxu0 %v1521
  %2100 = vmatpush1.bf16.msra.mxu0 %v1520
  %2101 = vmatprep.subr.bf16.mxu0 %v1525
  %2102 = vmatpush1.bf16.msra.mxu0 %v1524
  %2103 = vmatprep.subr.bf16.mxu0 %v1529
  %2104 = vmatpush1.bf16.msra.mxu0 %v1528
  %2105 = vmatprep.subr.bf16.mxu0 %v1533
  %2106 = vmatpush1.bf16.msra.mxu0 %v1532
  %2107 = vmatprep.subr.bf16.mxu0 %v1537
  %2108 = vmatpush1.bf16.msra.mxu0 %v1536
  %2109 = vmatprep.subr.bf16.mxu0 %v1541
  %2110 = vmatpush1.bf16.msra.mxu0 %v1540
  %2111 = vmatprep.subr.bf16.mxu0 %v1545
  %2112 = vmatpush1.bf16.msra.mxu0 %v1544
  %2113 = vmatprep.mubr.bf16.mxu0 %v89
  %2114 = vmatmul.mubr.bf16.gmra.mrb[0].mxu0 %v88
  %v2115 = vpop.f32.mrb[0].mxu0
  %v2116 = vadd.f32 %v2045, %v2115
  %v2117 = vpop.f32.mrb[0].mxu0
  %v2118 = vadd.f32 %v2047, %v2117
  %v2119 = vpop.f32.mrb[0].mxu0
  %v2120 = vadd.f32 %v2049, %v2119
  %v2121 = vpop.f32.mrb[0].mxu0
  %v2122 = vadd.f32 %v2051, %v2121
  %2123 = vmatprep.mubr.bf16.mxu0 %v98
  %2124 = vmatmul.mubr.bf16.gmra.mrb[0].mxu0 %v97
  %v2125 = vpop.f32.mrb[0].mxu0
  %v2126 = vadd.f32 %v2055, %v2125
  %v2127 = vpop.f32.mrb[0].mxu0
  %v2128 = vadd.f32 %v2057, %v2127
  %v2129 = vpop.f32.mrb[0].mxu0
  %v2130 = vadd.f32 %v2059, %v2129
  %v2131 = vpop.f32.mrb[0].mxu0
  %v2132 = vadd.f32 %v2061, %v2131
  %2133 = vmatprep.mubr.bf16.mxu0 %v107
  %2134 = vmatmul.mubr.bf16.gmra.mrb[0].mxu0 %v106
  %v2135 = vpop.f32.mrb[0].mxu0
  %v2136 = vadd.f32 %v2065, %v2135
  %v2137 = vpop.f32.mrb[0].mxu0
  %v2138 = vadd.f32 %v2067, %v2137
  %v2139 = vpop.f32.mrb[0].mxu0
  %v2140 = vadd.f32 %v2069, %v2139
  %v2141 = vpop.f32.mrb[0].mxu0
  %v2142 = vadd.f32 %v2071, %v2141
  %2143 = vmatprep.mubr.bf16.mxu0 %v116
  %2144 = vmatmul.mubr.bf16.gmra.mrb[0].mxu0 %v115
  %v2145 = vpop.f32.mrb[0].mxu0
  %v2146 = vadd.f32 %v2075, %v2145
  %v2147 = vpop.f32.mrb[0].mxu0
  %v2148 = vadd.f32 %v2077, %v2147
  %v2149 = vpop.f32.mrb[0].mxu0
  %v2150 = vpop.f32.mrb[0].mxu0
  %2151 = vdwg.mxu0
  %2152 = vmatprep.subr.bf16.mxu0 %v1549
  %2153 = vmatpush1.bf16.msra.mxu0 %v1548
  %2154 = vmatprep.subr.bf16.mxu0 %v1553
  %2155 = vmatpush1.bf16.msra.mxu0 %v1552
  %2156 = vmatprep.subr.bf16.mxu0 %v1557
  %2157 = vmatpush1.bf16.msra.mxu0 %v1556
  %2158 = vmatprep.subr.bf16.mxu0 %v1561
  %2159 = vmatpush1.bf16.msra.mxu0 %v1560
  %2160 = vmatprep.subr.bf16.mxu0 %v1565
  %2161 = vmatpush1.bf16.msra.mxu0 %v1564
  %2162 = vmatprep.subr.bf16.mxu0 %v1569
  %2163 = vmatpush1.bf16.msra.mxu0 %v1568
  %2164 = vmatprep.subr.bf16.mxu0 %v1573
  %2165 = vmatpush1.bf16.msra.mxu0 %v1572
  %2166 = vmatprep.subr.bf16.mxu0 %v1577
  %2167 = vmatpush1.bf16.msra.mxu0 %v1576
  %2168 = vmatprep.subr.bf16.mxu0 0
  %2169 = vmatpush1.bf16.msra.mxu0 0
  %2170 = vmatprep.subr.bf16.mxu0 0
  %2171 = vmatpush1.bf16.msra.mxu0 0
  %2172 = vmatprep.subr.bf16.mxu0 0
  %2173 = vmatpush1.bf16.msra.mxu0 0
  %2174 = vmatprep.subr.bf16.mxu0 0
  %2175 = vmatpush1.bf16.msra.mxu0 0
  %2176 = vmatprep.subr.bf16.mxu0 0
  %2177 = vmatpush1.bf16.msra.mxu0 0
  %2178 = vmatprep.subr.bf16.mxu0 0
  %2179 = vmatpush1.bf16.msra.mxu0 0
  %2180 = vmatprep.subr.bf16.mxu0 0
  %2181 = vmatpush1.bf16.msra.mxu0 0
  %2182 = vmatprep.subr.bf16.mxu0 0
  %2183 = vmatpush1.bf16.msra.mxu0 0
  %2184 = vmatprep.mubr.bf16.mxu0 0
  %2185 = vmatmul.mubr.bf16.gmra.mrb[0].mxu0 %v90
  %v2186 = vpop.f32.mrb[0].mxu0
  %v2187 = vadd.f32 %v2116, %v2186
  %v2188 = vpop.f32.mrb[0].mxu0
  %v2189 = vadd.f32 %v2118, %v2188
  %v2190 = vpop.f32.mrb[0].mxu0
  %v2191 = vadd.f32 %v2120, %v2190
  %v2192 = vpop.f32.mrb[0].mxu0
  %v2193 = vadd.f32 %v2122, %v2192
  %2194 = vmatprep.mubr.bf16.mxu0 0
  %2195 = vmatmul.mubr.bf16.gmra.mrb[0].mxu0 %v99
  %v2196 = vpop.f32.mrb[0].mxu0
  %v2197 = vadd.f32 %v2126, %v2196
  %v2198 = vpop.f32.mrb[0].mxu0
  %v2199 = vadd.f32 %v2128, %v2198
  %v2200 = vpop.f32.mrb[0].mxu0
  %v2201 = vadd.f32 %v2130, %v2200
  %v2202 = vpop.f32.mrb[0].mxu0
  %v2203 = vadd.f32 %v2132, %v2202
  %2204 = vmatprep.mubr.bf16.mxu0 0
  %2205 = vmatmul.mubr.bf16.gmra.mrb[0].mxu0 %v108
  %v2206 = vpop.f32.mrb[0].mxu0
  %v2207 = vadd.f32 %v2136, %v2206
  %v2208 = vpop.f32.mrb[0].mxu0
  %v2209 = vadd.f32 %v2138, %v2208
  %v2210 = vpop.f32.mrb[0].mxu0
  %v2211 = vadd.f32 %v2140, %v2210
  %v2212 = vpop.f32.mrb[0].mxu0
  %v2213 = vadd.f32 %v2142, %v2212
  %2214 = vmatprep.mubr.bf16.mxu0 0
  %2215 = vmatmul.mubr.bf16.gmra.mrb[0].mxu0 %v117
  %v2216 = vpop.f32.mrb[0].mxu0
  %v2217 = vadd.f32 %v2146, %v2216
  %v2218 = vpop.f32.mrb[0].mxu0
  %v2219 = vadd.f32 %v2148, %v2218
  %v2220 = vpop.f32.mrb[0].mxu0
  %v2221 = vpop.f32.mrb[0].mxu0
  %2222 = vdwg.mxu0
  %2223 = vmatprep.subr.bf16.mxu0 %v1295
  %2224 = vmatpush1.bf16.msra.mxu0 %v1294
  %2225 = vmatprep.subr.bf16.mxu0 %v1299
  %2226 = vmatpush1.bf16.msra.mxu0 %v1298
  %2227 = vmatprep.subr.bf16.mxu0 %v1303
  %2228 = vmatpush1.bf16.msra.mxu0 %v1302
  %2229 = vmatprep.subr.bf16.mxu0 %v1307
  %2230 = vmatpush1.bf16.msra.mxu0 %v1306
  %2231 = vmatprep.subr.bf16.mxu0 %v1311
  %2232 = vmatpush1.bf16.msra.mxu0 %v1310
  %2233 = vmatprep.subr.bf16.mxu0 %v1315
  %2234 = vmatpush1.bf16.msra.mxu0 %v1314
  %2235 = vmatprep.subr.bf16.mxu0 %v1319
  %2236 = vmatpush1.bf16.msra.mxu0 %v1318
  %2237 = vmatprep.subr.bf16.mxu0 %v1323
  %2238 = vmatpush1.bf16.msra.mxu0 %v1322
  %2239 = vmatprep.subr.bf16.mxu0 %v1327
  %2240 = vmatpush1.bf16.msra.mxu0 %v1326
  %2241 = vmatprep.subr.bf16.mxu0 %v1331
  %2242 = vmatpush1.bf16.msra.mxu0 %v1330
  %2243 = vmatprep.subr.bf16.mxu0 %v1335
  %2244 = vmatpush1.bf16.msra.mxu0 %v1334
  %2245 = vmatprep.subr.bf16.mxu0 %v1339
  %2246 = vmatpush1.bf16.msra.mxu0 %v1338
  %2247 = vmatprep.subr.bf16.mxu0 %v1343
  %2248 = vmatpush1.bf16.msra.mxu0 %v1342
  %2249 = vmatprep.subr.bf16.mxu0 %v1347
  %2250 = vmatpush1.bf16.msra.mxu0 %v1346
  %2251 = vmatprep.subr.bf16.mxu0 %v1351
  %2252 = vmatpush1.bf16.msra.mxu0 %v1350
  %2253 = vmatprep.subr.bf16.mxu0 %v1355
  %2254 = vmatpush1.bf16.msra.mxu0 %v1354
  %2255 = vmatprep.mubr.bf16.mxu0 %v83
  %2256 = vmatmul.mubr.bf16.gmra.mrb[0].mxu0 %v82
  %v2257 = vpop.f32.mrb[0].mxu0
  %v2258 = vadd.f32 %v419, %v2257
  %v2259 = vpop.f32.mrb[0].mxu0
  %v2260 = vadd.f32 %v423, %v2259
  %v2261 = vpop.f32.mrb[0].mxu0
  %v2262 = vadd.f32 %v419, %v2261
  %v2263 = vpop.f32.mrb[0].mxu0
  %v2264 = vadd.f32 %v423, %v2263
  %2265 = vmatprep.mubr.bf16.mxu0 %v92
  %2266 = vmatmul.mubr.bf16.gmra.mrb[0].mxu0 %v91
  %v2267 = vpop.f32.mrb[0].mxu0
  %v2268 = vadd.f32 %v419, %v2267
  %v2269 = vpop.f32.mrb[0].mxu0
  %v2270 = vadd.f32 %v423, %v2269
  %v2271 = vpop.f32.mrb[0].mxu0
  %v2272 = vadd.f32 %v419, %v2271
  %v2273 = vpop.f32.mrb[0].mxu0
  %v2274 = vadd.f32 %v423, %v2273
  %2275 = vmatprep.mubr.bf16.mxu0 %v101
  %2276 = vmatmul.mubr.bf16.gmra.mrb[0].mxu0 %v100
  %v2277 = vpop.f32.mrb[0].mxu0
  %v2278 = vadd.f32 %v419, %v2277
  %v2279 = vpop.f32.mrb[0].mxu0
  %v2280 = vadd.f32 %v423, %v2279
  %v2281 = vpop.f32.mrb[0].mxu0
  %v2282 = vadd.f32 %v419, %v2281
  %v2283 = vpop.f32.mrb[0].mxu0
  %v2284 = vadd.f32 %v423, %v2283
  %2285 = vmatprep.mubr.bf16.mxu0 %v110
  %2286 = vmatmul.mubr.bf16.gmra.mrb[0].mxu0 %v109
  %v2287 = vpop.f32.mrb[0].mxu0
  %v2288 = vadd.f32 %v419, %v2287
  %v2289 = vpop.f32.mrb[0].mxu0
  %v2290 = vadd.f32 %v423, %v2289
  %v2291 = vpop.f32.mrb[0].mxu0
  %v2292 = vpop.f32.mrb[0].mxu0
  %2293 = vdwg.mxu0
  %2294 = vmatprep.subr.bf16.mxu0 %v1359
  %2295 = vmatpush1.bf16.msra.mxu0 %v1358
  %2296 = vmatprep.subr.bf16.mxu0 %v1363
  %2297 = vmatpush1.bf16.msra.mxu0 %v1362
  %2298 = vmatprep.subr.bf16.mxu0 %v1367
  %2299 = vmatpush1.bf16.msra.mxu0 %v1366
  %2300 = vmatprep.subr.bf16.mxu0 %v1371
  %2301 = vmatpush1.bf16.msra.mxu0 %v1370
  %2302 = vmatprep.subr.bf16.mxu0 %v1375
  %2303 = vmatpush1.bf16.msra.mxu0 %v1374
  %2304 = vmatprep.subr.bf16.mxu0 %v1379
  %2305 = vmatpush1.bf16.msra.mxu0 %v1378
  %2306 = vmatprep.subr.bf16.mxu0 %v1383
  %2307 = vmatpush1.bf16.msra.mxu0 %v1382
  %2308 = vmatprep.subr.bf16.mxu0 %v1387
  %2309 = vmatpush1.bf16.msra.mxu0 %v1386
  %2310 = vmatprep.subr.bf16.mxu0 %v1391
  %2311 = vmatpush1.bf16.msra.mxu0 %v1390
  %2312 = vmatprep.subr.bf16.mxu0 %v1395
  %2313 = vmatpush1.bf16.msra.mxu0 %v1394
  %2314 = vmatprep.subr.bf16.mxu0 %v1399
  %2315 = vmatpush1.bf16.msra.mxu0 %v1398
  %2316 = vmatprep.subr.bf16.mxu0 %v1403
  %2317 = vmatpush1.bf16.msra.mxu0 %v1402
  %2318 = vmatprep.subr.bf16.mxu0 %v1407
  %2319 = vmatpush1.bf16.msra.mxu0 %v1406
  %2320 = vmatprep.subr.bf16.mxu0 %v1411
  %2321 = vmatpush1.bf16.msra.mxu0 %v1410
  %2322 = vmatprep.subr.bf16.mxu0 %v1415
  %2323 = vmatpush1.bf16.msra.mxu0 %v1414
  %2324 = vmatprep.subr.bf16.mxu0 %v1419
  %2325 = vmatpush1.bf16.msra.mxu0 %v1418
  %2326 = vmatprep.mubr.bf16.mxu0 %v85
  %2327 = vmatmul.mubr.bf16.gmra.mrb[0].mxu0 %v84
  %v2328 = vpop.f32.mrb[0].mxu0
  %v2329 = vadd.f32 %v2258, %v2328
  %v2330 = vpop.f32.mrb[0].mxu0
  %v2331 = vadd.f32 %v2260, %v2330
  %v2332 = vpop.f32.mrb[0].mxu0
  %v2333 = vadd.f32 %v2262, %v2332
  %v2334 = vpop.f32.mrb[0].mxu0
  %v2335 = vadd.f32 %v2264, %v2334
  %2336 = vmatprep.mubr.bf16.mxu0 %v94
  %2337 = vmatmul.mubr.bf16.gmra.mrb[0].mxu0 %v93
  %v2338 = vpop.f32.mrb[0].mxu0
  %v2339 = vadd.f32 %v2268, %v2338
  %v2340 = vpop.f32.mrb[0].mxu0
  %v2341 = vadd.f32 %v2270, %v2340
  %v2342 = vpop.f32.mrb[0].mxu0
  %v2343 = vadd.f32 %v2272, %v2342
  %v2344 = vpop.f32.mrb[0].mxu0
  %v2345 = vadd.f32 %v2274, %v2344
  %2346 = vmatprep.mubr.bf16.mxu0 %v103
  %2347 = vmatmul.mubr.bf16.gmra.mrb[0].mxu0 %v102
  %v2348 = vpop.f32.mrb[0].mxu0
  %v2349 = vadd.f32 %v2278, %v2348
  %v2350 = vpop.f32.mrb[0].mxu0
  %v2351 = vadd.f32 %v2280, %v2350
  %v2352 = vpop.f32.mrb[0].mxu0
  %v2353 = vadd.f32 %v2282, %v2352
  %v2354 = vpop.f32.mrb[0].mxu0
  %v2355 = vadd.f32 %v2284, %v2354
  %2356 = vmatprep.mubr.bf16.mxu0 %v112
  %2357 = vmatmul.mubr.bf16.gmra.mrb[0].mxu0 %v111
  %v2358 = vpop.f32.mrb[0].mxu0
  %v2359 = vadd.f32 %v2288, %v2358
  %v2360 = vpop.f32.mrb[0].mxu0
  %v2361 = vadd.f32 %v2290, %v2360
  %v2362 = vpop.f32.mrb[0].mxu0
  %v2363 = vpop.f32.mrb[0].mxu0
  %2364 = vdwg.mxu0
  %2365 = vmatprep.subr.bf16.mxu0 %v1423
  %2366 = vmatpush1.bf16.msra.mxu0 %v1422
  %2367 = vmatprep.subr.bf16.mxu0 %v1427
  %2368 = vmatpush1.bf16.msra.mxu0 %v1426
  %2369 = vmatprep.subr.bf16.mxu0 %v1431
  %2370 = vmatpush1.bf16.msra.mxu0 %v1430
  %2371 = vmatprep.subr.bf16.mxu0 %v1435
  %2372 = vmatpush1.bf16.msra.mxu0 %v1434
  %2373 = vmatprep.subr.bf16.mxu0 %v1439
  %2374 = vmatpush1.bf16.msra.mxu0 %v1438
  %2375 = vmatprep.subr.bf16.mxu0 %v1443
  %2376 = vmatpush1.bf16.msra.mxu0 %v1442
  %2377 = vmatprep.subr.bf16.mxu0 %v1447
  %2378 = vmatpush1.bf16.msra.mxu0 %v1446
  %2379 = vmatprep.subr.bf16.mxu0 %v1451
  %2380 = vmatpush1.bf16.msra.mxu0 %v1450
  %2381 = vmatprep.subr.bf16.mxu0 %v1455
  %2382 = vmatpush1.bf16.msra.mxu0 %v1454
  %2383 = vmatprep.subr.bf16.mxu0 %v1459
  %2384 = vmatpush1.bf16.msra.mxu0 %v1458
  %2385 = vmatprep.subr.bf16.mxu0 %v1463
  %2386 = vmatpush1.bf16.msra.mxu0 %v1462
  %2387 = vmatprep.subr.bf16.mxu0 %v1467
  %2388 = vmatpush1.bf16.msra.mxu0 %v1466
  %2389 = vmatprep.subr.bf16.mxu0 %v1471
  %2390 = vmatpush1.bf16.msra.mxu0 %v1470
  %2391 = vmatprep.subr.bf16.mxu0 %v1475
  %2392 = vmatpush1.bf16.msra.mxu0 %v1474
  %2393 = vmatprep.subr.bf16.mxu0 %v1479
  %2394 = vmatpush1.bf16.msra.mxu0 %v1478
  %2395 = vmatprep.subr.bf16.mxu0 %v1483
  %2396 = vmatpush1.bf16.msra.mxu0 %v1482
  %2397 = vmatprep.mubr.bf16.mxu0 %v87
  %2398 = vmatmul.mubr.bf16.gmra.mrb[0].mxu0 %v86
  %v2399 = vpop.f32.mrb[0].mxu0
  %v2400 = vadd.f32 %v2329, %v2399
  %v2401 = vpop.f32.mrb[0].mxu0
  %v2402 = vadd.f32 %v2331, %v2401
  %v2403 = vpop.f32.mrb[0].mxu0
  %v2404 = vadd.f32 %v2333, %v2403
  %v2405 = vpop.f32.mrb[0].mxu0
  %v2406 = vadd.f32 %v2335, %v2405
  %2407 = vmatprep.mubr.bf16.mxu0 %v96
  %2408 = vmatmul.mubr.bf16.gmra.mrb[0].mxu0 %v95
  %v2409 = vpop.f32.mrb[0].mxu0
  %v2410 = vadd.f32 %v2339, %v2409
  %v2411 = vpop.f32.mrb[0].mxu0
  %v2412 = vadd.f32 %v2341, %v2411
  %v2413 = vpop.f32.mrb[0].mxu0
  %v2414 = vadd.f32 %v2343, %v2413
  %v2415 = vpop.f32.mrb[0].mxu0
  %v2416 = vadd.f32 %v2345, %v2415
  %2417 = vmatprep.mubr.bf16.mxu0 %v105
  %2418 = vmatmul.mubr.bf16.gmra.mrb[0].mxu0 %v104
  %v2419 = vpop.f32.mrb[0].mxu0
  %v2420 = vadd.f32 %v2349, %v2419
  %v2421 = vpop.f32.mrb[0].mxu0
  %v2422 = vadd.f32 %v2351, %v2421
  %v2423 = vpop.f32.mrb[0].mxu0
  %v2424 = vadd.f32 %v2353, %v2423
  %v2425 = vpop.f32.mrb[0].mxu0
  %v2426 = vadd.f32 %v2355, %v2425
  %2427 = vmatprep.mubr.bf16.mxu0 %v114
  %2428 = vmatmul.mubr.bf16.gmra.mrb[0].mxu0 %v113
  %v2429 = vpop.f32.mrb[0].mxu0
  %v2430 = vadd.f32 %v2359, %v2429
  %v2431 = vpop.f32.mrb[0].mxu0
  %v2432 = vadd.f32 %v2361, %v2431
  %v2433 = vpop.f32.mrb[0].mxu0
  %v2434 = vpop.f32.mrb[0].mxu0
  %2435 = vdwg.mxu0
  %2436 = vmatprep.subr.bf16.mxu0 %v1487
  %2437 = vmatpush1.bf16.msra.mxu0 %v1486
  %2438 = vmatprep.subr.bf16.mxu0 %v1491
  %2439 = vmatpush1.bf16.msra.mxu0 %v1490
  %2440 = vmatprep.subr.bf16.mxu0 %v1495
  %2441 = vmatpush1.bf16.msra.mxu0 %v1494
  %2442 = vmatprep.subr.bf16.mxu0 %v1499
  %2443 = vmatpush1.bf16.msra.mxu0 %v1498
  %2444 = vmatprep.subr.bf16.mxu0 %v1503
  %2445 = vmatpush1.bf16.msra.mxu0 %v1502
  %2446 = vmatprep.subr.bf16.mxu0 %v1507
  %2447 = vmatpush1.bf16.msra.mxu0 %v1506
  %2448 = vmatprep.subr.bf16.mxu0 %v1511
  %2449 = vmatpush1.bf16.msra.mxu0 %v1510
  %2450 = vmatprep.subr.bf16.mxu0 %v1515
  %2451 = vmatpush1.bf16.msra.mxu0 %v1514
  %2452 = vmatprep.subr.bf16.mxu0 %v1519
  %2453 = vmatpush1.bf16.msra.mxu0 %v1518
  %2454 = vmatprep.subr.bf16.mxu0 %v1523
  %2455 = vmatpush1.bf16.msra.mxu0 %v1522
  %2456 = vmatprep.subr.bf16.mxu0 %v1527
  %2457 = vmatpush1.bf16.msra.mxu0 %v1526
  %2458 = vmatprep.subr.bf16.mxu0 %v1531
  %2459 = vmatpush1.bf16.msra.mxu0 %v1530
  %2460 = vmatprep.subr.bf16.mxu0 %v1535
  %2461 = vmatpush1.bf16.msra.mxu0 %v1534
  %2462 = vmatprep.subr.bf16.mxu0 %v1539
  %2463 = vmatpush1.bf16.msra.mxu0 %v1538
  %2464 = vmatprep.subr.bf16.mxu0 %v1543
  %2465 = vmatpush1.bf16.msra.mxu0 %v1542
  %2466 = vmatprep.subr.bf16.mxu0 %v1547
  %2467 = vmatpush1.bf16.msra.mxu0 %v1546
  %2468 = vmatprep.mubr.bf16.mxu0 %v89
  %2469 = vmatmul.mubr.bf16.gmra.mrb[0].mxu0 %v88
  %v2470 = vpop.f32.mrb[0].mxu0
  %v2471 = vadd.f32 %v2400, %v2470
  %v2472 = vpop.f32.mrb[0].mxu0
  %v2473 = vadd.f32 %v2402, %v2472
  %v2474 = vpop.f32.mrb[0].mxu0
  %v2475 = vadd.f32 %v2404, %v2474
  %v2476 = vpop.f32.mrb[0].mxu0
  %v2477 = vadd.f32 %v2406, %v2476
  %2478 = vmatprep.mubr.bf16.mxu0 %v98
  %2479 = vmatmul.mubr.bf16.gmra.mrb[0].mxu0 %v97
  %v2480 = vpop.f32.mrb[0].mxu0
  %v2481 = vadd.f32 %v2410, %v2480
  %v2482 = vpop.f32.mrb[0].mxu0
  %v2483 = vadd.f32 %v2412, %v2482
  %v2484 = vpop.f32.mrb[0].mxu0
  %v2485 = vadd.f32 %v2414, %v2484
  %v2486 = vpop.f32.mrb[0].mxu0
  %v2487 = vadd.f32 %v2416, %v2486
  %2488 = vmatprep.mubr.bf16.mxu0 %v107
  %2489 = vmatmul.mubr.bf16.gmra.mrb[0].mxu0 %v106
  %v2490 = vpop.f32.mrb[0].mxu0
  %v2491 = vadd.f32 %v2420, %v2490
  %v2492 = vpop.f32.mrb[0].mxu0
  %v2493 = vadd.f32 %v2422, %v2492
  %v2494 = vpop.f32.mrb[0].mxu0
  %v2495 = vadd.f32 %v2424, %v2494
  %v2496 = vpop.f32.mrb[0].mxu0
  %v2497 = vadd.f32 %v2426, %v2496
  %2498 = vmatprep.mubr.bf16.mxu0 %v116
  %2499 = vmatmul.mubr.bf16.gmra.mrb[0].mxu0 %v115
  %v2500 = vpop.f32.mrb[0].mxu0
  %v2501 = vadd.f32 %v2430, %v2500
  %v2502 = vpop.f32.mrb[0].mxu0
  %v2503 = vadd.f32 %v2432, %v2502
  %v2504 = vpop.f32.mrb[0].mxu0
  %v2505 = vpop.f32.mrb[0].mxu0
  %2506 = vdwg.mxu0
  %2507 = vmatprep.subr.bf16.mxu0 %v1551
  %2508 = vmatpush1.bf16.msra.mxu0 %v1550
  %2509 = vmatprep.subr.bf16.mxu0 %v1555
  %2510 = vmatpush1.bf16.msra.mxu0 %v1554
  %2511 = vmatprep.subr.bf16.mxu0 %v1559
  %2512 = vmatpush1.bf16.msra.mxu0 %v1558
  %2513 = vmatprep.subr.bf16.mxu0 %v1563
  %2514 = vmatpush1.bf16.msra.mxu0 %v1562
  %2515 = vmatprep.subr.bf16.mxu0 %v1567
  %2516 = vmatpush1.bf16.msra.mxu0 %v1566
  %2517 = vmatprep.subr.bf16.mxu0 %v1571
  %2518 = vmatpush1.bf16.msra.mxu0 %v1570
  %2519 = vmatprep.subr.bf16.mxu0 %v1575
  %2520 = vmatpush1.bf16.msra.mxu0 %v1574
  %2521 = vmatprep.subr.bf16.mxu0 %v1579
  %2522 = vmatpush1.bf16.msra.mxu0 %v1578
  %2523 = vmatprep.subr.bf16.mxu0 0
  %2524 = vmatpush1.bf16.msra.mxu0 0
  %2525 = vmatprep.subr.bf16.mxu0 0
  %2526 = vmatpush1.bf16.msra.mxu0 0
  %2527 = vmatprep.subr.bf16.mxu0 0
  %2528 = vmatpush1.bf16.msra.mxu0 0
  %2529 = vmatprep.subr.bf16.mxu0 0
  %2530 = vmatpush1.bf16.msra.mxu0 0
  %2531 = vmatprep.subr.bf16.mxu0 0
  %2532 = vmatpush1.bf16.msra.mxu0 0
  %2533 = vmatprep.subr.bf16.mxu0 0
  %2534 = vmatpush1.bf16.msra.mxu0 0
  %2535 = vmatprep.subr.bf16.mxu0 0
  %2536 = vmatpush1.bf16.msra.mxu0 0
  %2537 = vmatprep.subr.bf16.mxu0 0
  %2538 = vmatpush1.bf16.msra.mxu0 0
  %2539 = vmatprep.mubr.bf16.mxu0 0
  %2540 = vmatmul.mubr.bf16.gmra.mrb[0].mxu0 %v90
  %v2541 = vpop.f32.mrb[0].mxu0
  %v2542 = vadd.f32 %v2471, %v2541
  %v2543 = vpop.f32.mrb[0].mxu0
  %v2544 = vadd.f32 %v2473, %v2543
  %v2545 = vpop.f32.mrb[0].mxu0
  %v2546 = vadd.f32 %v2475, %v2545
  %v2547 = vpop.f32.mrb[0].mxu0
  %v2548 = vadd.f32 %v2477, %v2547
  %2549 = vmatprep.mubr.bf16.mxu0 0
  %2550 = vmatmul.mubr.bf16.gmra.mrb[0].mxu0 %v99
  %v2551 = vpop.f32.mrb[0].mxu0
  %v2552 = vadd.f32 %v2481, %v2551
  %v2553 = vpop.f32.mrb[0].mxu0
  %v2554 = vadd.f32 %v2483, %v2553
  %v2555 = vpop.f32.mrb[0].mxu0
  %v2556 = vadd.f32 %v2485, %v2555
  %v2557 = vpop.f32.mrb[0].mxu0
  %v2558 = vadd.f32 %v2487, %v2557
  %2559 = vmatprep.mubr.bf16.mxu0 0
  %2560 = vmatmul.mubr.bf16.gmra.mrb[0].mxu0 %v108
  %v2561 = vpop.f32.mrb[0].mxu0
  %v2562 = vadd.f32 %v2491, %v2561
  %v2563 = vpop.f32.mrb[0].mxu0
  %v2564 = vadd.f32 %v2493, %v2563
  %v2565 = vpop.f32.mrb[0].mxu0
  %v2566 = vadd.f32 %v2495, %v2565
  %v2567 = vpop.f32.mrb[0].mxu0
  %v2568 = vadd.f32 %v2497, %v2567
  %2569 = vmatprep.mubr.bf16.mxu0 0
  %2570 = vmatmul.mubr.bf16.gmra.mrb[0].mxu0 %v117
  %v2571 = vpop.f32.mrb[0].mxu0
  %v2572 = vadd.f32 %v2501, %v2571
  %v2573 = vpop.f32.mrb[0].mxu0
  %v2574 = vadd.f32 %v2503, %v2573
  %v2575 = vpop.f32.mrb[0].mxu0
  %v2576 = vpop.f32.mrb[0].mxu0
  %2577 = vdwg.mxu0
  %s2578 = sld [smem:[#allocation2]]
  %vm2579 = vcmp.ge.f32.partialorder %v2187, 0.0
  %vm2580 = vcmp.ge.f32.partialorder %v2189, 0.0
  %vm2581 = vcmp.ge.f32.partialorder %v2542, 0.0
  %vm2582 = vcmp.ge.f32.partialorder %v2544, 0.0
  %vm2583 = vcmp.ge.f32.partialorder %v2191, 0.0
  %vm2584 = vcmp.ge.f32.partialorder %v2193, 0.0
  %vm2585 = vcmp.ge.f32.partialorder %v2546, 0.0
  %vm2586 = vcmp.ge.f32.partialorder %v2548, 0.0
  %vm2587 = vcmp.ge.f32.partialorder %v2197, 0.0
  %vm2588 = vcmp.ge.f32.partialorder %v2199, 0.0
  %vm2589 = vcmp.ge.f32.partialorder %v2552, 0.0
  %vm2590 = vcmp.ge.f32.partialorder %v2554, 0.0
  %vm2591 = vcmp.ge.f32.partialorder %v2201, 0.0
  %vm2592 = vcmp.ge.f32.partialorder %v2203, 0.0
  %vm2593 = vcmp.ge.f32.partialorder %v2556, 0.0
  %vm2594 = vcmp.ge.f32.partialorder %v2558, 0.0
  %vm2595 = vcmp.ge.f32.partialorder %v2207, 0.0
  %vm2596 = vcmp.ge.f32.partialorder %v2209, 0.0
  %vm2597 = vcmp.ge.f32.partialorder %v2562, 0.0
  %vm2598 = vcmp.ge.f32.partialorder %v2564, 0.0
  %vm2599 = vcmp.ge.f32.partialorder %v2211, 0.0
  %vm2600 = vcmp.ge.f32.partialorder %v2213, 0.0
  %vm2601 = vcmp.ge.f32.partialorder %v2566, 0.0
  %vm2602 = vcmp.ge.f32.partialorder %v2568, 0.0
  %vm2603 = vcmp.ge.f32.partialorder %v2217, 0.0
  %vm2604 = vcmp.ge.f32.partialorder %v2219, 0.0
  %vm2605 = vcmp.ge.f32.partialorder %v2572, 0.0
  %vm2606 = vcmp.ge.f32.partialorder %v2574, 0.0
  %v2607 = vstv %s2578
  %v2608 = vmul.f32 %v2607, %v2187
  %v2609 = vmul.f32 %v2607, %v2189
  %v2610 = vmul.f32 %v2607, %v2542
  %v2611 = vmul.f32 %v2607, %v2544
  %v2612 = vmul.f32 %v2607, %v2191
  %v2613 = vmul.f32 %v2607, %v2193
  %v2614 = vmul.f32 %v2607, %v2546
  %v2615 = vmul.f32 %v2607, %v2548
  %v2616 = vmul.f32 %v2607, %v2197
  %v2617 = vmul.f32 %v2607, %v2199
  %v2618 = vmul.f32 %v2607, %v2552
  %v2619 = vmul.f32 %v2607, %v2554
  %v2620 = vmul.f32 %v2607, %v2201
  %v2621 = vmul.f32 %v2607, %v2203
  %v2622 = vmul.f32 %v2607, %v2556
  %v2623 = vmul.f32 %v2607, %v2558
  %v2624 = vmul.f32 %v2607, %v2207
  %v2625 = vmul.f32 %v2607, %v2209
  %v2626 = vmul.f32 %v2607, %v2562
  %v2627 = vmul.f32 %v2607, %v2564
  %v2628 = vmul.f32 %v2607, %v2211
  %v2629 = vmul.f32 %v2607, %v2213
  %v2630 = vmul.f32 %v2607, %v2566
  %v2631 = vmul.f32 %v2607, %v2568
  %v2632 = vmul.f32 %v2607, %v2217
  %v2633 = vmul.f32 %v2607, %v2219
  %v2634 = vmul.f32 %v2607, %v2572
  %v2635 = vmul.f32 %v2607, %v2574
  %v2636 = vsel %vm2579, %v2187, %v2608
  %v2637 = vsel %vm2580, %v2189, %v2609
  %v2638 = vsel %vm2581, %v2542, %v2610
  %v2639 = vsel %vm2582, %v2544, %v2611
  %v2640 = vsel %vm2583, %v2191, %v2612
  %v2641 = vsel %vm2584, %v2193, %v2613
  %v2642 = vsel %vm2585, %v2546, %v2614
  %v2643 = vsel %vm2586, %v2548, %v2615
  %v2644 = vsel %vm2587, %v2197, %v2616
  %v2645 = vsel %vm2588, %v2199, %v2617
  %v2646 = vsel %vm2589, %v2552, %v2618
  %v2647 = vsel %vm2590, %v2554, %v2619
  %v2648 = vsel %vm2591, %v2201, %v2620
  %v2649 = vsel %vm2592, %v2203, %v2621
  %v2650 = vsel %vm2593, %v2556, %v2622
  %v2651 = vsel %vm2594, %v2558, %v2623
  %v2652 = vsel %vm2595, %v2207, %v2624
  %v2653 = vsel %vm2596, %v2209, %v2625
  %v2654 = vsel %vm2597, %v2562, %v2626
  %v2655 = vsel %vm2598, %v2564, %v2627
  %v2656 = vsel %vm2599, %v2211, %v2628
  %v2657 = vsel %vm2600, %v2213, %v2629
  %v2658 = vsel %vm2601, %v2566, %v2630
  %v2659 = vsel %vm2602, %v2568, %v2631
  %v2660 = vsel %vm2603, %v2217, %v2632
  %v2661 = vsel %vm2604, %v2219, %v2633
  %v2662 = vsel %vm2605, %v2572, %v2634
  %v2663 = vsel %vm2606, %v2574, %v2635
  %v2664 = vmax.f32 %v2636, %v2637
  %v2665 = vmax.f32 %v2640, %v2641
  %v2666 = vmax.f32 %v2644, %v2645
  %v2667 = vmax.f32 %v2648, %v2649
  %v2668 = vmax.f32 %v2652, %v2653
  %v2669 = vmax.f32 %v2656, %v2657
  %v2670 = vmax.f32 %v2660, %v2661
  %v2671 = vmax.f32 %v2638, %v2639
  %v2672 = vmax.f32 %v2642, %v2643
  %v2673 = vmax.f32 %v2646, %v2647
  %v2674 = vmax.f32 %v2650, %v2651
  %v2675 = vmax.f32 %v2654, %v2655
  %v2676 = vmax.f32 %v2658, %v2659
  %v2677 = vmax.f32 %v2662, %v2663
  %v2678 = vmax.f32 %v2664, %v2671
  %v2679 = vmax.f32 %v2665, %v2672
  %v2680 = vmax.f32 %v2666, %v2673
  %v2681 = vmax.f32 %v2667, %v2674
  %v2682 = vmax.f32 %v2668, %v2675
  %v2683 = vmax.f32 %v2669, %v2676
  %v2684 = vmax.f32 %v2670, %v2677
  %2685 = vst [vmem:[%s4] sm:$0xff] %v2678
  %2686 = vst [vmem:[%s4 + $0x8] sm:$0xff] %v2679
  %2687 = vst [vmem:[%s4 + $0x10] sm:$0xff] %v2680
  %2688 = vst [vmem:[%s4 + $0x18] sm:$0xff] %v2681
  %2689 = vst [vmem:[%s4 + $0x20] sm:$0xff] %v2682
  %2690 = vst [vmem:[%s4 + $0x28] sm:$0xff] %v2683
  %2691 = vst [vmem:[%s4 + $0x30] sm:$0xff] %v2684
  // Predicated region
  $region18: #{embedding_net_rgb_forward.4} parent=0 // pred_check
    _
  $region19: #{embedding_net_rgb_forward.4} parent=0 // pred_check_branch
    %2693 = sbr.rel (0) target = $region21
  $region20: #{embedding_net_rgb_forward.4} parent=0 // pred_region
    _
  $region21: #{embedding_net_rgb_forward.4} parent=0 // pred_fallthru
    _
  // Predicated region
  $region22: #{embedding_net_rgb_forward.4} parent=0 // pred_check
    _
  $region23: #{embedding_net_rgb_forward.4} parent=0 // pred_check_branch
    %2695 = sbr.rel (0) target = $region25
  $region24: #{embedding_net_rgb_forward.4} parent=0 // pred_region
    _
  $region25: #{embedding_net_rgb_forward.4} parent=0 // pred_fallthru
    _

// kernel: embedding_net_rgb_forward.5
$region0: #{embedding_net_rgb_forward.5}
  #allocation0 [shape = 'u32[]', space=smem, size = 0x4, offset = 0x4, fixed_abs, tag = 'smem constant byte address 0x4 - core index']
  #allocation1 [shape = 'u32[144,128]{1,0:T(1,128)}', space=vmem, size = 0x12000, scoped, tag = 'internal scratch']
  %s0 = inlined_call_operand.vmem [shape: f32[8,3200], index: 0, kind: input, shape index: {}]
  %s1 = inlined_call_operand.vmem [shape: bf16[3200,256], index: 1, kind: input, shape index: {}]
  %s2 = inlined_call_operand.vmem [shape: f32[1,256], index: 2, kind: input, shape index: {}]
  %s3 = inlined_call_operand.vmem [shape: bf16[256,256], index: 3, kind: input, shape index: {}]
  %s4 = inlined_call_operand.vmem [shape: f32[1,256], index: 4, kind: input, shape index: {}]
  %s5 = inlined_call_operand.vmem [shape: bf16[256,128], index: 5, kind: input, shape index: {}]
  %s6 = inlined_call_operand.vmem [shape: f32[1,128], index: 6, kind: input, shape index: {}]
  %s7 = inlined_call_operand.vmem [shape: f32[2], index: 7, kind: input, shape index: {}]
  %s8 = inlined_call_operand.vmem [shape: f32[8,128], index: 8, kind: output, shape index: {}]
  %s9 = sld [smem:[#allocation0]]
  $region46: #{embedding_net_rgb_forward.5} parent=0
    _
  %s11 = ssub.s32 1, %s9
  %s12 = scalar_select 0, %s11, %s9
  $region1: #{embedding_net_rgb_forward.5} parent=0
    #allocation2 [shape = 'u8[512]{0}', space=smem, size = 0x200, scoped, tag = 'input window, operand 7, single buffered']
    #allocation3 [shape = 's32[1]{0}', space=sflag, size = 0x4, scoped, tag = 'scoped memory for embedding_net_rgb_forward.5']
    %13 = vsyncpa [#allocation3], 0
    // Predicated region
    $region2: #{embedding_net_rgb_forward.5} parent=1 // pred_check
      _
    $region3: #{embedding_net_rgb_forward.5} parent=1 // pred_check_branch
      %15 = sbr.rel (0) target = $region5
    $region4: #{embedding_net_rgb_forward.5} parent=1 // pred_region
      _
    $region5: #{embedding_net_rgb_forward.5} parent=1 // pred_fallthru
      _
    // Predicated region
    $region6: #{embedding_net_rgb_forward.5} parent=1 // pred_check
      _
    $region7: #{embedding_net_rgb_forward.5} parent=1 // pred_check_branch
      %17 = sbr.rel (0) target = $region9
    $region8: #{embedding_net_rgb_forward.5} parent=1 // pred_region
      _
    $region9: #{embedding_net_rgb_forward.5} parent=1 // pred_fallthru
      _
    // Predicated region
    $region10: #{embedding_net_rgb_forward.5} parent=1 // pred_check
      _
    $region11: #{embedding_net_rgb_forward.5} parent=1 // pred_check_branch
      %19 = sbr.rel (0) target = $region13
    $region12: #{embedding_net_rgb_forward.5} parent=1 // pred_region
      _
    $region13: #{embedding_net_rgb_forward.5} parent=1 // pred_fallthru
      _
    // Predicated region
    $region14: #{embedding_net_rgb_forward.5} parent=1 // pred_check
      _
    $region15: #{embedding_net_rgb_forward.5} parent=1 // pred_check_branch
      %21 = sbr.rel (0) target = $region17
    $region16: #{embedding_net_rgb_forward.5} parent=1 // pred_region
      _
    $region17: #{embedding_net_rgb_forward.5} parent=1 // pred_fallthru
      _
    // Predicated region
    $region18: #{embedding_net_rgb_forward.5} parent=1 // pred_check
      _
    $region19: #{embedding_net_rgb_forward.5} parent=1 // pred_check_branch
      %23 = sbr.rel (0) target = $region21
    $region20: #{embedding_net_rgb_forward.5} parent=1 // pred_region
      _
    $region21: #{embedding_net_rgb_forward.5} parent=1 // pred_fallthru
      _
    // Predicated region
    $region22: #{embedding_net_rgb_forward.5} parent=1 // pred_check
      _
    $region23: #{embedding_net_rgb_forward.5} parent=1 // pred_check_branch
      %25 = sbr.rel (0) target = $region25
    $region24: #{embedding_net_rgb_forward.5} parent=1 // pred_region
      _
    $region25: #{embedding_net_rgb_forward.5} parent=1 // pred_fallthru
      _
    // Predicated region
    $region26: #{embedding_net_rgb_forward.5} parent=1 // pred_check
      _
    $region27: #{embedding_net_rgb_forward.5} parent=1 // pred_check_branch
      %27 = sbr.rel (0) target = $region29
    $region28: #{embedding_net_rgb_forward.5} parent=1 // pred_region
      _
    $region29: #{embedding_net_rgb_forward.5} parent=1 // pred_fallthru
      _
    // Predicated region
    $region30: #{embedding_net_rgb_forward.5} parent=1 // pred_check
      _
    $region31: #{embedding_net_rgb_forward.5} parent=1 // pred_check_branch
      %29 = sbr.rel (0) target = $region33
    $region32: #{embedding_net_rgb_forward.5} parent=1 // pred_region
      %s31 = ssub.s32 16, 16
      %32 = vsyncadd [#allocation3], %s31
      %s34 = sshll.u32 %s7, 4
      %s35 = int_to_ptr.vmem [resolvable:$true] %s34
      %37 = dma.vmem_to_smem %s35, 16, [#allocation2], [#allocation3]
    $region33: #{embedding_net_rgb_forward.5} parent=1 // pred_fallthru
      _
    // Predicated region
    $region34: #{embedding_net_rgb_forward.5} parent=1 // pred_check
      _
    $region35: #{embedding_net_rgb_forward.5} parent=1 // pred_check_branch
      %39 = sbr.rel (0) target = $region37
    $region36: #{embedding_net_rgb_forward.5} parent=1 // pred_region
      %40 = dma.done [#allocation3], 16
    $region37: #{embedding_net_rgb_forward.5} parent=1 // pred_fallthru
      _
    %41 = sfence
    %v43 = vld [vmem:[%s0] sm:$0xff]
    %v44 = vld [vmem:[%s0 + $0x8] sm:$0xff]
    %v45 = vld [vmem:[%s0 + $0x10] sm:$0xff]
    %v46 = vld [vmem:[%s0 + $0x18] sm:$0xff]
    %v47 = vld [vmem:[%s0 + $0x20] sm:$0xff]
    %v48 = vld [vmem:[%s0 + $0x28] sm:$0xff]
    %v49 = vld [vmem:[%s0 + $0x30] sm:$0xff]
    %v50 = vld [vmem:[%s0 + $0x38] sm:$0xff]
    %v51 = vld [vmem:[%s0 + $0x40] sm:$0xff]
    %v52 = vld [vmem:[%s0 + $0x48] sm:$0xff]
    %v53 = vld [vmem:[%s0 + $0x50] sm:$0xff]
    %v54 = vld [vmem:[%s0 + $0x58] sm:$0xff]
    %v55 = vld [vmem:[%s0 + $0x60] sm:$0xff]
    %v56 = vld [vmem:[%s0 + $0x68] sm:$0xff]
    %v57 = vld [vmem:[%s0 + $0x70] sm:$0xff]
    %v58 = vld [vmem:[%s0 + $0x78] sm:$0xff]
    %v59 = vld [vmem:[%s0 + $0x80] sm:$0xff]
    %v60 = vld [vmem:[%s0 + $0x88] sm:$0xff]
    %v61 = vld [vmem:[%s0 + $0x90] sm:$0xff]
    %v62 = vld [vmem:[%s0 + $0x98] sm:$0xff]
    %v63 = vld [vmem:[%s0 + $0xa0] sm:$0xff]
    %v64 = vld [vmem:[%s0 + $0xa8] sm:$0xff]
    %v65 = vld [vmem:[%s0 + $0xb0] sm:$0xff]
    %v66 = vld [vmem:[%s0 + $0xb8] sm:$0xff]
    %v67 = vld [vmem:[%s0 + $0xc0] sm:$0xff]
    %v68 = vpack.c.bf16 %v43, %v43
    %v69 = vpack.c.bf16 %v44, %v44
    %v70 = vpack.c.bf16 %v45, %v45
    %v71 = vpack.c.bf16 %v46, %v46
    %v72 = vpack.c.bf16 %v47, %v47
    %v73 = vpack.c.bf16 %v48, %v48
    %v74 = vpack.c.bf16 %v49, %v49
    %v75 = vpack.c.bf16 %v50, %v50
    %v76 = vpack.c.bf16 %v51, %v51
    %v77 = vpack.c.bf16 %v52, %v52
    %v78 = vpack.c.bf16 %v53, %v53
    %v79 = vpack.c.bf16 %v54, %v54
    %v80 = vpack.c.bf16 %v55, %v55
    %v81 = vpack.c.bf16 %v56, %v56
    %v82 = vpack.c.bf16 %v57, %v57
    %v83 = vpack.c.bf16 %v58, %v58
    %v84 = vpack.c.bf16 %v59, %v59
    %v85 = vpack.c.bf16 %v60, %v60
    %v86 = vpack.c.bf16 %v61, %v61
    %v87 = vpack.c.bf16 %v62, %v62
    %v88 = vpack.c.bf16 %v63, %v63
    %v89 = vpack.c.bf16 %v64, %v64
    %v90 = vpack.c.bf16 %v65, %v65
    %v91 = vpack.c.bf16 %v66, %v66
    %v92 = vpack.c.bf16 %v67, %v67
    %v93 = vld [vmem:[%s1] sm:$0xff]
    %v94 = vld [vmem:[%s1 + $0x8] sm:$0xff]
    %v95 = vld [vmem:[%s1 + $0x10] sm:$0xff]
    %v96 = vld [vmem:[%s1 + $0x18] sm:$0xff]
    %v97 = vld [vmem:[%s1 + $0x20] sm:$0xff]
    %v98 = vld [vmem:[%s1 + $0x28] sm:$0xff]
    %v99 = vld [vmem:[%s1 + $0x30] sm:$0xff]
    %v100 = vld [vmem:[%s1 + $0x38] sm:$0xff]
    %v101 = vld [vmem:[%s1 + $0x40] sm:$0xff]
    %v102 = vld [vmem:[%s1 + $0x48] sm:$0xff]
    %v103 = vld [vmem:[%s1 + $0x50] sm:$0xff]
    %v104 = vld [vmem:[%s1 + $0x58] sm:$0xff]
    %v105 = vld [vmem:[%s1 + $0x60] sm:$0xff]
    %v106 = vld [vmem:[%s1 + $0x68] sm:$0xff]
    %v107 = vld [vmem:[%s1 + $0x70] sm:$0xff]
    %v108 = vld [vmem:[%s1 + $0x78] sm:$0xff]
    %v109 = vld [vmem:[%s1 + $0x80] sm:$0xff]
    %v110 = vld [vmem:[%s1 + $0x88] sm:$0xff]
    %v111 = vld [vmem:[%s1 + $0x90] sm:$0xff]
    %v112 = vld [vmem:[%s1 + $0x98] sm:$0xff]
    %v113 = vld [vmem:[%s1 + $0xa0] sm:$0xff]
    %v114 = vld [vmem:[%s1 + $0xa8] sm:$0xff]
    %v115 = vld [vmem:[%s1 + $0xb0] sm:$0xff]
    %v116 = vld [vmem:[%s1 + $0xb8] sm:$0xff]
    %v117 = vld [vmem:[%s1 + $0xc0] sm:$0xff]
    %v118 = vld [vmem:[%s1 + $0xc8] sm:$0xff]
    %v119 = vld [vmem:[%s1 + $0xd0] sm:$0xff]
    %v120 = vld [vmem:[%s1 + $0xd8] sm:$0xff]
    %v121 = vld [vmem:[%s1 + $0xe0] sm:$0xff]
    %v122 = vld [vmem:[%s1 + $0xe8] sm:$0xff]
    %v123 = vld [vmem:[%s1 + $0xf0] sm:$0xff]
    %v124 = vld [vmem:[%s1 + $0xf8] sm:$0xff]
    %v125 = vld [vmem:[%s1 + $0x100] sm:$0xff]
    %v126 = vld [vmem:[%s1 + $0x108] sm:$0xff]
    %v127 = vld [vmem:[%s1 + $0x110] sm:$0xff]
    %v128 = vld [vmem:[%s1 + $0x118] sm:$0xff]
    %v129 = vld [vmem:[%s1 + $0x120] sm:$0xff]
    %v130 = vld [vmem:[%s1 + $0x128] sm:$0xff]
    %v131 = vld [vmem:[%s1 + $0x130] sm:$0xff]
    %v132 = vld [vmem:[%s1 + $0x138] sm:$0xff]
    %v133 = vld [vmem:[%s1 + $0x140] sm:$0xff]
    %v134 = vld [vmem:[%s1 + $0x148] sm:$0xff]
    %v135 = vld [vmem:[%s1 + $0x150] sm:$0xff]
    %v136 = vld [vmem:[%s1 + $0x158] sm:$0xff]
    %v137 = vld [vmem:[%s1 + $0x160] sm:$0xff]
    %v138 = vld [vmem:[%s1 + $0x168] sm:$0xff]
    %v139 = vld [vmem:[%s1 + $0x170] sm:$0xff]
    %v140 = vld [vmem:[%s1 + $0x178] sm:$0xff]
    %v141 = vld [vmem:[%s1 + $0x180] sm:$0xff]
    %v142 = vld [vmem:[%s1 + $0x188] sm:$0xff]
    %v143 = vld [vmem:[%s1 + $0x190] sm:$0xff]
    %v144 = vld [vmem:[%s1 + $0x198] sm:$0xff]
    %v145 = vld [vmem:[%s1 + $0x1a0] sm:$0xff]
    %v146 = vld [vmem:[%s1 + $0x1a8] sm:$0xff]
    %v147 = vld [vmem:[%s1 + $0x1b0] sm:$0xff]
    %v148 = vld [vmem:[%s1 + $0x1b8] sm:$0xff]
    %v149 = vld [vmem:[%s1 + $0x1c0] sm:$0xff]
    %v150 = vld [vmem:[%s1 + $0x1c8] sm:$0xff]
    %v151 = vld [vmem:[%s1 + $0x1d0] sm:$0xff]
    %v152 = vld [vmem:[%s1 + $0x1d8] sm:$0xff]
    %v153 = vld [vmem:[%s1 + $0x1e0] sm:$0xff]
    %v154 = vld [vmem:[%s1 + $0x1e8] sm:$0xff]
    %v155 = vld [vmem:[%s1 + $0x1f0] sm:$0xff]
    %v156 = vld [vmem:[%s1 + $0x1f8] sm:$0xff]
    %v157 = vld [vmem:[%s1 + $0x200] sm:$0xff]
    %v158 = vld [vmem:[%s1 + $0x208] sm:$0xff]
    %v159 = vld [vmem:[%s1 + $0x210] sm:$0xff]
    %v160 = vld [vmem:[%s1 + $0x218] sm:$0xff]
    %v161 = vld [vmem:[%s1 + $0x220] sm:$0xff]
    %v162 = vld [vmem:[%s1 + $0x228] sm:$0xff]
    %v163 = vld [vmem:[%s1 + $0x230] sm:$0xff]
    %v164 = vld [vmem:[%s1 + $0x238] sm:$0xff]
    %v165 = vld [vmem:[%s1 + $0x240] sm:$0xff]
    %v166 = vld [vmem:[%s1 + $0x248] sm:$0xff]
    %v167 = vld [vmem:[%s1 + $0x250] sm:$0xff]
    %v168 = vld [vmem:[%s1 + $0x258] sm:$0xff]
    %v169 = vld [vmem:[%s1 + $0x260] sm:$0xff]
    %v170 = vld [vmem:[%s1 + $0x268] sm:$0xff]
    %v171 = vld [vmem:[%s1 + $0x270] sm:$0xff]
    %v172 = vld [vmem:[%s1 + $0x278] sm:$0xff]
    %v173 = vld [vmem:[%s1 + $0x280] sm:$0xff]
    %v174 = vld [vmem:[%s1 + $0x288] sm:$0xff]
    %v175 = vld [vmem:[%s1 + $0x290] sm:$0xff]
    %v176 = vld [vmem:[%s1 + $0x298] sm:$0xff]
    %v177 = vld [vmem:[%s1 + $0x2a0] sm:$0xff]
    %v178 = vld [vmem:[%s1 + $0x2a8] sm:$0xff]
    %v179 = vld [vmem:[%s1 + $0x2b0] sm:$0xff]
    %v180 = vld [vmem:[%s1 + $0x2b8] sm:$0xff]
    %v181 = vld [vmem:[%s1 + $0x2c0] sm:$0xff]
    %v182 = vld [vmem:[%s1 + $0x2c8] sm:$0xff]
    %v183 = vld [vmem:[%s1 + $0x2d0] sm:$0xff]
    %v184 = vld [vmem:[%s1 + $0x2d8] sm:$0xff]
    %v185 = vld [vmem:[%s1 + $0x2e0] sm:$0xff]
    %v186 = vld [vmem:[%s1 + $0x2e8] sm:$0xff]
    %v187 = vld [vmem:[%s1 + $0x2f0] sm:$0xff]
    %v188 = vld [vmem:[%s1 + $0x2f8] sm:$0xff]
    %v189 = vld [vmem:[%s1 + $0x300] sm:$0xff]
    %v190 = vld [vmem:[%s1 + $0x308] sm:$0xff]
    %v191 = vld [vmem:[%s1 + $0x310] sm:$0xff]
    %v192 = vld [vmem:[%s1 + $0x318] sm:$0xff]
    %v193 = vld [vmem:[%s1 + $0x320] sm:$0xff]
    %v194 = vld [vmem:[%s1 + $0x328] sm:$0xff]
    %v195 = vld [vmem:[%s1 + $0x330] sm:$0xff]
    %v196 = vld [vmem:[%s1 + $0x338] sm:$0xff]
    %v197 = vld [vmem:[%s1 + $0x340] sm:$0xff]
    %v198 = vld [vmem:[%s1 + $0x348] sm:$0xff]
    %v199 = vld [vmem:[%s1 + $0x350] sm:$0xff]
    %v200 = vld [vmem:[%s1 + $0x358] sm:$0xff]
    %v201 = vld [vmem:[%s1 + $0x360] sm:$0xff]
    %v202 = vld [vmem:[%s1 + $0x368] sm:$0xff]
    %v203 = vld [vmem:[%s1 + $0x370] sm:$0xff]
    %v204 = vld [vmem:[%s1 + $0x378] sm:$0xff]
    %v205 = vld [vmem:[%s1 + $0x380] sm:$0xff]
    %v206 = vld [vmem:[%s1 + $0x388] sm:$0xff]
    %v207 = vld [vmem:[%s1 + $0x390] sm:$0xff]
    %v208 = vld [vmem:[%s1 + $0x398] sm:$0xff]
    %v209 = vld [vmem:[%s1 + $0x3a0] sm:$0xff]
    %v210 = vld [vmem:[%s1 + $0x3a8] sm:$0xff]
    %v211 = vld [vmem:[%s1 + $0x3b0] sm:$0xff]
    %v212 = vld [vmem:[%s1 + $0x3b8] sm:$0xff]
    %v213 = vld [vmem:[%s1 + $0x3c0] sm:$0xff]
    %v214 = vld [vmem:[%s1 + $0x3c8] sm:$0xff]
    %v215 = vld [vmem:[%s1 + $0x3d0] sm:$0xff]
    %v216 = vld [vmem:[%s1 + $0x3d8] sm:$0xff]
    %v217 = vld [vmem:[%s1 + $0x3e0] sm:$0xff]
    %v218 = vld [vmem:[%s1 + $0x3e8] sm:$0xff]
    %v219 = vld [vmem:[%s1 + $0x3f0] sm:$0xff]
    %v220 = vld [vmem:[%s1 + $0x3f8] sm:$0xff]
    %v221 = vld [vmem:[%s1 + $0x400] sm:$0xff]
    %v222 = vld [vmem:[%s1 + $0x408] sm:$0xff]
    %v223 = vld [vmem:[%s1 + $0x410] sm:$0xff]
    %v224 = vld [vmem:[%s1 + $0x418] sm:$0xff]
    %v225 = vld [vmem:[%s1 + $0x420] sm:$0xff]
    %v226 = vld [vmem:[%s1 + $0x428] sm:$0xff]
    %v227 = vld [vmem:[%s1 + $0x430] sm:$0xff]
    %v228 = vld [vmem:[%s1 + $0x438] sm:$0xff]
    %v229 = vld [vmem:[%s1 + $0x440] sm:$0xff]
    %v230 = vld [vmem:[%s1 + $0x448] sm:$0xff]
    %v231 = vld [vmem:[%s1 + $0x450] sm:$0xff]
    %v232 = vld [vmem:[%s1 + $0x458] sm:$0xff]
    %v233 = vld [vmem:[%s1 + $0x460] sm:$0xff]
    %v234 = vld [vmem:[%s1 + $0x468] sm:$0xff]
    %v235 = vld [vmem:[%s1 + $0x470] sm:$0xff]
    %v236 = vld [vmem:[%s1 + $0x478] sm:$0xff]
    %v237 = vld [vmem:[%s1 + $0x480] sm:$0xff]
    %v238 = vld [vmem:[%s1 + $0x488] sm:$0xff]
    %v239 = vld [vmem:[%s1 + $0x490] sm:$0xff]
    %v240 = vld [vmem:[%s1 + $0x498] sm:$0xff]
    %v241 = vld [vmem:[%s1 + $0x4a0] sm:$0xff]
    %v242 = vld [vmem:[%s1 + $0x4a8] sm:$0xff]
    %v243 = vld [vmem:[%s1 + $0x4b0] sm:$0xff]
    %v244 = vld [vmem:[%s1 + $0x4b8] sm:$0xff]
    %v245 = vld [vmem:[%s1 + $0x4c0] sm:$0xff]
    %v246 = vld [vmem:[%s1 + $0x4c8] sm:$0xff]
    %v247 = vld [vmem:[%s1 + $0x4d0] sm:$0xff]
    %v248 = vld [vmem:[%s1 + $0x4d8] sm:$0xff]
    %v249 = vld [vmem:[%s1 + $0x4e0] sm:$0xff]
    %v250 = vld [vmem:[%s1 + $0x4e8] sm:$0xff]
    %v251 = vld [vmem:[%s1 + $0x4f0] sm:$0xff]
    %v252 = vld [vmem:[%s1 + $0x4f8] sm:$0xff]
    %v253 = vld [vmem:[%s1 + $0x500] sm:$0xff]
    %v254 = vld [vmem:[%s1 + $0x508] sm:$0xff]
    %v255 = vld [vmem:[%s1 + $0x510] sm:$0xff]
    %v256 = vld [vmem:[%s1 + $0x518] sm:$0xff]
    %v257 = vld [vmem:[%s1 + $0x520] sm:$0xff]
    %v258 = vld [vmem:[%s1 + $0x528] sm:$0xff]
    %v259 = vld [vmem:[%s1 + $0x530] sm:$0xff]
    %v260 = vld [vmem:[%s1 + $0x538] sm:$0xff]
    %v261 = vld [vmem:[%s1 + $0x540] sm:$0xff]
    %v262 = vld [vmem:[%s1 + $0x548] sm:$0xff]
    %v263 = vld [vmem:[%s1 + $0x550] sm:$0xff]
    %v264 = vld [vmem:[%s1 + $0x558] sm:$0xff]
    %v265 = vld [vmem:[%s1 + $0x560] sm:$0xff]
    %v266 = vld [vmem:[%s1 + $0x568] sm:$0xff]
    %v267 = vld [vmem:[%s1 + $0x570] sm:$0xff]
    %v268 = vld [vmem:[%s1 + $0x578] sm:$0xff]
    %v269 = vld [vmem:[%s1 + $0x580] sm:$0xff]
    %v270 = vld [vmem:[%s1 + $0x588] sm:$0xff]
    %v271 = vld [vmem:[%s1 + $0x590] sm:$0xff]
    %v272 = vld [vmem:[%s1 + $0x598] sm:$0xff]
    %v273 = vld [vmem:[%s1 + $0x5a0] sm:$0xff]
    %v274 = vld [vmem:[%s1 + $0x5a8] sm:$0xff]
    %v275 = vld [vmem:[%s1 + $0x5b0] sm:$0xff]
    %v276 = vld [vmem:[%s1 + $0x5b8] sm:$0xff]
    %v277 = vld [vmem:[%s1 + $0x5c0] sm:$0xff]
    %v278 = vld [vmem:[%s1 + $0x5c8] sm:$0xff]
    %v279 = vld [vmem:[%s1 + $0x5d0] sm:$0xff]
    %v280 = vld [vmem:[%s1 + $0x5d8] sm:$0xff]
    %v281 = vld [vmem:[%s1 + $0x5e0] sm:$0xff]
    %v282 = vld [vmem:[%s1 + $0x5e8] sm:$0xff]
    %v283 = vld [vmem:[%s1 + $0x5f0] sm:$0xff]
    %v284 = vld [vmem:[%s1 + $0x5f8] sm:$0xff]
    %v285 = vld [vmem:[%s1 + $0x600] sm:$0xff]
    %v286 = vld [vmem:[%s1 + $0x608] sm:$0xff]
    %v287 = vld [vmem:[%s1 + $0x610] sm:$0xff]
    %v288 = vld [vmem:[%s1 + $0x618] sm:$0xff]
    %v289 = vld [vmem:[%s1 + $0x620] sm:$0xff]
    %v290 = vld [vmem:[%s1 + $0x628] sm:$0xff]
    %v291 = vld [vmem:[%s1 + $0x630] sm:$0xff]
    %v292 = vld [vmem:[%s1 + $0x638] sm:$0xff]
    %v293 = vld [vmem:[%s1 + $0x640] sm:$0xff]
    %v294 = vld [vmem:[%s1 + $0x648] sm:$0xff]
    %v295 = vld [vmem:[%s1 + $0x650] sm:$0xff]
    %v296 = vld [vmem:[%s1 + $0x658] sm:$0xff]
    %v297 = vld [vmem:[%s1 + $0x660] sm:$0xff]
    %v298 = vld [vmem:[%s1 + $0x668] sm:$0xff]
    %v299 = vld [vmem:[%s1 + $0x670] sm:$0xff]
    %v300 = vld [vmem:[%s1 + $0x678] sm:$0xff]
    %v301 = vld [vmem:[%s1 + $0x680] sm:$0xff]
    %v302 = vld [vmem:[%s1 + $0x688] sm:$0xff]
    %v303 = vld [vmem:[%s1 + $0x690] sm:$0xff]
    %v304 = vld [vmem:[%s1 + $0x698] sm:$0xff]
    %v305 = vld [vmem:[%s1 + $0x6a0] sm:$0xff]
    %v306 = vld [vmem:[%s1 + $0x6a8] sm:$0xff]
    %v307 = vld [vmem:[%s1 + $0x6b0] sm:$0xff]
    %v308 = vld [vmem:[%s1 + $0x6b8] sm:$0xff]
    %v309 = vld [vmem:[%s1 + $0x6c0] sm:$0xff]
    %v310 = vld [vmem:[%s1 + $0x6c8] sm:$0xff]
    %v311 = vld [vmem:[%s1 + $0x6d0] sm:$0xff]
    %v312 = vld [vmem:[%s1 + $0x6d8] sm:$0xff]
    %v313 = vld [vmem:[%s1 + $0x6e0] sm:$0xff]
    %v314 = vld [vmem:[%s1 + $0x6e8] sm:$0xff]
    %v315 = vld [vmem:[%s1 + $0x6f0] sm:$0xff]
    %v316 = vld [vmem:[%s1 + $0x6f8] sm:$0xff]
    %v317 = vld [vmem:[%s1 + $0x700] sm:$0xff]
    %v318 = vld [vmem:[%s1 + $0x708] sm:$0xff]
    %v319 = vld [vmem:[%s1 + $0x710] sm:$0xff]
    %v320 = vld [vmem:[%s1 + $0x718] sm:$0xff]
    %v321 = vld [vmem:[%s1 + $0x720] sm:$0xff]
    %v322 = vld [vmem:[%s1 + $0x728] sm:$0xff]
    %v323 = vld [vmem:[%s1 + $0x730] sm:$0xff]
    %v324 = vld [vmem:[%s1 + $0x738] sm:$0xff]
    %v325 = vld [vmem:[%s1 + $0x740] sm:$0xff]
    %v326 = vld [vmem:[%s1 + $0x748] sm:$0xff]
    %v327 = vld [vmem:[%s1 + $0x750] sm:$0xff]
    %v328 = vld [vmem:[%s1 + $0x758] sm:$0xff]
    %v329 = vld [vmem:[%s1 + $0x760] sm:$0xff]
    %v330 = vld [vmem:[%s1 + $0x768] sm:$0xff]
    %v331 = vld [vmem:[%s1 + $0x770] sm:$0xff]
    %v332 = vld [vmem:[%s1 + $0x778] sm:$0xff]
    %v333 = vld [vmem:[%s1 + $0x780] sm:$0xff]
    %v334 = vld [vmem:[%s1 + $0x788] sm:$0xff]
    %v335 = vld [vmem:[%s1 + $0x790] sm:$0xff]
    %v336 = vld [vmem:[%s1 + $0x798] sm:$0xff]
    %v337 = vld [vmem:[%s1 + $0x7a0] sm:$0xff]
    %v338 = vld [vmem:[%s1 + $0x7a8] sm:$0xff]
    %v339 = vld [vmem:[%s1 + $0x7b0] sm:$0xff]
    %v340 = vld [vmem:[%s1 + $0x7b8] sm:$0xff]
    %v341 = vld [vmem:[%s1 + $0x7c0] sm:$0xff]
    %v342 = vld [vmem:[%s1 + $0x7c8] sm:$0xff]
    %v343 = vld [vmem:[%s1 + $0x7d0] sm:$0xff]
    %v344 = vld [vmem:[%s1 + $0x7d8] sm:$0xff]
    %v345 = vld [vmem:[%s1 + $0x7e0] sm:$0xff]
    %v346 = vld [vmem:[%s1 + $0x7e8] sm:$0xff]
    %v347 = vld [vmem:[%s1 + $0x7f0] sm:$0xff]
    %v348 = vld [vmem:[%s1 + $0x7f8] sm:$0xff]
    %v349 = vld [vmem:[%s1 + $0x800] sm:$0xff]
    %v350 = vld [vmem:[%s1 + $0x808] sm:$0xff]
    %v351 = vld [vmem:[%s1 + $0x810] sm:$0xff]
    %v352 = vld [vmem:[%s1 + $0x818] sm:$0xff]
    %v353 = vld [vmem:[%s1 + $0x820] sm:$0xff]
    %v354 = vld [vmem:[%s1 + $0x828] sm:$0xff]
    %v355 = vld [vmem:[%s1 + $0x830] sm:$0xff]
    %v356 = vld [vmem:[%s1 + $0x838] sm:$0xff]
    %v357 = vld [vmem:[%s1 + $0x840] sm:$0xff]
    %v358 = vld [vmem:[%s1 + $0x848] sm:$0xff]
    %v359 = vld [vmem:[%s1 + $0x850] sm:$0xff]
    %v360 = vld [vmem:[%s1 + $0x858] sm:$0xff]
    %v361 = vld [vmem:[%s1 + $0x860] sm:$0xff]
    %v362 = vld [vmem:[%s1 + $0x868] sm:$0xff]
    %v363 = vld [vmem:[%s1 + $0x870] sm:$0xff]
    %v364 = vld [vmem:[%s1 + $0x878] sm:$0xff]
    %v365 = vld [vmem:[%s1 + $0x880] sm:$0xff]
    %v366 = vld [vmem:[%s1 + $0x888] sm:$0xff]
    %v367 = vld [vmem:[%s1 + $0x890] sm:$0xff]
    %v368 = vld [vmem:[%s1 + $0x898] sm:$0xff]
    %v369 = vld [vmem:[%s1 + $0x8a0] sm:$0xff]
    %v370 = vld [vmem:[%s1 + $0x8a8] sm:$0xff]
    %v371 = vld [vmem:[%s1 + $0x8b0] sm:$0xff]
    %v372 = vld [vmem:[%s1 + $0x8b8] sm:$0xff]
    %v373 = vld [vmem:[%s1 + $0x8c0] sm:$0xff]
    %v374 = vld [vmem:[%s1 + $0x8c8] sm:$0xff]
    %v375 = vld [vmem:[%s1 + $0x8d0] sm:$0xff]
    %v376 = vld [vmem:[%s1 + $0x8d8] sm:$0xff]
    %v377 = vld [vmem:[%s1 + $0x8e0] sm:$0xff]
    %v378 = vld [vmem:[%s1 + $0x8e8] sm:$0xff]
    %v379 = vld [vmem:[%s1 + $0x8f0] sm:$0xff]
    %v380 = vld [vmem:[%s1 + $0x8f8] sm:$0xff]
    %v381 = vld [vmem:[%s1 + $0x900] sm:$0xff]
    %v382 = vld [vmem:[%s1 + $0x908] sm:$0xff]
    %v383 = vld [vmem:[%s1 + $0x910] sm:$0xff]
    %v384 = vld [vmem:[%s1 + $0x918] sm:$0xff]
    %v385 = vld [vmem:[%s1 + $0x920] sm:$0xff]
    %v386 = vld [vmem:[%s1 + $0x928] sm:$0xff]
    %v387 = vld [vmem:[%s1 + $0x930] sm:$0xff]
    %v388 = vld [vmem:[%s1 + $0x938] sm:$0xff]
    %v389 = vld [vmem:[%s1 + $0x940] sm:$0xff]
    %v390 = vld [vmem:[%s1 + $0x948] sm:$0xff]
    %v391 = vld [vmem:[%s1 + $0x950] sm:$0xff]
    %v392 = vld [vmem:[%s1 + $0x958] sm:$0xff]
    %v393 = vld [vmem:[%s1 + $0x960] sm:$0xff]
    %v394 = vld [vmem:[%s1 + $0x968] sm:$0xff]
    %v395 = vld [vmem:[%s1 + $0x970] sm:$0xff]
    %v396 = vld [vmem:[%s1 + $0x978] sm:$0xff]
    %v397 = vld [vmem:[%s1 + $0x980] sm:$0xff]
    %v398 = vld [vmem:[%s1 + $0x988] sm:$0xff]
    %v399 = vld [vmem:[%s1 + $0x990] sm:$0xff]
    %v400 = vld [vmem:[%s1 + $0x998] sm:$0xff]
    %v401 = vld [vmem:[%s1 + $0x9a0] sm:$0xff]
    %v402 = vld [vmem:[%s1 + $0x9a8] sm:$0xff]
    %v403 = vld [vmem:[%s1 + $0x9b0] sm:$0xff]
    %v404 = vld [vmem:[%s1 + $0x9b8] sm:$0xff]
    %v405 = vld [vmem:[%s1 + $0x9c0] sm:$0xff]
    %v406 = vld [vmem:[%s1 + $0x9c8] sm:$0xff]
    %v407 = vld [vmem:[%s1 + $0x9d0] sm:$0xff]
    %v408 = vld [vmem:[%s1 + $0x9d8] sm:$0xff]
    %v409 = vld [vmem:[%s1 + $0x9e0] sm:$0xff]
    %v410 = vld [vmem:[%s1 + $0x9e8] sm:$0xff]
    %v411 = vld [vmem:[%s1 + $0x9f0] sm:$0xff]
    %v412 = vld [vmem:[%s1 + $0x9f8] sm:$0xff]
    %v413 = vld [vmem:[%s1 + $0xa00] sm:$0xff]
    %v414 = vld [vmem:[%s1 + $0xa08] sm:$0xff]
    %v415 = vld [vmem:[%s1 + $0xa10] sm:$0xff]
    %v416 = vld [vmem:[%s1 + $0xa18] sm:$0xff]
    %v417 = vld [vmem:[%s1 + $0xa20] sm:$0xff]
    %v418 = vld [vmem:[%s1 + $0xa28] sm:$0xff]
    %v419 = vld [vmem:[%s1 + $0xa30] sm:$0xff]
    %v420 = vld [vmem:[%s1 + $0xa38] sm:$0xff]
    %v421 = vld [vmem:[%s1 + $0xa40] sm:$0xff]
    %v422 = vld [vmem:[%s1 + $0xa48] sm:$0xff]
    %v423 = vld [vmem:[%s1 + $0xa50] sm:$0xff]
    %v424 = vld [vmem:[%s1 + $0xa58] sm:$0xff]
    %v425 = vld [vmem:[%s1 + $0xa60] sm:$0xff]
    %v426 = vld [vmem:[%s1 + $0xa68] sm:$0xff]
    %v427 = vld [vmem:[%s1 + $0xa70] sm:$0xff]
    %v428 = vld [vmem:[%s1 + $0xa78] sm:$0xff]
    %v429 = vld [vmem:[%s1 + $0xa80] sm:$0xff]
    %v430 = vld [vmem:[%s1 + $0xa88] sm:$0xff]
    %v431 = vld [vmem:[%s1 + $0xa90] sm:$0xff]
    %v432 = vld [vmem:[%s1 + $0xa98] sm:$0xff]
    %v433 = vld [vmem:[%s1 + $0xaa0] sm:$0xff]
    %v434 = vld [vmem:[%s1 + $0xaa8] sm:$0xff]
    %v435 = vld [vmem:[%s1 + $0xab0] sm:$0xff]
    %v436 = vld [vmem:[%s1 + $0xab8] sm:$0xff]
    %v437 = vld [vmem:[%s1 + $0xac0] sm:$0xff]
    %v438 = vld [vmem:[%s1 + $0xac8] sm:$0xff]
    %v439 = vld [vmem:[%s1 + $0xad0] sm:$0xff]
    %v440 = vld [vmem:[%s1 + $0xad8] sm:$0xff]
    %v441 = vld [vmem:[%s1 + $0xae0] sm:$0xff]
    %v442 = vld [vmem:[%s1 + $0xae8] sm:$0xff]
    %v443 = vld [vmem:[%s1 + $0xaf0] sm:$0xff]
    %v444 = vld [vmem:[%s1 + $0xaf8] sm:$0xff]
    %v445 = vld [vmem:[%s1 + $0xb00] sm:$0xff]
    %v446 = vld [vmem:[%s1 + $0xb08] sm:$0xff]
    %v447 = vld [vmem:[%s1 + $0xb10] sm:$0xff]
    %v448 = vld [vmem:[%s1 + $0xb18] sm:$0xff]
    %v449 = vld [vmem:[%s1 + $0xb20] sm:$0xff]
    %v450 = vld [vmem:[%s1 + $0xb28] sm:$0xff]
    %v451 = vld [vmem:[%s1 + $0xb30] sm:$0xff]
    %v452 = vld [vmem:[%s1 + $0xb38] sm:$0xff]
    %v453 = vld [vmem:[%s1 + $0xb40] sm:$0xff]
    %v454 = vld [vmem:[%s1 + $0xb48] sm:$0xff]
    %v455 = vld [vmem:[%s1 + $0xb50] sm:$0xff]
    %v456 = vld [vmem:[%s1 + $0xb58] sm:$0xff]
    %v457 = vld [vmem:[%s1 + $0xb60] sm:$0xff]
    %v458 = vld [vmem:[%s1 + $0xb68] sm:$0xff]
    %v459 = vld [vmem:[%s1 + $0xb70] sm:$0xff]
    %v460 = vld [vmem:[%s1 + $0xb78] sm:$0xff]
    %v461 = vld [vmem:[%s1 + $0xb80] sm:$0xff]
    %v462 = vld [vmem:[%s1 + $0xb88] sm:$0xff]
    %v463 = vld [vmem:[%s1 + $0xb90] sm:$0xff]
    %v464 = vld [vmem:[%s1 + $0xb98] sm:$0xff]
    %v465 = vld [vmem:[%s1 + $0xba0] sm:$0xff]
    %v466 = vld [vmem:[%s1 + $0xba8] sm:$0xff]
    %v467 = vld [vmem:[%s1 + $0xbb0] sm:$0xff]
    %v468 = vld [vmem:[%s1 + $0xbb8] sm:$0xff]
    %v469 = vld [vmem:[%s1 + $0xbc0] sm:$0xff]
    %v470 = vld [vmem:[%s1 + $0xbc8] sm:$0xff]
    %v471 = vld [vmem:[%s1 + $0xbd0] sm:$0xff]
    %v472 = vld [vmem:[%s1 + $0xbd8] sm:$0xff]
    %v473 = vld [vmem:[%s1 + $0xbe0] sm:$0xff]
    %v474 = vld [vmem:[%s1 + $0xbe8] sm:$0xff]
    %v475 = vld [vmem:[%s1 + $0xbf0] sm:$0xff]
    %v476 = vld [vmem:[%s1 + $0xbf8] sm:$0xff]
    %v477 = vld [vmem:[%s1 + $0xc00] sm:$0xff]
    %v478 = vld [vmem:[%s1 + $0xc08] sm:$0xff]
    %v479 = vld [vmem:[%s1 + $0xc10] sm:$0xff]
    %v480 = vld [vmem:[%s1 + $0xc18] sm:$0xff]
    %v481 = vld [vmem:[%s1 + $0xc20] sm:$0xff]
    %v482 = vld [vmem:[%s1 + $0xc28] sm:$0xff]
    %v483 = vld [vmem:[%s1 + $0xc30] sm:$0xff]
    %v484 = vld [vmem:[%s1 + $0xc38] sm:$0xff]
    %v485 = vld [vmem:[%s1 + $0xc40] sm:$0xff]
    %v486 = vld [vmem:[%s1 + $0xc48] sm:$0xff]
    %v487 = vld [vmem:[%s1 + $0xc50] sm:$0xff]
    %v488 = vld [vmem:[%s1 + $0xc58] sm:$0xff]
    %v489 = vld [vmem:[%s1 + $0xc60] sm:$0xff]
    %v490 = vld [vmem:[%s1 + $0xc68] sm:$0xff]
    %v491 = vld [vmem:[%s1 + $0xc70] sm:$0xff]
    %v492 = vld [vmem:[%s1 + $0xc78] sm:$0xff]
    %v493 = vld [vmem:[%s2] sm:$0x3]
    %v495 = vlaneseq
    %v496 = vshrl.u32 %v495, 7
    %v497 = vsub.s32 0, %v496
    %v498 = vrot.slane %v493, %v497
    %v499 = vlaneseq
    %v500 = vshrl.u32 %v499, 7
    %v501 = vsub.s32 1, %v500
    %v502 = vrot.slane %v493, %v501
    %v905 = vunpack.c.l.b16 %v93
    %v906 = vunpack.c.h.b16 %v93
    %v907 = vunpack.c.l.b16 %v94
    %v908 = vunpack.c.h.b16 %v94
    %v909 = vunpack.c.l.b16 %v95
    %v910 = vunpack.c.h.b16 %v95
    %v911 = vunpack.c.l.b16 %v96
    %v912 = vunpack.c.h.b16 %v96
    %v913 = vunpack.c.l.b16 %v97
    %v914 = vunpack.c.h.b16 %v97
    %v915 = vunpack.c.l.b16 %v98
    %v916 = vunpack.c.h.b16 %v98
    %v917 = vunpack.c.l.b16 %v99
    %v918 = vunpack.c.h.b16 %v99
    %v919 = vunpack.c.l.b16 %v100
    %v920 = vunpack.c.h.b16 %v100
    %v921 = vunpack.c.l.b16 %v101
    %v922 = vunpack.c.h.b16 %v101
    %v923 = vunpack.c.l.b16 %v102
    %v924 = vunpack.c.h.b16 %v102
    %v925 = vunpack.c.l.b16 %v103
    %v926 = vunpack.c.h.b16 %v103
    %v927 = vunpack.c.l.b16 %v104
    %v928 = vunpack.c.h.b16 %v104
    %v929 = vunpack.c.l.b16 %v105
    %v930 = vunpack.c.h.b16 %v105
    %v931 = vunpack.c.l.b16 %v106
    %v932 = vunpack.c.h.b16 %v106
    %v933 = vunpack.c.l.b16 %v107
    %v934 = vunpack.c.h.b16 %v107
    %v935 = vunpack.c.l.b16 %v108
    %v936 = vunpack.c.h.b16 %v108
    %v937 = vunpack.c.l.b16 %v109
    %v938 = vunpack.c.h.b16 %v109
    %v939 = vunpack.c.l.b16 %v110
    %v940 = vunpack.c.h.b16 %v110
    %v941 = vunpack.c.l.b16 %v111
    %v942 = vunpack.c.h.b16 %v111
    %v943 = vunpack.c.l.b16 %v112
    %v944 = vunpack.c.h.b16 %v112
    %v945 = vunpack.c.l.b16 %v113
    %v946 = vunpack.c.h.b16 %v113
    %v947 = vunpack.c.l.b16 %v114
    %v948 = vunpack.c.h.b16 %v114
    %v949 = vunpack.c.l.b16 %v115
    %v950 = vunpack.c.h.b16 %v115
    %v951 = vunpack.c.l.b16 %v116
    %v952 = vunpack.c.h.b16 %v116
    %v953 = vunpack.c.l.b16 %v117
    %v954 = vunpack.c.h.b16 %v117
    %v955 = vunpack.c.l.b16 %v118
    %v956 = vunpack.c.h.b16 %v118
    %v957 = vunpack.c.l.b16 %v119
    %v958 = vunpack.c.h.b16 %v119
    %v959 = vunpack.c.l.b16 %v120
    %v960 = vunpack.c.h.b16 %v120
    %v961 = vunpack.c.l.b16 %v121
    %v962 = vunpack.c.h.b16 %v121
    %v963 = vunpack.c.l.b16 %v122
    %v964 = vunpack.c.h.b16 %v122
    %v965 = vunpack.c.l.b16 %v123
    %v966 = vunpack.c.h.b16 %v123
    %v967 = vunpack.c.l.b16 %v124
    %v968 = vunpack.c.h.b16 %v124
    %v969 = vunpack.c.l.b16 %v125
    %v970 = vunpack.c.h.b16 %v125
    %v971 = vunpack.c.l.b16 %v126
    %v972 = vunpack.c.h.b16 %v126
    %v973 = vunpack.c.l.b16 %v127
    %v974 = vunpack.c.h.b16 %v127
    %v975 = vunpack.c.l.b16 %v128
    %v976 = vunpack.c.h.b16 %v128
    %v977 = vunpack.c.l.b16 %v129
    %v978 = vunpack.c.h.b16 %v129
    %v979 = vunpack.c.l.b16 %v130
    %v980 = vunpack.c.h.b16 %v130
    %v981 = vunpack.c.l.b16 %v131
    %v982 = vunpack.c.h.b16 %v131
    %v983 = vunpack.c.l.b16 %v132
    %v984 = vunpack.c.h.b16 %v132
    %v985 = vunpack.c.l.b16 %v133
    %v986 = vunpack.c.h.b16 %v133
    %v987 = vunpack.c.l.b16 %v134
    %v988 = vunpack.c.h.b16 %v134
    %v989 = vunpack.c.l.b16 %v135
    %v990 = vunpack.c.h.b16 %v135
    %v991 = vunpack.c.l.b16 %v136
    %v992 = vunpack.c.h.b16 %v136
    %v993 = vunpack.c.l.b16 %v137
    %v994 = vunpack.c.h.b16 %v137
    %v995 = vunpack.c.l.b16 %v138
    %v996 = vunpack.c.h.b16 %v138
    %v997 = vunpack.c.l.b16 %v139
    %v998 = vunpack.c.h.b16 %v139
    %v999 = vunpack.c.l.b16 %v140
    %v1000 = vunpack.c.h.b16 %v140
    %v1001 = vunpack.c.l.b16 %v141
    %v1002 = vunpack.c.h.b16 %v141
    %v1003 = vunpack.c.l.b16 %v142
    %v1004 = vunpack.c.h.b16 %v142
    %v1005 = vunpack.c.l.b16 %v143
    %v1006 = vunpack.c.h.b16 %v143
    %v1007 = vunpack.c.l.b16 %v144
    %v1008 = vunpack.c.h.b16 %v144
    %v1009 = vunpack.c.l.b16 %v145
    %v1010 = vunpack.c.h.b16 %v145
    %v1011 = vunpack.c.l.b16 %v146
    %v1012 = vunpack.c.h.b16 %v146
    %v1013 = vunpack.c.l.b16 %v147
    %v1014 = vunpack.c.h.b16 %v147
    %v1015 = vunpack.c.l.b16 %v148
    %v1016 = vunpack.c.h.b16 %v148
    %v1017 = vunpack.c.l.b16 %v149
    %v1018 = vunpack.c.h.b16 %v149
    %v1019 = vunpack.c.l.b16 %v150
    %v1020 = vunpack.c.h.b16 %v150
    %v1021 = vunpack.c.l.b16 %v151
    %v1022 = vunpack.c.h.b16 %v151
    %v1023 = vunpack.c.l.b16 %v152
    %v1024 = vunpack.c.h.b16 %v152
    %v1025 = vunpack.c.l.b16 %v153
    %v1026 = vunpack.c.h.b16 %v153
    %v1027 = vunpack.c.l.b16 %v154
    %v1028 = vunpack.c.h.b16 %v154
    %v1029 = vunpack.c.l.b16 %v155
    %v1030 = vunpack.c.h.b16 %v155
    %v1031 = vunpack.c.l.b16 %v156
    %v1032 = vunpack.c.h.b16 %v156
    %v1033 = vunpack.c.l.b16 %v157
    %v1034 = vunpack.c.h.b16 %v157
    %v1035 = vunpack.c.l.b16 %v158
    %v1036 = vunpack.c.h.b16 %v158
    %v1037 = vunpack.c.l.b16 %v159
    %v1038 = vunpack.c.h.b16 %v159
    %v1039 = vunpack.c.l.b16 %v160
    %v1040 = vunpack.c.h.b16 %v160
    %v1041 = vunpack.c.l.b16 %v161
    %v1042 = vunpack.c.h.b16 %v161
    %v1043 = vunpack.c.l.b16 %v162
    %v1044 = vunpack.c.h.b16 %v162
    %v1045 = vunpack.c.l.b16 %v163
    %v1046 = vunpack.c.h.b16 %v163
    %v1047 = vunpack.c.l.b16 %v164
    %v1048 = vunpack.c.h.b16 %v164
    %v1049 = vunpack.c.l.b16 %v165
    %v1050 = vunpack.c.h.b16 %v165
    %v1051 = vunpack.c.l.b16 %v166
    %v1052 = vunpack.c.h.b16 %v166
    %v1053 = vunpack.c.l.b16 %v167
    %v1054 = vunpack.c.h.b16 %v167
    %v1055 = vunpack.c.l.b16 %v168
    %v1056 = vunpack.c.h.b16 %v168
    %v1057 = vunpack.c.l.b16 %v169
    %v1058 = vunpack.c.h.b16 %v169
    %v1059 = vunpack.c.l.b16 %v170
    %v1060 = vunpack.c.h.b16 %v170
    %v1061 = vunpack.c.l.b16 %v171
    %v1062 = vunpack.c.h.b16 %v171
    %v1063 = vunpack.c.l.b16 %v172
    %v1064 = vunpack.c.h.b16 %v172
    %v1065 = vunpack.c.l.b16 %v173
    %v1066 = vunpack.c.h.b16 %v173
    %v1067 = vunpack.c.l.b16 %v174
    %v1068 = vunpack.c.h.b16 %v174
    %v1069 = vunpack.c.l.b16 %v175
    %v1070 = vunpack.c.h.b16 %v175
    %v1071 = vunpack.c.l.b16 %v176
    %v1072 = vunpack.c.h.b16 %v176
    %v1073 = vunpack.c.l.b16 %v177
    %v1074 = vunpack.c.h.b16 %v177
    %v1075 = vunpack.c.l.b16 %v178
    %v1076 = vunpack.c.h.b16 %v178
    %v1077 = vunpack.c.l.b16 %v179
    %v1078 = vunpack.c.h.b16 %v179
    %v1079 = vunpack.c.l.b16 %v180
    %v1080 = vunpack.c.h.b16 %v180
    %v1081 = vunpack.c.l.b16 %v181
    %v1082 = vunpack.c.h.b16 %v181
    %v1083 = vunpack.c.l.b16 %v182
    %v1084 = vunpack.c.h.b16 %v182
    %v1085 = vunpack.c.l.b16 %v183
    %v1086 = vunpack.c.h.b16 %v183
    %v1087 = vunpack.c.l.b16 %v184
    %v1088 = vunpack.c.h.b16 %v184
    %v1089 = vunpack.c.l.b16 %v185
    %v1090 = vunpack.c.h.b16 %v185
    %v1091 = vunpack.c.l.b16 %v186
    %v1092 = vunpack.c.h.b16 %v186
    %v1093 = vunpack.c.l.b16 %v187
    %v1094 = vunpack.c.h.b16 %v187
    %v1095 = vunpack.c.l.b16 %v188
    %v1096 = vunpack.c.h.b16 %v188
    %v1097 = vunpack.c.l.b16 %v189
    %v1098 = vunpack.c.h.b16 %v189
    %v1099 = vunpack.c.l.b16 %v190
    %v1100 = vunpack.c.h.b16 %v190
    %v1101 = vunpack.c.l.b16 %v191
    %v1102 = vunpack.c.h.b16 %v191
    %v1103 = vunpack.c.l.b16 %v192
    %v1104 = vunpack.c.h.b16 %v192
    %v1105 = vunpack.c.l.b16 %v193
    %v1106 = vunpack.c.h.b16 %v193
    %v1107 = vunpack.c.l.b16 %v194
    %v1108 = vunpack.c.h.b16 %v194
    %v1109 = vunpack.c.l.b16 %v195
    %v1110 = vunpack.c.h.b16 %v195
    %v1111 = vunpack.c.l.b16 %v196
    %v1112 = vunpack.c.h.b16 %v196
    %v1113 = vunpack.c.l.b16 %v197
    %v1114 = vunpack.c.h.b16 %v197
    %v1115 = vunpack.c.l.b16 %v198
    %v1116 = vunpack.c.h.b16 %v198
    %v1117 = vunpack.c.l.b16 %v199
    %v1118 = vunpack.c.h.b16 %v199
    %v1119 = vunpack.c.l.b16 %v200
    %v1120 = vunpack.c.h.b16 %v200
    %v1121 = vunpack.c.l.b16 %v201
    %v1122 = vunpack.c.h.b16 %v201
    %v1123 = vunpack.c.l.b16 %v202
    %v1124 = vunpack.c.h.b16 %v202
    %v1125 = vunpack.c.l.b16 %v203
    %v1126 = vunpack.c.h.b16 %v203
    %v1127 = vunpack.c.l.b16 %v204
    %v1128 = vunpack.c.h.b16 %v204
    %v1129 = vunpack.c.l.b16 %v205
    %v1130 = vunpack.c.h.b16 %v205
    %v1131 = vunpack.c.l.b16 %v206
    %v1132 = vunpack.c.h.b16 %v206
    %v1133 = vunpack.c.l.b16 %v207
    %v1134 = vunpack.c.h.b16 %v207
    %v1135 = vunpack.c.l.b16 %v208
    %v1136 = vunpack.c.h.b16 %v208
    %v1137 = vunpack.c.l.b16 %v209
    %v1138 = vunpack.c.h.b16 %v209
    %v1139 = vunpack.c.l.b16 %v210
    %v1140 = vunpack.c.h.b16 %v210
    %v1141 = vunpack.c.l.b16 %v211
    %v1142 = vunpack.c.h.b16 %v211
    %v1143 = vunpack.c.l.b16 %v212
    %v1144 = vunpack.c.h.b16 %v212
    %v1145 = vunpack.c.l.b16 %v213
    %v1146 = vunpack.c.h.b16 %v213
    %v1147 = vunpack.c.l.b16 %v214
    %v1148 = vunpack.c.h.b16 %v214
    %v1149 = vunpack.c.l.b16 %v215
    %v1150 = vunpack.c.h.b16 %v215
    %v1151 = vunpack.c.l.b16 %v216
    %v1152 = vunpack.c.h.b16 %v216
    %v1153 = vunpack.c.l.b16 %v217
    %v1154 = vunpack.c.h.b16 %v217
    %v1155 = vunpack.c.l.b16 %v218
    %v1156 = vunpack.c.h.b16 %v218
    %v1157 = vunpack.c.l.b16 %v219
    %v1158 = vunpack.c.h.b16 %v219
    %v1159 = vunpack.c.l.b16 %v220
    %v1160 = vunpack.c.h.b16 %v220
    %v1161 = vunpack.c.l.b16 %v221
    %v1162 = vunpack.c.h.b16 %v221
    %v1163 = vunpack.c.l.b16 %v222
    %v1164 = vunpack.c.h.b16 %v222
    %v1165 = vunpack.c.l.b16 %v223
    %v1166 = vunpack.c.h.b16 %v223
    %v1167 = vunpack.c.l.b16 %v224
    %v1168 = vunpack.c.h.b16 %v224
    %v1169 = vunpack.c.l.b16 %v225
    %v1170 = vunpack.c.h.b16 %v225
    %v1171 = vunpack.c.l.b16 %v226
    %v1172 = vunpack.c.h.b16 %v226
    %v1173 = vunpack.c.l.b16 %v227
    %v1174 = vunpack.c.h.b16 %v227
    %v1175 = vunpack.c.l.b16 %v228
    %v1176 = vunpack.c.h.b16 %v228
    %v1177 = vunpack.c.l.b16 %v229
    %v1178 = vunpack.c.h.b16 %v229
    %v1179 = vunpack.c.l.b16 %v230
    %v1180 = vunpack.c.h.b16 %v230
    %v1181 = vunpack.c.l.b16 %v231
    %v1182 = vunpack.c.h.b16 %v231
    %v1183 = vunpack.c.l.b16 %v232
    %v1184 = vunpack.c.h.b16 %v232
    %v1185 = vunpack.c.l.b16 %v233
    %v1186 = vunpack.c.h.b16 %v233
    %v1187 = vunpack.c.l.b16 %v234
    %v1188 = vunpack.c.h.b16 %v234
    %v1189 = vunpack.c.l.b16 %v235
    %v1190 = vunpack.c.h.b16 %v235
    %v1191 = vunpack.c.l.b16 %v236
    %v1192 = vunpack.c.h.b16 %v236
    %v1193 = vunpack.c.l.b16 %v237
    %v1194 = vunpack.c.h.b16 %v237
    %v1195 = vunpack.c.l.b16 %v238
    %v1196 = vunpack.c.h.b16 %v238
    %v1197 = vunpack.c.l.b16 %v239
    %v1198 = vunpack.c.h.b16 %v239
    %v1199 = vunpack.c.l.b16 %v240
    %v1200 = vunpack.c.h.b16 %v240
    %v1201 = vunpack.c.l.b16 %v241
    %v1202 = vunpack.c.h.b16 %v241
    %v1203 = vunpack.c.l.b16 %v242
    %v1204 = vunpack.c.h.b16 %v242
    %v1205 = vunpack.c.l.b16 %v243
    %v1206 = vunpack.c.h.b16 %v243
    %v1207 = vunpack.c.l.b16 %v244
    %v1208 = vunpack.c.h.b16 %v244
    %v1209 = vunpack.c.l.b16 %v245
    %v1210 = vunpack.c.h.b16 %v245
    %v1211 = vunpack.c.l.b16 %v246
    %v1212 = vunpack.c.h.b16 %v246
    %v1213 = vunpack.c.l.b16 %v247
    %v1214 = vunpack.c.h.b16 %v247
    %v1215 = vunpack.c.l.b16 %v248
    %v1216 = vunpack.c.h.b16 %v248
    %v1217 = vunpack.c.l.b16 %v249
    %v1218 = vunpack.c.h.b16 %v249
    %v1219 = vunpack.c.l.b16 %v250
    %v1220 = vunpack.c.h.b16 %v250
    %v1221 = vunpack.c.l.b16 %v251
    %v1222 = vunpack.c.h.b16 %v251
    %v1223 = vunpack.c.l.b16 %v252
    %v1224 = vunpack.c.h.b16 %v252
    %v1225 = vunpack.c.l.b16 %v253
    %v1226 = vunpack.c.h.b16 %v253
    %v1227 = vunpack.c.l.b16 %v254
    %v1228 = vunpack.c.h.b16 %v254
    %v1229 = vunpack.c.l.b16 %v255
    %v1230 = vunpack.c.h.b16 %v255
    %v1231 = vunpack.c.l.b16 %v256
    %v1232 = vunpack.c.h.b16 %v256
    %v1233 = vunpack.c.l.b16 %v257
    %v1234 = vunpack.c.h.b16 %v257
    %v1235 = vunpack.c.l.b16 %v258
    %v1236 = vunpack.c.h.b16 %v258
    %v1237 = vunpack.c.l.b16 %v259
    %v1238 = vunpack.c.h.b16 %v259
    %v1239 = vunpack.c.l.b16 %v260
    %v1240 = vunpack.c.h.b16 %v260
    %v1241 = vunpack.c.l.b16 %v261
    %v1242 = vunpack.c.h.b16 %v261
    %v1243 = vunpack.c.l.b16 %v262
    %v1244 = vunpack.c.h.b16 %v262
    %v1245 = vunpack.c.l.b16 %v263
    %v1246 = vunpack.c.h.b16 %v263
    %v1247 = vunpack.c.l.b16 %v264
    %v1248 = vunpack.c.h.b16 %v264
    %v1249 = vunpack.c.l.b16 %v265
    %v1250 = vunpack.c.h.b16 %v265
    %v1251 = vunpack.c.l.b16 %v266
    %v1252 = vunpack.c.h.b16 %v266
    %v1253 = vunpack.c.l.b16 %v267
    %v1254 = vunpack.c.h.b16 %v267
    %v1255 = vunpack.c.l.b16 %v268
    %v1256 = vunpack.c.h.b16 %v268
    %v1257 = vunpack.c.l.b16 %v269
    %v1258 = vunpack.c.h.b16 %v269
    %v1259 = vunpack.c.l.b16 %v270
    %v1260 = vunpack.c.h.b16 %v270
    %v1261 = vunpack.c.l.b16 %v271
    %v1262 = vunpack.c.h.b16 %v271
    %v1263 = vunpack.c.l.b16 %v272
    %v1264 = vunpack.c.h.b16 %v272
    %v1265 = vunpack.c.l.b16 %v273
    %v1266 = vunpack.c.h.b16 %v273
    %v1267 = vunpack.c.l.b16 %v274
    %v1268 = vunpack.c.h.b16 %v274
    %v1269 = vunpack.c.l.b16 %v275
    %v1270 = vunpack.c.h.b16 %v275
    %v1271 = vunpack.c.l.b16 %v276
    %v1272 = vunpack.c.h.b16 %v276
    %v1273 = vunpack.c.l.b16 %v277
    %v1274 = vunpack.c.h.b16 %v277
    %v1275 = vunpack.c.l.b16 %v278
    %v1276 = vunpack.c.h.b16 %v278
    %v1277 = vunpack.c.l.b16 %v279
    %v1278 = vunpack.c.h.b16 %v279
    %v1279 = vunpack.c.l.b16 %v280
    %v1280 = vunpack.c.h.b16 %v280
    %v1281 = vunpack.c.l.b16 %v281
    %v1282 = vunpack.c.h.b16 %v281
    %v1283 = vunpack.c.l.b16 %v282
    %v1284 = vunpack.c.h.b16 %v282
    %v1285 = vunpack.c.l.b16 %v283
    %v1286 = vunpack.c.h.b16 %v283
    %v1287 = vunpack.c.l.b16 %v284
    %v1288 = vunpack.c.h.b16 %v284
    %v1289 = vunpack.c.l.b16 %v285
    %v1290 = vunpack.c.h.b16 %v285
    %v1291 = vunpack.c.l.b16 %v286
    %v1292 = vunpack.c.h.b16 %v286
    %v1293 = vunpack.c.l.b16 %v287
    %v1294 = vunpack.c.h.b16 %v287
    %v1295 = vunpack.c.l.b16 %v288
    %v1296 = vunpack.c.h.b16 %v288
    %v1297 = vunpack.c.l.b16 %v289
    %v1298 = vunpack.c.h.b16 %v289
    %v1299 = vunpack.c.l.b16 %v290
    %v1300 = vunpack.c.h.b16 %v290
    %v1301 = vunpack.c.l.b16 %v291
    %v1302 = vunpack.c.h.b16 %v291
    %v1303 = vunpack.c.l.b16 %v292
    %v1304 = vunpack.c.h.b16 %v292
    %v1305 = vunpack.c.l.b16 %v293
    %v1306 = vunpack.c.h.b16 %v293
    %v1307 = vunpack.c.l.b16 %v294
    %v1308 = vunpack.c.h.b16 %v294
    %v1309 = vunpack.c.l.b16 %v295
    %v1310 = vunpack.c.h.b16 %v295
    %v1311 = vunpack.c.l.b16 %v296
    %v1312 = vunpack.c.h.b16 %v296
    %v1313 = vunpack.c.l.b16 %v297
    %v1314 = vunpack.c.h.b16 %v297
    %v1315 = vunpack.c.l.b16 %v298
    %v1316 = vunpack.c.h.b16 %v298
    %v1317 = vunpack.c.l.b16 %v299
    %v1318 = vunpack.c.h.b16 %v299
    %v1319 = vunpack.c.l.b16 %v300
    %v1320 = vunpack.c.h.b16 %v300
    %v1321 = vunpack.c.l.b16 %v301
    %v1322 = vunpack.c.h.b16 %v301
    %v1323 = vunpack.c.l.b16 %v302
    %v1324 = vunpack.c.h.b16 %v302
    %v1325 = vunpack.c.l.b16 %v303
    %v1326 = vunpack.c.h.b16 %v303
    %v1327 = vunpack.c.l.b16 %v304
    %v1328 = vunpack.c.h.b16 %v304
    %v1329 = vunpack.c.l.b16 %v305
    %v1330 = vunpack.c.h.b16 %v305
    %v1331 = vunpack.c.l.b16 %v306
    %v1332 = vunpack.c.h.b16 %v306
    %v1333 = vunpack.c.l.b16 %v307
    %v1334 = vunpack.c.h.b16 %v307
    %v1335 = vunpack.c.l.b16 %v308
    %v1336 = vunpack.c.h.b16 %v308
    %v1337 = vunpack.c.l.b16 %v309
    %v1338 = vunpack.c.h.b16 %v309
    %v1339 = vunpack.c.l.b16 %v310
    %v1340 = vunpack.c.h.b16 %v310
    %v1341 = vunpack.c.l.b16 %v311
    %v1342 = vunpack.c.h.b16 %v311
    %v1343 = vunpack.c.l.b16 %v312
    %v1344 = vunpack.c.h.b16 %v312
    %v1345 = vunpack.c.l.b16 %v313
    %v1346 = vunpack.c.h.b16 %v313
    %v1347 = vunpack.c.l.b16 %v314
    %v1348 = vunpack.c.h.b16 %v314
    %v1349 = vunpack.c.l.b16 %v315
    %v1350 = vunpack.c.h.b16 %v315
    %v1351 = vunpack.c.l.b16 %v316
    %v1352 = vunpack.c.h.b16 %v316
    %v1353 = vunpack.c.l.b16 %v317
    %v1354 = vunpack.c.h.b16 %v317
    %v1355 = vunpack.c.l.b16 %v318
    %v1356 = vunpack.c.h.b16 %v318
    %v1357 = vunpack.c.l.b16 %v319
    %v1358 = vunpack.c.h.b16 %v319
    %v1359 = vunpack.c.l.b16 %v320
    %v1360 = vunpack.c.h.b16 %v320
    %v1361 = vunpack.c.l.b16 %v321
    %v1362 = vunpack.c.h.b16 %v321
    %v1363 = vunpack.c.l.b16 %v322
    %v1364 = vunpack.c.h.b16 %v322
    %v1365 = vunpack.c.l.b16 %v323
    %v1366 = vunpack.c.h.b16 %v323
    %v1367 = vunpack.c.l.b16 %v324
    %v1368 = vunpack.c.h.b16 %v324
    %v1369 = vunpack.c.l.b16 %v325
    %v1370 = vunpack.c.h.b16 %v325
    %v1371 = vunpack.c.l.b16 %v326
    %v1372 = vunpack.c.h.b16 %v326
    %v1373 = vunpack.c.l.b16 %v327
    %v1374 = vunpack.c.h.b16 %v327
    %v1375 = vunpack.c.l.b16 %v328
    %v1376 = vunpack.c.h.b16 %v328
    %v1377 = vunpack.c.l.b16 %v329
    %v1378 = vunpack.c.h.b16 %v329
    %v1379 = vunpack.c.l.b16 %v330
    %v1380 = vunpack.c.h.b16 %v330
    %v1381 = vunpack.c.l.b16 %v331
    %v1382 = vunpack.c.h.b16 %v331
    %v1383 = vunpack.c.l.b16 %v332
    %v1384 = vunpack.c.h.b16 %v332
    %v1385 = vunpack.c.l.b16 %v333
    %v1386 = vunpack.c.h.b16 %v333
    %v1387 = vunpack.c.l.b16 %v334
    %v1388 = vunpack.c.h.b16 %v334
    %v1389 = vunpack.c.l.b16 %v335
    %v1390 = vunpack.c.h.b16 %v335
    %v1391 = vunpack.c.l.b16 %v336
    %v1392 = vunpack.c.h.b16 %v336
    %v1393 = vunpack.c.l.b16 %v337
    %v1394 = vunpack.c.h.b16 %v337
    %v1395 = vunpack.c.l.b16 %v338
    %v1396 = vunpack.c.h.b16 %v338
    %v1397 = vunpack.c.l.b16 %v339
    %v1398 = vunpack.c.h.b16 %v339
    %v1399 = vunpack.c.l.b16 %v340
    %v1400 = vunpack.c.h.b16 %v340
    %v1401 = vunpack.c.l.b16 %v341
    %v1402 = vunpack.c.h.b16 %v341
    %v1403 = vunpack.c.l.b16 %v342
    %v1404 = vunpack.c.h.b16 %v342
    %v1405 = vunpack.c.l.b16 %v343
    %v1406 = vunpack.c.h.b16 %v343
    %v1407 = vunpack.c.l.b16 %v344
    %v1408 = vunpack.c.h.b16 %v344
    %v1409 = vunpack.c.l.b16 %v345
    %v1410 = vunpack.c.h.b16 %v345
    %v1411 = vunpack.c.l.b16 %v346
    %v1412 = vunpack.c.h.b16 %v346
    %v1413 = vunpack.c.l.b16 %v347
    %v1414 = vunpack.c.h.b16 %v347
    %v1415 = vunpack.c.l.b16 %v348
    %v1416 = vunpack.c.h.b16 %v348
    %v1417 = vunpack.c.l.b16 %v349
    %v1418 = vunpack.c.h.b16 %v349
    %v1419 = vunpack.c.l.b16 %v350
    %v1420 = vunpack.c.h.b16 %v350
    %v1421 = vunpack.c.l.b16 %v351
    %v1422 = vunpack.c.h.b16 %v351
    %v1423 = vunpack.c.l.b16 %v352
    %v1424 = vunpack.c.h.b16 %v352
    %v1425 = vunpack.c.l.b16 %v353
    %v1426 = vunpack.c.h.b16 %v353
    %v1427 = vunpack.c.l.b16 %v354
    %v1428 = vunpack.c.h.b16 %v354
    %v1429 = vunpack.c.l.b16 %v355
    %v1430 = vunpack.c.h.b16 %v355
    %v1431 = vunpack.c.l.b16 %v356
    %v1432 = vunpack.c.h.b16 %v356
    %v1433 = vunpack.c.l.b16 %v357
    %v1434 = vunpack.c.h.b16 %v357
    %v1435 = vunpack.c.l.b16 %v358
    %v1436 = vunpack.c.h.b16 %v358
    %v1437 = vunpack.c.l.b16 %v359
    %v1438 = vunpack.c.h.b16 %v359
    %v1439 = vunpack.c.l.b16 %v360
    %v1440 = vunpack.c.h.b16 %v360
    %v1441 = vunpack.c.l.b16 %v361
    %v1442 = vunpack.c.h.b16 %v361
    %v1443 = vunpack.c.l.b16 %v362
    %v1444 = vunpack.c.h.b16 %v362
    %v1445 = vunpack.c.l.b16 %v363
    %v1446 = vunpack.c.h.b16 %v363
    %v1447 = vunpack.c.l.b16 %v364
    %v1448 = vunpack.c.h.b16 %v364
    %v1449 = vunpack.c.l.b16 %v365
    %v1450 = vunpack.c.h.b16 %v365
    %v1451 = vunpack.c.l.b16 %v366
    %v1452 = vunpack.c.h.b16 %v366
    %v1453 = vunpack.c.l.b16 %v367
    %v1454 = vunpack.c.h.b16 %v367
    %v1455 = vunpack.c.l.b16 %v368
    %v1456 = vunpack.c.h.b16 %v368
    %v1457 = vunpack.c.l.b16 %v369
    %v1458 = vunpack.c.h.b16 %v369
    %v1459 = vunpack.c.l.b16 %v370
    %v1460 = vunpack.c.h.b16 %v370
    %v1461 = vunpack.c.l.b16 %v371
    %v1462 = vunpack.c.h.b16 %v371
    %v1463 = vunpack.c.l.b16 %v372
    %v1464 = vunpack.c.h.b16 %v372
    %v1465 = vunpack.c.l.b16 %v373
    %v1466 = vunpack.c.h.b16 %v373
    %v1467 = vunpack.c.l.b16 %v374
    %v1468 = vunpack.c.h.b16 %v374
    %v1469 = vunpack.c.l.b16 %v375
    %v1470 = vunpack.c.h.b16 %v375
    %v1471 = vunpack.c.l.b16 %v376
    %v1472 = vunpack.c.h.b16 %v376
    %v1473 = vunpack.c.l.b16 %v377
    %v1474 = vunpack.c.h.b16 %v377
    %v1475 = vunpack.c.l.b16 %v378
    %v1476 = vunpack.c.h.b16 %v378
    %v1477 = vunpack.c.l.b16 %v379
    %v1478 = vunpack.c.h.b16 %v379
    %v1479 = vunpack.c.l.b16 %v380
    %v1480 = vunpack.c.h.b16 %v380
    %v1481 = vunpack.c.l.b16 %v381
    %v1482 = vunpack.c.h.b16 %v381
    %v1483 = vunpack.c.l.b16 %v382
    %v1484 = vunpack.c.h.b16 %v382
    %v1485 = vunpack.c.l.b16 %v383
    %v1486 = vunpack.c.h.b16 %v383
    %v1487 = vunpack.c.l.b16 %v384
    %v1488 = vunpack.c.h.b16 %v384
    %v1489 = vunpack.c.l.b16 %v385
    %v1490 = vunpack.c.h.b16 %v385
    %v1491 = vunpack.c.l.b16 %v386
    %v1492 = vunpack.c.h.b16 %v386
    %v1493 = vunpack.c.l.b16 %v387
    %v1494 = vunpack.c.h.b16 %v387
    %v1495 = vunpack.c.l.b16 %v388
    %v1496 = vunpack.c.h.b16 %v388
    %v1497 = vunpack.c.l.b16 %v389
    %v1498 = vunpack.c.h.b16 %v389
    %v1499 = vunpack.c.l.b16 %v390
    %v1500 = vunpack.c.h.b16 %v390
    %v1501 = vunpack.c.l.b16 %v391
    %v1502 = vunpack.c.h.b16 %v391
    %v1503 = vunpack.c.l.b16 %v392
    %v1504 = vunpack.c.h.b16 %v392
    %v1505 = vunpack.c.l.b16 %v393
    %v1506 = vunpack.c.h.b16 %v393
    %v1507 = vunpack.c.l.b16 %v394
    %v1508 = vunpack.c.h.b16 %v394
    %v1509 = vunpack.c.l.b16 %v395
    %v1510 = vunpack.c.h.b16 %v395
    %v1511 = vunpack.c.l.b16 %v396
    %v1512 = vunpack.c.h.b16 %v396
    %v1513 = vunpack.c.l.b16 %v397
    %v1514 = vunpack.c.h.b16 %v397
    %v1515 = vunpack.c.l.b16 %v398
    %v1516 = vunpack.c.h.b16 %v398
    %v1517 = vunpack.c.l.b16 %v399
    %v1518 = vunpack.c.h.b16 %v399
    %v1519 = vunpack.c.l.b16 %v400
    %v1520 = vunpack.c.h.b16 %v400
    %v1521 = vunpack.c.l.b16 %v401
    %v1522 = vunpack.c.h.b16 %v401
    %v1523 = vunpack.c.l.b16 %v402
    %v1524 = vunpack.c.h.b16 %v402
    %v1525 = vunpack.c.l.b16 %v403
    %v1526 = vunpack.c.h.b16 %v403
    %v1527 = vunpack.c.l.b16 %v404
    %v1528 = vunpack.c.h.b16 %v404
    %v1529 = vunpack.c.l.b16 %v405
    %v1530 = vunpack.c.h.b16 %v405
    %v1531 = vunpack.c.l.b16 %v406
    %v1532 = vunpack.c.h.b16 %v406
    %v1533 = vunpack.c.l.b16 %v407
    %v1534 = vunpack.c.h.b16 %v407
    %v1535 = vunpack.c.l.b16 %v408
    %v1536 = vunpack.c.h.b16 %v408
    %v1537 = vunpack.c.l.b16 %v409
    %v1538 = vunpack.c.h.b16 %v409
    %v1539 = vunpack.c.l.b16 %v410
    %v1540 = vunpack.c.h.b16 %v410
    %v1541 = vunpack.c.l.b16 %v411
    %v1542 = vunpack.c.h.b16 %v411
    %v1543 = vunpack.c.l.b16 %v412
    %v1544 = vunpack.c.h.b16 %v412
    %v1545 = vunpack.c.l.b16 %v413
    %v1546 = vunpack.c.h.b16 %v413
    %v1547 = vunpack.c.l.b16 %v414
    %v1548 = vunpack.c.h.b16 %v414
    %v1549 = vunpack.c.l.b16 %v415
    %v1550 = vunpack.c.h.b16 %v415
    %v1551 = vunpack.c.l.b16 %v416
    %v1552 = vunpack.c.h.b16 %v416
    %v1553 = vunpack.c.l.b16 %v417
    %v1554 = vunpack.c.h.b16 %v417
    %v1555 = vunpack.c.l.b16 %v418
    %v1556 = vunpack.c.h.b16 %v418
    %v1557 = vunpack.c.l.b16 %v419
    %v1558 = vunpack.c.h.b16 %v419
    %v1559 = vunpack.c.l.b16 %v420
    %v1560 = vunpack.c.h.b16 %v420
    %v1561 = vunpack.c.l.b16 %v421
    %v1562 = vunpack.c.h.b16 %v421
    %v1563 = vunpack.c.l.b16 %v422
    %v1564 = vunpack.c.h.b16 %v422
    %v1565 = vunpack.c.l.b16 %v423
    %v1566 = vunpack.c.h.b16 %v423
    %v1567 = vunpack.c.l.b16 %v424
    %v1568 = vunpack.c.h.b16 %v424
    %v1569 = vunpack.c.l.b16 %v425
    %v1570 = vunpack.c.h.b16 %v425
    %v1571 = vunpack.c.l.b16 %v426
    %v1572 = vunpack.c.h.b16 %v426
    %v1573 = vunpack.c.l.b16 %v427
    %v1574 = vunpack.c.h.b16 %v427
    %v1575 = vunpack.c.l.b16 %v428
    %v1576 = vunpack.c.h.b16 %v428
    %v1577 = vunpack.c.l.b16 %v429
    %v1578 = vunpack.c.h.b16 %v429
    %v1579 = vunpack.c.l.b16 %v430
    %v1580 = vunpack.c.h.b16 %v430
    %v1581 = vunpack.c.l.b16 %v431
    %v1582 = vunpack.c.h.b16 %v431
    %v1583 = vunpack.c.l.b16 %v432
    %v1584 = vunpack.c.h.b16 %v432
    %v1585 = vunpack.c.l.b16 %v433
    %v1586 = vunpack.c.h.b16 %v433
    %v1587 = vunpack.c.l.b16 %v434
    %v1588 = vunpack.c.h.b16 %v434
    %v1589 = vunpack.c.l.b16 %v435
    %v1590 = vunpack.c.h.b16 %v435
    %v1591 = vunpack.c.l.b16 %v436
    %v1592 = vunpack.c.h.b16 %v436
    %v1593 = vunpack.c.l.b16 %v437
    %v1594 = vunpack.c.h.b16 %v437
    %v1595 = vunpack.c.l.b16 %v438
    %v1596 = vunpack.c.h.b16 %v438
    %v1597 = vunpack.c.l.b16 %v439
    %v1598 = vunpack.c.h.b16 %v439
    %v1599 = vunpack.c.l.b16 %v440
    %v1600 = vunpack.c.h.b16 %v440
    %v1601 = vunpack.c.l.b16 %v441
    %v1602 = vunpack.c.h.b16 %v441
    %v1603 = vunpack.c.l.b16 %v442
    %v1604 = vunpack.c.h.b16 %v442
    %v1605 = vunpack.c.l.b16 %v443
    %v1606 = vunpack.c.h.b16 %v443
    %v1607 = vunpack.c.l.b16 %v444
    %v1608 = vunpack.c.h.b16 %v444
    %v1609 = vunpack.c.l.b16 %v445
    %v1610 = vunpack.c.h.b16 %v445
    %v1611 = vunpack.c.l.b16 %v446
    %v1612 = vunpack.c.h.b16 %v446
    %v1613 = vunpack.c.l.b16 %v447
    %v1614 = vunpack.c.h.b16 %v447
    %v1615 = vunpack.c.l.b16 %v448
    %v1616 = vunpack.c.h.b16 %v448
    %v1617 = vunpack.c.l.b16 %v449
    %v1618 = vunpack.c.h.b16 %v449
    %v1619 = vunpack.c.l.b16 %v450
    %v1620 = vunpack.c.h.b16 %v450
    %v1621 = vunpack.c.l.b16 %v451
    %v1622 = vunpack.c.h.b16 %v451
    %v1623 = vunpack.c.l.b16 %v452
    %v1624 = vunpack.c.h.b16 %v452
    %v1625 = vunpack.c.l.b16 %v453
    %v1626 = vunpack.c.h.b16 %v453
    %v1627 = vunpack.c.l.b16 %v454
    %v1628 = vunpack.c.h.b16 %v454
    %v1629 = vunpack.c.l.b16 %v455
    %v1630 = vunpack.c.h.b16 %v455
    %v1631 = vunpack.c.l.b16 %v456
    %v1632 = vunpack.c.h.b16 %v456
    %v1633 = vunpack.c.l.b16 %v457
    %v1634 = vunpack.c.h.b16 %v457
    %v1635 = vunpack.c.l.b16 %v458
    %v1636 = vunpack.c.h.b16 %v458
    %v1637 = vunpack.c.l.b16 %v459
    %v1638 = vunpack.c.h.b16 %v459
    %v1639 = vunpack.c.l.b16 %v460
    %v1640 = vunpack.c.h.b16 %v460
    %v1641 = vunpack.c.l.b16 %v461
    %v1642 = vunpack.c.h.b16 %v461
    %v1643 = vunpack.c.l.b16 %v462
    %v1644 = vunpack.c.h.b16 %v462
    %v1645 = vunpack.c.l.b16 %v463
    %v1646 = vunpack.c.h.b16 %v463
    %v1647 = vunpack.c.l.b16 %v464
    %v1648 = vunpack.c.h.b16 %v464
    %v1649 = vunpack.c.l.b16 %v465
    %v1650 = vunpack.c.h.b16 %v465
    %v1651 = vunpack.c.l.b16 %v466
    %v1652 = vunpack.c.h.b16 %v466
    %v1653 = vunpack.c.l.b16 %v467
    %v1654 = vunpack.c.h.b16 %v467
    %v1655 = vunpack.c.l.b16 %v468
    %v1656 = vunpack.c.h.b16 %v468
    %v1657 = vunpack.c.l.b16 %v469
    %v1658 = vunpack.c.h.b16 %v469
    %v1659 = vunpack.c.l.b16 %v470
    %v1660 = vunpack.c.h.b16 %v470
    %v1661 = vunpack.c.l.b16 %v471
    %v1662 = vunpack.c.h.b16 %v471
    %v1663 = vunpack.c.l.b16 %v472
    %v1664 = vunpack.c.h.b16 %v472
    %v1665 = vunpack.c.l.b16 %v473
    %v1666 = vunpack.c.h.b16 %v473
    %v1667 = vunpack.c.l.b16 %v474
    %v1668 = vunpack.c.h.b16 %v474
    %v1669 = vunpack.c.l.b16 %v475
    %v1670 = vunpack.c.h.b16 %v475
    %v1671 = vunpack.c.l.b16 %v476
    %v1672 = vunpack.c.h.b16 %v476
    %v1673 = vunpack.c.l.b16 %v477
    %v1674 = vunpack.c.h.b16 %v477
    %v1675 = vunpack.c.l.b16 %v478
    %v1676 = vunpack.c.h.b16 %v478
    %v1677 = vunpack.c.l.b16 %v479
    %v1678 = vunpack.c.h.b16 %v479
    %v1679 = vunpack.c.l.b16 %v480
    %v1680 = vunpack.c.h.b16 %v480
    %v1681 = vunpack.c.l.b16 %v481
    %v1682 = vunpack.c.h.b16 %v481
    %v1683 = vunpack.c.l.b16 %v482
    %v1684 = vunpack.c.h.b16 %v482
    %v1685 = vunpack.c.l.b16 %v483
    %v1686 = vunpack.c.h.b16 %v483
    %v1687 = vunpack.c.l.b16 %v484
    %v1688 = vunpack.c.h.b16 %v484
    %v1689 = vunpack.c.l.b16 %v485
    %v1690 = vunpack.c.h.b16 %v485
    %v1691 = vunpack.c.l.b16 %v486
    %v1692 = vunpack.c.h.b16 %v486
    %v1693 = vunpack.c.l.b16 %v487
    %v1694 = vunpack.c.h.b16 %v487
    %v1695 = vunpack.c.l.b16 %v488
    %v1696 = vunpack.c.h.b16 %v488
    %v1697 = vunpack.c.l.b16 %v489
    %v1698 = vunpack.c.h.b16 %v489
    %v1699 = vunpack.c.l.b16 %v490
    %v1700 = vunpack.c.h.b16 %v490
    %v1701 = vunpack.c.l.b16 %v491
    %v1702 = vunpack.c.h.b16 %v491
    %v1703 = vunpack.c.l.b16 %v492
    %v1704 = vunpack.c.h.b16 %v492
    %v1705 = vpack.c.b16 %v907, %v905
    %v1706 = vpack.c.b16 %v908, %v906
    %v1707 = vpack.c.b16 %v911, %v909
    %v1708 = vpack.c.b16 %v912, %v910
    %v1709 = vpack.c.b16 %v915, %v913
    %v1710 = vpack.c.b16 %v916, %v914
    %v1711 = vpack.c.b16 %v919, %v917
    %v1712 = vpack.c.b16 %v920, %v918
    %v1713 = vpack.c.b16 %v923, %v921
    %v1714 = vpack.c.b16 %v924, %v922
    %v1715 = vpack.c.b16 %v927, %v925
    %v1716 = vpack.c.b16 %v928, %v926
    %v1717 = vpack.c.b16 %v931, %v929
    %v1718 = vpack.c.b16 %v932, %v930
    %v1719 = vpack.c.b16 %v935, %v933
    %v1720 = vpack.c.b16 %v936, %v934
    %v1721 = vpack.c.b16 %v939, %v937
    %v1722 = vpack.c.b16 %v940, %v938
    %v1723 = vpack.c.b16 %v943, %v941
    %v1724 = vpack.c.b16 %v944, %v942
    %v1725 = vpack.c.b16 %v947, %v945
    %v1726 = vpack.c.b16 %v948, %v946
    %v1727 = vpack.c.b16 %v951, %v949
    %v1728 = vpack.c.b16 %v952, %v950
    %v1729 = vpack.c.b16 %v955, %v953
    %v1730 = vpack.c.b16 %v956, %v954
    %v1731 = vpack.c.b16 %v959, %v957
    %v1732 = vpack.c.b16 %v960, %v958
    %v1733 = vpack.c.b16 %v963, %v961
    %v1734 = vpack.c.b16 %v964, %v962
    %v1735 = vpack.c.b16 %v967, %v965
    %v1736 = vpack.c.b16 %v968, %v966
    %v1737 = vpack.c.b16 %v971, %v969
    %v1738 = vpack.c.b16 %v972, %v970
    %v1739 = vpack.c.b16 %v975, %v973
    %v1740 = vpack.c.b16 %v976, %v974
    %v1741 = vpack.c.b16 %v979, %v977
    %v1742 = vpack.c.b16 %v980, %v978
    %v1743 = vpack.c.b16 %v983, %v981
    %v1744 = vpack.c.b16 %v984, %v982
    %v1745 = vpack.c.b16 %v987, %v985
    %v1746 = vpack.c.b16 %v988, %v986
    %v1747 = vpack.c.b16 %v991, %v989
    %v1748 = vpack.c.b16 %v992, %v990
    %v1749 = vpack.c.b16 %v995, %v993
    %v1750 = vpack.c.b16 %v996, %v994
    %v1751 = vpack.c.b16 %v999, %v997
    %v1752 = vpack.c.b16 %v1000, %v998
    %v1753 = vpack.c.b16 %v1003, %v1001
    %v1754 = vpack.c.b16 %v1004, %v1002
    %v1755 = vpack.c.b16 %v1007, %v1005
    %v1756 = vpack.c.b16 %v1008, %v1006
    %v1757 = vpack.c.b16 %v1011, %v1009
    %v1758 = vpack.c.b16 %v1012, %v1010
    %v1759 = vpack.c.b16 %v1015, %v1013
    %v1760 = vpack.c.b16 %v1016, %v1014
    %v1761 = vpack.c.b16 %v1019, %v1017
    %v1762 = vpack.c.b16 %v1020, %v1018
    %v1763 = vpack.c.b16 %v1023, %v1021
    %v1764 = vpack.c.b16 %v1024, %v1022
    %v1765 = vpack.c.b16 %v1027, %v1025
    %v1766 = vpack.c.b16 %v1028, %v1026
    %v1767 = vpack.c.b16 %v1031, %v1029
    %v1768 = vpack.c.b16 %v1032, %v1030
    %v1769 = vpack.c.b16 %v1035, %v1033
    %v1770 = vpack.c.b16 %v1036, %v1034
    %v1771 = vpack.c.b16 %v1039, %v1037
    %v1772 = vpack.c.b16 %v1040, %v1038
    %v1773 = vpack.c.b16 %v1043, %v1041
    %v1774 = vpack.c.b16 %v1044, %v1042
    %v1775 = vpack.c.b16 %v1047, %v1045
    %v1776 = vpack.c.b16 %v1048, %v1046
    %v1777 = vpack.c.b16 %v1051, %v1049
    %v1778 = vpack.c.b16 %v1052, %v1050
    %v1779 = vpack.c.b16 %v1055, %v1053
    %v1780 = vpack.c.b16 %v1056, %v1054
    %v1781 = vpack.c.b16 %v1059, %v1057
    %v1782 = vpack.c.b16 %v1060, %v1058
    %v1783 = vpack.c.b16 %v1063, %v1061
    %v1784 = vpack.c.b16 %v1064, %v1062
    %v1785 = vpack.c.b16 %v1067, %v1065
    %v1786 = vpack.c.b16 %v1068, %v1066
    %v1787 = vpack.c.b16 %v1071, %v1069
    %v1788 = vpack.c.b16 %v1072, %v1070
    %v1789 = vpack.c.b16 %v1075, %v1073
    %v1790 = vpack.c.b16 %v1076, %v1074
    %v1791 = vpack.c.b16 %v1079, %v1077
    %v1792 = vpack.c.b16 %v1080, %v1078
    %v1793 = vpack.c.b16 %v1083, %v1081
    %v1794 = vpack.c.b16 %v1084, %v1082
    %v1795 = vpack.c.b16 %v1087, %v1085
    %v1796 = vpack.c.b16 %v1088, %v1086
    %v1797 = vpack.c.b16 %v1091, %v1089
    %v1798 = vpack.c.b16 %v1092, %v1090
    %v1799 = vpack.c.b16 %v1095, %v1093
    %v1800 = vpack.c.b16 %v1096, %v1094
    %v1801 = vpack.c.b16 %v1099, %v1097
    %v1802 = vpack.c.b16 %v1100, %v1098
    %v1803 = vpack.c.b16 %v1103, %v1101
    %v1804 = vpack.c.b16 %v1104, %v1102
    %v1805 = vpack.c.b16 %v1107, %v1105
    %v1806 = vpack.c.b16 %v1108, %v1106
    %v1807 = vpack.c.b16 %v1111, %v1109
    %v1808 = vpack.c.b16 %v1112, %v1110
    %v1809 = vpack.c.b16 %v1115, %v1113
    %v1810 = vpack.c.b16 %v1116, %v1114
    %v1811 = vpack.c.b16 %v1119, %v1117
    %v1812 = vpack.c.b16 %v1120, %v1118
    %v1813 = vpack.c.b16 %v1123, %v1121
    %v1814 = vpack.c.b16 %v1124, %v1122
    %v1815 = vpack.c.b16 %v1127, %v1125
    %v1816 = vpack.c.b16 %v1128, %v1126
    %v1817 = vpack.c.b16 %v1131, %v1129
    %v1818 = vpack.c.b16 %v1132, %v1130
    %v1819 = vpack.c.b16 %v1135, %v1133
    %v1820 = vpack.c.b16 %v1136, %v1134
    %v1821 = vpack.c.b16 %v1139, %v1137
    %v1822 = vpack.c.b16 %v1140, %v1138
    %v1823 = vpack.c.b16 %v1143, %v1141
    %v1824 = vpack.c.b16 %v1144, %v1142
    %v1825 = vpack.c.b16 %v1147, %v1145
    %v1826 = vpack.c.b16 %v1148, %v1146
    %v1827 = vpack.c.b16 %v1151, %v1149
    %v1828 = vpack.c.b16 %v1152, %v1150
    %v1829 = vpack.c.b16 %v1155, %v1153
    %v1830 = vpack.c.b16 %v1156, %v1154
    %v1831 = vpack.c.b16 %v1159, %v1157
    %v1832 = vpack.c.b16 %v1160, %v1158
    %v1833 = vpack.c.b16 %v1163, %v1161
    %v1834 = vpack.c.b16 %v1164, %v1162
    %v1835 = vpack.c.b16 %v1167, %v1165
    %v1836 = vpack.c.b16 %v1168, %v1166
    %v1837 = vpack.c.b16 %v1171, %v1169
    %v1838 = vpack.c.b16 %v1172, %v1170
    %v1839 = vpack.c.b16 %v1175, %v1173
    %v1840 = vpack.c.b16 %v1176, %v1174
    %v1841 = vpack.c.b16 %v1179, %v1177
    %v1842 = vpack.c.b16 %v1180, %v1178
    %v1843 = vpack.c.b16 %v1183, %v1181
    %v1844 = vpack.c.b16 %v1184, %v1182
    %v1845 = vpack.c.b16 %v1187, %v1185
    %v1846 = vpack.c.b16 %v1188, %v1186
    %v1847 = vpack.c.b16 %v1191, %v1189
    %v1848 = vpack.c.b16 %v1192, %v1190
    %v1849 = vpack.c.b16 %v1195, %v1193
    %v1850 = vpack.c.b16 %v1196, %v1194
    %v1851 = vpack.c.b16 %v1199, %v1197
    %v1852 = vpack.c.b16 %v1200, %v1198
    %v1853 = vpack.c.b16 %v1203, %v1201
    %v1854 = vpack.c.b16 %v1204, %v1202
    %v1855 = vpack.c.b16 %v1207, %v1205
    %v1856 = vpack.c.b16 %v1208, %v1206
    %v1857 = vpack.c.b16 %v1211, %v1209
    %v1858 = vpack.c.b16 %v1212, %v1210
    %v1859 = vpack.c.b16 %v1215, %v1213
    %v1860 = vpack.c.b16 %v1216, %v1214
    %v1861 = vpack.c.b16 %v1219, %v1217
    %v1862 = vpack.c.b16 %v1220, %v1218
    %v1863 = vpack.c.b16 %v1223, %v1221
    %v1864 = vpack.c.b16 %v1224, %v1222
    %v1865 = vpack.c.b16 %v1227, %v1225
    %v1866 = vpack.c.b16 %v1228, %v1226
    %v1867 = vpack.c.b16 %v1231, %v1229
    %v1868 = vpack.c.b16 %v1232, %v1230
    %v1869 = vpack.c.b16 %v1235, %v1233
    %v1870 = vpack.c.b16 %v1236, %v1234
    %v1871 = vpack.c.b16 %v1239, %v1237
    %v1872 = vpack.c.b16 %v1240, %v1238
    %v1873 = vpack.c.b16 %v1243, %v1241
    %v1874 = vpack.c.b16 %v1244, %v1242
    %v1875 = vpack.c.b16 %v1247, %v1245
    %v1876 = vpack.c.b16 %v1248, %v1246
    %v1877 = vpack.c.b16 %v1251, %v1249
    %v1878 = vpack.c.b16 %v1252, %v1250
    %v1879 = vpack.c.b16 %v1255, %v1253
    %v1880 = vpack.c.b16 %v1256, %v1254
    %v1881 = vpack.c.b16 %v1259, %v1257
    %v1882 = vpack.c.b16 %v1260, %v1258
    %v1883 = vpack.c.b16 %v1263, %v1261
    %v1884 = vpack.c.b16 %v1264, %v1262
    %v1885 = vpack.c.b16 %v1267, %v1265
    %v1886 = vpack.c.b16 %v1268, %v1266
    %v1887 = vpack.c.b16 %v1271, %v1269
    %v1888 = vpack.c.b16 %v1272, %v1270
    %v1889 = vpack.c.b16 %v1275, %v1273
    %v1890 = vpack.c.b16 %v1276, %v1274
    %v1891 = vpack.c.b16 %v1279, %v1277
    %v1892 = vpack.c.b16 %v1280, %v1278
    %v1893 = vpack.c.b16 %v1283, %v1281
    %v1894 = vpack.c.b16 %v1284, %v1282
    %v1895 = vpack.c.b16 %v1287, %v1285
    %v1896 = vpack.c.b16 %v1288, %v1286
    %v1897 = vpack.c.b16 %v1291, %v1289
    %v1898 = vpack.c.b16 %v1292, %v1290
    %v1899 = vpack.c.b16 %v1295, %v1293
    %v1900 = vpack.c.b16 %v1296, %v1294
    %v1901 = vpack.c.b16 %v1299, %v1297
    %v1902 = vpack.c.b16 %v1300, %v1298
    %v1903 = vpack.c.b16 %v1303, %v1301
    %v1904 = vpack.c.b16 %v1304, %v1302
    %v1905 = vpack.c.b16 %v1307, %v1305
    %v1906 = vpack.c.b16 %v1308, %v1306
    %v1907 = vpack.c.b16 %v1311, %v1309
    %v1908 = vpack.c.b16 %v1312, %v1310
    %v1909 = vpack.c.b16 %v1315, %v1313
    %v1910 = vpack.c.b16 %v1316, %v1314
    %v1911 = vpack.c.b16 %v1319, %v1317
    %v1912 = vpack.c.b16 %v1320, %v1318
    %v1913 = vpack.c.b16 %v1323, %v1321
    %v1914 = vpack.c.b16 %v1324, %v1322
    %v1915 = vpack.c.b16 %v1327, %v1325
    %v1916 = vpack.c.b16 %v1328, %v1326
    %v1917 = vpack.c.b16 %v1331, %v1329
    %v1918 = vpack.c.b16 %v1332, %v1330
    %v1919 = vpack.c.b16 %v1335, %v1333
    %v1920 = vpack.c.b16 %v1336, %v1334
    %v1921 = vpack.c.b16 %v1339, %v1337
    %v1922 = vpack.c.b16 %v1340, %v1338
    %v1923 = vpack.c.b16 %v1343, %v1341
    %v1924 = vpack.c.b16 %v1344, %v1342
    %v1925 = vpack.c.b16 %v1347, %v1345
    %v1926 = vpack.c.b16 %v1348, %v1346
    %v1927 = vpack.c.b16 %v1351, %v1349
    %v1928 = vpack.c.b16 %v1352, %v1350
    %v1929 = vpack.c.b16 %v1355, %v1353
    %v1930 = vpack.c.b16 %v1356, %v1354
    %v1931 = vpack.c.b16 %v1359, %v1357
    %v1932 = vpack.c.b16 %v1360, %v1358
    %v1933 = vpack.c.b16 %v1363, %v1361
    %v1934 = vpack.c.b16 %v1364, %v1362
    %v1935 = vpack.c.b16 %v1367, %v1365
    %v1936 = vpack.c.b16 %v1368, %v1366
    %v1937 = vpack.c.b16 %v1371, %v1369
    %v1938 = vpack.c.b16 %v1372, %v1370
    %v1939 = vpack.c.b16 %v1375, %v1373
    %v1940 = vpack.c.b16 %v1376, %v1374
    %v1941 = vpack.c.b16 %v1379, %v1377
    %v1942 = vpack.c.b16 %v1380, %v1378
    %v1943 = vpack.c.b16 %v1383, %v1381
    %v1944 = vpack.c.b16 %v1384, %v1382
    %v1945 = vpack.c.b16 %v1387, %v1385
    %v1946 = vpack.c.b16 %v1388, %v1386
    %v1947 = vpack.c.b16 %v1391, %v1389
    %v1948 = vpack.c.b16 %v1392, %v1390
    %v1949 = vpack.c.b16 %v1395, %v1393
    %v1950 = vpack.c.b16 %v1396, %v1394
    %v1951 = vpack.c.b16 %v1399, %v1397
    %v1952 = vpack.c.b16 %v1400, %v1398
    %v1953 = vpack.c.b16 %v1403, %v1401
    %v1954 = vpack.c.b16 %v1404, %v1402
    %v1955 = vpack.c.b16 %v1407, %v1405
    %v1956 = vpack.c.b16 %v1408, %v1406
    %v1957 = vpack.c.b16 %v1411, %v1409
    %v1958 = vpack.c.b16 %v1412, %v1410
    %v1959 = vpack.c.b16 %v1415, %v1413
    %v1960 = vpack.c.b16 %v1416, %v1414
    %v1961 = vpack.c.b16 %v1419, %v1417
    %v1962 = vpack.c.b16 %v1420, %v1418
    %v1963 = vpack.c.b16 %v1423, %v1421
    %v1964 = vpack.c.b16 %v1424, %v1422
    %v1965 = vpack.c.b16 %v1427, %v1425
    %v1966 = vpack.c.b16 %v1428, %v1426
    %v1967 = vpack.c.b16 %v1431, %v1429
    %v1968 = vpack.c.b16 %v1432, %v1430
    %v1969 = vpack.c.b16 %v1435, %v1433
    %v1970 = vpack.c.b16 %v1436, %v1434
    %v1971 = vpack.c.b16 %v1439, %v1437
    %v1972 = vpack.c.b16 %v1440, %v1438
    %v1973 = vpack.c.b16 %v1443, %v1441
    %v1974 = vpack.c.b16 %v1444, %v1442
    %v1975 = vpack.c.b16 %v1447, %v1445
    %v1976 = vpack.c.b16 %v1448, %v1446
    %v1977 = vpack.c.b16 %v1451, %v1449
    %v1978 = vpack.c.b16 %v1452, %v1450
    %v1979 = vpack.c.b16 %v1455, %v1453
    %v1980 = vpack.c.b16 %v1456, %v1454
    %v1981 = vpack.c.b16 %v1459, %v1457
    %v1982 = vpack.c.b16 %v1460, %v1458
    %v1983 = vpack.c.b16 %v1463, %v1461
    %v1984 = vpack.c.b16 %v1464, %v1462
    %v1985 = vpack.c.b16 %v1467, %v1465
    %v1986 = vpack.c.b16 %v1468, %v1466
    %v1987 = vpack.c.b16 %v1471, %v1469
    %v1988 = vpack.c.b16 %v1472, %v1470
    %v1989 = vpack.c.b16 %v1475, %v1473
    %v1990 = vpack.c.b16 %v1476, %v1474
    %v1991 = vpack.c.b16 %v1479, %v1477
    %v1992 = vpack.c.b16 %v1480, %v1478
    %v1993 = vpack.c.b16 %v1483, %v1481
    %v1994 = vpack.c.b16 %v1484, %v1482
    %v1995 = vpack.c.b16 %v1487, %v1485
    %v1996 = vpack.c.b16 %v1488, %v1486
    %v1997 = vpack.c.b16 %v1491, %v1489
    %v1998 = vpack.c.b16 %v1492, %v1490
    %v1999 = vpack.c.b16 %v1495, %v1493
    %v2000 = vpack.c.b16 %v1496, %v1494
    %v2001 = vpack.c.b16 %v1499, %v1497
    %v2002 = vpack.c.b16 %v1500, %v1498
    %v2003 = vpack.c.b16 %v1503, %v1501
    %v2004 = vpack.c.b16 %v1504, %v1502
    %v2005 = vpack.c.b16 %v1507, %v1505
    %v2006 = vpack.c.b16 %v1508, %v1506
    %v2007 = vpack.c.b16 %v1511, %v1509
    %v2008 = vpack.c.b16 %v1512, %v1510
    %v2009 = vpack.c.b16 %v1515, %v1513
    %v2010 = vpack.c.b16 %v1516, %v1514
    %v2011 = vpack.c.b16 %v1519, %v1517
    %v2012 = vpack.c.b16 %v1520, %v1518
    %v2013 = vpack.c.b16 %v1523, %v1521
    %v2014 = vpack.c.b16 %v1524, %v1522
    %v2015 = vpack.c.b16 %v1527, %v1525
    %v2016 = vpack.c.b16 %v1528, %v1526
    %v2017 = vpack.c.b16 %v1531, %v1529
    %v2018 = vpack.c.b16 %v1532, %v1530
    %v2019 = vpack.c.b16 %v1535, %v1533
    %v2020 = vpack.c.b16 %v1536, %v1534
    %v2021 = vpack.c.b16 %v1539, %v1537
    %v2022 = vpack.c.b16 %v1540, %v1538
    %v2023 = vpack.c.b16 %v1543, %v1541
    %v2024 = vpack.c.b16 %v1544, %v1542
    %v2025 = vpack.c.b16 %v1547, %v1545
    %v2026 = vpack.c.b16 %v1548, %v1546
    %v2027 = vpack.c.b16 %v1551, %v1549
    %v2028 = vpack.c.b16 %v1552, %v1550
    %v2029 = vpack.c.b16 %v1555, %v1553
    %v2030 = vpack.c.b16 %v1556, %v1554
    %v2031 = vpack.c.b16 %v1559, %v1557
    %v2032 = vpack.c.b16 %v1560, %v1558
    %v2033 = vpack.c.b16 %v1563, %v1561
    %v2034 = vpack.c.b16 %v1564, %v1562
    %v2035 = vpack.c.b16 %v1567, %v1565
    %v2036 = vpack.c.b16 %v1568, %v1566
    %v2037 = vpack.c.b16 %v1571, %v1569
    %v2038 = vpack.c.b16 %v1572, %v1570
    %v2039 = vpack.c.b16 %v1575, %v1573
    %v2040 = vpack.c.b16 %v1576, %v1574
    %v2041 = vpack.c.b16 %v1579, %v1577
    %v2042 = vpack.c.b16 %v1580, %v1578
    %v2043 = vpack.c.b16 %v1583, %v1581
    %v2044 = vpack.c.b16 %v1584, %v1582
    %v2045 = vpack.c.b16 %v1587, %v1585
    %v2046 = vpack.c.b16 %v1588, %v1586
    %v2047 = vpack.c.b16 %v1591, %v1589
    %v2048 = vpack.c.b16 %v1592, %v1590
    %v2049 = vpack.c.b16 %v1595, %v1593
    %v2050 = vpack.c.b16 %v1596, %v1594
    %v2051 = vpack.c.b16 %v1599, %v1597
    %v2052 = vpack.c.b16 %v1600, %v1598
    %v2053 = vpack.c.b16 %v1603, %v1601
    %v2054 = vpack.c.b16 %v1604, %v1602
    %v2055 = vpack.c.b16 %v1607, %v1605
    %v2056 = vpack.c.b16 %v1608, %v1606
    %v2057 = vpack.c.b16 %v1611, %v1609
    %v2058 = vpack.c.b16 %v1612, %v1610
    %v2059 = vpack.c.b16 %v1615, %v1613
    %v2060 = vpack.c.b16 %v1616, %v1614
    %v2061 = vpack.c.b16 %v1619, %v1617
    %v2062 = vpack.c.b16 %v1620, %v1618
    %v2063 = vpack.c.b16 %v1623, %v1621
    %v2064 = vpack.c.b16 %v1624, %v1622
    %v2065 = vpack.c.b16 %v1627, %v1625
    %v2066 = vpack.c.b16 %v1628, %v1626
    %v2067 = vpack.c.b16 %v1631, %v1629
    %v2068 = vpack.c.b16 %v1632, %v1630
    %v2069 = vpack.c.b16 %v1635, %v1633
    %v2070 = vpack.c.b16 %v1636, %v1634
    %v2071 = vpack.c.b16 %v1639, %v1637
    %v2072 = vpack.c.b16 %v1640, %v1638
    %v2073 = vpack.c.b16 %v1643, %v1641
    %v2074 = vpack.c.b16 %v1644, %v1642
    %v2075 = vpack.c.b16 %v1647, %v1645
    %v2076 = vpack.c.b16 %v1648, %v1646
    %v2077 = vpack.c.b16 %v1651, %v1649
    %v2078 = vpack.c.b16 %v1652, %v1650
    %v2079 = vpack.c.b16 %v1655, %v1653
    %v2080 = vpack.c.b16 %v1656, %v1654
    %v2081 = vpack.c.b16 %v1659, %v1657
    %v2082 = vpack.c.b16 %v1660, %v1658
    %v2083 = vpack.c.b16 %v1663, %v1661
    %v2084 = vpack.c.b16 %v1664, %v1662
    %v2085 = vpack.c.b16 %v1667, %v1665
    %v2086 = vpack.c.b16 %v1668, %v1666
    %v2087 = vpack.c.b16 %v1671, %v1669
    %v2088 = vpack.c.b16 %v1672, %v1670
    %v2089 = vpack.c.b16 %v1675, %v1673
    %v2090 = vpack.c.b16 %v1676, %v1674
    %v2091 = vpack.c.b16 %v1679, %v1677
    %v2092 = vpack.c.b16 %v1680, %v1678
    %v2093 = vpack.c.b16 %v1683, %v1681
    %v2094 = vpack.c.b16 %v1684, %v1682
    %v2095 = vpack.c.b16 %v1687, %v1685
    %v2096 = vpack.c.b16 %v1688, %v1686
    %v2097 = vpack.c.b16 %v1691, %v1689
    %v2098 = vpack.c.b16 %v1692, %v1690
    %v2099 = vpack.c.b16 %v1695, %v1693
    %v2100 = vpack.c.b16 %v1696, %v1694
    %v2101 = vpack.c.b16 %v1699, %v1697
    %v2102 = vpack.c.b16 %v1700, %v1698
    %v2103 = vpack.c.b16 %v1703, %v1701
    %v2104 = vpack.c.b16 %v1704, %v1702
    %2505 = vmatprep.subr.bf16.mxu0 %v1706
    %2506 = vmatpush1.bf16.msra.mxu0 %v1705
    %2507 = vmatprep.subr.bf16.mxu0 %v1708
    %2508 = vmatpush1.bf16.msra.mxu0 %v1707
    %2509 = vmatprep.subr.bf16.mxu0 %v1710
    %2510 = vmatpush1.bf16.msra.mxu0 %v1709
    %2511 = vmatprep.subr.bf16.mxu0 %v1712
    %2512 = vmatpush1.bf16.msra.mxu0 %v1711
    %2513 = vmatprep.subr.bf16.mxu0 %v1714
    %2514 = vmatpush1.bf16.msra.mxu0 %v1713
    %2515 = vmatprep.subr.bf16.mxu0 %v1716
    %2516 = vmatpush1.bf16.msra.mxu0 %v1715
    %2517 = vmatprep.subr.bf16.mxu0 %v1718
    %2518 = vmatpush1.bf16.msra.mxu0 %v1717
    %2519 = vmatprep.subr.bf16.mxu0 %v1720
    %2520 = vmatpush1.bf16.msra.mxu0 %v1719
    %2521 = vmatprep.subr.bf16.mxu0 %v1722
    %2522 = vmatpush1.bf16.msra.mxu0 %v1721
    %2523 = vmatprep.subr.bf16.mxu0 %v1724
    %2524 = vmatpush1.bf16.msra.mxu0 %v1723
    %2525 = vmatprep.subr.bf16.mxu0 %v1726
    %2526 = vmatpush1.bf16.msra.mxu0 %v1725
    %2527 = vmatprep.subr.bf16.mxu0 %v1728
    %2528 = vmatpush1.bf16.msra.mxu0 %v1727
    %2529 = vmatprep.subr.bf16.mxu0 %v1730
    %2530 = vmatpush1.bf16.msra.mxu0 %v1729
    %2531 = vmatprep.subr.bf16.mxu0 %v1732
    %2532 = vmatpush1.bf16.msra.mxu0 %v1731
    %2533 = vmatprep.subr.bf16.mxu0 %v1734
    %2534 = vmatpush1.bf16.msra.mxu0 %v1733
    %2535 = vmatprep.subr.bf16.mxu0 %v1736
    %2536 = vmatpush1.bf16.msra.mxu0 %v1735
    %2537 = vmatprep.mubr.bf16.mxu0 %v69
    %2538 = vmatmul.mubr.bf16.gmra.mrb[0].mxu0 %v68
    %v2539 = vpop.f32.mrb[0].mxu0
    %v2540 = vadd.f32 %v498, %v2539
    %v2541 = vpop.f32.mrb[0].mxu0
    %v2542 = vadd.f32 %v502, %v2541
    %v2543 = vpop.f32.mrb[0].mxu0
    %v2544 = vpop.f32.mrb[0].mxu0
    %2545 = vdwg.mxu0
    %2546 = vmatprep.subr.bf16.mxu0 %v1738
    %2547 = vmatpush1.bf16.msra.mxu0 %v1737
    %2548 = vmatprep.subr.bf16.mxu0 %v1740
    %2549 = vmatpush1.bf16.msra.mxu0 %v1739
    %2550 = vmatprep.subr.bf16.mxu0 %v1742
    %2551 = vmatpush1.bf16.msra.mxu0 %v1741
    %2552 = vmatprep.subr.bf16.mxu0 %v1744
    %2553 = vmatpush1.bf16.msra.mxu0 %v1743
    %2554 = vmatprep.subr.bf16.mxu0 %v1746
    %2555 = vmatpush1.bf16.msra.mxu0 %v1745
    %2556 = vmatprep.subr.bf16.mxu0 %v1748
    %2557 = vmatpush1.bf16.msra.mxu0 %v1747
    %2558 = vmatprep.subr.bf16.mxu0 %v1750
    %2559 = vmatpush1.bf16.msra.mxu0 %v1749
    %2560 = vmatprep.subr.bf16.mxu0 %v1752
    %2561 = vmatpush1.bf16.msra.mxu0 %v1751
    %2562 = vmatprep.subr.bf16.mxu0 %v1754
    %2563 = vmatpush1.bf16.msra.mxu0 %v1753
    %2564 = vmatprep.subr.bf16.mxu0 %v1756
    %2565 = vmatpush1.bf16.msra.mxu0 %v1755
    %2566 = vmatprep.subr.bf16.mxu0 %v1758
    %2567 = vmatpush1.bf16.msra.mxu0 %v1757
    %2568 = vmatprep.subr.bf16.mxu0 %v1760
    %2569 = vmatpush1.bf16.msra.mxu0 %v1759
    %2570 = vmatprep.subr.bf16.mxu0 %v1762
    %2571 = vmatpush1.bf16.msra.mxu0 %v1761
    %2572 = vmatprep.subr.bf16.mxu0 %v1764
    %2573 = vmatpush1.bf16.msra.mxu0 %v1763
    %2574 = vmatprep.subr.bf16.mxu0 %v1766
    %2575 = vmatpush1.bf16.msra.mxu0 %v1765
    %2576 = vmatprep.subr.bf16.mxu0 %v1768
    %2577 = vmatpush1.bf16.msra.mxu0 %v1767
    %2578 = vmatprep.mubr.bf16.mxu0 %v71
    %2579 = vmatmul.mubr.bf16.gmra.mrb[0].mxu0 %v70
    %v2580 = vpop.f32.mrb[0].mxu0
    %v2581 = vadd.f32 %v2540, %v2580
    %v2582 = vpop.f32.mrb[0].mxu0
    %v2583 = vadd.f32 %v2542, %v2582
    %v2584 = vpop.f32.mrb[0].mxu0
    %v2585 = vpop.f32.mrb[0].mxu0
    %2586 = vdwg.mxu0
    %2587 = vmatprep.subr.bf16.mxu0 %v1770
    %2588 = vmatpush1.bf16.msra.mxu0 %v1769
    %2589 = vmatprep.subr.bf16.mxu0 %v1772
    %2590 = vmatpush1.bf16.msra.mxu0 %v1771
    %2591 = vmatprep.subr.bf16.mxu0 %v1774
    %2592 = vmatpush1.bf16.msra.mxu0 %v1773
    %2593 = vmatprep.subr.bf16.mxu0 %v1776
    %2594 = vmatpush1.bf16.msra.mxu0 %v1775
    %2595 = vmatprep.subr.bf16.mxu0 %v1778
    %2596 = vmatpush1.bf16.msra.mxu0 %v1777
    %2597 = vmatprep.subr.bf16.mxu0 %v1780
    %2598 = vmatpush1.bf16.msra.mxu0 %v1779
    %2599 = vmatprep.subr.bf16.mxu0 %v1782
    %2600 = vmatpush1.bf16.msra.mxu0 %v1781
    %2601 = vmatprep.subr.bf16.mxu0 %v1784
    %2602 = vmatpush1.bf16.msra.mxu0 %v1783
    %2603 = vmatprep.subr.bf16.mxu0 %v1786
    %2604 = vmatpush1.bf16.msra.mxu0 %v1785
    %2605 = vmatprep.subr.bf16.mxu0 %v1788
    %2606 = vmatpush1.bf16.msra.mxu0 %v1787
    %2607 = vmatprep.subr.bf16.mxu0 %v1790
    %2608 = vmatpush1.bf16.msra.mxu0 %v1789
    %2609 = vmatprep.subr.bf16.mxu0 %v1792
    %2610 = vmatpush1.bf16.msra.mxu0 %v1791
    %2611 = vmatprep.subr.bf16.mxu0 %v1794
    %2612 = vmatpush1.bf16.msra.mxu0 %v1793
    %2613 = vmatprep.subr.bf16.mxu0 %v1796
    %2614 = vmatpush1.bf16.msra.mxu0 %v1795
    %2615 = vmatprep.subr.bf16.mxu0 %v1798
    %2616 = vmatpush1.bf16.msra.mxu0 %v1797
    %2617 = vmatprep.subr.bf16.mxu0 %v1800
    %2618 = vmatpush1.bf16.msra.mxu0 %v1799
    %2619 = vmatprep.mubr.bf16.mxu0 %v73
    %2620 = vmatmul.mubr.bf16.gmra.mrb[0].mxu0 %v72
    %v2621 = vpop.f32.mrb[0].mxu0
    %v2622 = vadd.f32 %v2581, %v2621
    %v2623 = vpop.f32.mrb[0].mxu0
    %v2624 = vadd.f32 %v2583, %v2623
    %v2625 = vpop.f32.mrb[0].mxu0
    %v2626 = vpop.f32.mrb[0].mxu0
    %2627 = vdwg.mxu0
    %2628 = vmatprep.subr.bf16.mxu0 %v1802
    %2629 = vmatpush1.bf16.msra.mxu0 %v1801
    %2630 = vmatprep.subr.bf16.mxu0 %v1804
    %2631 = vmatpush1.bf16.msra.mxu0 %v1803
    %2632 = vmatprep.subr.bf16.mxu0 %v1806
    %2633 = vmatpush1.bf16.msra.mxu0 %v1805
    %2634 = vmatprep.subr.bf16.mxu0 %v1808
    %2635 = vmatpush1.bf16.msra.mxu0 %v1807
    %2636 = vmatprep.subr.bf16.mxu0 %v1810
    %2637 = vmatpush1.bf16.msra.mxu0 %v1809
    %2638 = vmatprep.subr.bf16.mxu0 %v1812
    %2639 = vmatpush1.bf16.msra.mxu0 %v1811
    %2640 = vmatprep.subr.bf16.mxu0 %v1814
    %2641 = vmatpush1.bf16.msra.mxu0 %v1813
    %2642 = vmatprep.subr.bf16.mxu0 %v1816
    %2643 = vmatpush1.bf16.msra.mxu0 %v1815
    %2644 = vmatprep.subr.bf16.mxu0 %v1818
    %2645 = vmatpush1.bf16.msra.mxu0 %v1817
    %2646 = vmatprep.subr.bf16.mxu0 %v1820
    %2647 = vmatpush1.bf16.msra.mxu0 %v1819
    %2648 = vmatprep.subr.bf16.mxu0 %v1822
    %2649 = vmatpush1.bf16.msra.mxu0 %v1821
    %2650 = vmatprep.subr.bf16.mxu0 %v1824
    %2651 = vmatpush1.bf16.msra.mxu0 %v1823
    %2652 = vmatprep.subr.bf16.mxu0 %v1826
    %2653 = vmatpush1.bf16.msra.mxu0 %v1825
    %2654 = vmatprep.subr.bf16.mxu0 %v1828
    %2655 = vmatpush1.bf16.msra.mxu0 %v1827
    %2656 = vmatprep.subr.bf16.mxu0 %v1830
    %2657 = vmatpush1.bf16.msra.mxu0 %v1829
    %2658 = vmatprep.subr.bf16.mxu0 %v1832
    %2659 = vmatpush1.bf16.msra.mxu0 %v1831
    %2660 = vmatprep.mubr.bf16.mxu0 %v75
    %2661 = vmatmul.mubr.bf16.gmra.mrb[0].mxu0 %v74
    %v2662 = vpop.f32.mrb[0].mxu0
    %v2663 = vadd.f32 %v2622, %v2662
    %v2664 = vpop.f32.mrb[0].mxu0
    %v2665 = vadd.f32 %v2624, %v2664
    %v2666 = vpop.f32.mrb[0].mxu0
    %v2667 = vpop.f32.mrb[0].mxu0
    %2668 = vdwg.mxu0
    %2669 = vmatprep.subr.bf16.mxu0 %v1834
    %2670 = vmatpush1.bf16.msra.mxu0 %v1833
    %2671 = vmatprep.subr.bf16.mxu0 %v1836
    %2672 = vmatpush1.bf16.msra.mxu0 %v1835
    %2673 = vmatprep.subr.bf16.mxu0 %v1838
    %2674 = vmatpush1.bf16.msra.mxu0 %v1837
    %2675 = vmatprep.subr.bf16.mxu0 %v1840
    %2676 = vmatpush1.bf16.msra.mxu0 %v1839
    %2677 = vmatprep.subr.bf16.mxu0 %v1842
    %2678 = vmatpush1.bf16.msra.mxu0 %v1841
    %2679 = vmatprep.subr.bf16.mxu0 %v1844
    %2680 = vmatpush1.bf16.msra.mxu0 %v1843
    %2681 = vmatprep.subr.bf16.mxu0 %v1846
    %2682 = vmatpush1.bf16.msra.mxu0 %v1845
    %2683 = vmatprep.subr.bf16.mxu0 %v1848
    %2684 = vmatpush1.bf16.msra.mxu0 %v1847
    %2685 = vmatprep.subr.bf16.mxu0 %v1850
    %2686 = vmatpush1.bf16.msra.mxu0 %v1849
    %2687 = vmatprep.subr.bf16.mxu0 %v1852
    %2688 = vmatpush1.bf16.msra.mxu0 %v1851
    %2689 = vmatprep.subr.bf16.mxu0 %v1854
    %2690 = vmatpush1.bf16.msra.mxu0 %v1853
    %2691 = vmatprep.subr.bf16.mxu0 %v1856
    %2692 = vmatpush1.bf16.msra.mxu0 %v1855
    %2693 = vmatprep.subr.bf16.mxu0 %v1858
    %2694 = vmatpush1.bf16.msra.mxu0 %v1857
    %2695 = vmatprep.subr.bf16.mxu0 %v1860
    %2696 = vmatpush1.bf16.msra.mxu0 %v1859
    %2697 = vmatprep.subr.bf16.mxu0 %v1862
    %2698 = vmatpush1.bf16.msra.mxu0 %v1861
    %2699 = vmatprep.subr.bf16.mxu0 %v1864
    %2700 = vmatpush1.bf16.msra.mxu0 %v1863
    %2701 = vmatprep.mubr.bf16.mxu0 %v77
    %2702 = vmatmul.mubr.bf16.gmra.mrb[0].mxu0 %v76
    %v2703 = vpop.f32.mrb[0].mxu0
    %v2704 = vadd.f32 %v2663, %v2703
    %v2705 = vpop.f32.mrb[0].mxu0
    %v2706 = vadd.f32 %v2665, %v2705
    %v2707 = vpop.f32.mrb[0].mxu0
    %v2708 = vpop.f32.mrb[0].mxu0
    %2709 = vdwg.mxu0
    %2710 = vmatprep.subr.bf16.mxu0 %v1866
    %2711 = vmatpush1.bf16.msra.mxu0 %v1865
    %2712 = vmatprep.subr.bf16.mxu0 %v1868
    %2713 = vmatpush1.bf16.msra.mxu0 %v1867
    %2714 = vmatprep.subr.bf16.mxu0 %v1870
    %2715 = vmatpush1.bf16.msra.mxu0 %v1869
    %2716 = vmatprep.subr.bf16.mxu0 %v1872
    %2717 = vmatpush1.bf16.msra.mxu0 %v1871
    %2718 = vmatprep.subr.bf16.mxu0 %v1874
    %2719 = vmatpush1.bf16.msra.mxu0 %v1873
    %2720 = vmatprep.subr.bf16.mxu0 %v1876
    %2721 = vmatpush1.bf16.msra.mxu0 %v1875
    %2722 = vmatprep.subr.bf16.mxu0 %v1878
    %2723 = vmatpush1.bf16.msra.mxu0 %v1877
    %2724 = vmatprep.subr.bf16.mxu0 %v1880
    %2725 = vmatpush1.bf16.msra.mxu0 %v1879
    %2726 = vmatprep.subr.bf16.mxu0 %v1882
    %2727 = vmatpush1.bf16.msra.mxu0 %v1881
    %2728 = vmatprep.subr.bf16.mxu0 %v1884
    %2729 = vmatpush1.bf16.msra.mxu0 %v1883
    %2730 = vmatprep.subr.bf16.mxu0 %v1886
    %2731 = vmatpush1.bf16.msra.mxu0 %v1885
    %2732 = vmatprep.subr.bf16.mxu0 %v1888
    %2733 = vmatpush1.bf16.msra.mxu0 %v1887
    %2734 = vmatprep.subr.bf16.mxu0 %v1890
    %2735 = vmatpush1.bf16.msra.mxu0 %v1889
    %2736 = vmatprep.subr.bf16.mxu0 %v1892
    %2737 = vmatpush1.bf16.msra.mxu0 %v1891
    %2738 = vmatprep.subr.bf16.mxu0 %v1894
    %2739 = vmatpush1.bf16.msra.mxu0 %v1893
    %2740 = vmatprep.subr.bf16.mxu0 %v1896
    %2741 = vmatpush1.bf16.msra.mxu0 %v1895
    %2742 = vmatprep.mubr.bf16.mxu0 %v79
    %2743 = vmatmul.mubr.bf16.gmra.mrb[0].mxu0 %v78
    %v2744 = vpop.f32.mrb[0].mxu0
    %v2745 = vadd.f32 %v2704, %v2744
    %v2746 = vpop.f32.mrb[0].mxu0
    %v2747 = vadd.f32 %v2706, %v2746
    %v2748 = vpop.f32.mrb[0].mxu0
    %v2749 = vpop.f32.mrb[0].mxu0
    %2750 = vdwg.mxu0
    %2751 = vmatprep.subr.bf16.mxu0 %v1898
    %2752 = vmatpush1.bf16.msra.mxu0 %v1897
    %2753 = vmatprep.subr.bf16.mxu0 %v1900
    %2754 = vmatpush1.bf16.msra.mxu0 %v1899
    %2755 = vmatprep.subr.bf16.mxu0 %v1902
    %2756 = vmatpush1.bf16.msra.mxu0 %v1901
    %2757 = vmatprep.subr.bf16.mxu0 %v1904
    %2758 = vmatpush1.bf16.msra.mxu0 %v1903
    %2759 = vmatprep.subr.bf16.mxu0 %v1906
    %2760 = vmatpush1.bf16.msra.mxu0 %v1905
    %2761 = vmatprep.subr.bf16.mxu0 %v1908
    %2762 = vmatpush1.bf16.msra.mxu0 %v1907
    %2763 = vmatprep.subr.bf16.mxu0 %v1910
    %2764 = vmatpush1.bf16.msra.mxu0 %v1909
    %2765 = vmatprep.subr.bf16.mxu0 %v1912
    %2766 = vmatpush1.bf16.msra.mxu0 %v1911
    %2767 = vmatprep.subr.bf16.mxu0 %v1914
    %2768 = vmatpush1.bf16.msra.mxu0 %v1913
    %2769 = vmatprep.subr.bf16.mxu0 %v1916
    %2770 = vmatpush1.bf16.msra.mxu0 %v1915
    %2771 = vmatprep.subr.bf16.mxu0 %v1918
    %2772 = vmatpush1.bf16.msra.mxu0 %v1917
    %2773 = vmatprep.subr.bf16.mxu0 %v1920
    %2774 = vmatpush1.bf16.msra.mxu0 %v1919
    %2775 = vmatprep.subr.bf16.mxu0 %v1922
    %2776 = vmatpush1.bf16.msra.mxu0 %v1921
    %2777 = vmatprep.subr.bf16.mxu0 %v1924
    %2778 = vmatpush1.bf16.msra.mxu0 %v1923
    %2779 = vmatprep.subr.bf16.mxu0 %v1926
    %2780 = vmatpush1.bf16.msra.mxu0 %v1925
    %2781 = vmatprep.subr.bf16.mxu0 %v1928
    %2782 = vmatpush1.bf16.msra.mxu0 %v1927
    %2783 = vmatprep.mubr.bf16.mxu0 %v81
    %2784 = vmatmul.mubr.bf16.gmra.mrb[0].mxu0 %v80
    %v2785 = vpop.f32.mrb[0].mxu0
    %v2786 = vadd.f32 %v2745, %v2785
    %v2787 = vpop.f32.mrb[0].mxu0
    %v2788 = vadd.f32 %v2747, %v2787
    %v2789 = vpop.f32.mrb[0].mxu0
    %v2790 = vpop.f32.mrb[0].mxu0
    %2791 = vdwg.mxu0
    %2792 = vmatprep.subr.bf16.mxu0 %v1930
    %2793 = vmatpush1.bf16.msra.mxu0 %v1929
    %2794 = vmatprep.subr.bf16.mxu0 %v1932
    %2795 = vmatpush1.bf16.msra.mxu0 %v1931
    %2796 = vmatprep.subr.bf16.mxu0 %v1934
    %2797 = vmatpush1.bf16.msra.mxu0 %v1933
    %2798 = vmatprep.subr.bf16.mxu0 %v1936
    %2799 = vmatpush1.bf16.msra.mxu0 %v1935
    %2800 = vmatprep.subr.bf16.mxu0 %v1938
    %2801 = vmatpush1.bf16.msra.mxu0 %v1937
    %2802 = vmatprep.subr.bf16.mxu0 %v1940
    %2803 = vmatpush1.bf16.msra.mxu0 %v1939
    %2804 = vmatprep.subr.bf16.mxu0 %v1942
    %2805 = vmatpush1.bf16.msra.mxu0 %v1941
    %2806 = vmatprep.subr.bf16.mxu0 %v1944
    %2807 = vmatpush1.bf16.msra.mxu0 %v1943
    %2808 = vmatprep.subr.bf16.mxu0 %v1946
    %2809 = vmatpush1.bf16.msra.mxu0 %v1945
    %2810 = vmatprep.subr.bf16.mxu0 %v1948
    %2811 = vmatpush1.bf16.msra.mxu0 %v1947
    %2812 = vmatprep.subr.bf16.mxu0 %v1950
    %2813 = vmatpush1.bf16.msra.mxu0 %v1949
    %2814 = vmatprep.subr.bf16.mxu0 %v1952
    %2815 = vmatpush1.bf16.msra.mxu0 %v1951
    %2816 = vmatprep.subr.bf16.mxu0 %v1954
    %2817 = vmatpush1.bf16.msra.mxu0 %v1953
    %2818 = vmatprep.subr.bf16.mxu0 %v1956
    %2819 = vmatpush1.bf16.msra.mxu0 %v1955
    %2820 = vmatprep.subr.bf16.mxu0 %v1958
    %2821 = vmatpush1.bf16.msra.mxu0 %v1957
    %2822 = vmatprep.subr.bf16.mxu0 %v1960
    %2823 = vmatpush1.bf16.msra.mxu0 %v1959
    %2824 = vmatprep.mubr.bf16.mxu0 %v83
    %2825 = vmatmul.mubr.bf16.gmra.mrb[0].mxu0 %v82
    %v2826 = vpop.f32.mrb[0].mxu0
    %v2827 = vadd.f32 %v2786, %v2826
    %v2828 = vpop.f32.mrb[0].mxu0
    %v2829 = vadd.f32 %v2788, %v2828
    %v2830 = vpop.f32.mrb[0].mxu0
    %v2831 = vpop.f32.mrb[0].mxu0
    %2832 = vdwg.mxu0
    %2833 = vmatprep.subr.bf16.mxu0 %v1962
    %2834 = vmatpush1.bf16.msra.mxu0 %v1961
    %2835 = vmatprep.subr.bf16.mxu0 %v1964
    %2836 = vmatpush1.bf16.msra.mxu0 %v1963
    %2837 = vmatprep.subr.bf16.mxu0 %v1966
    %2838 = vmatpush1.bf16.msra.mxu0 %v1965
    %2839 = vmatprep.subr.bf16.mxu0 %v1968
    %2840 = vmatpush1.bf16.msra.mxu0 %v1967
    %2841 = vmatprep.subr.bf16.mxu0 %v1970
    %2842 = vmatpush1.bf16.msra.mxu0 %v1969
    %2843 = vmatprep.subr.bf16.mxu0 %v1972
    %2844 = vmatpush1.bf16.msra.mxu0 %v1971
    %2845 = vmatprep.subr.bf16.mxu0 %v1974
    %2846 = vmatpush1.bf16.msra.mxu0 %v1973
    %2847 = vmatprep.subr.bf16.mxu0 %v1976
    %2848 = vmatpush1.bf16.msra.mxu0 %v1975
    %2849 = vmatprep.subr.bf16.mxu0 %v1978
    %2850 = vmatpush1.bf16.msra.mxu0 %v1977
    %2851 = vmatprep.subr.bf16.mxu0 %v1980
    %2852 = vmatpush1.bf16.msra.mxu0 %v1979
    %2853 = vmatprep.subr.bf16.mxu0 %v1982
    %2854 = vmatpush1.bf16.msra.mxu0 %v1981
    %2855 = vmatprep.subr.bf16.mxu0 %v1984
    %2856 = vmatpush1.bf16.msra.mxu0 %v1983
    %2857 = vmatprep.subr.bf16.mxu0 %v1986
    %2858 = vmatpush1.bf16.msra.mxu0 %v1985
    %2859 = vmatprep.subr.bf16.mxu0 %v1988
    %2860 = vmatpush1.bf16.msra.mxu0 %v1987
    %2861 = vmatprep.subr.bf16.mxu0 %v1990
    %2862 = vmatpush1.bf16.msra.mxu0 %v1989
    %2863 = vmatprep.subr.bf16.mxu0 %v1992
    %2864 = vmatpush1.bf16.msra.mxu0 %v1991
    %2865 = vmatprep.mubr.bf16.mxu0 %v85
    %2866 = vmatmul.mubr.bf16.gmra.mrb[0].mxu0 %v84
    %v2867 = vpop.f32.mrb[0].mxu0
    %v2868 = vadd.f32 %v2827, %v2867
    %v2869 = vpop.f32.mrb[0].mxu0
    %v2870 = vadd.f32 %v2829, %v2869
    %v2871 = vpop.f32.mrb[0].mxu0
    %v2872 = vpop.f32.mrb[0].mxu0
    %2873 = vdwg.mxu0
    %2874 = vmatprep.subr.bf16.mxu0 %v1994
    %2875 = vmatpush1.bf16.msra.mxu0 %v1993
    %2876 = vmatprep.subr.bf16.mxu0 %v1996
    %2877 = vmatpush1.bf16.msra.mxu0 %v1995
    %2878 = vmatprep.subr.bf16.mxu0 %v1998
    %2879 = vmatpush1.bf16.msra.mxu0 %v1997
    %2880 = vmatprep.subr.bf16.mxu0 %v2000
    %2881 = vmatpush1.bf16.msra.mxu0 %v1999
    %2882 = vmatprep.subr.bf16.mxu0 %v2002
    %2883 = vmatpush1.bf16.msra.mxu0 %v2001
    %2884 = vmatprep.subr.bf16.mxu0 %v2004
    %2885 = vmatpush1.bf16.msra.mxu0 %v2003
    %2886 = vmatprep.subr.bf16.mxu0 %v2006
    %2887 = vmatpush1.bf16.msra.mxu0 %v2005
    %2888 = vmatprep.subr.bf16.mxu0 %v2008
    %2889 = vmatpush1.bf16.msra.mxu0 %v2007
    %2890 = vmatprep.subr.bf16.mxu0 %v2010
    %2891 = vmatpush1.bf16.msra.mxu0 %v2009
    %2892 = vmatprep.subr.bf16.mxu0 %v2012
    %2893 = vmatpush1.bf16.msra.mxu0 %v2011
    %2894 = vmatprep.subr.bf16.mxu0 %v2014
    %2895 = vmatpush1.bf16.msra.mxu0 %v2013
    %2896 = vmatprep.subr.bf16.mxu0 %v2016
    %2897 = vmatpush1.bf16.msra.mxu0 %v2015
    %2898 = vmatprep.subr.bf16.mxu0 %v2018
    %2899 = vmatpush1.bf16.msra.mxu0 %v2017
    %2900 = vmatprep.subr.bf16.mxu0 %v2020
    %2901 = vmatpush1.bf16.msra.mxu0 %v2019
    %2902 = vmatprep.subr.bf16.mxu0 %v2022
    %2903 = vmatpush1.bf16.msra.mxu0 %v2021
    %2904 = vmatprep.subr.bf16.mxu0 %v2024
    %2905 = vmatpush1.bf16.msra.mxu0 %v2023
    %2906 = vmatprep.mubr.bf16.mxu0 %v87
    %2907 = vmatmul.mubr.bf16.gmra.mrb[0].mxu0 %v86
    %v2908 = vpop.f32.mrb[0].mxu0
    %v2909 = vadd.f32 %v2868, %v2908
    %v2910 = vpop.f32.mrb[0].mxu0
    %v2911 = vadd.f32 %v2870, %v2910
    %v2912 = vpop.f32.mrb[0].mxu0
    %v2913 = vpop.f32.mrb[0].mxu0
    %2914 = vdwg.mxu0
    %2915 = vmatprep.subr.bf16.mxu0 %v2026
    %2916 = vmatpush1.bf16.msra.mxu0 %v2025
    %2917 = vmatprep.subr.bf16.mxu0 %v2028
    %2918 = vmatpush1.bf16.msra.mxu0 %v2027
    %2919 = vmatprep.subr.bf16.mxu0 %v2030
    %2920 = vmatpush1.bf16.msra.mxu0 %v2029
    %2921 = vmatprep.subr.bf16.mxu0 %v2032
    %2922 = vmatpush1.bf16.msra.mxu0 %v2031
    %2923 = vmatprep.subr.bf16.mxu0 %v2034
    %2924 = vmatpush1.bf16.msra.mxu0 %v2033
    %2925 = vmatprep.subr.bf16.mxu0 %v2036
    %2926 = vmatpush1.bf16.msra.mxu0 %v2035
    %2927 = vmatprep.subr.bf16.mxu0 %v2038
    %2928 = vmatpush1.bf16.msra.mxu0 %v2037
    %2929 = vmatprep.subr.bf16.mxu0 %v2040
    %2930 = vmatpush1.bf16.msra.mxu0 %v2039
    %2931 = vmatprep.subr.bf16.mxu0 %v2042
    %2932 = vmatpush1.bf16.msra.mxu0 %v2041
    %2933 = vmatprep.subr.bf16.mxu0 %v2044
    %2934 = vmatpush1.bf16.msra.mxu0 %v2043
    %2935 = vmatprep.subr.bf16.mxu0 %v2046
    %2936 = vmatpush1.bf16.msra.mxu0 %v2045
    %2937 = vmatprep.subr.bf16.mxu0 %v2048
    %2938 = vmatpush1.bf16.msra.mxu0 %v2047
    %2939 = vmatprep.subr.bf16.mxu0 %v2050
    %2940 = vmatpush1.bf16.msra.mxu0 %v2049
    %2941 = vmatprep.subr.bf16.mxu0 %v2052
    %2942 = vmatpush1.bf16.msra.mxu0 %v2051
    %2943 = vmatprep.subr.bf16.mxu0 %v2054
    %2944 = vmatpush1.bf16.msra.mxu0 %v2053
    %2945 = vmatprep.subr.bf16.mxu0 %v2056
    %2946 = vmatpush1.bf16.msra.mxu0 %v2055
    %2947 = vmatprep.mubr.bf16.mxu0 %v89
    %2948 = vmatmul.mubr.bf16.gmra.mrb[0].mxu0 %v88
    %v2949 = vpop.f32.mrb[0].mxu0
    %v2950 = vadd.f32 %v2909, %v2949
    %v2951 = vpop.f32.mrb[0].mxu0
    %v2952 = vadd.f32 %v2911, %v2951
    %v2953 = vpop.f32.mrb[0].mxu0
    %v2954 = vpop.f32.mrb[0].mxu0
    %2955 = vdwg.mxu0
    %2956 = vmatprep.subr.bf16.mxu0 %v2058
    %2957 = vmatpush1.bf16.msra.mxu0 %v2057
    %2958 = vmatprep.subr.bf16.mxu0 %v2060
    %2959 = vmatpush1.bf16.msra.mxu0 %v2059
    %2960 = vmatprep.subr.bf16.mxu0 %v2062
    %2961 = vmatpush1.bf16.msra.mxu0 %v2061
    %2962 = vmatprep.subr.bf16.mxu0 %v2064
    %2963 = vmatpush1.bf16.msra.mxu0 %v2063
    %2964 = vmatprep.subr.bf16.mxu0 %v2066
    %2965 = vmatpush1.bf16.msra.mxu0 %v2065
    %2966 = vmatprep.subr.bf16.mxu0 %v2068
    %2967 = vmatpush1.bf16.msra.mxu0 %v2067
    %2968 = vmatprep.subr.bf16.mxu0 %v2070
    %2969 = vmatpush1.bf16.msra.mxu0 %v2069
    %2970 = vmatprep.subr.bf16.mxu0 %v2072
    %2971 = vmatpush1.bf16.msra.mxu0 %v2071
    %2972 = vmatprep.subr.bf16.mxu0 %v2074
    %2973 = vmatpush1.bf16.msra.mxu0 %v2073
    %2974 = vmatprep.subr.bf16.mxu0 %v2076
    %2975 = vmatpush1.bf16.msra.mxu0 %v2075
    %2976 = vmatprep.subr.bf16.mxu0 %v2078
    %2977 = vmatpush1.bf16.msra.mxu0 %v2077
    %2978 = vmatprep.subr.bf16.mxu0 %v2080
    %2979 = vmatpush1.bf16.msra.mxu0 %v2079
    %2980 = vmatprep.subr.bf16.mxu0 %v2082
    %2981 = vmatpush1.bf16.msra.mxu0 %v2081
    %2982 = vmatprep.subr.bf16.mxu0 %v2084
    %2983 = vmatpush1.bf16.msra.mxu0 %v2083
    %2984 = vmatprep.subr.bf16.mxu0 %v2086
    %2985 = vmatpush1.bf16.msra.mxu0 %v2085
    %2986 = vmatprep.subr.bf16.mxu0 %v2088
    %2987 = vmatpush1.bf16.msra.mxu0 %v2087
    %2988 = vmatprep.mubr.bf16.mxu0 %v91
    %2989 = vmatmul.mubr.bf16.gmra.mrb[0].mxu0 %v90
    %v2990 = vpop.f32.mrb[0].mxu0
    %v2991 = vadd.f32 %v2950, %v2990
    %v2992 = vpop.f32.mrb[0].mxu0
    %v2993 = vadd.f32 %v2952, %v2992
    %v2994 = vpop.f32.mrb[0].mxu0
    %v2995 = vpop.f32.mrb[0].mxu0
    %2996 = vdwg.mxu0
    %2997 = vmatprep.subr.bf16.mxu0 %v2090
    %2998 = vmatpush1.bf16.msra.mxu0 %v2089
    %2999 = vmatprep.subr.bf16.mxu0 %v2092
    %3000 = vmatpush1.bf16.msra.mxu0 %v2091
    %3001 = vmatprep.subr.bf16.mxu0 %v2094
    %3002 = vmatpush1.bf16.msra.mxu0 %v2093
    %3003 = vmatprep.subr.bf16.mxu0 %v2096
    %3004 = vmatpush1.bf16.msra.mxu0 %v2095
    %3005 = vmatprep.subr.bf16.mxu0 %v2098
    %3006 = vmatpush1.bf16.msra.mxu0 %v2097
    %3007 = vmatprep.subr.bf16.mxu0 %v2100
    %3008 = vmatpush1.bf16.msra.mxu0 %v2099
    %3009 = vmatprep.subr.bf16.mxu0 %v2102
    %3010 = vmatpush1.bf16.msra.mxu0 %v2101
    %3011 = vmatprep.subr.bf16.mxu0 %v2104
    %3012 = vmatpush1.bf16.msra.mxu0 %v2103
    %3013 = vmatprep.subr.bf16.mxu0 0
    %3014 = vmatpush1.bf16.msra.mxu0 0
    %3015 = vmatprep.subr.bf16.mxu0 0
    %3016 = vmatpush1.bf16.msra.mxu0 0
    %3017 = vmatprep.subr.bf16.mxu0 0
    %3018 = vmatpush1.bf16.msra.mxu0 0
    %3019 = vmatprep.subr.bf16.mxu0 0
    %3020 = vmatpush1.bf16.msra.mxu0 0
    %3021 = vmatprep.subr.bf16.mxu0 0
    %3022 = vmatpush1.bf16.msra.mxu0 0
    %3023 = vmatprep.subr.bf16.mxu0 0
    %3024 = vmatpush1.bf16.msra.mxu0 0
    %3025 = vmatprep.subr.bf16.mxu0 0
    %3026 = vmatpush1.bf16.msra.mxu0 0
    %3027 = vmatprep.subr.bf16.mxu0 0
    %3028 = vmatpush1.bf16.msra.mxu0 0
    %3029 = vmatprep.mubr.bf16.mxu0 0
    %3030 = vmatmul.mubr.bf16.gmra.mrb[0].mxu0 %v92
    %v3031 = vpop.f32.mrb[0].mxu0
    %v3032 = vadd.f32 %v2991, %v3031
    %v3033 = vpop.f32.mrb[0].mxu0
    %v3034 = vadd.f32 %v2993, %v3033
    %v3035 = vpop.f32.mrb[0].mxu0
    %v3036 = vpop.f32.mrb[0].mxu0
    %3037 = vdwg.mxu0
    %vm3038 = vcmp.ge.f32.partialorder %v3032, 0.0
    %vm3039 = vcmp.ge.f32.partialorder %v3034, 0.0
    %s3040 = sld [smem:[#allocation2]]
    %v3041 = vstv %s3040
    %v3042 = vmul.f32 %v3041, %v3032
    %v3043 = vmul.f32 %v3041, %v3034
    %v3044 = vsel %vm3038, %v3032, %v3042
    %v3045 = vsel %vm3039, %v3034, %v3043
    %v3046 = vpack.c.bf16 %v3044, %v3044
    %v3047 = vpack.c.bf16 %v3045, %v3045
    %v3048 = vld [vmem:[%s3] sm:$0xff]
    %v3049 = vld [vmem:[%s3 + $0x8] sm:$0xff]
    %v3050 = vld [vmem:[%s3 + $0x10] sm:$0xff]
    %v3051 = vld [vmem:[%s3 + $0x18] sm:$0xff]
    %v3052 = vld [vmem:[%s3 + $0x20] sm:$0xff]
    %v3053 = vld [vmem:[%s3 + $0x28] sm:$0xff]
    %v3054 = vld [vmem:[%s3 + $0x30] sm:$0xff]
    %v3055 = vld [vmem:[%s3 + $0x38] sm:$0xff]
    %v3056 = vld [vmem:[%s3 + $0x40] sm:$0xff]
    %v3057 = vld [vmem:[%s3 + $0x48] sm:$0xff]
    %v3058 = vld [vmem:[%s3 + $0x50] sm:$0xff]
    %v3059 = vld [vmem:[%s3 + $0x58] sm:$0xff]
    %v3060 = vld [vmem:[%s3 + $0x60] sm:$0xff]
    %v3061 = vld [vmem:[%s3 + $0x68] sm:$0xff]
    %v3062 = vld [vmem:[%s3 + $0x70] sm:$0xff]
    %v3063 = vld [vmem:[%s3 + $0x78] sm:$0xff]
    %v3064 = vld [vmem:[%s3 + $0x80] sm:$0xff]
    %v3065 = vld [vmem:[%s3 + $0x88] sm:$0xff]
    %v3066 = vld [vmem:[%s3 + $0x90] sm:$0xff]
    %v3067 = vld [vmem:[%s3 + $0x98] sm:$0xff]
    %v3068 = vld [vmem:[%s3 + $0xa0] sm:$0xff]
    %v3069 = vld [vmem:[%s3 + $0xa8] sm:$0xff]
    %v3070 = vld [vmem:[%s3 + $0xb0] sm:$0xff]
    %v3071 = vld [vmem:[%s3 + $0xb8] sm:$0xff]
    %v3072 = vld [vmem:[%s3 + $0xc0] sm:$0xff]
    %v3073 = vld [vmem:[%s3 + $0xc8] sm:$0xff]
    %v3074 = vld [vmem:[%s3 + $0xd0] sm:$0xff]
    %v3075 = vld [vmem:[%s3 + $0xd8] sm:$0xff]
    %v3076 = vld [vmem:[%s3 + $0xe0] sm:$0xff]
    %v3077 = vld [vmem:[%s3 + $0xe8] sm:$0xff]
    %v3078 = vld [vmem:[%s3 + $0xf0] sm:$0xff]
    %v3079 = vld [vmem:[%s3 + $0xf8] sm:$0xff]
    %v3080 = vld [vmem:[%s4] sm:$0x3]
    %v3082 = vlaneseq
    %v3083 = vshrl.u32 %v3082, 7
    %v3084 = vsub.s32 0, %v3083
    %v3085 = vrot.slane %v3080, %v3084
    %v3086 = vlaneseq
    %v3087 = vshrl.u32 %v3086, 7
    %v3088 = vsub.s32 1, %v3087
    %v3089 = vrot.slane %v3080, %v3088
    %v3124 = vunpack.c.l.b16 %v3048
    %v3125 = vunpack.c.h.b16 %v3048
    %v3126 = vunpack.c.l.b16 %v3049
    %v3127 = vunpack.c.h.b16 %v3049
    %v3128 = vunpack.c.l.b16 %v3050
    %v3129 = vunpack.c.h.b16 %v3050
    %v3130 = vunpack.c.l.b16 %v3051
    %v3131 = vunpack.c.h.b16 %v3051
    %v3132 = vunpack.c.l.b16 %v3052
    %v3133 = vunpack.c.h.b16 %v3052
    %v3134 = vunpack.c.l.b16 %v3053
    %v3135 = vunpack.c.h.b16 %v3053
    %v3136 = vunpack.c.l.b16 %v3054
    %v3137 = vunpack.c.h.b16 %v3054
    %v3138 = vunpack.c.l.b16 %v3055
    %v3139 = vunpack.c.h.b16 %v3055
    %v3140 = vunpack.c.l.b16 %v3056
    %v3141 = vunpack.c.h.b16 %v3056
    %v3142 = vunpack.c.l.b16 %v3057
    %v3143 = vunpack.c.h.b16 %v3057
    %v3144 = vunpack.c.l.b16 %v3058
    %v3145 = vunpack.c.h.b16 %v3058
    %v3146 = vunpack.c.l.b16 %v3059
    %v3147 = vunpack.c.h.b16 %v3059
    %v3148 = vunpack.c.l.b16 %v3060
    %v3149 = vunpack.c.h.b16 %v3060
    %v3150 = vunpack.c.l.b16 %v3061
    %v3151 = vunpack.c.h.b16 %v3061
    %v3152 = vunpack.c.l.b16 %v3062
    %v3153 = vunpack.c.h.b16 %v3062
    %v3154 = vunpack.c.l.b16 %v3063
    %v3155 = vunpack.c.h.b16 %v3063
    %v3156 = vunpack.c.l.b16 %v3064
    %v3157 = vunpack.c.h.b16 %v3064
    %v3158 = vunpack.c.l.b16 %v3065
    %v3159 = vunpack.c.h.b16 %v3065
    %v3160 = vunpack.c.l.b16 %v3066
    %v3161 = vunpack.c.h.b16 %v3066
    %v3162 = vunpack.c.l.b16 %v3067
    %v3163 = vunpack.c.h.b16 %v3067
    %v3164 = vunpack.c.l.b16 %v3068
    %v3165 = vunpack.c.h.b16 %v3068
    %v3166 = vunpack.c.l.b16 %v3069
    %v3167 = vunpack.c.h.b16 %v3069
    %v3168 = vunpack.c.l.b16 %v3070
    %v3169 = vunpack.c.h.b16 %v3070
    %v3170 = vunpack.c.l.b16 %v3071
    %v3171 = vunpack.c.h.b16 %v3071
    %v3172 = vunpack.c.l.b16 %v3072
    %v3173 = vunpack.c.h.b16 %v3072
    %v3174 = vunpack.c.l.b16 %v3073
    %v3175 = vunpack.c.h.b16 %v3073
    %v3176 = vunpack.c.l.b16 %v3074
    %v3177 = vunpack.c.h.b16 %v3074
    %v3178 = vunpack.c.l.b16 %v3075
    %v3179 = vunpack.c.h.b16 %v3075
    %v3180 = vunpack.c.l.b16 %v3076
    %v3181 = vunpack.c.h.b16 %v3076
    %v3182 = vunpack.c.l.b16 %v3077
    %v3183 = vunpack.c.h.b16 %v3077
    %v3184 = vunpack.c.l.b16 %v3078
    %v3185 = vunpack.c.h.b16 %v3078
    %v3186 = vunpack.c.l.b16 %v3079
    %v3187 = vunpack.c.h.b16 %v3079
    %v3188 = vpack.c.b16 %v3126, %v3124
    %v3189 = vpack.c.b16 %v3127, %v3125
    %v3190 = vpack.c.b16 %v3130, %v3128
    %v3191 = vpack.c.b16 %v3131, %v3129
    %v3192 = vpack.c.b16 %v3134, %v3132
    %v3193 = vpack.c.b16 %v3135, %v3133
    %v3194 = vpack.c.b16 %v3138, %v3136
    %v3195 = vpack.c.b16 %v3139, %v3137
    %v3196 = vpack.c.b16 %v3142, %v3140
    %v3197 = vpack.c.b16 %v3143, %v3141
    %v3198 = vpack.c.b16 %v3146, %v3144
    %v3199 = vpack.c.b16 %v3147, %v3145
    %v3200 = vpack.c.b16 %v3150, %v3148
    %v3201 = vpack.c.b16 %v3151, %v3149
    %v3202 = vpack.c.b16 %v3154, %v3152
    %v3203 = vpack.c.b16 %v3155, %v3153
    %v3204 = vpack.c.b16 %v3158, %v3156
    %v3205 = vpack.c.b16 %v3159, %v3157
    %v3206 = vpack.c.b16 %v3162, %v3160
    %v3207 = vpack.c.b16 %v3163, %v3161
    %v3208 = vpack.c.b16 %v3166, %v3164
    %v3209 = vpack.c.b16 %v3167, %v3165
    %v3210 = vpack.c.b16 %v3170, %v3168
    %v3211 = vpack.c.b16 %v3171, %v3169
    %v3212 = vpack.c.b16 %v3174, %v3172
    %v3213 = vpack.c.b16 %v3175, %v3173
    %v3214 = vpack.c.b16 %v3178, %v3176
    %v3215 = vpack.c.b16 %v3179, %v3177
    %v3216 = vpack.c.b16 %v3182, %v3180
    %v3217 = vpack.c.b16 %v3183, %v3181
    %v3218 = vpack.c.b16 %v3186, %v3184
    %v3219 = vpack.c.b16 %v3187, %v3185
    %3252 = vmatprep.subr.bf16.mxu0 %v3189
    %3253 = vmatpush1.bf16.msra.mxu0 %v3188
    %3254 = vmatprep.subr.bf16.mxu0 %v3191
    %3255 = vmatpush1.bf16.msra.mxu0 %v3190
    %3256 = vmatprep.subr.bf16.mxu0 %v3193
    %3257 = vmatpush1.bf16.msra.mxu0 %v3192
    %3258 = vmatprep.subr.bf16.mxu0 %v3195
    %3259 = vmatpush1.bf16.msra.mxu0 %v3194
    %3260 = vmatprep.subr.bf16.mxu0 %v3197
    %3261 = vmatpush1.bf16.msra.mxu0 %v3196
    %3262 = vmatprep.subr.bf16.mxu0 %v3199
    %3263 = vmatpush1.bf16.msra.mxu0 %v3198
    %3264 = vmatprep.subr.bf16.mxu0 %v3201
    %3265 = vmatpush1.bf16.msra.mxu0 %v3200
    %3266 = vmatprep.subr.bf16.mxu0 %v3203
    %3267 = vmatpush1.bf16.msra.mxu0 %v3202
    %3268 = vmatprep.subr.bf16.mxu0 %v3205
    %3269 = vmatpush1.bf16.msra.mxu0 %v3204
    %3270 = vmatprep.subr.bf16.mxu0 %v3207
    %3271 = vmatpush1.bf16.msra.mxu0 %v3206
    %3272 = vmatprep.subr.bf16.mxu0 %v3209
    %3273 = vmatpush1.bf16.msra.mxu0 %v3208
    %3274 = vmatprep.subr.bf16.mxu0 %v3211
    %3275 = vmatpush1.bf16.msra.mxu0 %v3210
    %3276 = vmatprep.subr.bf16.mxu0 %v3213
    %3277 = vmatpush1.bf16.msra.mxu0 %v3212
    %3278 = vmatprep.subr.bf16.mxu0 %v3215
    %3279 = vmatpush1.bf16.msra.mxu0 %v3214
    %3280 = vmatprep.subr.bf16.mxu0 %v3217
    %3281 = vmatpush1.bf16.msra.mxu0 %v3216
    %3282 = vmatprep.subr.bf16.mxu0 %v3219
    %3283 = vmatpush1.bf16.msra.mxu0 %v3218
    %3284 = vmatprep.mubr.bf16.mxu0 %v3047
    %3285 = vmatmul.mubr.bf16.gmra.mrb[0].mxu0 %v3046
    %v3286 = vpop.f32.mrb[0].mxu0
    %v3287 = vadd.f32 %v3085, %v3286
    %v3288 = vpop.f32.mrb[0].mxu0
    %v3289 = vadd.f32 %v3089, %v3288
    %v3290 = vpop.f32.mrb[0].mxu0
    %v3291 = vpop.f32.mrb[0].mxu0
    %3292 = vdwg.mxu0
    %vm3293 = vcmp.ge.f32.partialorder %v3287, 0.0
    %vm3294 = vcmp.ge.f32.partialorder %v3289, 0.0
    %s3295 = sld [smem:[#allocation2 + $0x1]]
    %v3296 = vstv %s3295
    %v3297 = vmul.f32 %v3296, %v3287
    %v3298 = vmul.f32 %v3296, %v3289
    %v3299 = vsel %vm3293, %v3287, %v3297
    %v3300 = vsel %vm3294, %v3289, %v3298
    %v3301 = vpack.c.bf16 %v3299, %v3299
    %v3302 = vpack.c.bf16 %v3300, %v3300
    %v3303 = vld [vmem:[%s5] sm:$0xf]
    %v3304 = vld [vmem:[%s5 + $0x4] sm:$0xf]
    %v3305 = vld [vmem:[%s5 + $0x8] sm:$0xf]
    %v3306 = vld [vmem:[%s5 + $0xc] sm:$0xf]
    %v3307 = vld [vmem:[%s5 + $0x10] sm:$0xf]
    %v3308 = vld [vmem:[%s5 + $0x14] sm:$0xf]
    %v3309 = vld [vmem:[%s5 + $0x18] sm:$0xf]
    %v3310 = vld [vmem:[%s5 + $0x1c] sm:$0xf]
    %v3311 = vld [vmem:[%s5 + $0x20] sm:$0xf]
    %v3312 = vld [vmem:[%s5 + $0x24] sm:$0xf]
    %v3313 = vld [vmem:[%s5 + $0x28] sm:$0xf]
    %v3314 = vld [vmem:[%s5 + $0x2c] sm:$0xf]
    %v3315 = vld [vmem:[%s5 + $0x30] sm:$0xf]
    %v3316 = vld [vmem:[%s5 + $0x34] sm:$0xf]
    %v3317 = vld [vmem:[%s5 + $0x38] sm:$0xf]
    %v3318 = vld [vmem:[%s5 + $0x3c] sm:$0xf]
    %v3319 = vld [vmem:[%s5 + $0x40] sm:$0xf]
    %v3320 = vld [vmem:[%s5 + $0x44] sm:$0xf]
    %v3321 = vld [vmem:[%s5 + $0x48] sm:$0xf]
    %v3322 = vld [vmem:[%s5 + $0x4c] sm:$0xf]
    %v3323 = vld [vmem:[%s5 + $0x50] sm:$0xf]
    %v3324 = vld [vmem:[%s5 + $0x54] sm:$0xf]
    %v3325 = vld [vmem:[%s5 + $0x58] sm:$0xf]
    %v3326 = vld [vmem:[%s5 + $0x5c] sm:$0xf]
    %v3327 = vld [vmem:[%s5 + $0x60] sm:$0xf]
    %v3328 = vld [vmem:[%s5 + $0x64] sm:$0xf]
    %v3329 = vld [vmem:[%s5 + $0x68] sm:$0xf]
    %v3330 = vld [vmem:[%s5 + $0x6c] sm:$0xf]
    %v3331 = vld [vmem:[%s5 + $0x70] sm:$0xf]
    %v3332 = vld [vmem:[%s5 + $0x74] sm:$0xf]
    %v3333 = vld [vmem:[%s5 + $0x78] sm:$0xf]
    %v3334 = vld [vmem:[%s5 + $0x7c] sm:$0xf]
    %v3335 = vld [vmem:[%s6] sm:$0x1]
    %v3337 = vlaneseq
    %v3338 = vshrl.u32 %v3337, 7
    %v3339 = vsub.s32 0, %v3338
    %v3340 = vrot.slane %v3335, %v3339
    %v3374 = vunpack.c.l.b16 %v3303
    %v3375 = vunpack.c.l.b16 %v3304
    %v3376 = vunpack.c.l.b16 %v3305
    %v3377 = vunpack.c.l.b16 %v3306
    %v3378 = vunpack.c.l.b16 %v3307
    %v3379 = vunpack.c.l.b16 %v3308
    %v3380 = vunpack.c.l.b16 %v3309
    %v3381 = vunpack.c.l.b16 %v3310
    %v3382 = vunpack.c.l.b16 %v3311
    %v3383 = vunpack.c.l.b16 %v3312
    %v3384 = vunpack.c.l.b16 %v3313
    %v3385 = vunpack.c.l.b16 %v3314
    %v3386 = vunpack.c.l.b16 %v3315
    %v3387 = vunpack.c.l.b16 %v3316
    %v3388 = vunpack.c.l.b16 %v3317
    %v3389 = vunpack.c.l.b16 %v3318
    %v3390 = vunpack.c.l.b16 %v3319
    %v3391 = vunpack.c.l.b16 %v3320
    %v3392 = vunpack.c.l.b16 %v3321
    %v3393 = vunpack.c.l.b16 %v3322
    %v3394 = vunpack.c.l.b16 %v3323
    %v3395 = vunpack.c.l.b16 %v3324
    %v3396 = vunpack.c.l.b16 %v3325
    %v3397 = vunpack.c.l.b16 %v3326
    %v3398 = vunpack.c.l.b16 %v3327
    %v3399 = vunpack.c.l.b16 %v3328
    %v3400 = vunpack.c.l.b16 %v3329
    %v3401 = vunpack.c.l.b16 %v3330
    %v3402 = vunpack.c.l.b16 %v3331
    %v3403 = vunpack.c.l.b16 %v3332
    %v3404 = vunpack.c.l.b16 %v3333
    %v3405 = vunpack.c.l.b16 %v3334
    %v3406 = vpack.c.b16 %v3375, %v3374
    %v3407 = vpack.c.b16 %v3377, %v3376
    %v3408 = vpack.c.b16 %v3379, %v3378
    %v3409 = vpack.c.b16 %v3381, %v3380
    %v3410 = vpack.c.b16 %v3383, %v3382
    %v3411 = vpack.c.b16 %v3385, %v3384
    %v3412 = vpack.c.b16 %v3387, %v3386
    %v3413 = vpack.c.b16 %v3389, %v3388
    %v3414 = vpack.c.b16 %v3391, %v3390
    %v3415 = vpack.c.b16 %v3393, %v3392
    %v3416 = vpack.c.b16 %v3395, %v3394
    %v3417 = vpack.c.b16 %v3397, %v3396
    %v3418 = vpack.c.b16 %v3399, %v3398
    %v3419 = vpack.c.b16 %v3401, %v3400
    %v3420 = vpack.c.b16 %v3403, %v3402
    %v3421 = vpack.c.b16 %v3405, %v3404
    %3438 = vmatprep.subr.bf16.mxu0 0
    %3439 = vmatpush1.bf16.msra.mxu0 %v3406
    %3440 = vmatprep.subr.bf16.mxu0 0
    %3441 = vmatpush1.bf16.msra.mxu0 %v3407
    %3442 = vmatprep.subr.bf16.mxu0 0
    %3443 = vmatpush1.bf16.msra.mxu0 %v3408
    %3444 = vmatprep.subr.bf16.mxu0 0
    %3445 = vmatpush1.bf16.msra.mxu0 %v3409
    %3446 = vmatprep.subr.bf16.mxu0 0
    %3447 = vmatpush1.bf16.msra.mxu0 %v3410
    %3448 = vmatprep.subr.bf16.mxu0 0
    %3449 = vmatpush1.bf16.msra.mxu0 %v3411
    %3450 = vmatprep.subr.bf16.mxu0 0
    %3451 = vmatpush1.bf16.msra.mxu0 %v3412
    %3452 = vmatprep.subr.bf16.mxu0 0
    %3453 = vmatpush1.bf16.msra.mxu0 %v3413
    %3454 = vmatprep.subr.bf16.mxu0 0
    %3455 = vmatpush1.bf16.msra.mxu0 %v3414
    %3456 = vmatprep.subr.bf16.mxu0 0
    %3457 = vmatpush1.bf16.msra.mxu0 %v3415
    %3458 = vmatprep.subr.bf16.mxu0 0
    %3459 = vmatpush1.bf16.msra.mxu0 %v3416
    %3460 = vmatprep.subr.bf16.mxu0 0
    %3461 = vmatpush1.bf16.msra.mxu0 %v3417
    %3462 = vmatprep.subr.bf16.mxu0 0
    %3463 = vmatpush1.bf16.msra.mxu0 %v3418
    %3464 = vmatprep.subr.bf16.mxu0 0
    %3465 = vmatpush1.bf16.msra.mxu0 %v3419
    %3466 = vmatprep.subr.bf16.mxu0 0
    %3467 = vmatpush1.bf16.msra.mxu0 %v3420
    %3468 = vmatprep.subr.bf16.mxu0 0
    %3469 = vmatpush1.bf16.msra.mxu0 %v3421
    %3470 = vmatprep.mubr.bf16.mxu0 %v3302
    %3471 = vmatmul.mubr.bf16.gmra.mrb[0].mxu0 %v3301
    %v3472 = vpop.f32.mrb[0].mxu0
    %v3473 = vadd.f32 %v3340, %v3472
    %v3474 = vpop.f32.mrb[0].mxu0
    %v3475 = vpop.f32.mrb[0].mxu0
    %v3476 = vpop.f32.mrb[0].mxu0
    %3477 = vdwg.mxu0
    %3478 = vst [vmem:[%s8] sm:$0xff] %v3473
    // Predicated region
    $region38: #{embedding_net_rgb_forward.5} parent=1 // pred_check
      _
    $region39: #{embedding_net_rgb_forward.5} parent=1 // pred_check_branch
      %3480 = sbr.rel (0) target = $region41
    $region40: #{embedding_net_rgb_forward.5} parent=1 // pred_region
      _
    $region41: #{embedding_net_rgb_forward.5} parent=1 // pred_fallthru
      _
    // Predicated region
    $region42: #{embedding_net_rgb_forward.5} parent=1 // pred_check
      _
    $region43: #{embedding_net_rgb_forward.5} parent=1 // pred_check_branch
      %3482 = sbr.rel (0) target = $region45
    $region44: #{embedding_net_rgb_forward.5} parent=1 // pred_region
      _
    $region45: #{embedding_net_rgb_forward.5} parent=1 // pred_fallthru
      _
    %3483 = vsyncpa [#allocation3], 1

</llo_original>
